<compile_context>
chip_gen: v7x
topology: tpu7x:2x2x1
jax: 0.10.0
libtpu: 0.0.40
codegen_flags: <defaults>
</compile_context>

<pallas_src>
import functools

import jax
import jax.numpy as jnp
from jax import lax
from jax.experimental import pallas as pl
from jax.experimental.pallas import tpu as pltpu


# ----------------------------------------------------------------------------
# In-kernel helpers (traced inside the Pallas kernel body)
# ----------------------------------------------------------------------------
def _silu(y):
    # sigmoid(y) = 0.5*(1 + tanh(y/2)): tanh runs on the EUP (free slot) and
    # never overflows, unlike recip(1 + exp(-y)) for y << -88.
    return y * (0.5 * (1.0 + jnp.tanh(0.5 * y)))


def _layernorm(y, g, b, eps=1e-5):
    mu = jnp.mean(y, axis=-1, keepdims=True)
    yc = y - mu
    var = jnp.mean(yc * yc, axis=-1, keepdims=True)
    return yc * lax.rsqrt(var + eps) * g + b


def _mm(x_f32, w_ref, b_ref):
    """bf16 MXU matmul with f32 accumulation + f32 bias add."""
    return (
        jnp.dot(x_f32.astype(jnp.bfloat16), w_ref[...],
                preferred_element_type=jnp.float32)
        + b_ref[...]
    )


# ----------------------------------------------------------------------------
# Fused whole-network kernel.  grid = (instance_groups, encoder_layers).
# ----------------------------------------------------------------------------
def _fused_kernel(
    # data ------------------------------------------------------------------
    x_ref, prior_ref, p_ref, freqs_ref, abias_ref,
    # map_inputs Linear, split along its concatenated input axis -------------
    wix_ref, wipr_ref, wicos_ref, wisin_ref, mib_ref,
    # per-layer encoder weights (streamed along the layer grid axis) ---------
    ipw_ref, ipb_ref, opw_ref, opb_ref,
    l1w_ref, l1b_ref, l2w_ref, l2b_ref,
    ln1g_ref, ln1b_ref, ln2g_ref, ln2b_ref,
    # map_output head (constant-index, VMEM-resident) ------------------------
    o1w_ref, o1b_ref, og1_ref, ob1_ref,
    o2w_ref, o2b_ref, og2_ref, ob2_ref,
    o3w_ref, o3b_ref,
    # outputs / scratch -------------------------------------------------------
    out_ref, h_ref,
    *, num_heads, head_dim, model_dim,
):
    layer = pl.program_id(1)
    num_layers = pl.num_programs(1)

    # --- step (g, 0): positional embedding + concat + map_inputs, fused ------
    # xin = [x | prior | cos(p*f) | sin(p*f)]; realised as a sum of four small
    # matmuls against the correspondingly split weight (no in-kernel lane
    # concat of 16/64/16/16-wide pieces).
    @pl.when(layer == 0)
    def _():
        ph = p_ref[...] * freqs_ref[...]                          # (R, half)
        h0 = (
            jnp.dot(x_ref[...].astype(jnp.bfloat16), wix_ref[...],
                    preferred_element_type=jnp.float32)
            + jnp.dot(prior_ref[...].astype(jnp.bfloat16), wipr_ref[...],
                      preferred_element_type=jnp.float32)
            + jnp.dot(jnp.cos(ph).astype(jnp.bfloat16), wicos_ref[...],
                      preferred_element_type=jnp.float32)
            + jnp.dot(jnp.sin(ph).astype(jnp.bfloat16), wisin_ref[...],
                      preferred_element_type=jnp.float32)
            + mib_ref[...]
        )
        h_ref[...] = _silu(h0)

    h = h_ref[...]          # (R, D) f32, resident in VMEM across all layers

    # --- self-attention block (post-norm TransformerEncoderLayer) ------------
    qkv = _mm(h, ipw_ref, ipb_ref)        # (R, 3D); 1/sqrt(hd) folded into q
    q = qkv[:, :model_dim]
    k = qkv[:, model_dim:2 * model_dim]
    v = qkv[:, 2 * model_dim:]
    abias = abias_ref[...]                # block-diag additive mask (0 / -1e30)

    heads = []
    for hix in range(num_heads):          # short static unroll
        lo = hix * head_dim
        qh = q[:, lo:lo + head_dim].astype(jnp.bfloat16)
        kh = k[:, lo:lo + head_dim].astype(jnp.bfloat16)
        vh = v[:, lo:lo + head_dim].astype(jnp.bfloat16)
        # contract the last dims directly (no explicit transpose of kh)
        s = lax.dot_general(qh, kh, (((1,), (1,)), ((), ())),
                            preferred_element_type=jnp.float32)
        s = s + abias                     # keep attention within each instance
        s = s - jnp.max(s, axis=-1, keepdims=True)
        e = jnp.exp(s)
        pr = e * pl.reciprocal(jnp.sum(e, axis=-1, keepdims=True), approx=True)
        heads.append(jnp.dot(pr.astype(jnp.bfloat16), vh,
                             preferred_element_type=jnp.float32))
    attn = jnp.concatenate(heads, axis=-1)          # lane-dense (R, D)

    attn = _mm(attn, opw_ref, opb_ref)
    h = _layernorm(attn + h, ln1g_ref[...], ln1b_ref[...])

    # --- feed-forward block (Linear -> ReLU -> Linear) -----------------------
    ff = jnp.maximum(_mm(h, l1w_ref, l1b_ref), 0.0)
    ff = _mm(ff, l2w_ref, l2b_ref)
    h = _layernorm(ff + h, ln2g_ref[...], ln2b_ref[...])

    h_ref[...] = h

    # --- step (g, last): map_output head; out_ref is lane-dense (128-padded)
    # and only written (hence only flushed with real data) on the final layer
    # of each instance group.
    @pl.when(layer == num_layers - 1)
    def _():
        z = _silu(_layernorm(_mm(h, o1w_ref, o1b_ref), og1_ref[...], ob1_ref[...]))
        z = _silu(_layernorm(_mm(z, o2w_ref, o2b_ref), og2_ref[...], ob2_ref[...]))
        out_ref[...] = jnp.tanh(_mm(z, o3w_ref, o3b_ref))


# ----------------------------------------------------------------------------
# pallas_call builder
# ----------------------------------------------------------------------------
def _fused_forward(params, x2, prior2, p2, *, num_heads, num_inst, inst_rows,
                   num_groups):
    total_rows = x2.shape[0]
    assert num_inst % num_groups == 0, "instances must divide evenly into groups"
    rows_per_group = total_rows // num_groups
    inst_per_group = num_inst // num_groups

    x_dim = params["map_in_w_x"].shape[0]
    prior_dim = params["map_in_w_pr"].shape[0]
    emb_half = params["map_in_w_cos"].shape[0]
    model_dim = params["map_in_b"].shape[1]
    dim_ff = params["lin1_w"].shape[2]
    out_pad = params["out3_w"].shape[1]
    num_layers = params["in_proj_w"].shape[0]
    head_dim = model_dim // num_heads

    # Block-diagonal additive attention bias: rows of different instances in a
    # row-stacked group must not attend to each other.  Rows are 8-sublane
    # aligned (inst_rows = 8), so the mask is cheap; it is a constant-index
    # VMEM-resident input (no in-kernel iota/div).
    if inst_per_group > 1:
        blk = jnp.arange(rows_per_group, dtype=jnp.int32) // inst_rows
        attn_bias = jnp.where(blk[:, None] == blk[None, :],
                              0.0, -1e30).astype(jnp.float32)
    else:
        attn_bias = jnp.zeros((rows_per_group, rows_per_group), jnp.float32)

    def full(shape):                 # loaded once, stays resident in VMEM
        return pl.BlockSpec(shape, lambda g, l: (0,) * len(shape))

    def per_layer(shape):            # streamed along the (inner) layer axis
        return pl.BlockSpec((None,) + shape,
                            lambda g, l: (l,) + (0,) * len(shape))

    def per_group(shape):            # data rows of the current instance group
        return pl.BlockSpec(shape, lambda g, l: (g,) + (0,) * (len(shape) - 1))

    kernel = functools.partial(
        _fused_kernel,
        num_heads=num_heads, head_dim=head_dim, model_dim=model_dim,
    )

    in_specs = [
        per_group((rows_per_group, x_dim)),            # x
        per_group((rows_per_group, prior_dim)),        # prior
        per_group((rows_per_group, 1)),                # p
        full((1, emb_half)),                           # emb_freqs
        full((rows_per_group, rows_per_group)),        # attn_bias
        full((x_dim, model_dim)),                      # map_in_w_x
        full((prior_dim, model_dim)),                  # map_in_w_pr
        full((emb_half, model_dim)),                   # map_in_w_cos
        full((emb_half, model_dim)),                   # map_in_w_sin
        full((1, model_dim)),                          # map_in_b
        per_layer((model_dim, 3 * model_dim)),         # in_proj_w
        per_layer((1, 3 * model_dim)),                 # in_proj_b
        per_layer((model_dim, model_dim)),             # out_proj_w
        per_layer((1, model_dim)),                     # out_proj_b
        per_layer((model_dim, dim_ff)),                # lin1_w
        per_layer((1, dim_ff)),                        # lin1_b
        per_layer((dim_ff, model_dim)),                # lin2_w
        per_layer((1, model_dim)),                     # lin2_b
        per_layer((1, model_dim)),                     # ln1_g
        per_layer((1, model_dim)),                     # ln1_b
        per_layer((1, model_dim)),                     # ln2_g
        per_layer((1, model_dim)),                     # ln2_b
        full((model_dim, model_dim)),                  # out1_w
        full((1, model_dim)),                          # out1_b
        full((1, model_dim)),                          # out_ln1_g
        full((1, model_dim)),                          # out_ln1_b
        full((model_dim, model_dim)),                  # out2_w
        full((1, model_dim)),                          # out2_b
        full((1, model_dim)),                          # out_ln2_g
        full((1, model_dim)),                          # out_ln2_b
        full((model_dim, out_pad)),                    # out3_w (lane-padded)
        full((1, out_pad)),                            # out3_b (lane-padded)
    ]

    grid_spec = pltpu.PrefetchScalarGridSpec(
        num_scalar_prefetch=0,
        grid=(num_groups, num_layers),
        in_specs=in_specs,
        out_specs=pl.BlockSpec((rows_per_group, out_pad), lambda g, l: (g, 0)),
        scratch_shapes=[pltpu.VMEM((rows_per_group, model_dim), jnp.float32)],
    )

    out = pl.pallas_call(
        kernel,
        out_shape=jax.ShapeDtypeStruct((total_rows, out_pad), jnp.float32),
        grid_spec=grid_spec,
        compiler_params=pltpu.CompilerParams(
            # groups are independent (dual-TC chips split them across cores);
            # layers carry the activation scratch and must stay sequential.
            dimension_semantics=("parallel", "arbitrary"),
            vmem_limit_bytes=32 * 1024 * 1024,
        ),
    )(
        x2, prior2, p2, params["emb_freqs"], attn_bias,
        params["map_in_w_x"], params["map_in_w_pr"],
        params["map_in_w_cos"], params["map_in_w_sin"], params["map_in_b"],
        params["in_proj_w"], params["in_proj_b"],
        params["out_proj_w"], params["out_proj_b"],
        params["lin1_w"], params["lin1_b"],
        params["lin2_w"], params["lin2_b"],
        params["ln1_g"], params["ln1_b"],
        params["ln2_g"], params["ln2_b"],
        params["out1_w"], params["out1_b"],
        params["out_ln1_g"], params["out_ln1_b"],
        params["out2_w"], params["out2_b"],
        params["out_ln2_g"], params["out_ln2_b"],
        params["out3_w"], params["out3_b"],
    )
    return out[:, :x_dim]          # drop lane padding of the final Linear


def conditional_attention_forward(params, x, prior, p, *, num_heads,
                                  num_groups=1):
    """Forward pass of ConditionalAttention.

    x (B, x_dim), prior (B, d^3), p (B,): exact PyTorch semantics (attention
    mixes across the B rows, like the unbatched (S, E) TransformerEncoder).
    Stacked (G, B, ...) inputs fuse G independent forwards into ONE kernel
    call: weights are streamed from HBM once, the MXU sees G*B rows, and a
    block-diagonal attention bias keeps each instance independent.
    num_groups splits the G instances across a leading 'parallel' grid axis
    (use 2 on dual-TensorCore chips such as v7x; 1 otherwise).
    """
    single = (x.ndim == 2)
    if single:
        x, prior, p = x[None], prior[None], p[None]
    num_inst, inst_rows, x_dim = x.shape
    rows = num_inst * inst_rows
    out = _fused_forward(
        params,
        x.reshape(rows, x_dim).astype(jnp.float32),
        prior.reshape(rows, -1).astype(jnp.float32),
        p.reshape(rows, 1).astype(jnp.float32),
        num_heads=num_heads, num_inst=num_inst, inst_rows=inst_rows,
        num_groups=num_groups,
    )
    out = out.reshape(num_inst, inst_rows, x_dim)
    return out[0] if single else out


# ----------------------------------------------------------------------------
# Parameter init (synthetic, deterministic)
# ----------------------------------------------------------------------------
def _init_linear(key, fan_in, fan_out):
    k1, k2 = jax.random.split(key)
    w = jax.random.normal(k1, (fan_in, fan_out), jnp.float32) / jnp.sqrt(
        jnp.float32(fan_in))
    b = 0.01 * jax.random.normal(k2, (fan_out,), jnp.float32)
    return w, b   # stored as (in, out)


def init_params(key, *, d, emb_channels, model_dim, num_layers, num_heads,
                dim_ff):
    bf16 = jnp.bfloat16
    x_dim = d * d
    prior_dim = d * d * d
    half = emb_channels // 2
    in_dim = x_dim + prior_dim + emb_channels
    head_dim = model_dim // num_heads

    keys = jax.random.split(key, 2 + num_layers)
    params = {}

    # PositionalEmbedding(endpoint=True) frequencies.
    freqs = jnp.arange(half, dtype=jnp.float32) / (half - 1)
    params["emb_freqs"] = ((1.0 / 10000.0) ** freqs).reshape(1, half)

    # map_inputs Linear, split along its concatenated input axis so the
    # embedding + concat can be fused in-kernel as a sum of four matmuls.
    w, b = _init_linear(keys[0], in_dim, model_dim)
    params["map_in_w_x"] = w[:x_dim].astype(bf16)
    params["map_in_w_pr"] = w[x_dim:x_dim + prior_dim].astype(bf16)
    params["map_in_w_cos"] = w[x_dim + prior_dim:x_dim + prior_dim + half].astype(bf16)
    params["map_in_w_sin"] = w[x_dim + prior_dim + half:].astype(bf16)
    params["map_in_b"] = b.reshape(1, model_dim)

    # 1/sqrt(head_dim) softmax scale folded into the q columns of in_proj.
    qkv_scale = jnp.concatenate([
        jnp.full((model_dim,), 1.0 / (head_dim ** 0.5), jnp.float32),
        jnp.ones((2 * model_dim,), jnp.float32)])

    ipw, ipb, opw, opb, l1w, l1b, l2w, l2b = ([] for _ in range(8))
    for l in range(num_layers):
        lk = jax.random.split(keys[1 + l], 4)
        w, b = _init_linear(lk[0], model_dim, 3 * model_dim)
        ipw.append(w * qkv_scale[None, :]); ipb.append(b * qkv_scale)
        w, b = _init_linear(lk[1], model_dim, model_dim); opw.append(w); opb.append(b)
        w, b = _init_linear(lk[2], model_dim, dim_ff);    l1w.append(w); l1b.append(b)
        w, b = _init_linear(lk[3], dim_ff, model_dim);    l2w.append(w); l2b.append(b)

    params["in_proj_w"] = jnp.stack(ipw).astype(bf16)                 # (L, D, 3D)
    params["in_proj_b"] = jnp.stack(ipb).reshape(num_layers, 1, 3 * model_dim)
    params["out_proj_w"] = jnp.stack(opw).astype(bf16)                # (L, D, D)
    params["out_proj_b"] = jnp.stack(opb).reshape(num_layers, 1, model_dim)
    params["lin1_w"] = jnp.stack(l1w).astype(bf16)                    # (L, D, F)
    params["lin1_b"] = jnp.stack(l1b).reshape(num_layers, 1, dim_ff)
    params["lin2_w"] = jnp.stack(l2w).astype(bf16)                    # (L, F, D)
    params["lin2_b"] = jnp.stack(l2b).reshape(num_layers, 1, model_dim)
    params["ln1_g"] = jnp.ones((num_layers, 1, model_dim), jnp.float32)
    params["ln1_b"] = jnp.zeros((num_layers, 1, model_dim), jnp.float32)
    params["ln2_g"] = jnp.ones((num_layers, 1, model_dim), jnp.float32)
    params["ln2_b"] = jnp.zeros((num_layers, 1, model_dim), jnp.float32)

    ok = jax.random.split(keys[1 + num_layers], 3)
    w, b = _init_linear(ok[0], model_dim, model_dim)
    params["out1_w"] = w.astype(bf16); params["out1_b"] = b.reshape(1, model_dim)
    params["out_ln1_g"] = jnp.ones((1, model_dim), jnp.float32)
    params["out_ln1_b"] = jnp.zeros((1, model_dim), jnp.float32)
    w, b = _init_linear(ok[1], model_dim, model_dim)
    params["out2_w"] = w.astype(bf16); params["out2_b"] = b.reshape(1, model_dim)
    params["out_ln2_g"] = jnp.ones((1, model_dim), jnp.float32)
    params["out_ln2_b"] = jnp.zeros((1, model_dim), jnp.float32)

    # Final Linear padded to a lane-dense 128-multiple width; the wrapper
    # slices back to x_dim (pad weights/bias are zero -> tanh(0) = 0).
    w, b = _init_linear(ok[2], model_dim, x_dim)
    out_pad = ((x_dim + 127) // 128) * 128
    w_pad = jnp.zeros((model_dim, out_pad), jnp.float32).at[:, :x_dim].set(w)
    b_pad = jnp.zeros((out_pad,), jnp.float32).at[:x_dim].set(b)
    params["out3_w"] = w_pad.astype(bf16)
    params["out3_b"] = b_pad.reshape(1, out_pad)
    return params


# ----------------------------------------------------------------------------
# Demo / self-check
# ----------------------------------------------------------------------------
if __name__ == "__main__":
    # Small config consistent with the module:
    #   d=4 -> x_dim=16, prior_dim=64 ; embedding_channels=32 ;
    #   model_dimension=128, num_heads=4, num_encoder_layers=2,
    #   dim_feedforward=2048 (PyTorch TransformerEncoderLayer default).
    d = 4
    x_dim = d * d                 # 16
    prior_dim = d * d * d         # 64
    emb_channels = 32
    model_dim = 128
    num_heads = 4
    num_layers = 2
    dim_ff = 2048

    B = 8    # rows of one forward (attention mixes across them, as in PyTorch)
    G = 16   # independent forwards fused into one kernel call -> G*B = 128 rows

    key = jax.random.PRNGKey(0)
    k_params, k_x, k_prior, k_p = jax.random.split(key, 4)
    params = init_params(k_params, d=d, emb_channels=emb_channels,
                         model_dim=model_dim, num_layers=num_layers,
                         num_heads=num_heads, dim_ff=dim_ff)

    x = jax.random.normal(k_x, (G, B, x_dim), jnp.float32)
    prior = jax.random.normal(k_prior, (G, B, prior_dim), jnp.float32)
    p = jax.random.uniform(k_p, (G, B), jnp.float32)

    # TODO(synk): dropout layers are identity here (eval-mode semantics); train-mode RNG dropout not implemented.
    fwd_batched = jax.jit(functools.partial(
        conditional_attention_forward, num_heads=num_heads, num_groups=2))
    fwd_single = jax.jit(functools.partial(
        conditional_attention_forward, num_heads=num_heads, num_groups=1))

    out_b = fwd_batched(params, x, prior, p)           # 16 instances, one kernel
    jax.block_until_ready(out_b)
    out_s = fwd_single(params, x[0], prior[0], p[0])   # single-instance semantics
    jax.block_until_ready(out_s)

    assert out_b.shape == (G, B, x_dim), out_b.shape
    assert out_s.shape == (B, x_dim), out_s.shape
    assert bool(jnp.all(jnp.isfinite(out_b)))
    assert bool(jnp.all(jnp.isfinite(out_s)))
    # Block-diagonal masking must make the fused multi-instance call agree with
    # running an instance on its own.
    max_diff = float(jnp.max(jnp.abs(out_b[0] - out_s)))
    assert max_diff < 5e-2, max_diff
    print("KERNEL_OK")
</pallas_src>

<mosaic_0001>
module attributes {stable_mosaic.version = 11 : i64} {
  func.func @_fused_kernel(%arg0: i32, %arg1: i32, %arg2: memref<64x16xf32, #tpu.memory_space<vmem>>, %arg3: memref<64x64xf32, #tpu.memory_space<vmem>>, %arg4: memref<64x1xf32, #tpu.memory_space<vmem>>, %arg5: memref<1x16xf32, #tpu.memory_space<vmem>>, %arg6: memref<64x64xf32, #tpu.memory_space<vmem>>, %arg7: memref<16x128xbf16, #tpu.memory_space<vmem>>, %arg8: memref<64x128xbf16, #tpu.memory_space<vmem>>, %arg9: memref<16x128xbf16, #tpu.memory_space<vmem>>, %arg10: memref<16x128xbf16, #tpu.memory_space<vmem>>, %arg11: memref<1x128xf32, #tpu.memory_space<vmem>>, %arg12: memref<1x128x384xbf16, #tpu.memory_space<vmem>>, %arg13: memref<1x1x384xf32, #tpu.memory_space<vmem>>, %arg14: memref<1x128x128xbf16, #tpu.memory_space<vmem>>, %arg15: memref<1x1x128xf32, #tpu.memory_space<vmem>>, %arg16: memref<1x128x2048xbf16, #tpu.memory_space<vmem>>, %arg17: memref<1x1x2048xf32, #tpu.memory_space<vmem>>, %arg18: memref<1x2048x128xbf16, #tpu.memory_space<vmem>>, %arg19: memref<1x1x128xf32, #tpu.memory_space<vmem>>, %arg20: memref<1x1x128xf32, #tpu.memory_space<vmem>>, %arg21: memref<1x1x128xf32, #tpu.memory_space<vmem>>, %arg22: memref<1x1x128xf32, #tpu.memory_space<vmem>>, %arg23: memref<1x1x128xf32, #tpu.memory_space<vmem>>, %arg24: memref<128x128xbf16, #tpu.memory_space<vmem>>, %arg25: memref<1x128xf32, #tpu.memory_space<vmem>>, %arg26: memref<1x128xf32, #tpu.memory_space<vmem>>, %arg27: memref<1x128xf32, #tpu.memory_space<vmem>>, %arg28: memref<128x128xbf16, #tpu.memory_space<vmem>>, %arg29: memref<1x128xf32, #tpu.memory_space<vmem>>, %arg30: memref<1x128xf32, #tpu.memory_space<vmem>>, %arg31: memref<1x128xf32, #tpu.memory_space<vmem>>, %arg32: memref<128x128xbf16, #tpu.memory_space<vmem>>, %arg33: memref<1x128xf32, #tpu.memory_space<vmem>>, %arg34: memref<64x128xf32, #tpu.memory_space<vmem>>, %arg35: memref<64x128xf32, #tpu.memory_space<vmem>>) attributes {dimension_semantics = [#tpu.dimension_semantics<parallel>, #tpu.dimension_semantics<arbitrary>], iteration_bounds = array<i64: 2, 2>, scalar_prefetch = 0 : i64, scratch_operands = 1 : i64, tpu.core_type = #tpu.core_type<tc>, window_params = [{transform_indices = @transform_0, window_bounds = array<i64: 64, 16>}, {transform_indices = @transform_1, window_bounds = array<i64: 64, 64>}, {transform_indices = @transform_2, window_bounds = array<i64: 64, 1>}, {pipeline_mode = #tpu.pipeline_mode<synchronous>, transform_indices = @transform_3, window_bounds = array<i64: 1, 16>}, {pipeline_mode = #tpu.pipeline_mode<synchronous>, transform_indices = @transform_4, window_bounds = array<i64: 64, 64>}, {pipeline_mode = #tpu.pipeline_mode<synchronous>, transform_indices = @transform_5, window_bounds = array<i64: 16, 128>}, {pipeline_mode = #tpu.pipeline_mode<synchronous>, transform_indices = @transform_6, window_bounds = array<i64: 64, 128>}, {pipeline_mode = #tpu.pipeline_mode<synchronous>, transform_indices = @transform_7, window_bounds = array<i64: 16, 128>}, {pipeline_mode = #tpu.pipeline_mode<synchronous>, transform_indices = @transform_8, window_bounds = array<i64: 16, 128>}, {pipeline_mode = #tpu.pipeline_mode<synchronous>, transform_indices = @transform_9, window_bounds = array<i64: 1, 128>}, {transform_indices = @transform_10, window_bounds = array<i64: 1, 128, 384>}, {transform_indices = @transform_11, window_bounds = array<i64: 1, 1, 384>}, {transform_indices = @transform_12, window_bounds = array<i64: 1, 128, 128>}, {transform_indices = @transform_13, window_bounds = array<i64: 1, 1, 128>}, {transform_indices = @transform_14, window_bounds = array<i64: 1, 128, 2048>}, {transform_indices = @transform_15, window_bounds = array<i64: 1, 1, 2048>}, {transform_indices = @transform_16, window_bounds = array<i64: 1, 2048, 128>}, {transform_indices = @transform_17, window_bounds = array<i64: 1, 1, 128>}, {transform_indices = @transform_18, window_bounds = array<i64: 1, 1, 128>}, {transform_indices = @transform_19, window_bounds = array<i64: 1, 1, 128>}, {transform_indices = @transform_20, window_bounds = array<i64: 1, 1, 128>}, {transform_indices = @transform_21, window_bounds = array<i64: 1, 1, 128>}, {pipeline_mode = #tpu.pipeline_mode<synchronous>, transform_indices = @transform_22, window_bounds = array<i64: 128, 128>}, {pipeline_mode = #tpu.pipeline_mode<synchronous>, transform_indices = @transform_23, window_bounds = array<i64: 1, 128>}, {pipeline_mode = #tpu.pipeline_mode<synchronous>, transform_indices = @transform_24, window_bounds = array<i64: 1, 128>}, {pipeline_mode = #tpu.pipeline_mode<synchronous>, transform_indices = @transform_25, window_bounds = array<i64: 1, 128>}, {pipeline_mode = #tpu.pipeline_mode<synchronous>, transform_indices = @transform_26, window_bounds = array<i64: 128, 128>}, {pipeline_mode = #tpu.pipeline_mode<synchronous>, transform_indices = @transform_27, window_bounds = array<i64: 1, 128>}, {pipeline_mode = #tpu.pipeline_mode<synchronous>, transform_indices = @transform_28, window_bounds = array<i64: 1, 128>}, {pipeline_mode = #tpu.pipeline_mode<synchronous>, transform_indices = @transform_29, window_bounds = array<i64: 1, 128>}, {pipeline_mode = #tpu.pipeline_mode<synchronous>, transform_indices = @transform_30, window_bounds = array<i64: 128, 128>}, {pipeline_mode = #tpu.pipeline_mode<synchronous>, transform_indices = @transform_31, window_bounds = array<i64: 1, 128>}, {transform_indices = @transform_32, window_bounds = array<i64: 64, 128>}]} {
    %c0_i32 = arith.constant 0 : i32
    %0 = arith.cmpi eq, %arg1, %c0_i32 : i32
    %1 = arith.extui %0 : i1 to i32
    %c0_i32_0 = arith.constant 0 : i32
    %2 = arith.cmpi ne, %1, %c0_i32_0 : i32
    scf.if %2 {
      %c0_73 = arith.constant 0 : index
      %c0_74 = arith.constant 0 : index
      %177 = vector.load %arg4[%c0_73, %c0_74] : memref<64x1xf32, #tpu.memory_space<vmem>>, vector<64x1xf32>
      %c0_75 = arith.constant 0 : index
      %c0_76 = arith.constant 0 : index
      %178 = vector.load %arg5[%c0_75, %c0_76] : memref<1x16xf32, #tpu.memory_space<vmem>>, vector<1x16xf32>
      %179 = vector.broadcast %177 : vector<64x1xf32> to vector<64x16xf32>
      %180 = vector.broadcast %178 : vector<1x16xf32> to vector<64x16xf32>
      %181 = arith.mulf %179, %180 : vector<64x16xf32>
      %c0_77 = arith.constant 0 : index
      %c0_78 = arith.constant 0 : index
      %182 = vector.load %arg2[%c0_77, %c0_78] : memref<64x16xf32, #tpu.memory_space<vmem>>, vector<64x16xf32>
      %183 = arith.truncf %182 : vector<64x16xf32> to vector<64x16xbf16>
      %c0_79 = arith.constant 0 : index
      %c0_80 = arith.constant 0 : index
      %184 = vector.load %arg7[%c0_79, %c0_80] : memref<16x128xbf16, #tpu.memory_space<vmem>>, vector<16x128xbf16>
      %cst_81 = arith.constant dense<0.000000e+00> : vector<64x128xf32>
      %185 = tpu.matmul %183, %184, %cst_81 {dimension_numbers = #tpu.dot_dimension_numbers<[1], [0], [0], [1], [0, 0, 1, 1], [], []>} : vector<64x16xbf16>, vector<16x128xbf16>, vector<64x128xf32> -> vector<64x128xf32>
      %c0_82 = arith.constant 0 : index
      %c0_83 = arith.constant 0 : index
      %186 = vector.load %arg3[%c0_82, %c0_83] : memref<64x64xf32, #tpu.memory_space<vmem>>, vector<64x64xf32>
      %187 = arith.truncf %186 : vector<64x64xf32> to vector<64x64xbf16>
      %c0_84 = arith.constant 0 : index
      %c0_85 = arith.constant 0 : index
      %188 = vector.load %arg8[%c0_84, %c0_85] : memref<64x128xbf16, #tpu.memory_space<vmem>>, vector<64x128xbf16>
      %cst_86 = arith.constant dense<0.000000e+00> : vector<64x128xf32>
      %189 = tpu.matmul %187, %188, %cst_86 {dimension_numbers = #tpu.dot_dimension_numbers<[1], [0], [0], [1], [0, 0, 1, 1], [], []>} : vector<64x64xbf16>, vector<64x128xbf16>, vector<64x128xf32> -> vector<64x128xf32>
      %190 = arith.addf %185, %189 : vector<64x128xf32>
      %191 = math.cos %181 : vector<64x16xf32>
      %192 = arith.truncf %191 : vector<64x16xf32> to vector<64x16xbf16>
      %c0_87 = arith.constant 0 : index
      %c0_88 = arith.constant 0 : index
      %193 = vector.load %arg9[%c0_87, %c0_88] : memref<16x128xbf16, #tpu.memory_space<vmem>>, vector<16x128xbf16>
      %cst_89 = arith.constant dense<0.000000e+00> : vector<64x128xf32>
      %194 = tpu.matmul %192, %193, %cst_89 {dimension_numbers = #tpu.dot_dimension_numbers<[1], [0], [0], [1], [0, 0, 1, 1], [], []>} : vector<64x16xbf16>, vector<16x128xbf16>, vector<64x128xf32> -> vector<64x128xf32>
      %195 = arith.addf %190, %194 : vector<64x128xf32>
      %196 = math.sin %181 : vector<64x16xf32>
      %197 = arith.truncf %196 : vector<64x16xf32> to vector<64x16xbf16>
      %c0_90 = arith.constant 0 : index
      %c0_91 = arith.constant 0 : index
      %198 = vector.load %arg10[%c0_90, %c0_91] : memref<16x128xbf16, #tpu.memory_space<vmem>>, vector<16x128xbf16>
      %cst_92 = arith.constant dense<0.000000e+00> : vector<64x128xf32>
      %199 = tpu.matmul %197, %198, %cst_92 {dimension_numbers = #tpu.dot_dimension_numbers<[1], [0], [0], [1], [0, 0, 1, 1], [], []>} : vector<64x16xbf16>, vector<16x128xbf16>, vector<64x128xf32> -> vector<64x128xf32>
      %200 = arith.addf %195, %199 : vector<64x128xf32>
      %c0_93 = arith.constant 0 : index
      %c0_94 = arith.constant 0 : index
      %201 = vector.load %arg11[%c0_93, %c0_94] : memref<1x128xf32, #tpu.memory_space<vmem>>, vector<1x128xf32>
      %202 = vector.broadcast %201 : vector<1x128xf32> to vector<64x128xf32>
      %203 = arith.addf %200, %202 : vector<64x128xf32>
      %cst_95 = arith.constant 5.000000e-01 : f32
      %204 = vector.broadcast %cst_95 : f32 to vector<64x128xf32>
      %205 = arith.mulf %204, %203 : vector<64x128xf32>
      %206 = math.tanh %205 : vector<64x128xf32>
      %cst_96 = arith.constant 1.000000e+00 : f32
      %207 = vector.broadcast %cst_96 : f32 to vector<64x128xf32>
      %208 = arith.addf %207, %206 : vector<64x128xf32>
      %cst_97 = arith.constant 5.000000e-01 : f32
      %209 = vector.broadcast %cst_97 : f32 to vector<64x128xf32>
      %210 = arith.mulf %209, %208 : vector<64x128xf32>
      %211 = arith.mulf %203, %210 : vector<64x128xf32>
      %c0_98 = arith.constant 0 : index
      %c0_99 = arith.constant 0 : index
      %212 = vector.load %arg35[%c0_98, %c0_99] : memref<64x128xf32, #tpu.memory_space<vmem>>, vector<64x128xf32>
      tpu.vector_store %arg35[%c0_98, %c0_99], %211 {strides = array<i32>} : memref<64x128xf32, #tpu.memory_space<vmem>>, vector<64x128xf32>,
    } else {
    }
    %c0 = arith.constant 0 : index
    %c0_1 = arith.constant 0 : index
    %3 = vector.load %arg35[%c0, %c0_1] : memref<64x128xf32, #tpu.memory_space<vmem>>, vector<64x128xf32>
    %4 = arith.truncf %3 : vector<64x128xf32> to vector<64x128xbf16>
    %c0_2 = arith.constant 0 : index
    %c0_3 = arith.constant 0 : index
    %c0_4 = arith.constant 0 : index
    %5 = vector.load %arg12[%c0_2, %c0_3, %c0_4] : memref<1x128x384xbf16, #tpu.memory_space<vmem>>, vector<1x128x384xbf16>
    %6 = vector.shape_cast %5 : vector<1x128x384xbf16> to vector<128x384xbf16>
    %cst = arith.constant dense<0.000000e+00> : vector<64x384xf32>
    %7 = tpu.matmul %4, %6, %cst {dimension_numbers = #tpu.dot_dimension_numbers<[1], [0], [0], [1], [0, 0, 1, 1], [], []>} : vector<64x128xbf16>, vector<128x384xbf16>, vector<64x384xf32> -> vector<64x384xf32>
    %c0_5 = arith.constant 0 : index
    %c0_6 = arith.constant 0 : index
    %c0_7 = arith.constant 0 : index
    %8 = vector.load %arg13[%c0_5, %c0_6, %c0_7] : memref<1x1x384xf32, #tpu.memory_space<vmem>>, vector<1x1x384xf32>
    %9 = vector.shape_cast %8 : vector<1x1x384xf32> to vector<1x384xf32>
    %10 = vector.broadcast %9 : vector<1x384xf32> to vector<64x384xf32>
    %11 = arith.addf %7, %10 : vector<64x384xf32>
    %12 = vector.extract_strided_slice %11 {offsets = [0, 0], sizes = [64, 128], strides = [1, 1]} : vector<64x384xf32> to vector<64x128xf32>
    %13 = vector.extract_strided_slice %11 {offsets = [0, 128], sizes = [64, 128], strides = [1, 1]} : vector<64x384xf32> to vector<64x128xf32>
    %14 = vector.extract_strided_slice %11 {offsets = [0, 256], sizes = [64, 128], strides = [1, 1]} : vector<64x384xf32> to vector<64x128xf32>
    %c0_8 = arith.constant 0 : index
    %c0_9 = arith.constant 0 : index
    %15 = vector.load %arg6[%c0_8, %c0_9] : memref<64x64xf32, #tpu.memory_space<vmem>>, vector<64x64xf32>
    %16 = vector.extract_strided_slice %12 {offsets = [0, 0], sizes = [64, 32], strides = [1, 1]} : vector<64x128xf32> to vector<64x32xf32>
    %17 = arith.truncf %16 : vector<64x32xf32> to vector<64x32xbf16>
    %18 = vector.extract_strided_slice %13 {offsets = [0, 0], sizes = [64, 32], strides = [1, 1]} : vector<64x128xf32> to vector<64x32xf32>
    %19 = arith.truncf %18 : vector<64x32xf32> to vector<64x32xbf16>
    %20 = vector.extract_strided_slice %14 {offsets = [0, 0], sizes = [64, 32], strides = [1, 1]} : vector<64x128xf32> to vector<64x32xf32>
    %21 = arith.truncf %20 : vector<64x32xf32> to vector<64x32xbf16>
    %cst_10 = arith.constant dense<0.000000e+00> : vector<64x64xf32>
    %22 = tpu.matmul %17, %19, %cst_10 {dimension_numbers = #tpu.dot_dimension_numbers<[1], [1], [0], [0], [0, 0, 1, 0], [], []>} : vector<64x32xbf16>, vector<64x32xbf16>, vector<64x64xf32> -> vector<64x64xf32>
    %23 = arith.addf %22, %15 : vector<64x64xf32>
    %cst_11 = arith.constant dense<0xFF800000> : vector<64xf32>
    %24 = vector.multi_reduction <maximumf>, %23, %cst_11 [1] : vector<64x64xf32> to vector<64xf32>
    %25 = vector.shape_cast %24 : vector<64xf32> to vector<64x1xf32>
    %26 = vector.broadcast %25 : vector<64x1xf32> to vector<64x64xf32>
    %27 = arith.subf %23, %26 : vector<64x64xf32>
    %28 = math.exp %27 : vector<64x64xf32>
    %cst_12 = arith.constant dense<0.000000e+00> : vector<64xf32>
    %29 = vector.multi_reduction <add>, %28, %cst_12 [1] : vector<64x64xf32> to vector<64xf32>
    %30 = vector.shape_cast %29 : vector<64xf32> to vector<64x1xf32>
    %31 = tpu.reciprocal %30 {approx = true} : vector<64x1xf32> -> vector<64x1xf32>
    %32 = vector.broadcast %31 : vector<64x1xf32> to vector<64x64xf32>
    %33 = arith.mulf %28, %32 : vector<64x64xf32>
    %34 = arith.truncf %33 : vector<64x64xf32> to vector<64x64xbf16>
    %cst_13 = arith.constant dense<0.000000e+00> : vector<64x32xf32>
    %35 = tpu.matmul %34, %21, %cst_13 {dimension_numbers = #tpu.dot_dimension_numbers<[1], [0], [0], [1], [0, 0, 1, 1], [], []>} : vector<64x64xbf16>, vector<64x32xbf16>, vector<64x32xf32> -> vector<64x32xf32>
    %36 = vector.extract_strided_slice %12 {offsets = [0, 32], sizes = [64, 32], strides = [1, 1]} : vector<64x128xf32> to vector<64x32xf32>
    %37 = arith.truncf %36 : vector<64x32xf32> to vector<64x32xbf16>
    %38 = vector.extract_strided_slice %13 {offsets = [0, 32], sizes = [64, 32], strides = [1, 1]} : vector<64x128xf32> to vector<64x32xf32>
    %39 = arith.truncf %38 : vector<64x32xf32> to vector<64x32xbf16>
    %40 = vector.extract_strided_slice %14 {offsets = [0, 32], sizes = [64, 32], strides = [1, 1]} : vector<64x128xf32> to vector<64x32xf32>
    %41 = arith.truncf %40 : vector<64x32xf32> to vector<64x32xbf16>
    %cst_14 = arith.constant dense<0.000000e+00> : vector<64x64xf32>
    %42 = tpu.matmul %37, %39, %cst_14 {dimension_numbers = #tpu.dot_dimension_numbers<[1], [1], [0], [0], [0, 0, 1, 0], [], []>} : vector<64x32xbf16>, vector<64x32xbf16>, vector<64x64xf32> -> vector<64x64xf32>
    %43 = arith.addf %42, %15 : vector<64x64xf32>
    %cst_15 = arith.constant dense<0xFF800000> : vector<64xf32>
    %44 = vector.multi_reduction <maximumf>, %43, %cst_15 [1] : vector<64x64xf32> to vector<64xf32>
    %45 = vector.shape_cast %44 : vector<64xf32> to vector<64x1xf32>
    %46 = vector.broadcast %45 : vector<64x1xf32> to vector<64x64xf32>
    %47 = arith.subf %43, %46 : vector<64x64xf32>
    %48 = math.exp %47 : vector<64x64xf32>
    %cst_16 = arith.constant dense<0.000000e+00> : vector<64xf32>
    %49 = vector.multi_reduction <add>, %48, %cst_16 [1] : vector<64x64xf32> to vector<64xf32>
    %50 = vector.shape_cast %49 : vector<64xf32> to vector<64x1xf32>
    %51 = tpu.reciprocal %50 {approx = true} : vector<64x1xf32> -> vector<64x1xf32>
    %52 = vector.broadcast %51 : vector<64x1xf32> to vector<64x64xf32>
    %53 = arith.mulf %48, %52 : vector<64x64xf32>
    %54 = arith.truncf %53 : vector<64x64xf32> to vector<64x64xbf16>
    %cst_17 = arith.constant dense<0.000000e+00> : vector<64x32xf32>
    %55 = tpu.matmul %54, %41, %cst_17 {dimension_numbers = #tpu.dot_dimension_numbers<[1], [0], [0], [1], [0, 0, 1, 1], [], []>} : vector<64x64xbf16>, vector<64x32xbf16>, vector<64x32xf32> -> vector<64x32xf32>
    %56 = vector.extract_strided_slice %12 {offsets = [0, 64], sizes = [64, 32], strides = [1, 1]} : vector<64x128xf32> to vector<64x32xf32>
    %57 = arith.truncf %56 : vector<64x32xf32> to vector<64x32xbf16>
    %58 = vector.extract_strided_slice %13 {offsets = [0, 64], sizes = [64, 32], strides = [1, 1]} : vector<64x128xf32> to vector<64x32xf32>
    %59 = arith.truncf %58 : vector<64x32xf32> to vector<64x32xbf16>
    %60 = vector.extract_strided_slice %14 {offsets = [0, 64], sizes = [64, 32], strides = [1, 1]} : vector<64x128xf32> to vector<64x32xf32>
    %61 = arith.truncf %60 : vector<64x32xf32> to vector<64x32xbf16>
    %cst_18 = arith.constant dense<0.000000e+00> : vector<64x64xf32>
    %62 = tpu.matmul %57, %59, %cst_18 {dimension_numbers = #tpu.dot_dimension_numbers<[1], [1], [0], [0], [0, 0, 1, 0], [], []>} : vector<64x32xbf16>, vector<64x32xbf16>, vector<64x64xf32> -> vector<64x64xf32>
    %63 = arith.addf %62, %15 : vector<64x64xf32>
    %cst_19 = arith.constant dense<0xFF800000> : vector<64xf32>
    %64 = vector.multi_reduction <maximumf>, %63, %cst_19 [1] : vector<64x64xf32> to vector<64xf32>
    %65 = vector.shape_cast %64 : vector<64xf32> to vector<64x1xf32>
    %66 = vector.broadcast %65 : vector<64x1xf32> to vector<64x64xf32>
    %67 = arith.subf %63, %66 : vector<64x64xf32>
    %68 = math.exp %67 : vector<64x64xf32>
    %cst_20 = arith.constant dense<0.000000e+00> : vector<64xf32>
    %69 = vector.multi_reduction <add>, %68, %cst_20 [1] : vector<64x64xf32> to vector<64xf32>
    %70 = vector.shape_cast %69 : vector<64xf32> to vector<64x1xf32>
    %71 = tpu.reciprocal %70 {approx = true} : vector<64x1xf32> -> vector<64x1xf32>
    %72 = vector.broadcast %71 : vector<64x1xf32> to vector<64x64xf32>
    %73 = arith.mulf %68, %72 : vector<64x64xf32>
    %74 = arith.truncf %73 : vector<64x64xf32> to vector<64x64xbf16>
    %cst_21 = arith.constant dense<0.000000e+00> : vector<64x32xf32>
    %75 = tpu.matmul %74, %61, %cst_21 {dimension_numbers = #tpu.dot_dimension_numbers<[1], [0], [0], [1], [0, 0, 1, 1], [], []>} : vector<64x64xbf16>, vector<64x32xbf16>, vector<64x32xf32> -> vector<64x32xf32>
    %76 = vector.extract_strided_slice %12 {offsets = [0, 96], sizes = [64, 32], strides = [1, 1]} : vector<64x128xf32> to vector<64x32xf32>
    %77 = arith.truncf %76 : vector<64x32xf32> to vector<64x32xbf16>
    %78 = vector.extract_strided_slice %13 {offsets = [0, 96], sizes = [64, 32], strides = [1, 1]} : vector<64x128xf32> to vector<64x32xf32>
    %79 = arith.truncf %78 : vector<64x32xf32> to vector<64x32xbf16>
    %80 = vector.extract_strided_slice %14 {offsets = [0, 96], sizes = [64, 32], strides = [1, 1]} : vector<64x128xf32> to vector<64x32xf32>
    %81 = arith.truncf %80 : vector<64x32xf32> to vector<64x32xbf16>
    %cst_22 = arith.constant dense<0.000000e+00> : vector<64x64xf32>
    %82 = tpu.matmul %77, %79, %cst_22 {dimension_numbers = #tpu.dot_dimension_numbers<[1], [1], [0], [0], [0, 0, 1, 0], [], []>} : vector<64x32xbf16>, vector<64x32xbf16>, vector<64x64xf32> -> vector<64x64xf32>
    %83 = arith.addf %82, %15 : vector<64x64xf32>
    %cst_23 = arith.constant dense<0xFF800000> : vector<64xf32>
    %84 = vector.multi_reduction <maximumf>, %83, %cst_23 [1] : vector<64x64xf32> to vector<64xf32>
    %85 = vector.shape_cast %84 : vector<64xf32> to vector<64x1xf32>
    %86 = vector.broadcast %85 : vector<64x1xf32> to vector<64x64xf32>
    %87 = arith.subf %83, %86 : vector<64x64xf32>
    %88 = math.exp %87 : vector<64x64xf32>
    %cst_24 = arith.constant dense<0.000000e+00> : vector<64xf32>
    %89 = vector.multi_reduction <add>, %88, %cst_24 [1] : vector<64x64xf32> to vector<64xf32>
    %90 = vector.shape_cast %89 : vector<64xf32> to vector<64x1xf32>
    %91 = tpu.reciprocal %90 {approx = true} : vector<64x1xf32> -> vector<64x1xf32>
    %92 = vector.broadcast %91 : vector<64x1xf32> to vector<64x64xf32>
    %93 = arith.mulf %88, %92 : vector<64x64xf32>
    %94 = arith.truncf %93 : vector<64x64xf32> to vector<64x64xbf16>
    %cst_25 = arith.constant dense<0.000000e+00> : vector<64x32xf32>
    %95 = tpu.matmul %94, %81, %cst_25 {dimension_numbers = #tpu.dot_dimension_numbers<[1], [0], [0], [1], [0, 0, 1, 1], [], []>} : vector<64x64xbf16>, vector<64x32xbf16>, vector<64x32xf32> -> vector<64x32xf32>
    %96 = tpu.concatenate %35, %55, %75, %95 in 1 : vector<64x32xf32>, vector<64x32xf32>, vector<64x32xf32>, vector<64x32xf32> -> vector<64x128xf32>
    %97 = arith.truncf %96 : vector<64x128xf32> to vector<64x128xbf16>
    %c0_26 = arith.constant 0 : index
    %c0_27 = arith.constant 0 : index
    %c0_28 = arith.constant 0 : index
    %98 = vector.load %arg14[%c0_26, %c0_27, %c0_28] : memref<1x128x128xbf16, #tpu.memory_space<vmem>>, vector<1x128x128xbf16>
    %99 = vector.shape_cast %98 : vector<1x128x128xbf16> to vector<128x128xbf16>
    %cst_29 = arith.constant dense<0.000000e+00> : vector<64x128xf32>
    %100 = tpu.matmul %97, %99, %cst_29 {dimension_numbers = #tpu.dot_dimension_numbers<[1], [0], [0], [1], [0, 0, 1, 1], [], []>} : vector<64x128xbf16>, vector<128x128xbf16>, vector<64x128xf32> -> vector<64x128xf32>
    %c0_30 = arith.constant 0 : index
    %c0_31 = arith.constant 0 : index
    %c0_32 = arith.constant 0 : index
    %101 = vector.load %arg15[%c0_30, %c0_31, %c0_32] : memref<1x1x128xf32, #tpu.memory_space<vmem>>, vector<1x1x128xf32>
    %102 = vector.shape_cast %101 : vector<1x1x128xf32> to vector<1x128xf32>
    %103 = vector.broadcast %102 : vector<1x128xf32> to vector<64x128xf32>
    %104 = arith.addf %100, %103 : vector<64x128xf32>
    %105 = arith.addf %104, %3 : vector<64x128xf32>
    %c0_33 = arith.constant 0 : index
    %c0_34 = arith.constant 0 : index
    %c0_35 = arith.constant 0 : index
    %106 = vector.load %arg20[%c0_33, %c0_34, %c0_35] : memref<1x1x128xf32, #tpu.memory_space<vmem>>, vector<1x1x128xf32>
    %107 = vector.shape_cast %106 : vector<1x1x128xf32> to vector<1x128xf32>
    %c0_36 = arith.constant 0 : index
    %c0_37 = arith.constant 0 : index
    %c0_38 = arith.constant 0 : index
    %108 = vector.load %arg21[%c0_36, %c0_37, %c0_38] : memref<1x1x128xf32, #tpu.memory_space<vmem>>, vector<1x1x128xf32>
    %109 = vector.shape_cast %108 : vector<1x1x128xf32> to vector<1x128xf32>
    %cst_39 = arith.constant dense<0.000000e+00> : vector<64xf32>
    %110 = vector.multi_reduction <add>, %105, %cst_39 [1] : vector<64x128xf32> to vector<64xf32>
    %111 = vector.shape_cast %110 : vector<64xf32> to vector<64x1xf32>
    %cst_40 = arith.constant 1.280000e+02 : f32
    %112 = vector.broadcast %cst_40 : f32 to vector<64x1xf32>
    %113 = arith.divf %111, %112 : vector<64x1xf32>
    %114 = vector.broadcast %113 : vector<64x1xf32> to vector<64x128xf32>
    %115 = arith.subf %105, %114 : vector<64x128xf32>
    %116 = arith.mulf %115, %115 : vector<64x128xf32>
    %cst_41 = arith.constant dense<0.000000e+00> : vector<64xf32>
    %117 = vector.multi_reduction <add>, %116, %cst_41 [1] : vector<64x128xf32> to vector<64xf32>
    %118 = vector.shape_cast %117 : vector<64xf32> to vector<64x1xf32>
    %cst_42 = arith.constant 1.280000e+02 : f32
    %119 = vector.broadcast %cst_42 : f32 to vector<64x1xf32>
    %120 = arith.divf %118, %119 : vector<64x1xf32>
    %cst_43 = arith.constant 9.99999974E-6 : f32
    %121 = vector.broadcast %cst_43 : f32 to vector<64x1xf32>
    %122 = arith.addf %120, %121 : vector<64x1xf32>
    %123 = math.rsqrt %122 : vector<64x1xf32>
    %124 = vector.broadcast %123 : vector<64x1xf32> to vector<64x128xf32>
    %125 = arith.mulf %115, %124 : vector<64x128xf32>
    %126 = vector.broadcast %107 : vector<1x128xf32> to vector<64x128xf32>
    %127 = arith.mulf %125, %126 : vector<64x128xf32>
    %128 = vector.broadcast %109 : vector<1x128xf32> to vector<64x128xf32>
    %129 = arith.addf %127, %128 : vector<64x128xf32>
    %130 = arith.truncf %129 : vector<64x128xf32> to vector<64x128xbf16>
    %c0_44 = arith.constant 0 : index
    %c0_45 = arith.constant 0 : index
    %c0_46 = arith.constant 0 : index
    %131 = vector.load %arg16[%c0_44, %c0_45, %c0_46] : memref<1x128x2048xbf16, #tpu.memory_space<vmem>>, vector<1x128x2048xbf16>
    %132 = vector.shape_cast %131 : vector<1x128x2048xbf16> to vector<128x2048xbf16>
    %cst_47 = arith.constant dense<0.000000e+00> : vector<64x2048xf32>
    %133 = tpu.matmul %130, %132, %cst_47 {dimension_numbers = #tpu.dot_dimension_numbers<[1], [0], [0], [1], [0, 0, 1, 1], [], []>} : vector<64x128xbf16>, vector<128x2048xbf16>, vector<64x2048xf32> -> vector<64x2048xf32>
    %c0_48 = arith.constant 0 : index
    %c0_49 = arith.constant 0 : index
    %c0_50 = arith.constant 0 : index
    %134 = vector.load %arg17[%c0_48, %c0_49, %c0_50] : memref<1x1x2048xf32, #tpu.memory_space<vmem>>, vector<1x1x2048xf32>
    %135 = vector.shape_cast %134 : vector<1x1x2048xf32> to vector<1x2048xf32>
    %136 = vector.broadcast %135 : vector<1x2048xf32> to vector<64x2048xf32>
    %137 = arith.addf %133, %136 : vector<64x2048xf32>
    %cst_51 = arith.constant 0.000000e+00 : f32
    %138 = vector.broadcast %cst_51 : f32 to vector<64x2048xf32>
    %139 = arith.maximumf %137, %138 : vector<64x2048xf32>
    %140 = arith.truncf %139 : vector<64x2048xf32> to vector<64x2048xbf16>
    %c0_52 = arith.constant 0 : index
    %c0_53 = arith.constant 0 : index
    %c0_54 = arith.constant 0 : index
    %141 = vector.load %arg18[%c0_52, %c0_53, %c0_54] : memref<1x2048x128xbf16, #tpu.memory_space<vmem>>, vector<1x2048x128xbf16>
    %142 = vector.shape_cast %141 : vector<1x2048x128xbf16> to vector<2048x128xbf16>
    %cst_55 = arith.constant dense<0.000000e+00> : vector<64x128xf32>
    %143 = tpu.matmul %140, %142, %cst_55 {dimension_numbers = #tpu.dot_dimension_numbers<[1], [0], [0], [1], [0, 0, 1, 1], [], []>} : vector<64x2048xbf16>, vector<2048x128xbf16>, vector<64x128xf32> -> vector<64x128xf32>
    %c0_56 = arith.constant 0 : index
    %c0_57 = arith.constant 0 : index
    %c0_58 = arith.constant 0 : index
    %144 = vector.load %arg19[%c0_56, %c0_57, %c0_58] : memref<1x1x128xf32, #tpu.memory_space<vmem>>, vector<1x1x128xf32>
    %145 = vector.shape_cast %144 : vector<1x1x128xf32> to vector<1x128xf32>
    %146 = vector.broadcast %145 : vector<1x128xf32> to vector<64x128xf32>
    %147 = arith.addf %143, %146 : vector<64x128xf32>
    %148 = arith.addf %147, %129 : vector<64x128xf32>
    %c0_59 = arith.constant 0 : index
    %c0_60 = arith.constant 0 : index
    %c0_61 = arith.constant 0 : index
    %149 = vector.load %arg22[%c0_59, %c0_60, %c0_61] : memref<1x1x128xf32, #tpu.memory_space<vmem>>, vector<1x1x128xf32>
    %150 = vector.shape_cast %149 : vector<1x1x128xf32> to vector<1x128xf32>
    %c0_62 = arith.constant 0 : index
    %c0_63 = arith.constant 0 : index
    %c0_64 = arith.constant 0 : index
    %151 = vector.load %arg23[%c0_62, %c0_63, %c0_64] : memref<1x1x128xf32, #tpu.memory_space<vmem>>, vector<1x1x128xf32>
    %152 = vector.shape_cast %151 : vector<1x1x128xf32> to vector<1x128xf32>
    %cst_65 = arith.constant dense<0.000000e+00> : vector<64xf32>
    %153 = vector.multi_reduction <add>, %148, %cst_65 [1] : vector<64x128xf32> to vector<64xf32>
    %154 = vector.shape_cast %153 : vector<64xf32> to vector<64x1xf32>
    %cst_66 = arith.constant 1.280000e+02 : f32
    %155 = vector.broadcast %cst_66 : f32 to vector<64x1xf32>
    %156 = arith.divf %154, %155 : vector<64x1xf32>
    %157 = vector.broadcast %156 : vector<64x1xf32> to vector<64x128xf32>
    %158 = arith.subf %148, %157 : vector<64x128xf32>
    %159 = arith.mulf %158, %158 : vector<64x128xf32>
    %cst_67 = arith.constant dense<0.000000e+00> : vector<64xf32>
    %160 = vector.multi_reduction <add>, %159, %cst_67 [1] : vector<64x128xf32> to vector<64xf32>
    %161 = vector.shape_cast %160 : vector<64xf32> to vector<64x1xf32>
    %cst_68 = arith.constant 1.280000e+02 : f32
    %162 = vector.broadcast %cst_68 : f32 to vector<64x1xf32>
    %163 = arith.divf %161, %162 : vector<64x1xf32>
    %cst_69 = arith.constant 9.99999974E-6 : f32
    %164 = vector.broadcast %cst_69 : f32 to vector<64x1xf32>
    %165 = arith.addf %163, %164 : vector<64x1xf32>
    %166 = math.rsqrt %165 : vector<64x1xf32>
    %167 = vector.broadcast %166 : vector<64x1xf32> to vector<64x128xf32>
    %168 = arith.mulf %158, %167 : vector<64x128xf32>
    %169 = vector.broadcast %150 : vector<1x128xf32> to vector<64x128xf32>
    %170 = arith.mulf %168, %169 : vector<64x128xf32>
    %171 = vector.broadcast %152 : vector<1x128xf32> to vector<64x128xf32>
    %172 = arith.addf %170, %171 : vector<64x128xf32>
    %c0_70 = arith.constant 0 : index
    %c0_71 = arith.constant 0 : index
    %173 = vector.load %arg35[%c0_70, %c0_71] : memref<64x128xf32, #tpu.memory_space<vmem>>, vector<64x128xf32>
    tpu.vector_store %arg35[%c0_70, %c0_71], %172 {strides = array<i32>} : memref<64x128xf32, #tpu.memory_space<vmem>>, vector<64x128xf32>,
    %c1_i32 = arith.constant 1 : i32
    %174 = arith.cmpi eq, %arg1, %c1_i32 : i32
    %175 = arith.extui %174 : i1 to i32
    %c0_i32_72 = arith.constant 0 : i32
    %176 = arith.cmpi ne, %175, %c0_i32_72 : i32
    scf.if %176 {
      %177 = arith.truncf %172 : vector<64x128xf32> to vector<64x128xbf16>
      %c0_73 = arith.constant 0 : index
      %c0_74 = arith.constant 0 : index
      %178 = vector.load %arg24[%c0_73, %c0_74] : memref<128x128xbf16, #tpu.memory_space<vmem>>, vector<128x128xbf16>
      %cst_75 = arith.constant dense<0.000000e+00> : vector<64x128xf32>
      %179 = tpu.matmul %177, %178, %cst_75 {dimension_numbers = #tpu.dot_dimension_numbers<[1], [0], [0], [1], [0, 0, 1, 1], [], []>} : vector<64x128xbf16>, vector<128x128xbf16>, vector<64x128xf32> -> vector<64x128xf32>
      %c0_76 = arith.constant 0 : index
      %c0_77 = arith.constant 0 : index
      %180 = vector.load %arg25[%c0_76, %c0_77] : memref<1x128xf32, #tpu.memory_space<vmem>>, vector<1x128xf32>
      %181 = vector.broadcast %180 : vector<1x128xf32> to vector<64x128xf32>
      %182 = arith.addf %179, %181 : vector<64x128xf32>
      %c0_78 = arith.constant 0 : index
      %c0_79 = arith.constant 0 : index
      %183 = vector.load %arg26[%c0_78, %c0_79] : memref<1x128xf32, #tpu.memory_space<vmem>>, vector<1x128xf32>
      %c0_80 = arith.constant 0 : index
      %c0_81 = arith.constant 0 : index
      %184 = vector.load %arg27[%c0_80, %c0_81] : memref<1x128xf32, #tpu.memory_space<vmem>>, vector<1x128xf32>
      %cst_82 = arith.constant dense<0.000000e+00> : vector<64xf32>
      %185 = vector.multi_reduction <add>, %182, %cst_82 [1] : vector<64x128xf32> to vector<64xf32>
      %186 = vector.shape_cast %185 : vector<64xf32> to vector<64x1xf32>
      %cst_83 = arith.constant 1.280000e+02 : f32
      %187 = vector.broadcast %cst_83 : f32 to vector<64x1xf32>
      %188 = arith.divf %186, %187 : vector<64x1xf32>
      %189 = vector.broadcast %188 : vector<64x1xf32> to vector<64x128xf32>
      %190 = arith.subf %182, %189 : vector<64x128xf32>
      %191 = arith.mulf %190, %190 : vector<64x128xf32>
      %cst_84 = arith.constant dense<0.000000e+00> : vector<64xf32>
      %192 = vector.multi_reduction <add>, %191, %cst_84 [1] : vector<64x128xf32> to vector<64xf32>
      %193 = vector.shape_cast %192 : vector<64xf32> to vector<64x1xf32>
      %cst_85 = arith.constant 1.280000e+02 : f32
      %194 = vector.broadcast %cst_85 : f32 to vector<64x1xf32>
      %195 = arith.divf %193, %194 : vector<64x1xf32>
      %cst_86 = arith.constant 9.99999974E-6 : f32
      %196 = vector.broadcast %cst_86 : f32 to vector<64x1xf32>
      %197 = arith.addf %195, %196 : vector<64x1xf32>
      %198 = math.rsqrt %197 : vector<64x1xf32>
      %199 = vector.broadcast %198 : vector<64x1xf32> to vector<64x128xf32>
      %200 = arith.mulf %190, %199 : vector<64x128xf32>
      %201 = vector.broadcast %183 : vector<1x128xf32> to vector<64x128xf32>
      %202 = arith.mulf %200, %201 : vector<64x128xf32>
      %203 = vector.broadcast %184 : vector<1x128xf32> to vector<64x128xf32>
      %204 = arith.addf %202, %203 : vector<64x128xf32>
      %cst_87 = arith.constant 5.000000e-01 : f32
      %205 = vector.broadcast %cst_87 : f32 to vector<64x128xf32>
      %206 = arith.mulf %205, %204 : vector<64x128xf32>
      %207 = math.tanh %206 : vector<64x128xf32>
      %cst_88 = arith.constant 1.000000e+00 : f32
      %208 = vector.broadcast %cst_88 : f32 to vector<64x128xf32>
      %209 = arith.addf %208, %207 : vector<64x128xf32>
      %cst_89 = arith.constant 5.000000e-01 : f32
      %210 = vector.broadcast %cst_89 : f32 to vector<64x128xf32>
      %211 = arith.mulf %210, %209 : vector<64x128xf32>
      %212 = arith.mulf %204, %211 : vector<64x128xf32>
      %213 = arith.truncf %212 : vector<64x128xf32> to vector<64x128xbf16>
      %c0_90 = arith.constant 0 : index
      %c0_91 = arith.constant 0 : index
      %214 = vector.load %arg28[%c0_90, %c0_91] : memref<128x128xbf16, #tpu.memory_space<vmem>>, vector<128x128xbf16>
      %cst_92 = arith.constant dense<0.000000e+00> : vector<64x128xf32>
      %215 = tpu.matmul %213, %214, %cst_92 {dimension_numbers = #tpu.dot_dimension_numbers<[1], [0], [0], [1], [0, 0, 1, 1], [], []>} : vector<64x128xbf16>, vector<128x128xbf16>, vector<64x128xf32> -> vector<64x128xf32>
      %c0_93 = arith.constant 0 : index
      %c0_94 = arith.constant 0 : index
      %216 = vector.load %arg29[%c0_93, %c0_94] : memref<1x128xf32, #tpu.memory_space<vmem>>, vector<1x128xf32>
      %217 = vector.broadcast %216 : vector<1x128xf32> to vector<64x128xf32>
      %218 = arith.addf %215, %217 : vector<64x128xf32>
      %c0_95 = arith.constant 0 : index
      %c0_96 = arith.constant 0 : index
      %219 = vector.load %arg30[%c0_95, %c0_96] : memref<1x128xf32, #tpu.memory_space<vmem>>, vector<1x128xf32>
      %c0_97 = arith.constant 0 : index
      %c0_98 = arith.constant 0 : index
      %220 = vector.load %arg31[%c0_97, %c0_98] : memref<1x128xf32, #tpu.memory_space<vmem>>, vector<1x128xf32>
      %cst_99 = arith.constant dense<0.000000e+00> : vector<64xf32>
      %221 = vector.multi_reduction <add>, %218, %cst_99 [1] : vector<64x128xf32> to vector<64xf32>
      %222 = vector.shape_cast %221 : vector<64xf32> to vector<64x1xf32>
      %cst_100 = arith.constant 1.280000e+02 : f32
      %223 = vector.broadcast %cst_100 : f32 to vector<64x1xf32>
      %224 = arith.divf %222, %223 : vector<64x1xf32>
      %225 = vector.broadcast %224 : vector<64x1xf32> to vector<64x128xf32>
      %226 = arith.subf %218, %225 : vector<64x128xf32>
      %227 = arith.mulf %226, %226 : vector<64x128xf32>
      %cst_101 = arith.constant dense<0.000000e+00> : vector<64xf32>
      %228 = vector.multi_reduction <add>, %227, %cst_101 [1] : vector<64x128xf32> to vector<64xf32>
      %229 = vector.shape_cast %228 : vector<64xf32> to vector<64x1xf32>
      %cst_102 = arith.constant 1.280000e+02 : f32
      %230 = vector.broadcast %cst_102 : f32 to vector<64x1xf32>
      %231 = arith.divf %229, %230 : vector<64x1xf32>
      %cst_103 = arith.constant 9.99999974E-6 : f32
      %232 = vector.broadcast %cst_103 : f32 to vector<64x1xf32>
      %233 = arith.addf %231, %232 : vector<64x1xf32>
      %234 = math.rsqrt %233 : vector<64x1xf32>
      %235 = vector.broadcast %234 : vector<64x1xf32> to vector<64x128xf32>
      %236 = arith.mulf %226, %235 : vector<64x128xf32>
      %237 = vector.broadcast %219 : vector<1x128xf32> to vector<64x128xf32>
      %238 = arith.mulf %236, %237 : vector<64x128xf32>
      %239 = vector.broadcast %220 : vector<1x128xf32> to vector<64x128xf32>
      %240 = arith.addf %238, %239 : vector<64x128xf32>
      %cst_104 = arith.constant 5.000000e-01 : f32
      %241 = vector.broadcast %cst_104 : f32 to vector<64x128xf32>
      %242 = arith.mulf %241, %240 : vector<64x128xf32>
      %243 = math.tanh %242 : vector<64x128xf32>
      %cst_105 = arith.constant 1.000000e+00 : f32
      %244 = vector.broadcast %cst_105 : f32 to vector<64x128xf32>
      %245 = arith.addf %244, %243 : vector<64x128xf32>
      %cst_106 = arith.constant 5.000000e-01 : f32
      %246 = vector.broadcast %cst_106 : f32 to vector<64x128xf32>
      %247 = arith.mulf %246, %245 : vector<64x128xf32>
      %248 = arith.mulf %240, %247 : vector<64x128xf32>
      %249 = arith.truncf %248 : vector<64x128xf32> to vector<64x128xbf16>
      %c0_107 = arith.constant 0 : index
      %c0_108 = arith.constant 0 : index
      %250 = vector.load %arg32[%c0_107, %c0_108] : memref<128x128xbf16, #tpu.memory_space<vmem>>, vector<128x128xbf16>
      %cst_109 = arith.constant dense<0.000000e+00> : vector<64x128xf32>
      %251 = tpu.matmul %249, %250, %cst_109 {dimension_numbers = #tpu.dot_dimension_numbers<[1], [0], [0], [1], [0, 0, 1, 1], [], []>} : vector<64x128xbf16>, vector<128x128xbf16>, vector<64x128xf32> -> vector<64x128xf32>
      %c0_110 = arith.constant 0 : index
      %c0_111 = arith.constant 0 : index
      %252 = vector.load %arg33[%c0_110, %c0_111] : memref<1x128xf32, #tpu.memory_space<vmem>>, vector<1x128xf32>
      %253 = vector.broadcast %252 : vector<1x128xf32> to vector<64x128xf32>
      %254 = arith.addf %251, %253 : vector<64x128xf32>
      %255 = math.tanh %254 : vector<64x128xf32>
      %c0_112 = arith.constant 0 : index
      %c0_113 = arith.constant 0 : index
      %256 = vector.load %arg34[%c0_112, %c0_113] : memref<64x128xf32, #tpu.memory_space<vmem>>, vector<64x128xf32>
      tpu.vector_store %arg34[%c0_112, %c0_113], %255 {strides = array<i32>} : memref<64x128xf32, #tpu.memory_space<vmem>>, vector<64x128xf32>,
    } else {
    }
    return
  }
  func.func @transform_0(%arg0: i32, %arg1: i32) -> (i32, i32) {
    %c0_i32 = arith.constant 0 : i32
    %c0_i32_0 = arith.constant 0 : i32
    return %arg0, %c0_i32 : i32, i32
  }
  func.func @transform_1(%arg0: i32, %arg1: i32) -> (i32, i32) {
    %c0_i32 = arith.constant 0 : i32
    %c0_i32_0 = arith.constant 0 : i32
    return %arg0, %c0_i32 : i32, i32
  }
  func.func @transform_2(%arg0: i32, %arg1: i32) -> (i32, i32) {
    %c0_i32 = arith.constant 0 : i32
    %c0_i32_0 = arith.constant 0 : i32
    return %arg0, %c0_i32 : i32, i32
  }
  func.func @transform_3(%arg0: i32, %arg1: i32) -> (i32, i32) {
    %c0_i32 = arith.constant 0 : i32
    %c0_i32_0 = arith.constant 0 : i32
    %c0_i32_1 = arith.constant 0 : i32
    return %c0_i32, %c0_i32_0 : i32, i32
  }
  func.func @transform_4(%arg0: i32, %arg1: i32) -> (i32, i32) {
    %c0_i32 = arith.constant 0 : i32
    %c0_i32_0 = arith.constant 0 : i32
    %c0_i32_1 = arith.constant 0 : i32
    return %c0_i32, %c0_i32_0 : i32, i32
  }
  func.func @transform_5(%arg0: i32, %arg1: i32) -> (i32, i32) {
    %c0_i32 = arith.constant 0 : i32
    %c0_i32_0 = arith.constant 0 : i32
    %c0_i32_1 = arith.constant 0 : i32
    return %c0_i32, %c0_i32_0 : i32, i32
  }
  func.func @transform_6(%arg0: i32, %arg1: i32) -> (i32, i32) {
    %c0_i32 = arith.constant 0 : i32
    %c0_i32_0 = arith.constant 0 : i32
    %c0_i32_1 = arith.constant 0 : i32
    return %c0_i32, %c0_i32_0 : i32, i32
  }
  func.func @transform_7(%arg0: i32, %arg1: i32) -> (i32, i32) {
    %c0_i32 = arith.constant 0 : i32
    %c0_i32_0 = arith.constant 0 : i32
    %c0_i32_1 = arith.constant 0 : i32
    return %c0_i32, %c0_i32_0 : i32, i32
  }
  func.func @transform_8(%arg0: i32, %arg1: i32) -> (i32, i32) {
    %c0_i32 = arith.constant 0 : i32
    %c0_i32_0 = arith.constant 0 : i32
    %c0_i32_1 = arith.constant 0 : i32
    return %c0_i32, %c0_i32_0 : i32, i32
  }
  func.func @transform_9(%arg0: i32, %arg1: i32) -> (i32, i32) {
    %c0_i32 = arith.constant 0 : i32
    %c0_i32_0 = arith.constant 0 : i32
    %c0_i32_1 = arith.constant 0 : i32
    return %c0_i32, %c0_i32_0 : i32, i32
  }
  func.func @transform_10(%arg0: i32, %arg1: i32) -> (i32, i32, i32) {
    %c0_i32 = arith.constant 0 : i32
    %c0_i32_0 = arith.constant 0 : i32
    %c0_i32_1 = arith.constant 0 : i32
    return %arg1, %c0_i32, %c0_i32_0 : i32, i32, i32
  }
  func.func @transform_11(%arg0: i32, %arg1: i32) -> (i32, i32, i32) {
    %c0_i32 = arith.constant 0 : i32
    %c0_i32_0 = arith.constant 0 : i32
    %c0_i32_1 = arith.constant 0 : i32
    return %arg1, %c0_i32, %c0_i32_0 : i32, i32, i32
  }
  func.func @transform_12(%arg0: i32, %arg1: i32) -> (i32, i32, i32) {
    %c0_i32 = arith.constant 0 : i32
    %c0_i32_0 = arith.constant 0 : i32
    %c0_i32_1 = arith.constant 0 : i32
    return %arg1, %c0_i32, %c0_i32_0 : i32, i32, i32
  }
  func.func @transform_13(%arg0: i32, %arg1: i32) -> (i32, i32, i32) {
    %c0_i32 = arith.constant 0 : i32
    %c0_i32_0 = arith.constant 0 : i32
    %c0_i32_1 = arith.constant 0 : i32
    return %arg1, %c0_i32, %c0_i32_0 : i32, i32, i32
  }
  func.func @transform_14(%arg0: i32, %arg1: i32) -> (i32, i32, i32) {
    %c0_i32 = arith.constant 0 : i32
    %c0_i32_0 = arith.constant 0 : i32
    %c0_i32_1 = arith.constant 0 : i32
    return %arg1, %c0_i32, %c0_i32_0 : i32, i32, i32
  }
  func.func @transform_15(%arg0: i32, %arg1: i32) -> (i32, i32, i32) {
    %c0_i32 = arith.constant 0 : i32
    %c0_i32_0 = arith.constant 0 : i32
    %c0_i32_1 = arith.constant 0 : i32
    return %arg1, %c0_i32, %c0_i32_0 : i32, i32, i32
  }
  func.func @transform_16(%arg0: i32, %arg1: i32) -> (i32, i32, i32) {
    %c0_i32 = arith.constant 0 : i32
    %c0_i32_0 = arith.constant 0 : i32
    %c0_i32_1 = arith.constant 0 : i32
    return %arg1, %c0_i32, %c0_i32_0 : i32, i32, i32
  }
  func.func @transform_17(%arg0: i32, %arg1: i32) -> (i32, i32, i32) {
    %c0_i32 = arith.constant 0 : i32
    %c0_i32_0 = arith.constant 0 : i32
    %c0_i32_1 = arith.constant 0 : i32
    return %arg1, %c0_i32, %c0_i32_0 : i32, i32, i32
  }
  func.func @transform_18(%arg0: i32, %arg1: i32) -> (i32, i32, i32) {
    %c0_i32 = arith.constant 0 : i32
    %c0_i32_0 = arith.constant 0 : i32
    %c0_i32_1 = arith.constant 0 : i32
    return %arg1, %c0_i32, %c0_i32_0 : i32, i32, i32
  }
  func.func @transform_19(%arg0: i32, %arg1: i32) -> (i32, i32, i32) {
    %c0_i32 = arith.constant 0 : i32
    %c0_i32_0 = arith.constant 0 : i32
    %c0_i32_1 = arith.constant 0 : i32
    return %arg1, %c0_i32, %c0_i32_0 : i32, i32, i32
  }
  func.func @transform_20(%arg0: i32, %arg1: i32) -> (i32, i32, i32) {
    %c0_i32 = arith.constant 0 : i32
    %c0_i32_0 = arith.constant 0 : i32
    %c0_i32_1 = arith.constant 0 : i32
    return %arg1, %c0_i32, %c0_i32_0 : i32, i32, i32
  }
  func.func @transform_21(%arg0: i32, %arg1: i32) -> (i32, i32, i32) {
    %c0_i32 = arith.constant 0 : i32
    %c0_i32_0 = arith.constant 0 : i32
    %c0_i32_1 = arith.constant 0 : i32
    return %arg1, %c0_i32, %c0_i32_0 : i32, i32, i32
  }
  func.func @transform_22(%arg0: i32, %arg1: i32) -> (i32, i32) {
    %c0_i32 = arith.constant 0 : i32
    %c0_i32_0 = arith.constant 0 : i32
    %c0_i32_1 = arith.constant 0 : i32
    return %c0_i32, %c0_i32_0 : i32, i32
  }
  func.func @transform_23(%arg0: i32, %arg1: i32) -> (i32, i32) {
    %c0_i32 = arith.constant 0 : i32
    %c0_i32_0 = arith.constant 0 : i32
    %c0_i32_1 = arith.constant 0 : i32
    return %c0_i32, %c0_i32_0 : i32, i32
  }
  func.func @transform_24(%arg0: i32, %arg1: i32) -> (i32, i32) {
    %c0_i32 = arith.constant 0 : i32
    %c0_i32_0 = arith.constant 0 : i32
    %c0_i32_1 = arith.constant 0 : i32
    return %c0_i32, %c0_i32_0 : i32, i32
  }
  func.func @transform_25(%arg0: i32, %arg1: i32) -> (i32, i32) {
    %c0_i32 = arith.constant 0 : i32
    %c0_i32_0 = arith.constant 0 : i32
    %c0_i32_1 = arith.constant 0 : i32
    return %c0_i32, %c0_i32_0 : i32, i32
  }
  func.func @transform_26(%arg0: i32, %arg1: i32) -> (i32, i32) {
    %c0_i32 = arith.constant 0 : i32
    %c0_i32_0 = arith.constant 0 : i32
    %c0_i32_1 = arith.constant 0 : i32
    return %c0_i32, %c0_i32_0 : i32, i32
  }
  func.func @transform_27(%arg0: i32, %arg1: i32) -> (i32, i32) {
    %c0_i32 = arith.constant 0 : i32
    %c0_i32_0 = arith.constant 0 : i32
    %c0_i32_1 = arith.constant 0 : i32
    return %c0_i32, %c0_i32_0 : i32, i32
  }
  func.func @transform_28(%arg0: i32, %arg1: i32) -> (i32, i32) {
    %c0_i32 = arith.constant 0 : i32
    %c0_i32_0 = arith.constant 0 : i32
    %c0_i32_1 = arith.constant 0 : i32
    return %c0_i32, %c0_i32_0 : i32, i32
  }
  func.func @transform_29(%arg0: i32, %arg1: i32) -> (i32, i32) {
    %c0_i32 = arith.constant 0 : i32
    %c0_i32_0 = arith.constant 0 : i32
    %c0_i32_1 = arith.constant 0 : i32
    return %c0_i32, %c0_i32_0 : i32, i32
  }
  func.func @transform_30(%arg0: i32, %arg1: i32) -> (i32, i32) {
    %c0_i32 = arith.constant 0 : i32
    %c0_i32_0 = arith.constant 0 : i32
    %c0_i32_1 = arith.constant 0 : i32
    return %c0_i32, %c0_i32_0 : i32, i32
  }
  func.func @transform_31(%arg0: i32, %arg1: i32) -> (i32, i32) {
    %c0_i32 = arith.constant 0 : i32
    %c0_i32_0 = arith.constant 0 : i32
    %c0_i32_1 = arith.constant 0 : i32
    return %c0_i32, %c0_i32_0 : i32, i32
  }
  func.func @transform_32(%arg0: i32, %arg1: i32) -> (i32, i32) {
    %c0_i32 = arith.constant 0 : i32
    %c0_i32_0 = arith.constant 0 : i32
    return %arg0, %c0_i32 : i32, i32
  }
}

</mosaic_0001>

<llo_original>
// kernel: conditional_attention_forward.1
$region0: #{conditional_attention_forward.1}
  #allocation0 [shape = 'u32[]', space=smem, size = 0x4, offset = 0x4, fixed_abs, tag = 'smem constant byte address 0x4 - core index']
  #allocation1 [shape = 'u32[144,128]{1,0:T(1,128)}', space=vmem, size = 0x12000, scoped, tag = 'internal scratch']
  #allocation2 [shape = 'f32[64,128]{1,0:T(8,128)}', space=vmem, size = 0x8000, scoped, tag = 'scratch operand']
  %s0 = inlined_call_operand.smem [shape: u32[33], index: -1, kind: input, shape index: {}]
  %s1 = sld [smem:[%s0]]
  %s2 = scalar_lea.smem %s0, 1
  %s3 = sld [smem:[%s2]]
  %s4 = scalar_lea.smem %s0, 2
  %s5 = sld [smem:[%s4]]
  %s6 = scalar_lea.smem %s0, 3
  %s7 = sld [smem:[%s6]]
  %s8 = scalar_lea.smem %s0, 4
  %s9 = sld [smem:[%s8]]
  %s10 = scalar_lea.smem %s0, 5
  %s11 = sld [smem:[%s10]]
  %s12 = scalar_lea.smem %s0, 6
  %s13 = sld [smem:[%s12]]
  %s14 = scalar_lea.smem %s0, 7
  %s15 = sld [smem:[%s14]]
  %s16 = scalar_lea.smem %s0, 8
  %s17 = sld [smem:[%s16]]
  %s18 = scalar_lea.smem %s0, 9
  %s19 = sld [smem:[%s18]]
  %s20 = scalar_lea.smem %s0, 10
  %s21 = sld [smem:[%s20]]
  %s22 = scalar_lea.smem %s0, 11
  %s23 = sld [smem:[%s22]]
  %s24 = scalar_lea.smem %s0, 12
  %s25 = sld [smem:[%s24]]
  %s26 = scalar_lea.smem %s0, 13
  %s27 = sld [smem:[%s26]]
  %s28 = scalar_lea.smem %s0, 14
  %s29 = sld [smem:[%s28]]
  %s30 = scalar_lea.smem %s0, 15
  %s31 = sld [smem:[%s30]]
  %s32 = scalar_lea.smem %s0, 16
  %s33 = sld [smem:[%s32]]
  %s34 = scalar_lea.smem %s0, 17
  %s35 = sld [smem:[%s34]]
  %s36 = scalar_lea.smem %s0, 18
  %s37 = sld [smem:[%s36]]
  %s38 = scalar_lea.smem %s0, 19
  %s39 = sld [smem:[%s38]]
  %s40 = scalar_lea.smem %s0, 20
  %s41 = sld [smem:[%s40]]
  %s42 = scalar_lea.smem %s0, 21
  %s43 = sld [smem:[%s42]]
  %s44 = scalar_lea.smem %s0, 22
  %s45 = sld [smem:[%s44]]
  %s46 = scalar_lea.smem %s0, 23
  %s47 = sld [smem:[%s46]]
  %s48 = scalar_lea.smem %s0, 24
  %s49 = sld [smem:[%s48]]
  %s50 = scalar_lea.smem %s0, 25
  %s51 = sld [smem:[%s50]]
  %s52 = scalar_lea.smem %s0, 26
  %s53 = sld [smem:[%s52]]
  %s54 = scalar_lea.smem %s0, 27
  %s55 = sld [smem:[%s54]]
  %s56 = scalar_lea.smem %s0, 28
  %s57 = sld [smem:[%s56]]
  %s58 = scalar_lea.smem %s0, 29
  %s59 = sld [smem:[%s58]]
  %s60 = scalar_lea.smem %s0, 30
  %s61 = sld [smem:[%s60]]
  %s62 = scalar_lea.smem %s0, 31
  %s63 = sld [smem:[%s62]]
  %s64 = scalar_lea.smem %s0, 32
  %s65 = sld [smem:[%s64]]
  %s66 = sld [smem:[#allocation0]]
  $region261: #{conditional_attention_forward.1} parent=0
    _
  %s68 = ssub.s32 1, %s66
  %s69 = scalar_select 0, %s68, %s66
  $region1: #{conditional_attention_forward.1} parent=0
    #allocation3 [shape = 'u8[512]{0}', space=vmem, size = 0x400, scoped, tag = 'input window, operand 3, single buffered']
    #allocation4 [shape = 's32[2]{0}', space=sflag, size = 0x8, scoped, tag = 'scoped memory for conditional_attention_forward.1']
    #allocation5 [shape = 'u8[4096]{0}', space=vmem, size = 0x1000, scoped, tag = 'input window, operand 5, single buffered']
    #allocation6 [shape = 's32[1]{0}', space=sflag, size = 0x4, scoped, tag = 'scoped memory for conditional_attention_forward.1']
    #allocation7 [shape = 'u8[16384]{0}', space=vmem, size = 0x4000, scoped, tag = 'input window, operand 6, single buffered']
    #allocation8 [shape = 'u8[4096]{0}', space=vmem, size = 0x1000, scoped, tag = 'input window, operand 7, single buffered']
    #allocation9 [shape = 's32[1]{0}', space=sflag, size = 0x4, scoped, tag = 'scoped memory for conditional_attention_forward.1']
    #allocation10 [shape = 'u8[4096]{0}', space=vmem, size = 0x1000, scoped, tag = 'input window, operand 8, single buffered']
    #allocation11 [shape = 'u8[512]{0}', space=vmem, size = 0x400, scoped, tag = 'input window, operand 9, single buffered']
    #allocation12 [shape = 's32[1]{0}', space=sflag, size = 0x4, scoped, tag = 'scoped memory for conditional_attention_forward.1']
    #allocation13 [shape = 'u8[196608]{0}', space=vmem, size = 0x30000, scoped, tag = 'input window, operand 10']
    #allocation14 [shape = 'u8[3072]{0}', space=vmem, size = 0xc00, scoped, tag = 'input window, operand 11']
    #allocation15 [shape = 'u8[65536]{0}', space=vmem, size = 0x10000, scoped, tag = 'input window, operand 12']
    #allocation16 [shape = 'u8[1048576]{0}', space=vmem, size = 0x100000, scoped, tag = 'input window, operand 14']
    #allocation17 [shape = 'u8[16384]{0}', space=vmem, size = 0x4000, scoped, tag = 'input window, operand 15']
    #allocation18 [shape = 'u8[1048576]{0}', space=vmem, size = 0x100000, scoped, tag = 'input window, operand 16']
    #allocation19 [shape = 'u8[1024]{0}', space=vmem, size = 0x400, scoped, tag = 'input window, operand 17']
    #allocation20 [shape = 'u8[1024]{0}', space=vmem, size = 0x400, scoped, tag = 'input window, operand 18']
    #allocation21 [shape = 'u8[1024]{0}', space=vmem, size = 0x400, scoped, tag = 'input window, operand 19']
    #allocation22 [shape = 'u8[1024]{0}', space=vmem, size = 0x400, scoped, tag = 'input window, operand 20']
    #allocation23 [shape = 'u8[1024]{0}', space=vmem, size = 0x400, scoped, tag = 'input window, operand 21']
    #allocation24 [shape = 'u8[32768]{0}', space=vmem, size = 0x8000, scoped, tag = 'input window, operand 22, single buffered']
    #allocation25 [shape = 'u8[512]{0}', space=vmem, size = 0x400, scoped, tag = 'input window, operand 23, single buffered']
    #allocation26 [shape = 'u8[512]{0}', space=vmem, size = 0x400, scoped, tag = 'input window, operand 25, single buffered']
    #allocation27 [shape = 'u8[32768]{0}', space=vmem, size = 0x8000, scoped, tag = 'input window, operand 26, single buffered']
    #allocation28 [shape = 's32[1]{0}', space=sflag, size = 0x4, scoped, tag = 'scoped memory for conditional_attention_forward.1']
    #allocation29 [shape = 'u8[512]{0}', space=vmem, size = 0x400, scoped, tag = 'input window, operand 27, single buffered']
    #allocation30 [shape = 'u8[512]{0}', space=vmem, size = 0x400, scoped, tag = 'input window, operand 31, single buffered']
    #allocation31 [shape = 's32[1]{0}', space=sflag, size = 0x4, scoped, tag = 'scoped memory for conditional_attention_forward.1']
    %70 = vsyncpa [#allocation4], 0
    %71 = vsyncpa [#allocation6], 0
    %72 = vsyncpa [#allocation9], 0
    %73 = vsyncpa [#allocation12], 0
    %74 = vsyncpa [#allocation28], 0
    %75 = vsyncpa [#allocation31], 0
    loop: start=0, step=1, limit=6
    $region2: #{conditional_attention_forward.1} parent=1 // loop_pre_header
      _
    $region3: #{conditional_attention_forward.1} parent=1 // loop_header
      %s77 = sphi 0, %s81
      %p78 = scmp.ge.s32.totalorder %s77, 6
      %s84 = sphi 0, %s96
      %s85 = sphi 0, %s92
      %s86 = sphi 0, %s84
      %s87 = sphi 0, %s85
      %s88 = sphi 0, %s86
      %s89 = sphi 0, %s87
      %s99 = sphi 0, %s101
      %s102 = sphi 0, %s99
      %s103 = sphi 0, %s102
      %s119 = sphi 0, %s103
      %s125 = sphi 0, %s127
      %s128 = sphi 0, %s125
      %s129 = sphi 0, %s128
      %s145 = sphi 0, %s129
      %s151 = sphi 0, %s153
      %s154 = sphi 0, %s151
      %s155 = sphi 0, %s154
      %s171 = sphi 0, %s155
      %s175 = sphi 0, %s175
      %s177 = sphi 0, %s175
      %s178 = sphi 0, %s177
      %s192 = sphi 0, %s178
      %s196 = sphi 0, %s196
      %s198 = sphi 0, %s196
      %s199 = sphi 0, %s198
      %s213 = sphi 0, %s199
      %s217 = sphi 0, %s217
      %s219 = sphi 0, %s217
      %s220 = sphi 0, %s219
      %s234 = sphi 0, %s220
      %s238 = sphi 0, %s238
      %s240 = sphi 0, %s238
      %s241 = sphi 0, %s240
      %s255 = sphi 0, %s241
      %s259 = sphi 0, %s259
      %s261 = sphi 0, %s259
      %s262 = sphi 0, %s261
      %s276 = sphi 0, %s262
      %s280 = sphi 0, %s280
      %s282 = sphi 0, %s280
      %s283 = sphi 0, %s282
      %s297 = sphi 0, %s283
      %s301 = sphi 0, %s301
      %s303 = sphi 0, %s301
      %s304 = sphi 0, %s303
      %s318 = sphi 0, %s304
      %s324 = sphi 0, %s326
      %s327 = sphi 0, %s324
      %s328 = sphi 0, %s327
      %s344 = sphi 0, %s328
      %s350 = sphi 0, %s352
      %s353 = sphi 0, %s350
      %s354 = sphi 0, %s353
      %s370 = sphi 0, %s354
      %s376 = sphi 0, %s378
      %s379 = sphi 0, %s376
      %s380 = sphi 0, %s379
      %s396 = sphi 0, %s380
      %s402 = sphi 0, %s404
      %s405 = sphi 0, %s402
      %s406 = sphi 0, %s405
      %s422 = sphi 0, %s406
      %s428 = sphi 0, %s430
      %s431 = sphi 0, %s428
      %s432 = sphi 0, %s431
      %s448 = sphi 0, %s432
      %s454 = sphi 0, %s456
      %s457 = sphi 0, %s454
      %s458 = sphi 0, %s457
      %s474 = sphi 0, %s458
      %s480 = sphi 0, %s482
      %s483 = sphi 0, %s480
      %s484 = sphi 0, %s483
      %s500 = sphi 0, %s484
      %s506 = sphi 0, %s508
      %s509 = sphi 0, %s506
      %s510 = sphi 0, %s509
      %s526 = sphi 0, %s510
      %s532 = sphi 0, %s534
      %s535 = sphi 0, %s532
      %s536 = sphi 0, %s535
      %s552 = sphi 0, %s536
      %s558 = sphi 0, %s560
      %s561 = sphi 0, %s558
      %s562 = sphi 0, %s561
      %s578 = sphi 0, %s562
      %s584 = sphi 0, %s586
      %s587 = sphi 0, %s584
      %s588 = sphi 0, %s587
      %s604 = sphi 0, %s588
      %s610 = sphi 0, %s612
      %s613 = sphi 0, %s610
      %s614 = sphi 0, %s613
      %s630 = sphi 0, %s614
      %s634 = sphi 0, %s634
      %s636 = sphi 0, %s634
      %s637 = sphi 0, %s636
      %s651 = sphi 0, %s637
      %s655 = sphi 0, %s655
      %s657 = sphi 0, %s655
      %s658 = sphi 0, %s657
      %s672 = sphi 0, %s658
      %s676 = sphi 0, %s676
      %s678 = sphi 0, %s676
      %s679 = sphi 0, %s678
      %s693 = sphi 0, %s679
      %s697 = sphi 0, %s697
      %s699 = sphi 0, %s697
      %s700 = sphi 0, %s699
      %s714 = sphi 0, %s700
      %s718 = sphi 0, %s718
      %s720 = sphi 0, %s718
      %s721 = sphi 0, %s720
      %s735 = sphi 0, %s721
      %s739 = sphi 0, %s739
      %s741 = sphi 0, %s739
      %s742 = sphi 0, %s741
      %s756 = sphi 0, %s742
      %s760 = sphi 0, %s760
      %s762 = sphi 0, %s760
      %s763 = sphi 0, %s762
      %s777 = sphi 0, %s763
      %s781 = sphi 0, %s781
      %s783 = sphi 0, %s781
      %s784 = sphi 0, %s783
      %s798 = sphi 0, %s784
      %s802 = sphi 0, %s802
      %s804 = sphi 0, %s802
      %s805 = sphi 0, %s804
      %s819 = sphi 0, %s805
      %s823 = sphi 0, %s823
      %s825 = sphi 0, %s823
      %s826 = sphi 0, %s825
      %s840 = sphi 0, %s826
      %s846 = sphi 0, %s848
      %s849 = sphi 0, %s846
      %s850 = sphi 0, %s849
      %s866 = sphi 0, %s850
    $region4: #{conditional_attention_forward.1} parent=1 // loop_header_branch
      %80 = sbr.rel (%p78) target = $region8
    $region5: #{conditional_attention_forward.1} parent=1 // loop_body
      %s82 = ssub.s32 %s77, 1
      %s83 = ssub.s32 %s77, 2
      %s90 = sadd.s32 1, %s85
      %p91 = scmp.ge.s32.totalorder %s90, 2
      %s92 = scalar_select %p91, 0, %s90
      %s93 = sadd.s32 1, %s84
      %s94 = scalar_select %p91, %s93, %s84
      %p95 = scmp.ge.s32.totalorder %s94, 2
      %s96 = scalar_select %p95, 0, %s94
      %s97 = ssub.s32 %s84, %s96
      %p98 = scmp.eq.s32.totalorder %s97, 0
      %s100 = sadd.s32 %s99, 1
      %s101 = scalar_select %p98, %s99, %s100
      %p104 = pneg %p98
      %p105 = scmp.eq.s32.totalorder %s77, 3
      %p106 = por %p104, %p105
      %p107 = scmp.ne.s32.totalorder %s99, %s102
      %p108 = scmp.eq.s32.totalorder %s77, 0
      %p109 = por %p107, %p108
      %p110 = scmp.ne.s32.totalorder %s99, %s102
      %p111 = scmp.eq.s32.totalorder %s82, 3
      %p112 = por %p110, %p111
      %p113 = scmp.ne.s32.totalorder %s102, %s103
      %p114 = scmp.eq.s32.totalorder %s82, 0
      %p115 = por %p113, %p114
      %p116 = scmp.ne.s32.totalorder %s102, %s103
      %p117 = scmp.eq.s32.totalorder %s83, 3
      %p118 = por %p116, %p117
      %p120 = scmp.ne.s32.totalorder %s103, %s119
      %p121 = scmp.eq.s32.totalorder %s83, 0
      %p122 = por %p120, %p121
      %s123 = ssub.s32 %s84, %s96
      %p124 = scmp.eq.s32.totalorder %s123, 0
      %s126 = sadd.s32 %s125, 1
      %s127 = scalar_select %p124, %s125, %s126
      %p130 = pneg %p124
      %p131 = scmp.eq.s32.totalorder %s77, 3
      %p132 = por %p130, %p131
      %p133 = scmp.ne.s32.totalorder %s125, %s128
      %p134 = scmp.eq.s32.totalorder %s77, 0
      %p135 = por %p133, %p134
      %p136 = scmp.ne.s32.totalorder %s125, %s128
      %p137 = scmp.eq.s32.totalorder %s82, 3
      %p138 = por %p136, %p137
      %p139 = scmp.ne.s32.totalorder %s128, %s129
      %p140 = scmp.eq.s32.totalorder %s82, 0
      %p141 = por %p139, %p140
      %p142 = scmp.ne.s32.totalorder %s128, %s129
      %p143 = scmp.eq.s32.totalorder %s83, 3
      %p144 = por %p142, %p143
      %p146 = scmp.ne.s32.totalorder %s129, %s145
      %p147 = scmp.eq.s32.totalorder %s83, 0
      %p148 = por %p146, %p147
      %s149 = ssub.s32 %s84, %s96
      %p150 = scmp.eq.s32.totalorder %s149, 0
      %s152 = sadd.s32 %s151, 1
      %s153 = scalar_select %p150, %s151, %s152
      %p156 = pneg %p150
      %p157 = scmp.eq.s32.totalorder %s77, 3
      %p158 = por %p156, %p157
      %p159 = scmp.ne.s32.totalorder %s151, %s154
      %p160 = scmp.eq.s32.totalorder %s77, 0
      %p161 = por %p159, %p160
      %p162 = scmp.ne.s32.totalorder %s151, %s154
      %p163 = scmp.eq.s32.totalorder %s82, 3
      %p164 = por %p162, %p163
      %p165 = scmp.ne.s32.totalorder %s154, %s155
      %p166 = scmp.eq.s32.totalorder %s82, 0
      %p167 = por %p165, %p166
      %p168 = scmp.ne.s32.totalorder %s154, %s155
      %p169 = scmp.eq.s32.totalorder %s83, 3
      %p170 = por %p168, %p169
      %p172 = scmp.ne.s32.totalorder %s155, %s171
      %p173 = scmp.eq.s32.totalorder %s83, 0
      %p174 = por %p172, %p173
      %s176 = sadd.s32 %s175, 1
      %p179 = scmp.eq.s32.totalorder %s77, 3
      %p180 = scmp.ne.s32.totalorder %s175, %s177
      %p181 = scmp.eq.s32.totalorder %s77, 0
      %p182 = por %p180, %p181
      %p183 = scmp.ne.s32.totalorder %s175, %s177
      %p184 = scmp.eq.s32.totalorder %s82, 3
      %p185 = por %p183, %p184
      %p186 = scmp.ne.s32.totalorder %s177, %s178
      %p187 = scmp.eq.s32.totalorder %s82, 0
      %p188 = por %p186, %p187
      %p189 = scmp.ne.s32.totalorder %s177, %s178
      %p190 = scmp.eq.s32.totalorder %s83, 3
      %p191 = por %p189, %p190
      %p193 = scmp.ne.s32.totalorder %s178, %s192
      %p194 = scmp.eq.s32.totalorder %s83, 0
      %p195 = por %p193, %p194
      %s197 = sadd.s32 %s196, 1
      %p200 = scmp.eq.s32.totalorder %s77, 3
      %p201 = scmp.ne.s32.totalorder %s196, %s198
      %p202 = scmp.eq.s32.totalorder %s77, 0
      %p203 = por %p201, %p202
      %p204 = scmp.ne.s32.totalorder %s196, %s198
      %p205 = scmp.eq.s32.totalorder %s82, 3
      %p206 = por %p204, %p205
      %p207 = scmp.ne.s32.totalorder %s198, %s199
      %p208 = scmp.eq.s32.totalorder %s82, 0
      %p209 = por %p207, %p208
      %p210 = scmp.ne.s32.totalorder %s198, %s199
      %p211 = scmp.eq.s32.totalorder %s83, 3
      %p212 = por %p210, %p211
      %p214 = scmp.ne.s32.totalorder %s199, %s213
      %p215 = scmp.eq.s32.totalorder %s83, 0
      %p216 = por %p214, %p215
      %s218 = sadd.s32 %s217, 1
      %p221 = scmp.eq.s32.totalorder %s77, 3
      %p222 = scmp.ne.s32.totalorder %s217, %s219
      %p223 = scmp.eq.s32.totalorder %s77, 0
      %p224 = por %p222, %p223
      %p225 = scmp.ne.s32.totalorder %s217, %s219
      %p226 = scmp.eq.s32.totalorder %s82, 3
      %p227 = por %p225, %p226
      %p228 = scmp.ne.s32.totalorder %s219, %s220
      %p229 = scmp.eq.s32.totalorder %s82, 0
      %p230 = por %p228, %p229
      %p231 = scmp.ne.s32.totalorder %s219, %s220
      %p232 = scmp.eq.s32.totalorder %s83, 3
      %p233 = por %p231, %p232
      %p235 = scmp.ne.s32.totalorder %s220, %s234
      %p236 = scmp.eq.s32.totalorder %s83, 0
      %p237 = por %p235, %p236
      %s239 = sadd.s32 %s238, 1
      %p242 = scmp.eq.s32.totalorder %s77, 3
      %p243 = scmp.ne.s32.totalorder %s238, %s240
      %p244 = scmp.eq.s32.totalorder %s77, 0
      %p245 = por %p243, %p244
      %p246 = scmp.ne.s32.totalorder %s238, %s240
      %p247 = scmp.eq.s32.totalorder %s82, 3
      %p248 = por %p246, %p247
      %p249 = scmp.ne.s32.totalorder %s240, %s241
      %p250 = scmp.eq.s32.totalorder %s82, 0
      %p251 = por %p249, %p250
      %p252 = scmp.ne.s32.totalorder %s240, %s241
      %p253 = scmp.eq.s32.totalorder %s83, 3
      %p254 = por %p252, %p253
      %p256 = scmp.ne.s32.totalorder %s241, %s255
      %p257 = scmp.eq.s32.totalorder %s83, 0
      %p258 = por %p256, %p257
      %s260 = sadd.s32 %s259, 1
      %p263 = scmp.eq.s32.totalorder %s77, 3
      %p264 = scmp.ne.s32.totalorder %s259, %s261
      %p265 = scmp.eq.s32.totalorder %s77, 0
      %p266 = por %p264, %p265
      %p267 = scmp.ne.s32.totalorder %s259, %s261
      %p268 = scmp.eq.s32.totalorder %s82, 3
      %p269 = por %p267, %p268
      %p270 = scmp.ne.s32.totalorder %s261, %s262
      %p271 = scmp.eq.s32.totalorder %s82, 0
      %p272 = por %p270, %p271
      %p273 = scmp.ne.s32.totalorder %s261, %s262
      %p274 = scmp.eq.s32.totalorder %s83, 3
      %p275 = por %p273, %p274
      %p277 = scmp.ne.s32.totalorder %s262, %s276
      %p278 = scmp.eq.s32.totalorder %s83, 0
      %p279 = por %p277, %p278
      %s281 = sadd.s32 %s280, 1
      %p284 = scmp.eq.s32.totalorder %s77, 3
      %p285 = scmp.ne.s32.totalorder %s280, %s282
      %p286 = scmp.eq.s32.totalorder %s77, 0
      %p287 = por %p285, %p286
      %p288 = scmp.ne.s32.totalorder %s280, %s282
      %p289 = scmp.eq.s32.totalorder %s82, 3
      %p290 = por %p288, %p289
      %p291 = scmp.ne.s32.totalorder %s282, %s283
      %p292 = scmp.eq.s32.totalorder %s82, 0
      %p293 = por %p291, %p292
      %p294 = scmp.ne.s32.totalorder %s282, %s283
      %p295 = scmp.eq.s32.totalorder %s83, 3
      %p296 = por %p294, %p295
      %p298 = scmp.ne.s32.totalorder %s283, %s297
      %p299 = scmp.eq.s32.totalorder %s83, 0
      %p300 = por %p298, %p299
      %s302 = sadd.s32 %s301, 1
      %p305 = scmp.eq.s32.totalorder %s77, 3
      %p306 = scmp.ne.s32.totalorder %s301, %s303
      %p307 = scmp.eq.s32.totalorder %s77, 0
      %p308 = por %p306, %p307
      %p309 = scmp.ne.s32.totalorder %s301, %s303
      %p310 = scmp.eq.s32.totalorder %s82, 3
      %p311 = por %p309, %p310
      %p312 = scmp.ne.s32.totalorder %s303, %s304
      %p313 = scmp.eq.s32.totalorder %s82, 0
      %p314 = por %p312, %p313
      %p315 = scmp.ne.s32.totalorder %s303, %s304
      %p316 = scmp.eq.s32.totalorder %s83, 3
      %p317 = por %p315, %p316
      %p319 = scmp.ne.s32.totalorder %s304, %s318
      %p320 = scmp.eq.s32.totalorder %s83, 0
      %p321 = por %p319, %p320
      %s322 = ssub.s32 %s85, %s92
      %p323 = scmp.eq.s32.totalorder %s322, 0
      %s325 = sadd.s32 %s324, 1
      %s326 = scalar_select %p323, %s324, %s325
      %p329 = pneg %p323
      %p330 = scmp.eq.s32.totalorder %s77, 3
      %p331 = por %p329, %p330
      %p332 = scmp.ne.s32.totalorder %s324, %s327
      %p333 = scmp.eq.s32.totalorder %s77, 0
      %p334 = por %p332, %p333
      %p335 = scmp.ne.s32.totalorder %s324, %s327
      %p336 = scmp.eq.s32.totalorder %s82, 3
      %p337 = por %p335, %p336
      %p338 = scmp.ne.s32.totalorder %s327, %s328
      %p339 = scmp.eq.s32.totalorder %s82, 0
      %p340 = por %p338, %p339
      %p341 = scmp.ne.s32.totalorder %s327, %s328
      %p342 = scmp.eq.s32.totalorder %s83, 3
      %p343 = por %p341, %p342
      %p345 = scmp.ne.s32.totalorder %s328, %s344
      %p346 = scmp.eq.s32.totalorder %s83, 0
      %p347 = por %p345, %p346
      %s348 = ssub.s32 %s85, %s92
      %p349 = scmp.eq.s32.totalorder %s348, 0
      %s351 = sadd.s32 %s350, 1
      %s352 = scalar_select %p349, %s350, %s351
      %p355 = pneg %p349
      %p356 = scmp.eq.s32.totalorder %s77, 3
      %p357 = por %p355, %p356
      %p358 = scmp.ne.s32.totalorder %s350, %s353
      %p359 = scmp.eq.s32.totalorder %s77, 0
      %p360 = por %p358, %p359
      %p361 = scmp.ne.s32.totalorder %s350, %s353
      %p362 = scmp.eq.s32.totalorder %s82, 3
      %p363 = por %p361, %p362
      %p364 = scmp.ne.s32.totalorder %s353, %s354
      %p365 = scmp.eq.s32.totalorder %s82, 0
      %p366 = por %p364, %p365
      %p367 = scmp.ne.s32.totalorder %s353, %s354
      %p368 = scmp.eq.s32.totalorder %s83, 3
      %p369 = por %p367, %p368
      %p371 = scmp.ne.s32.totalorder %s354, %s370
      %p372 = scmp.eq.s32.totalorder %s83, 0
      %p373 = por %p371, %p372
      %s374 = ssub.s32 %s85, %s92
      %p375 = scmp.eq.s32.totalorder %s374, 0
      %s377 = sadd.s32 %s376, 1
      %s378 = scalar_select %p375, %s376, %s377
      %p381 = pneg %p375
      %p382 = scmp.eq.s32.totalorder %s77, 3
      %p383 = por %p381, %p382
      %p384 = scmp.ne.s32.totalorder %s376, %s379
      %p385 = scmp.eq.s32.totalorder %s77, 0
      %p386 = por %p384, %p385
      %p387 = scmp.ne.s32.totalorder %s376, %s379
      %p388 = scmp.eq.s32.totalorder %s82, 3
      %p389 = por %p387, %p388
      %p390 = scmp.ne.s32.totalorder %s379, %s380
      %p391 = scmp.eq.s32.totalorder %s82, 0
      %p392 = por %p390, %p391
      %p393 = scmp.ne.s32.totalorder %s379, %s380
      %p394 = scmp.eq.s32.totalorder %s83, 3
      %p395 = por %p393, %p394
      %p397 = scmp.ne.s32.totalorder %s380, %s396
      %p398 = scmp.eq.s32.totalorder %s83, 0
      %p399 = por %p397, %p398
      %s400 = ssub.s32 %s85, %s92
      %p401 = scmp.eq.s32.totalorder %s400, 0
      %s403 = sadd.s32 %s402, 1
      %s404 = scalar_select %p401, %s402, %s403
      %p407 = pneg %p401
      %p408 = scmp.eq.s32.totalorder %s77, 3
      %p409 = por %p407, %p408
      %p410 = scmp.ne.s32.totalorder %s402, %s405
      %p411 = scmp.eq.s32.totalorder %s77, 0
      %p412 = por %p410, %p411
      %p413 = scmp.ne.s32.totalorder %s402, %s405
      %p414 = scmp.eq.s32.totalorder %s82, 3
      %p415 = por %p413, %p414
      %p416 = scmp.ne.s32.totalorder %s405, %s406
      %p417 = scmp.eq.s32.totalorder %s82, 0
      %p418 = por %p416, %p417
      %p419 = scmp.ne.s32.totalorder %s405, %s406
      %p420 = scmp.eq.s32.totalorder %s83, 3
      %p421 = por %p419, %p420
      %p423 = scmp.ne.s32.totalorder %s406, %s422
      %p424 = scmp.eq.s32.totalorder %s83, 0
      %p425 = por %p423, %p424
      %s426 = ssub.s32 %s85, %s92
      %p427 = scmp.eq.s32.totalorder %s426, 0
      %s429 = sadd.s32 %s428, 1
      %s430 = scalar_select %p427, %s428, %s429
      %p433 = pneg %p427
      %p434 = scmp.eq.s32.totalorder %s77, 3
      %p435 = por %p433, %p434
      %p436 = scmp.ne.s32.totalorder %s428, %s431
      %p437 = scmp.eq.s32.totalorder %s77, 0
      %p438 = por %p436, %p437
      %p439 = scmp.ne.s32.totalorder %s428, %s431
      %p440 = scmp.eq.s32.totalorder %s82, 3
      %p441 = por %p439, %p440
      %p442 = scmp.ne.s32.totalorder %s431, %s432
      %p443 = scmp.eq.s32.totalorder %s82, 0
      %p444 = por %p442, %p443
      %p445 = scmp.ne.s32.totalorder %s431, %s432
      %p446 = scmp.eq.s32.totalorder %s83, 3
      %p447 = por %p445, %p446
      %p449 = scmp.ne.s32.totalorder %s432, %s448
      %p450 = scmp.eq.s32.totalorder %s83, 0
      %p451 = por %p449, %p450
      %s452 = ssub.s32 %s85, %s92
      %p453 = scmp.eq.s32.totalorder %s452, 0
      %s455 = sadd.s32 %s454, 1
      %s456 = scalar_select %p453, %s454, %s455
      %p459 = pneg %p453
      %p460 = scmp.eq.s32.totalorder %s77, 3
      %p461 = por %p459, %p460
      %p462 = scmp.ne.s32.totalorder %s454, %s457
      %p463 = scmp.eq.s32.totalorder %s77, 0
      %p464 = por %p462, %p463
      %p465 = scmp.ne.s32.totalorder %s454, %s457
      %p466 = scmp.eq.s32.totalorder %s82, 3
      %p467 = por %p465, %p466
      %p468 = scmp.ne.s32.totalorder %s457, %s458
      %p469 = scmp.eq.s32.totalorder %s82, 0
      %p470 = por %p468, %p469
      %p471 = scmp.ne.s32.totalorder %s457, %s458
      %p472 = scmp.eq.s32.totalorder %s83, 3
      %p473 = por %p471, %p472
      %p475 = scmp.ne.s32.totalorder %s458, %s474
      %p476 = scmp.eq.s32.totalorder %s83, 0
      %p477 = por %p475, %p476
      %s478 = ssub.s32 %s85, %s92
      %p479 = scmp.eq.s32.totalorder %s478, 0
      %s481 = sadd.s32 %s480, 1
      %s482 = scalar_select %p479, %s480, %s481
      %p485 = pneg %p479
      %p486 = scmp.eq.s32.totalorder %s77, 3
      %p487 = por %p485, %p486
      %p488 = scmp.ne.s32.totalorder %s480, %s483
      %p489 = scmp.eq.s32.totalorder %s77, 0
      %p490 = por %p488, %p489
      %p491 = scmp.ne.s32.totalorder %s480, %s483
      %p492 = scmp.eq.s32.totalorder %s82, 3
      %p493 = por %p491, %p492
      %p494 = scmp.ne.s32.totalorder %s483, %s484
      %p495 = scmp.eq.s32.totalorder %s82, 0
      %p496 = por %p494, %p495
      %p497 = scmp.ne.s32.totalorder %s483, %s484
      %p498 = scmp.eq.s32.totalorder %s83, 3
      %p499 = por %p497, %p498
      %p501 = scmp.ne.s32.totalorder %s484, %s500
      %p502 = scmp.eq.s32.totalorder %s83, 0
      %p503 = por %p501, %p502
      %s504 = ssub.s32 %s85, %s92
      %p505 = scmp.eq.s32.totalorder %s504, 0
      %s507 = sadd.s32 %s506, 1
      %s508 = scalar_select %p505, %s506, %s507
      %p511 = pneg %p505
      %p512 = scmp.eq.s32.totalorder %s77, 3
      %p513 = por %p511, %p512
      %p514 = scmp.ne.s32.totalorder %s506, %s509
      %p515 = scmp.eq.s32.totalorder %s77, 0
      %p516 = por %p514, %p515
      %p517 = scmp.ne.s32.totalorder %s506, %s509
      %p518 = scmp.eq.s32.totalorder %s82, 3
      %p519 = por %p517, %p518
      %p520 = scmp.ne.s32.totalorder %s509, %s510
      %p521 = scmp.eq.s32.totalorder %s82, 0
      %p522 = por %p520, %p521
      %p523 = scmp.ne.s32.totalorder %s509, %s510
      %p524 = scmp.eq.s32.totalorder %s83, 3
      %p525 = por %p523, %p524
      %p527 = scmp.ne.s32.totalorder %s510, %s526
      %p528 = scmp.eq.s32.totalorder %s83, 0
      %p529 = por %p527, %p528
      %s530 = ssub.s32 %s85, %s92
      %p531 = scmp.eq.s32.totalorder %s530, 0
      %s533 = sadd.s32 %s532, 1
      %s534 = scalar_select %p531, %s532, %s533
      %p537 = pneg %p531
      %p538 = scmp.eq.s32.totalorder %s77, 3
      %p539 = por %p537, %p538
      %p540 = scmp.ne.s32.totalorder %s532, %s535
      %p541 = scmp.eq.s32.totalorder %s77, 0
      %p542 = por %p540, %p541
      %p543 = scmp.ne.s32.totalorder %s532, %s535
      %p544 = scmp.eq.s32.totalorder %s82, 3
      %p545 = por %p543, %p544
      %p546 = scmp.ne.s32.totalorder %s535, %s536
      %p547 = scmp.eq.s32.totalorder %s82, 0
      %p548 = por %p546, %p547
      %p549 = scmp.ne.s32.totalorder %s535, %s536
      %p550 = scmp.eq.s32.totalorder %s83, 3
      %p551 = por %p549, %p550
      %p553 = scmp.ne.s32.totalorder %s536, %s552
      %p554 = scmp.eq.s32.totalorder %s83, 0
      %p555 = por %p553, %p554
      %s556 = ssub.s32 %s85, %s92
      %p557 = scmp.eq.s32.totalorder %s556, 0
      %s559 = sadd.s32 %s558, 1
      %s560 = scalar_select %p557, %s558, %s559
      %p563 = pneg %p557
      %p564 = scmp.eq.s32.totalorder %s77, 3
      %p565 = por %p563, %p564
      %p566 = scmp.ne.s32.totalorder %s558, %s561
      %p567 = scmp.eq.s32.totalorder %s77, 0
      %p568 = por %p566, %p567
      %p569 = scmp.ne.s32.totalorder %s558, %s561
      %p570 = scmp.eq.s32.totalorder %s82, 3
      %p571 = por %p569, %p570
      %p572 = scmp.ne.s32.totalorder %s561, %s562
      %p573 = scmp.eq.s32.totalorder %s82, 0
      %p574 = por %p572, %p573
      %p575 = scmp.ne.s32.totalorder %s561, %s562
      %p576 = scmp.eq.s32.totalorder %s83, 3
      %p577 = por %p575, %p576
      %p579 = scmp.ne.s32.totalorder %s562, %s578
      %p580 = scmp.eq.s32.totalorder %s83, 0
      %p581 = por %p579, %p580
      %s582 = ssub.s32 %s85, %s92
      %p583 = scmp.eq.s32.totalorder %s582, 0
      %s585 = sadd.s32 %s584, 1
      %s586 = scalar_select %p583, %s584, %s585
      %p589 = pneg %p583
      %p590 = scmp.eq.s32.totalorder %s77, 3
      %p591 = por %p589, %p590
      %p592 = scmp.ne.s32.totalorder %s584, %s587
      %p593 = scmp.eq.s32.totalorder %s77, 0
      %p594 = por %p592, %p593
      %p595 = scmp.ne.s32.totalorder %s584, %s587
      %p596 = scmp.eq.s32.totalorder %s82, 3
      %p597 = por %p595, %p596
      %p598 = scmp.ne.s32.totalorder %s587, %s588
      %p599 = scmp.eq.s32.totalorder %s82, 0
      %p600 = por %p598, %p599
      %p601 = scmp.ne.s32.totalorder %s587, %s588
      %p602 = scmp.eq.s32.totalorder %s83, 3
      %p603 = por %p601, %p602
      %p605 = scmp.ne.s32.totalorder %s588, %s604
      %p606 = scmp.eq.s32.totalorder %s83, 0
      %p607 = por %p605, %p606
      %s608 = ssub.s32 %s85, %s92
      %p609 = scmp.eq.s32.totalorder %s608, 0
      %s611 = sadd.s32 %s610, 1
      %s612 = scalar_select %p609, %s610, %s611
      %p615 = pneg %p609
      %p616 = scmp.eq.s32.totalorder %s77, 3
      %p617 = por %p615, %p616
      %p618 = scmp.ne.s32.totalorder %s610, %s613
      %p619 = scmp.eq.s32.totalorder %s77, 0
      %p620 = por %p618, %p619
      %p621 = scmp.ne.s32.totalorder %s610, %s613
      %p622 = scmp.eq.s32.totalorder %s82, 3
      %p623 = por %p621, %p622
      %p624 = scmp.ne.s32.totalorder %s613, %s614
      %p625 = scmp.eq.s32.totalorder %s82, 0
      %p626 = por %p624, %p625
      %p627 = scmp.ne.s32.totalorder %s613, %s614
      %p628 = scmp.eq.s32.totalorder %s83, 3
      %p629 = por %p627, %p628
      %p631 = scmp.ne.s32.totalorder %s614, %s630
      %p632 = scmp.eq.s32.totalorder %s83, 0
      %p633 = por %p631, %p632
      %s635 = sadd.s32 %s634, 1
      %p638 = scmp.eq.s32.totalorder %s77, 3
      %p639 = scmp.ne.s32.totalorder %s634, %s636
      %p640 = scmp.eq.s32.totalorder %s77, 0
      %p641 = por %p639, %p640
      %p642 = scmp.ne.s32.totalorder %s634, %s636
      %p643 = scmp.eq.s32.totalorder %s82, 3
      %p644 = por %p642, %p643
      %p645 = scmp.ne.s32.totalorder %s636, %s637
      %p646 = scmp.eq.s32.totalorder %s82, 0
      %p647 = por %p645, %p646
      %p648 = scmp.ne.s32.totalorder %s636, %s637
      %p649 = scmp.eq.s32.totalorder %s83, 3
      %p650 = por %p648, %p649
      %p652 = scmp.ne.s32.totalorder %s637, %s651
      %p653 = scmp.eq.s32.totalorder %s83, 0
      %p654 = por %p652, %p653
      %s656 = sadd.s32 %s655, 1
      %p659 = scmp.eq.s32.totalorder %s77, 3
      %p660 = scmp.ne.s32.totalorder %s655, %s657
      %p661 = scmp.eq.s32.totalorder %s77, 0
      %p662 = por %p660, %p661
      %p663 = scmp.ne.s32.totalorder %s655, %s657
      %p664 = scmp.eq.s32.totalorder %s82, 3
      %p665 = por %p663, %p664
      %p666 = scmp.ne.s32.totalorder %s657, %s658
      %p667 = scmp.eq.s32.totalorder %s82, 0
      %p668 = por %p666, %p667
      %p669 = scmp.ne.s32.totalorder %s657, %s658
      %p670 = scmp.eq.s32.totalorder %s83, 3
      %p671 = por %p669, %p670
      %p673 = scmp.ne.s32.totalorder %s658, %s672
      %p674 = scmp.eq.s32.totalorder %s83, 0
      %p675 = por %p673, %p674
      %s677 = sadd.s32 %s676, 1
      %p680 = scmp.eq.s32.totalorder %s77, 3
      %p681 = scmp.ne.s32.totalorder %s676, %s678
      %p682 = scmp.eq.s32.totalorder %s77, 0
      %p683 = por %p681, %p682
      %p684 = scmp.ne.s32.totalorder %s676, %s678
      %p685 = scmp.eq.s32.totalorder %s82, 3
      %p686 = por %p684, %p685
      %p687 = scmp.ne.s32.totalorder %s678, %s679
      %p688 = scmp.eq.s32.totalorder %s82, 0
      %p689 = por %p687, %p688
      %p690 = scmp.ne.s32.totalorder %s678, %s679
      %p691 = scmp.eq.s32.totalorder %s83, 3
      %p692 = por %p690, %p691
      %p694 = scmp.ne.s32.totalorder %s679, %s693
      %p695 = scmp.eq.s32.totalorder %s83, 0
      %p696 = por %p694, %p695
      %s698 = sadd.s32 %s697, 1
      %p701 = scmp.eq.s32.totalorder %s77, 3
      %p702 = scmp.ne.s32.totalorder %s697, %s699
      %p703 = scmp.eq.s32.totalorder %s77, 0
      %p704 = por %p702, %p703
      %p705 = scmp.ne.s32.totalorder %s697, %s699
      %p706 = scmp.eq.s32.totalorder %s82, 3
      %p707 = por %p705, %p706
      %p708 = scmp.ne.s32.totalorder %s699, %s700
      %p709 = scmp.eq.s32.totalorder %s82, 0
      %p710 = por %p708, %p709
      %p711 = scmp.ne.s32.totalorder %s699, %s700
      %p712 = scmp.eq.s32.totalorder %s83, 3
      %p713 = por %p711, %p712
      %p715 = scmp.ne.s32.totalorder %s700, %s714
      %p716 = scmp.eq.s32.totalorder %s83, 0
      %p717 = por %p715, %p716
      %s719 = sadd.s32 %s718, 1
      %p722 = scmp.eq.s32.totalorder %s77, 3
      %p723 = scmp.ne.s32.totalorder %s718, %s720
      %p724 = scmp.eq.s32.totalorder %s77, 0
      %p725 = por %p723, %p724
      %p726 = scmp.ne.s32.totalorder %s718, %s720
      %p727 = scmp.eq.s32.totalorder %s82, 3
      %p728 = por %p726, %p727
      %p729 = scmp.ne.s32.totalorder %s720, %s721
      %p730 = scmp.eq.s32.totalorder %s82, 0
      %p731 = por %p729, %p730
      %p732 = scmp.ne.s32.totalorder %s720, %s721
      %p733 = scmp.eq.s32.totalorder %s83, 3
      %p734 = por %p732, %p733
      %p736 = scmp.ne.s32.totalorder %s721, %s735
      %p737 = scmp.eq.s32.totalorder %s83, 0
      %p738 = por %p736, %p737
      %s740 = sadd.s32 %s739, 1
      %p743 = scmp.eq.s32.totalorder %s77, 3
      %p744 = scmp.ne.s32.totalorder %s739, %s741
      %p745 = scmp.eq.s32.totalorder %s77, 0
      %p746 = por %p744, %p745
      %p747 = scmp.ne.s32.totalorder %s739, %s741
      %p748 = scmp.eq.s32.totalorder %s82, 3
      %p749 = por %p747, %p748
      %p750 = scmp.ne.s32.totalorder %s741, %s742
      %p751 = scmp.eq.s32.totalorder %s82, 0
      %p752 = por %p750, %p751
      %p753 = scmp.ne.s32.totalorder %s741, %s742
      %p754 = scmp.eq.s32.totalorder %s83, 3
      %p755 = por %p753, %p754
      %p757 = scmp.ne.s32.totalorder %s742, %s756
      %p758 = scmp.eq.s32.totalorder %s83, 0
      %p759 = por %p757, %p758
      %s761 = sadd.s32 %s760, 1
      %p764 = scmp.eq.s32.totalorder %s77, 3
      %p765 = scmp.ne.s32.totalorder %s760, %s762
      %p766 = scmp.eq.s32.totalorder %s77, 0
      %p767 = por %p765, %p766
      %p768 = scmp.ne.s32.totalorder %s760, %s762
      %p769 = scmp.eq.s32.totalorder %s82, 3
      %p770 = por %p768, %p769
      %p771 = scmp.ne.s32.totalorder %s762, %s763
      %p772 = scmp.eq.s32.totalorder %s82, 0
      %p773 = por %p771, %p772
      %p774 = scmp.ne.s32.totalorder %s762, %s763
      %p775 = scmp.eq.s32.totalorder %s83, 3
      %p776 = por %p774, %p775
      %p778 = scmp.ne.s32.totalorder %s763, %s777
      %p779 = scmp.eq.s32.totalorder %s83, 0
      %p780 = por %p778, %p779
      %s782 = sadd.s32 %s781, 1
      %p785 = scmp.eq.s32.totalorder %s77, 3
      %p786 = scmp.ne.s32.totalorder %s781, %s783
      %p787 = scmp.eq.s32.totalorder %s77, 0
      %p788 = por %p786, %p787
      %p789 = scmp.ne.s32.totalorder %s781, %s783
      %p790 = scmp.eq.s32.totalorder %s82, 3
      %p791 = por %p789, %p790
      %p792 = scmp.ne.s32.totalorder %s783, %s784
      %p793 = scmp.eq.s32.totalorder %s82, 0
      %p794 = por %p792, %p793
      %p795 = scmp.ne.s32.totalorder %s783, %s784
      %p796 = scmp.eq.s32.totalorder %s83, 3
      %p797 = por %p795, %p796
      %p799 = scmp.ne.s32.totalorder %s784, %s798
      %p800 = scmp.eq.s32.totalorder %s83, 0
      %p801 = por %p799, %p800
      %s803 = sadd.s32 %s802, 1
      %p806 = scmp.eq.s32.totalorder %s77, 3
      %p807 = scmp.ne.s32.totalorder %s802, %s804
      %p808 = scmp.eq.s32.totalorder %s77, 0
      %p809 = por %p807, %p808
      %p810 = scmp.ne.s32.totalorder %s802, %s804
      %p811 = scmp.eq.s32.totalorder %s82, 3
      %p812 = por %p810, %p811
      %p813 = scmp.ne.s32.totalorder %s804, %s805
      %p814 = scmp.eq.s32.totalorder %s82, 0
      %p815 = por %p813, %p814
      %p816 = scmp.ne.s32.totalorder %s804, %s805
      %p817 = scmp.eq.s32.totalorder %s83, 3
      %p818 = por %p816, %p817
      %p820 = scmp.ne.s32.totalorder %s805, %s819
      %p821 = scmp.eq.s32.totalorder %s83, 0
      %p822 = por %p820, %p821
      %s824 = sadd.s32 %s823, 1
      %p827 = scmp.eq.s32.totalorder %s77, 3
      %p828 = scmp.ne.s32.totalorder %s823, %s825
      %p829 = scmp.eq.s32.totalorder %s77, 0
      %p830 = por %p828, %p829
      %p831 = scmp.ne.s32.totalorder %s823, %s825
      %p832 = scmp.eq.s32.totalorder %s82, 3
      %p833 = por %p831, %p832
      %p834 = scmp.ne.s32.totalorder %s825, %s826
      %p835 = scmp.eq.s32.totalorder %s82, 0
      %p836 = por %p834, %p835
      %p837 = scmp.ne.s32.totalorder %s825, %s826
      %p838 = scmp.eq.s32.totalorder %s83, 3
      %p839 = por %p837, %p838
      %p841 = scmp.ne.s32.totalorder %s826, %s840
      %p842 = scmp.eq.s32.totalorder %s83, 0
      %p843 = por %p841, %p842
      %s844 = ssub.s32 %s84, %s96
      %p845 = scmp.eq.s32.totalorder %s844, 0
      %s847 = sadd.s32 %s846, 1
      %s848 = scalar_select %p845, %s846, %s847
      %p851 = pneg %p845
      %p852 = scmp.eq.s32.totalorder %s77, 3
      %p853 = por %p851, %p852
      %p854 = scmp.ne.s32.totalorder %s846, %s849
      %p855 = scmp.eq.s32.totalorder %s77, 0
      %p856 = por %p854, %p855
      %p857 = scmp.ne.s32.totalorder %s846, %s849
      %p858 = scmp.eq.s32.totalorder %s82, 3
      %p859 = por %p857, %p858
      %p860 = scmp.ne.s32.totalorder %s849, %s850
      %p861 = scmp.eq.s32.totalorder %s82, 0
      %p862 = por %p860, %p861
      %p863 = scmp.ne.s32.totalorder %s849, %s850
      %p864 = scmp.eq.s32.totalorder %s83, 3
      %p865 = por %p863, %p864
      %p867 = scmp.ne.s32.totalorder %s850, %s866
      %p868 = scmp.eq.s32.totalorder %s83, 0
      %p869 = por %p867, %p868
      %p870 = scmp.le.s32.totalorder 1, %s77
      %p871 = scmp.lt.s32.totalorder %s77, 5
      %p872 = pnand %p870, %p871
      %p873 = pneg %p872
      // Predicated region
      $region9: #{conditional_attention_forward.1} parent=5 // pred_check
        _
      $region10: #{conditional_attention_forward.1} parent=5 // pred_check_branch
        %875 = sbr.rel (%p872) target = $region12
      $region11: #{conditional_attention_forward.1} parent=5 // pred_region
        %s876 = ssub.s32 %s77, 1
        // Predicated region
        $region13: #{conditional_attention_forward.1} parent=11 // pred_check
          %p877 = pneg %p188
        $region14: #{conditional_attention_forward.1} parent=11 // pred_check_branch
          %879 = sbr.rel (%p877) target = $region16
        $region15: #{conditional_attention_forward.1} parent=11 // pred_region
          %s881 = ssub.s32 16, 16
          %882 = vsyncadd [#allocation4], %s881
          %s884 = sshll.u32 [#allocation3], 4
          %s885 = int_to_ptr.vmem [resolvable:$true] %s884
          %887 = dma.hbm_to_vmem [thread:$0]  %s7, 16, %s885, [#allocation4]
        $region16: #{conditional_attention_forward.1} parent=11 // pred_fallthru
          _
        // Predicated region
        $region17: #{conditional_attention_forward.1} parent=11 // pred_check
          %p888 = pneg %p209
        $region18: #{conditional_attention_forward.1} parent=11 // pred_check_branch
          %890 = sbr.rel (%p888) target = $region20
        $region19: #{conditional_attention_forward.1} parent=11 // pred_region
          _
        $region20: #{conditional_attention_forward.1} parent=11 // pred_fallthru
          _
        // Predicated region
        $region21: #{conditional_attention_forward.1} parent=11 // pred_check
          %p891 = pneg %p230
        $region22: #{conditional_attention_forward.1} parent=11 // pred_check_branch
          %893 = sbr.rel (%p891) target = $region24
        $region23: #{conditional_attention_forward.1} parent=11 // pred_region
          %s895 = ssub.s32 128, 128
          %896 = vsyncadd [#allocation6], %s895
          %s897 = sshll.u32 [#allocation5], 4
          %s898 = int_to_ptr.vmem [resolvable:$true] %s897
          %903 = dma.hbm_to_vmem [thread:$0]  %s11, 128, %s898, [#allocation6], 64, 64, 4
        $region24: #{conditional_attention_forward.1} parent=11 // pred_fallthru
          _
        // Predicated region
        $region25: #{conditional_attention_forward.1} parent=11 // pred_check
          %p904 = pneg %p251
        $region26: #{conditional_attention_forward.1} parent=11 // pred_check_branch
          %906 = sbr.rel (%p904) target = $region28
        $region27: #{conditional_attention_forward.1} parent=11 // pred_region
          %s908 = ssub.s32 512, 512
          %909 = vsyncadd [#allocation6], %s908
          %s910 = sshll.u32 [#allocation7], 4
          %s911 = int_to_ptr.vmem [resolvable:$true] %s910
          %916 = dma.hbm_to_vmem [thread:$0]  %s13, 512, %s911, [#allocation6], 64, 64, 4
        $region28: #{conditional_attention_forward.1} parent=11 // pred_fallthru
          _
        // Predicated region
        $region29: #{conditional_attention_forward.1} parent=11 // pred_check
          %p917 = pneg %p272
        $region30: #{conditional_attention_forward.1} parent=11 // pred_check_branch
          %919 = sbr.rel (%p917) target = $region32
        $region31: #{conditional_attention_forward.1} parent=11 // pred_region
          %s921 = ssub.s32 128, 128
          %922 = vsyncadd [#allocation9], %s921
          %s923 = sshll.u32 [#allocation8], 4
          %s924 = int_to_ptr.vmem [resolvable:$true] %s923
          %929 = dma.hbm_to_vmem [thread:$0]  %s15, 128, %s924, [#allocation9], 64, 64, 4
        $region32: #{conditional_attention_forward.1} parent=11 // pred_fallthru
          _
        // Predicated region
        $region33: #{conditional_attention_forward.1} parent=11 // pred_check
          %p930 = pneg %p293
        $region34: #{conditional_attention_forward.1} parent=11 // pred_check_branch
          %932 = sbr.rel (%p930) target = $region36
        $region35: #{conditional_attention_forward.1} parent=11 // pred_region
          %s934 = ssub.s32 128, 128
          %935 = vsyncadd [#allocation9], %s934
          %s936 = sshll.u32 [#allocation10], 4
          %s937 = int_to_ptr.vmem [resolvable:$true] %s936
          %942 = dma.hbm_to_vmem [thread:$0]  %s17, 128, %s937, [#allocation9], 64, 64, 4
        $region36: #{conditional_attention_forward.1} parent=11 // pred_fallthru
          _
        // Predicated region
        $region37: #{conditional_attention_forward.1} parent=11 // pred_check
          %p943 = pneg %p314
        $region38: #{conditional_attention_forward.1} parent=11 // pred_check_branch
          %945 = sbr.rel (%p943) target = $region40
        $region39: #{conditional_attention_forward.1} parent=11 // pred_region
          %s947 = ssub.s32 16, 16
          %948 = vsyncadd [#allocation12], %s947
          %s950 = sshll.u32 [#allocation11], 4
          %s951 = int_to_ptr.vmem [resolvable:$true] %s950
          %953 = dma.hbm_to_vmem [thread:$0]  %s19, 16, %s951, [#allocation12]
        $region40: #{conditional_attention_forward.1} parent=11 // pred_fallthru
          _
        // Predicated region
        $region41: #{conditional_attention_forward.1} parent=11 // pred_check
          %p954 = pneg %p647
        $region42: #{conditional_attention_forward.1} parent=11 // pred_check_branch
          %956 = sbr.rel (%p954) target = $region44
        $region43: #{conditional_attention_forward.1} parent=11 // pred_region
          %s958 = ssub.s32 1024, 1024
          %959 = vsyncadd [#allocation6], %s958
          %s960 = sshll.u32 [#allocation24], 4
          %s961 = int_to_ptr.vmem [resolvable:$true] %s960
          %966 = dma.hbm_to_vmem [thread:$0]  %s45, 1024, %s961, [#allocation6], 64, 64, 4
        $region44: #{conditional_attention_forward.1} parent=11 // pred_fallthru
          _
        // Predicated region
        $region45: #{conditional_attention_forward.1} parent=11 // pred_check
          %p967 = pneg %p668
        $region46: #{conditional_attention_forward.1} parent=11 // pred_check_branch
          %969 = sbr.rel (%p967) target = $region48
        $region47: #{conditional_attention_forward.1} parent=11 // pred_region
          %s971 = ssub.s32 16, 16
          %972 = vsyncadd [#allocation9], %s971
          %s974 = sshll.u32 [#allocation25], 4
          %s975 = int_to_ptr.vmem [resolvable:$true] %s974
          %977 = dma.hbm_to_vmem [thread:$0]  %s47, 16, %s975, [#allocation9]
        $region48: #{conditional_attention_forward.1} parent=11 // pred_fallthru
          _
        // Predicated region
        $region49: #{conditional_attention_forward.1} parent=11 // pred_check
          %p978 = pneg %p689
        $region50: #{conditional_attention_forward.1} parent=11 // pred_check_branch
          %980 = sbr.rel (%p978) target = $region52
        $region51: #{conditional_attention_forward.1} parent=11 // pred_region
          _
        $region52: #{conditional_attention_forward.1} parent=11 // pred_fallthru
          _
        // Predicated region
        $region53: #{conditional_attention_forward.1} parent=11 // pred_check
          %p981 = pneg %p710
        $region54: #{conditional_attention_forward.1} parent=11 // pred_check_branch
          %983 = sbr.rel (%p981) target = $region56
        $region55: #{conditional_attention_forward.1} parent=11 // pred_region
          %s985 = ssub.s32 16, 16
          %986 = vsyncadd [#allocation12], %s985
          %s988 = sshll.u32 [#allocation26], 4
          %s989 = int_to_ptr.vmem [resolvable:$true] %s988
          %991 = dma.hbm_to_vmem [thread:$0]  %s51, 16, %s989, [#allocation12]
        $region56: #{conditional_attention_forward.1} parent=11 // pred_fallthru
          _
        // Predicated region
        $region57: #{conditional_attention_forward.1} parent=11 // pred_check
          %p992 = pneg %p731
        $region58: #{conditional_attention_forward.1} parent=11 // pred_check_branch
          %994 = sbr.rel (%p992) target = $region60
        $region59: #{conditional_attention_forward.1} parent=11 // pred_region
          %s996 = ssub.s32 1024, 1024
          %997 = vsyncadd [#allocation28], %s996
          %s998 = sshll.u32 [#allocation27], 4
          %s999 = int_to_ptr.vmem [resolvable:$true] %s998
          %1004 = dma.hbm_to_vmem [thread:$0]  %s53, 1024, %s999, [#allocation28], 64, 64, 4
        $region60: #{conditional_attention_forward.1} parent=11 // pred_fallthru
          _
        // Predicated region
        $region61: #{conditional_attention_forward.1} parent=11 // pred_check
          %p1005 = pneg %p752
        $region62: #{conditional_attention_forward.1} parent=11 // pred_check_branch
          %1007 = sbr.rel (%p1005) target = $region64
        $region63: #{conditional_attention_forward.1} parent=11 // pred_region
          %s1009 = ssub.s32 16, 16
          %1010 = vsyncadd [#allocation28], %s1009
          %s1012 = sshll.u32 [#allocation29], 4
          %s1013 = int_to_ptr.vmem [resolvable:$true] %s1012
          %1015 = dma.hbm_to_vmem [thread:$0]  %s55, 16, %s1013, [#allocation28]
        $region64: #{conditional_attention_forward.1} parent=11 // pred_fallthru
          _
        // Predicated region
        $region65: #{conditional_attention_forward.1} parent=11 // pred_check
          %p1016 = pneg %p773
        $region66: #{conditional_attention_forward.1} parent=11 // pred_check_branch
          %1018 = sbr.rel (%p1016) target = $region68
        $region67: #{conditional_attention_forward.1} parent=11 // pred_region
          _
        $region68: #{conditional_attention_forward.1} parent=11 // pred_fallthru
          _
        // Predicated region
        $region69: #{conditional_attention_forward.1} parent=11 // pred_check
          %p1019 = pneg %p794
        $region70: #{conditional_attention_forward.1} parent=11 // pred_check_branch
          %1021 = sbr.rel (%p1019) target = $region72
        $region71: #{conditional_attention_forward.1} parent=11 // pred_region
          _
        $region72: #{conditional_attention_forward.1} parent=11 // pred_fallthru
          _
        // Predicated region
        $region73: #{conditional_attention_forward.1} parent=11 // pred_check
          %p1022 = pneg %p815
        $region74: #{conditional_attention_forward.1} parent=11 // pred_check_branch
          %1024 = sbr.rel (%p1022) target = $region76
        $region75: #{conditional_attention_forward.1} parent=11 // pred_region
          _
        $region76: #{conditional_attention_forward.1} parent=11 // pred_fallthru
          _
        // Predicated region
        $region77: #{conditional_attention_forward.1} parent=11 // pred_check
          %p1025 = pneg %p836
        $region78: #{conditional_attention_forward.1} parent=11 // pred_check_branch
          %1027 = sbr.rel (%p1025) target = $region80
        $region79: #{conditional_attention_forward.1} parent=11 // pred_region
          %s1029 = ssub.s32 16, 16
          %1030 = vsyncadd [#allocation31], %s1029
          %s1032 = sshll.u32 [#allocation30], 4
          %s1033 = int_to_ptr.vmem [resolvable:$true] %s1032
          %1035 = dma.hbm_to_vmem [thread:$0]  %s63, 16, %s1033, [#allocation31]
        $region80: #{conditional_attention_forward.1} parent=11 // pred_fallthru
          _
      $region12: #{conditional_attention_forward.1} parent=5 // pred_fallthru
        _
      %p1036 = scmp.lt.s32.totalorder %s77, 4
      // Predicated region
      $region81: #{conditional_attention_forward.1} parent=5 // pred_check
        %p1037 = pneg %p1036
      $region82: #{conditional_attention_forward.1} parent=5 // pred_check_branch
        %1039 = sbr.rel (%p1037) target = $region84
      $region83: #{conditional_attention_forward.1} parent=5 // pred_region
        // Predicated region
        $region85: #{conditional_attention_forward.1} parent=83 // pred_check
          %p1040 = pneg %p109
        $region86: #{conditional_attention_forward.1} parent=83 // pred_check_branch
          %1042 = sbr.rel (%p1040) target = $region88
        $region87: #{conditional_attention_forward.1} parent=83 // pred_region
          %s1043 = smul.u32 8, %s84
          %p1044 = scmp.lt.s32.totalorder %s1043, 15
          %s1045 = scalar_select %p1044, %s1043, 15
          %s1046 = smul.addr %s1045, 8
          %s1047 = scalar_lea.vmem %s1, %s1046
          %s1048 = smul.u32 8, %s84
        $region88: #{conditional_attention_forward.1} parent=83 // pred_fallthru
          _
        // Predicated region
        $region89: #{conditional_attention_forward.1} parent=83 // pred_check
          %p1049 = pneg %p135
        $region90: #{conditional_attention_forward.1} parent=83 // pred_check_branch
          %1051 = sbr.rel (%p1049) target = $region92
        $region91: #{conditional_attention_forward.1} parent=83 // pred_region
          %s1052 = smul.u32 8, %s84
          %p1053 = scmp.lt.s32.totalorder %s1052, 15
          %s1054 = scalar_select %p1053, %s1052, 15
          %s1055 = smul.addr %s1054, 8
          %s1056 = scalar_lea.vmem %s3, %s1055
          %s1057 = smul.u32 8, %s84
        $region92: #{conditional_attention_forward.1} parent=83 // pred_fallthru
          _
        // Predicated region
        $region93: #{conditional_attention_forward.1} parent=83 // pred_check
          %p1058 = pneg %p161
        $region94: #{conditional_attention_forward.1} parent=83 // pred_check_branch
          %1060 = sbr.rel (%p1058) target = $region96
        $region95: #{conditional_attention_forward.1} parent=83 // pred_region
          %s1061 = smul.u32 8, %s84
          %p1062 = scmp.lt.s32.totalorder %s1061, 15
          %s1063 = scalar_select %p1062, %s1061, 15
          %s1064 = smul.addr %s1063, 8
          %s1065 = scalar_lea.vmem %s5, %s1064
          %s1066 = smul.u32 8, %s84
        $region96: #{conditional_attention_forward.1} parent=83 // pred_fallthru
          _
        // Predicated region
        $region97: #{conditional_attention_forward.1} parent=83 // pred_check
          %p1067 = pneg %p334
        $region98: #{conditional_attention_forward.1} parent=83 // pred_check_branch
          %1069 = sbr.rel (%p1067) target = $region100
        $region99: #{conditional_attention_forward.1} parent=83 // pred_region
          %s1070 = sand.u32 %s77, 1
          %s1071 = scalar_lea.sflag [#allocation4], %s1070
          %s1072 = sand.u32 %s324, 1
          %s1073 = smul.addr %s1072, 192
          %s1074 = scalar_lea.vmem [#allocation13], %s1073
          %s1076 = ssub.s32 3072, 3072
          %1077 = vsyncadd %s1071, %s1076
          %s1078 = smul.addr %s85, 48
          %s1079 = smul.addr %s1078, 64
          %s1080 = scalar_lea.hbm %s21, %s1079
          %s1081 = sshll.u32 %s1074, 4
          %s1082 = int_to_ptr.vmem [resolvable:$true] %s1081
          %1087 = dma.hbm_to_vmem [thread:$0]  %s1080, 3072, %s1082, %s1071, 192, 192, 12
        $region100: #{conditional_attention_forward.1} parent=83 // pred_fallthru
          _
        // Predicated region
        $region101: #{conditional_attention_forward.1} parent=83 // pred_check
          %p1088 = pneg %p360
        $region102: #{conditional_attention_forward.1} parent=83 // pred_check_branch
          %1090 = sbr.rel (%p1088) target = $region104
        $region103: #{conditional_attention_forward.1} parent=83 // pred_region
          %s1091 = sand.u32 %s77, 1
          %s1092 = scalar_lea.sflag [#allocation4], %s1091
          %s1093 = sand.u32 %s350, 1
          %s1094 = smul.addr %s1093, 3
          %s1095 = scalar_lea.vmem [#allocation14], %s1094
          %s1097 = ssub.s32 48, 48
          %1098 = vsyncadd %s1092, %s1097
          %s1099 = smul.addr %s85, 3
          %s1100 = smul.addr %s1099, 16
          %s1101 = scalar_lea.hbm %s23, %s1100
          %s1103 = sshll.u32 %s1095, 4
          %s1104 = int_to_ptr.vmem [resolvable:$true] %s1103
          %1106 = dma.hbm_to_vmem [thread:$0]  %s1101, 48, %s1104, %s1092
        $region104: #{conditional_attention_forward.1} parent=83 // pred_fallthru
          _
        // Predicated region
        $region105: #{conditional_attention_forward.1} parent=83 // pred_check
          %p1107 = pneg %p386
        $region106: #{conditional_attention_forward.1} parent=83 // pred_check_branch
          %1109 = sbr.rel (%p1107) target = $region108
        $region107: #{conditional_attention_forward.1} parent=83 // pred_region
          %s1110 = sand.u32 %s77, 1
          %s1111 = scalar_lea.sflag [#allocation4], %s1110
          %s1112 = sand.u32 %s376, 1
          %s1113 = smul.addr %s1112, 64
          %s1114 = scalar_lea.vmem [#allocation15], %s1113
          %s1116 = ssub.s32 1024, 1024
          %1117 = vsyncadd %s1111, %s1116
          %s1118 = smul.addr %s85, 16
          %s1119 = smul.addr %s1118, 64
          %s1120 = scalar_lea.hbm %s25, %s1119
          %s1121 = sshll.u32 %s1114, 4
          %s1122 = int_to_ptr.vmem [resolvable:$true] %s1121
          %1127 = dma.hbm_to_vmem [thread:$0]  %s1120, 1024, %s1122, %s1111, 64, 64, 4
        $region108: #{conditional_attention_forward.1} parent=83 // pred_fallthru
          _
        // Predicated region
        $region109: #{conditional_attention_forward.1} parent=83 // pred_check
          %p1128 = pneg %p412
        $region110: #{conditional_attention_forward.1} parent=83 // pred_check_branch
          %1130 = sbr.rel (%p1128) target = $region112
        $region111: #{conditional_attention_forward.1} parent=83 // pred_region
          %p1131 = scmp.lt.s32.totalorder %s85, 1
          %s1132 = scalar_select %p1131, %s85, 1
          %s1133 = scalar_lea.vmem %s27, %s1132
        $region112: #{conditional_attention_forward.1} parent=83 // pred_fallthru
          _
        // Predicated region
        $region113: #{conditional_attention_forward.1} parent=83 // pred_check
          %p1134 = pneg %p438
        $region114: #{conditional_attention_forward.1} parent=83 // pred_check_branch
          %1136 = sbr.rel (%p1134) target = $region116
        $region115: #{conditional_attention_forward.1} parent=83 // pred_region
          %s1137 = sand.u32 %s77, 1
          %s1138 = scalar_lea.sflag [#allocation4], %s1137
          %s1139 = sand.u32 %s428, 1
          %s1140 = smul.addr %s1139, 1024
          %s1141 = scalar_lea.vmem [#allocation16], %s1140
          %s1143 = ssub.s32 16384, 16384
          %1144 = vsyncadd %s1138, %s1143
          %s1145 = smul.addr %s85, 256
          %s1146 = smul.addr %s1145, 64
          %s1147 = scalar_lea.hbm %s29, %s1146
          %s1148 = sshll.u32 %s1141, 4
          %s1149 = int_to_ptr.vmem [resolvable:$true] %s1148
          %1154 = dma.hbm_to_vmem [thread:$0]  %s1147, 16384, %s1149, %s1138, 1024, 1024, 64
        $region116: #{conditional_attention_forward.1} parent=83 // pred_fallthru
          _
        // Predicated region
        $region117: #{conditional_attention_forward.1} parent=83 // pred_check
          %p1155 = pneg %p464
        $region118: #{conditional_attention_forward.1} parent=83 // pred_check_branch
          %1157 = sbr.rel (%p1155) target = $region120
        $region119: #{conditional_attention_forward.1} parent=83 // pred_region
          %s1158 = sand.u32 %s77, 1
          %s1159 = scalar_lea.sflag [#allocation4], %s1158
          %s1160 = sand.u32 %s454, 1
          %s1161 = smul.addr %s1160, 16
          %s1162 = scalar_lea.vmem [#allocation17], %s1161
          %s1164 = ssub.s32 256, 256
          %1165 = vsyncadd %s1159, %s1164
          %s1166 = smul.addr %s85, 16
          %s1167 = smul.addr %s1166, 16
          %s1168 = scalar_lea.hbm %s31, %s1167
          %s1170 = sshll.u32 %s1162, 4
          %s1171 = int_to_ptr.vmem [resolvable:$true] %s1170
          %1173 = dma.hbm_to_vmem [thread:$0]  %s1168, 256, %s1171, %s1159
        $region120: #{conditional_attention_forward.1} parent=83 // pred_fallthru
          _
        // Predicated region
        $region121: #{conditional_attention_forward.1} parent=83 // pred_check
          %p1174 = pneg %p490
        $region122: #{conditional_attention_forward.1} parent=83 // pred_check_branch
          %1176 = sbr.rel (%p1174) target = $region124
        $region123: #{conditional_attention_forward.1} parent=83 // pred_region
          %s1177 = sand.u32 %s77, 1
          %s1178 = scalar_lea.sflag [#allocation4], %s1177
          %s1179 = sand.u32 %s480, 1
          %s1180 = smul.addr %s1179, 1024
          %s1181 = scalar_lea.vmem [#allocation18], %s1180
          %s1183 = ssub.s32 16384, 16384
          %1184 = vsyncadd %s1178, %s1183
          %s1185 = smul.addr %s85, 256
          %s1186 = smul.addr %s1185, 64
          %s1187 = scalar_lea.hbm %s33, %s1186
          %s1188 = sshll.u32 %s1181, 4
          %s1189 = int_to_ptr.vmem [resolvable:$true] %s1188
          %1194 = dma.hbm_to_vmem [thread:$0]  %s1187, 16384, %s1189, %s1178, 64, 64, 4
        $region124: #{conditional_attention_forward.1} parent=83 // pred_fallthru
          _
        // Predicated region
        $region125: #{conditional_attention_forward.1} parent=83 // pred_check
          %p1195 = pneg %p516
        $region126: #{conditional_attention_forward.1} parent=83 // pred_check_branch
          %1197 = sbr.rel (%p1195) target = $region128
        $region127: #{conditional_attention_forward.1} parent=83 // pred_region
          %s1198 = sand.u32 %s77, 1
          %s1199 = scalar_lea.sflag [#allocation4], %s1198
          %s1200 = sand.u32 %s506, 1
          %s1201 = scalar_lea.vmem [#allocation19], %s1200
          %s1203 = ssub.s32 16, 16
          %1204 = vsyncadd %s1199, %s1203
          %s1205 = smul.addr %s85, 16
          %s1206 = scalar_lea.hbm %s35, %s1205
          %s1208 = sshll.u32 %s1201, 4
          %s1209 = int_to_ptr.vmem [resolvable:$true] %s1208
          %1211 = dma.hbm_to_vmem [thread:$0]  %s1206, 16, %s1209, %s1199
        $region128: #{conditional_attention_forward.1} parent=83 // pred_fallthru
          _
        // Predicated region
        $region129: #{conditional_attention_forward.1} parent=83 // pred_check
          %p1212 = pneg %p542
        $region130: #{conditional_attention_forward.1} parent=83 // pred_check_branch
          %1214 = sbr.rel (%p1212) target = $region132
        $region131: #{conditional_attention_forward.1} parent=83 // pred_region
          %s1215 = sand.u32 %s77, 1
          %s1216 = scalar_lea.sflag [#allocation4], %s1215
          %s1217 = sand.u32 %s532, 1
          %s1218 = scalar_lea.vmem [#allocation20], %s1217
          %s1220 = ssub.s32 16, 16
          %1221 = vsyncadd %s1216, %s1220
          %s1222 = smul.addr %s85, 16
          %s1223 = scalar_lea.hbm %s37, %s1222
          %s1225 = sshll.u32 %s1218, 4
          %s1226 = int_to_ptr.vmem [resolvable:$true] %s1225
          %1228 = dma.hbm_to_vmem [thread:$0]  %s1223, 16, %s1226, %s1216
        $region132: #{conditional_attention_forward.1} parent=83 // pred_fallthru
          _
        // Predicated region
        $region133: #{conditional_attention_forward.1} parent=83 // pred_check
          %p1229 = pneg %p568
        $region134: #{conditional_attention_forward.1} parent=83 // pred_check_branch
          %1231 = sbr.rel (%p1229) target = $region136
        $region135: #{conditional_attention_forward.1} parent=83 // pred_region
          %s1232 = sand.u32 %s77, 1
          %s1233 = scalar_lea.sflag [#allocation4], %s1232
          %s1234 = sand.u32 %s558, 1
          %s1235 = scalar_lea.vmem [#allocation21], %s1234
          %s1237 = ssub.s32 16, 16
          %1238 = vsyncadd %s1233, %s1237
          %s1239 = smul.addr %s85, 16
          %s1240 = scalar_lea.hbm %s39, %s1239
          %s1242 = sshll.u32 %s1235, 4
          %s1243 = int_to_ptr.vmem [resolvable:$true] %s1242
          %1245 = dma.hbm_to_vmem [thread:$0]  %s1240, 16, %s1243, %s1233
        $region136: #{conditional_attention_forward.1} parent=83 // pred_fallthru
          _
        // Predicated region
        $region137: #{conditional_attention_forward.1} parent=83 // pred_check
          %p1246 = pneg %p594
        $region138: #{conditional_attention_forward.1} parent=83 // pred_check_branch
          %1248 = sbr.rel (%p1246) target = $region140
        $region139: #{conditional_attention_forward.1} parent=83 // pred_region
          %s1249 = sand.u32 %s77, 1
          %s1250 = scalar_lea.sflag [#allocation4], %s1249
          %s1251 = sand.u32 %s584, 1
          %s1252 = scalar_lea.vmem [#allocation22], %s1251
          %s1254 = ssub.s32 16, 16
          %1255 = vsyncadd %s1250, %s1254
          %s1256 = smul.addr %s85, 16
          %s1257 = scalar_lea.hbm %s41, %s1256
          %s1259 = sshll.u32 %s1252, 4
          %s1260 = int_to_ptr.vmem [resolvable:$true] %s1259
          %1262 = dma.hbm_to_vmem [thread:$0]  %s1257, 16, %s1260, %s1250
        $region140: #{conditional_attention_forward.1} parent=83 // pred_fallthru
          _
        // Predicated region
        $region141: #{conditional_attention_forward.1} parent=83 // pred_check
          %p1263 = pneg %p620
        $region142: #{conditional_attention_forward.1} parent=83 // pred_check_branch
          %1265 = sbr.rel (%p1263) target = $region144
        $region143: #{conditional_attention_forward.1} parent=83 // pred_region
          %s1266 = sand.u32 %s77, 1
          %s1267 = scalar_lea.sflag [#allocation4], %s1266
          %s1268 = sand.u32 %s610, 1
          %s1269 = scalar_lea.vmem [#allocation23], %s1268
          %s1271 = ssub.s32 16, 16
          %1272 = vsyncadd %s1267, %s1271
          %s1273 = smul.addr %s85, 16
          %s1274 = scalar_lea.hbm %s43, %s1273
          %s1276 = sshll.u32 %s1269, 4
          %s1277 = int_to_ptr.vmem [resolvable:$true] %s1276
          %1279 = dma.hbm_to_vmem [thread:$0]  %s1274, 16, %s1277, %s1267
        $region144: #{conditional_attention_forward.1} parent=83 // pred_fallthru
          _
      $region84: #{conditional_attention_forward.1} parent=5 // pred_fallthru
        _
      %p1280 = scmp.le.s32.totalorder 1, %s77
      %p1281 = scmp.lt.s32.totalorder %s77, 5
      %p1282 = pnand %p1280, %p1281
      %p1283 = pneg %p1282
      // Predicated region
      $region145: #{conditional_attention_forward.1} parent=5 // pred_check
        _
      $region146: #{conditional_attention_forward.1} parent=5 // pred_check_branch
        %1285 = sbr.rel (%p1282) target = $region148
      $region147: #{conditional_attention_forward.1} parent=5 // pred_region
        %s1286 = ssub.s32 %s77, 1
        // Predicated region
        $region149: #{conditional_attention_forward.1} parent=147 // pred_check
          %p1287 = pneg %p188
        $region150: #{conditional_attention_forward.1} parent=147 // pred_check_branch
          %1289 = sbr.rel (%p1287) target = $region152
        $region151: #{conditional_attention_forward.1} parent=147 // pred_region
          %1290 = dma.done [#allocation4], 16
        $region152: #{conditional_attention_forward.1} parent=147 // pred_fallthru
          _
        // Predicated region
        $region153: #{conditional_attention_forward.1} parent=147 // pred_check
          %p1291 = pneg %p230
        $region154: #{conditional_attention_forward.1} parent=147 // pred_check_branch
          %1293 = sbr.rel (%p1291) target = $region156
        $region155: #{conditional_attention_forward.1} parent=147 // pred_region
          %1294 = dma.done [#allocation6], 128
        $region156: #{conditional_attention_forward.1} parent=147 // pred_fallthru
          _
        // Predicated region
        $region157: #{conditional_attention_forward.1} parent=147 // pred_check
          %p1295 = pneg %p251
        $region158: #{conditional_attention_forward.1} parent=147 // pred_check_branch
          %1297 = sbr.rel (%p1295) target = $region160
        $region159: #{conditional_attention_forward.1} parent=147 // pred_region
          %1298 = dma.done [#allocation6], 512
        $region160: #{conditional_attention_forward.1} parent=147 // pred_fallthru
          _
        // Predicated region
        $region161: #{conditional_attention_forward.1} parent=147 // pred_check
          %p1299 = pneg %p272
        $region162: #{conditional_attention_forward.1} parent=147 // pred_check_branch
          %1301 = sbr.rel (%p1299) target = $region164
        $region163: #{conditional_attention_forward.1} parent=147 // pred_region
          %1302 = dma.done [#allocation9], 128
        $region164: #{conditional_attention_forward.1} parent=147 // pred_fallthru
          _
        // Predicated region
        $region165: #{conditional_attention_forward.1} parent=147 // pred_check
          %p1303 = pneg %p293
        $region166: #{conditional_attention_forward.1} parent=147 // pred_check_branch
          %1305 = sbr.rel (%p1303) target = $region168
        $region167: #{conditional_attention_forward.1} parent=147 // pred_region
          %1306 = dma.done [#allocation9], 128
        $region168: #{conditional_attention_forward.1} parent=147 // pred_fallthru
          _
        // Predicated region
        $region169: #{conditional_attention_forward.1} parent=147 // pred_check
          %p1307 = pneg %p314
        $region170: #{conditional_attention_forward.1} parent=147 // pred_check_branch
          %1309 = sbr.rel (%p1307) target = $region172
        $region171: #{conditional_attention_forward.1} parent=147 // pred_region
          %1310 = dma.done [#allocation12], 16
        $region172: #{conditional_attention_forward.1} parent=147 // pred_fallthru
          _
        %s1311 = sand.u32 %s82, 1
        %s1312 = scalar_lea.sflag [#allocation4], %s1311
        %s1313 = sand.u32 %s327, 1
        %s1314 = smul.addr %s1313, 192
        %s1315 = scalar_lea.vmem [#allocation13], %s1314
        // Predicated region
        $region173: #{conditional_attention_forward.1} parent=147 // pred_check
          %p1316 = pneg %p340
        $region174: #{conditional_attention_forward.1} parent=147 // pred_check_branch
          %1318 = sbr.rel (%p1316) target = $region176
        $region175: #{conditional_attention_forward.1} parent=147 // pred_region
          %1319 = dma.done %s1312, 3072
        $region176: #{conditional_attention_forward.1} parent=147 // pred_fallthru
          _
        %s1320 = sand.u32 %s82, 1
        %s1321 = scalar_lea.sflag [#allocation4], %s1320
        %s1322 = sand.u32 %s353, 1
        %s1323 = smul.addr %s1322, 3
        %s1324 = scalar_lea.vmem [#allocation14], %s1323
        // Predicated region
        $region177: #{conditional_attention_forward.1} parent=147 // pred_check
          %p1325 = pneg %p366
        $region178: #{conditional_attention_forward.1} parent=147 // pred_check_branch
          %1327 = sbr.rel (%p1325) target = $region180
        $region179: #{conditional_attention_forward.1} parent=147 // pred_region
          %1328 = dma.done %s1321, 48
        $region180: #{conditional_attention_forward.1} parent=147 // pred_fallthru
          _
        %s1329 = sand.u32 %s82, 1
        %s1330 = scalar_lea.sflag [#allocation4], %s1329
        %s1331 = sand.u32 %s379, 1
        %s1332 = smul.addr %s1331, 64
        %s1333 = scalar_lea.vmem [#allocation15], %s1332
        // Predicated region
        $region181: #{conditional_attention_forward.1} parent=147 // pred_check
          %p1334 = pneg %p392
        $region182: #{conditional_attention_forward.1} parent=147 // pred_check_branch
          %1336 = sbr.rel (%p1334) target = $region184
        $region183: #{conditional_attention_forward.1} parent=147 // pred_region
          %1337 = dma.done %s1330, 1024
        $region184: #{conditional_attention_forward.1} parent=147 // pred_fallthru
          _
        %s1338 = sand.u32 %s82, 1
        %s1339 = scalar_lea.sflag [#allocation4], %s1338
        %s1340 = sand.u32 %s431, 1
        %s1341 = smul.addr %s1340, 1024
        %s1342 = scalar_lea.vmem [#allocation16], %s1341
        // Predicated region
        $region185: #{conditional_attention_forward.1} parent=147 // pred_check
          %p1343 = pneg %p444
        $region186: #{conditional_attention_forward.1} parent=147 // pred_check_branch
          %1345 = sbr.rel (%p1343) target = $region188
        $region187: #{conditional_attention_forward.1} parent=147 // pred_region
          %1346 = dma.done %s1339, 16384
        $region188: #{conditional_attention_forward.1} parent=147 // pred_fallthru
          _
        %s1347 = sand.u32 %s82, 1
        %s1348 = scalar_lea.sflag [#allocation4], %s1347
        %s1349 = sand.u32 %s457, 1
        %s1350 = smul.addr %s1349, 16
        %s1351 = scalar_lea.vmem [#allocation17], %s1350
        // Predicated region
        $region189: #{conditional_attention_forward.1} parent=147 // pred_check
          %p1352 = pneg %p470
        $region190: #{conditional_attention_forward.1} parent=147 // pred_check_branch
          %1354 = sbr.rel (%p1352) target = $region192
        $region191: #{conditional_attention_forward.1} parent=147 // pred_region
          %1355 = dma.done %s1348, 256
        $region192: #{conditional_attention_forward.1} parent=147 // pred_fallthru
          _
        %s1356 = sand.u32 %s82, 1
        %s1357 = scalar_lea.sflag [#allocation4], %s1356
        %s1358 = sand.u32 %s483, 1
        %s1359 = smul.addr %s1358, 1024
        %s1360 = scalar_lea.vmem [#allocation18], %s1359
        // Predicated region
        $region193: #{conditional_attention_forward.1} parent=147 // pred_check
          %p1361 = pneg %p496
        $region194: #{conditional_attention_forward.1} parent=147 // pred_check_branch
          %1363 = sbr.rel (%p1361) target = $region196
        $region195: #{conditional_attention_forward.1} parent=147 // pred_region
          %1364 = dma.done %s1357, 16384
        $region196: #{conditional_attention_forward.1} parent=147 // pred_fallthru
          _
        %s1365 = sand.u32 %s82, 1
        %s1366 = scalar_lea.sflag [#allocation4], %s1365
        %s1367 = sand.u32 %s509, 1
        %s1368 = scalar_lea.vmem [#allocation19], %s1367
        // Predicated region
        $region197: #{conditional_attention_forward.1} parent=147 // pred_check
          %p1369 = pneg %p522
        $region198: #{conditional_attention_forward.1} parent=147 // pred_check_branch
          %1371 = sbr.rel (%p1369) target = $region200
        $region199: #{conditional_attention_forward.1} parent=147 // pred_region
          %1372 = dma.done %s1366, 16
        $region200: #{conditional_attention_forward.1} parent=147 // pred_fallthru
          _
        %s1373 = sand.u32 %s82, 1
        %s1374 = scalar_lea.sflag [#allocation4], %s1373
        %s1375 = sand.u32 %s535, 1
        %s1376 = scalar_lea.vmem [#allocation20], %s1375
        // Predicated region
        $region201: #{conditional_attention_forward.1} parent=147 // pred_check
          %p1377 = pneg %p548
        $region202: #{conditional_attention_forward.1} parent=147 // pred_check_branch
          %1379 = sbr.rel (%p1377) target = $region204
        $region203: #{conditional_attention_forward.1} parent=147 // pred_region
          %1380 = dma.done %s1374, 16
        $region204: #{conditional_attention_forward.1} parent=147 // pred_fallthru
          _
        %s1381 = sand.u32 %s82, 1
        %s1382 = scalar_lea.sflag [#allocation4], %s1381
        %s1383 = sand.u32 %s561, 1
        %s1384 = scalar_lea.vmem [#allocation21], %s1383
        // Predicated region
        $region205: #{conditional_attention_forward.1} parent=147 // pred_check
          %p1385 = pneg %p574
        $region206: #{conditional_attention_forward.1} parent=147 // pred_check_branch
          %1387 = sbr.rel (%p1385) target = $region208
        $region207: #{conditional_attention_forward.1} parent=147 // pred_region
          %1388 = dma.done %s1382, 16
        $region208: #{conditional_attention_forward.1} parent=147 // pred_fallthru
          _
        %s1389 = sand.u32 %s82, 1
        %s1390 = scalar_lea.sflag [#allocation4], %s1389
        %s1391 = sand.u32 %s587, 1
        %s1392 = scalar_lea.vmem [#allocation22], %s1391
        // Predicated region
        $region209: #{conditional_attention_forward.1} parent=147 // pred_check
          %p1393 = pneg %p600
        $region210: #{conditional_attention_forward.1} parent=147 // pred_check_branch
          %1395 = sbr.rel (%p1393) target = $region212
        $region211: #{conditional_attention_forward.1} parent=147 // pred_region
          %1396 = dma.done %s1390, 16
        $region212: #{conditional_attention_forward.1} parent=147 // pred_fallthru
          _
        %s1397 = sand.u32 %s82, 1
        %s1398 = scalar_lea.sflag [#allocation4], %s1397
        %s1399 = sand.u32 %s613, 1
        %s1400 = scalar_lea.vmem [#allocation23], %s1399
        // Predicated region
        $region213: #{conditional_attention_forward.1} parent=147 // pred_check
          %p1401 = pneg %p626
        $region214: #{conditional_attention_forward.1} parent=147 // pred_check_branch
          %1403 = sbr.rel (%p1401) target = $region216
        $region215: #{conditional_attention_forward.1} parent=147 // pred_region
          %1404 = dma.done %s1398, 16
        $region216: #{conditional_attention_forward.1} parent=147 // pred_fallthru
          _
        // Predicated region
        $region217: #{conditional_attention_forward.1} parent=147 // pred_check
          %p1405 = pneg %p647
        $region218: #{conditional_attention_forward.1} parent=147 // pred_check_branch
          %1407 = sbr.rel (%p1405) target = $region220
        $region219: #{conditional_attention_forward.1} parent=147 // pred_region
          %1408 = dma.done [#allocation6], 1024
        $region220: #{conditional_attention_forward.1} parent=147 // pred_fallthru
          _
        // Predicated region
        $region221: #{conditional_attention_forward.1} parent=147 // pred_check
          %p1409 = pneg %p668
        $region222: #{conditional_attention_forward.1} parent=147 // pred_check_branch
          %1411 = sbr.rel (%p1409) target = $region224
        $region223: #{conditional_attention_forward.1} parent=147 // pred_region
          %1412 = dma.done [#allocation9], 16
        $region224: #{conditional_attention_forward.1} parent=147 // pred_fallthru
          _
        // Predicated region
        $region225: #{conditional_attention_forward.1} parent=147 // pred_check
          %p1413 = pneg %p710
        $region226: #{conditional_attention_forward.1} parent=147 // pred_check_branch
          %1415 = sbr.rel (%p1413) target = $region228
        $region227: #{conditional_attention_forward.1} parent=147 // pred_region
          %1416 = dma.done [#allocation12], 16
        $region228: #{conditional_attention_forward.1} parent=147 // pred_fallthru
          _
        // Predicated region
        $region229: #{conditional_attention_forward.1} parent=147 // pred_check
          %p1417 = pneg %p731
        $region230: #{conditional_attention_forward.1} parent=147 // pred_check_branch
          %1419 = sbr.rel (%p1417) target = $region232
        $region231: #{conditional_attention_forward.1} parent=147 // pred_region
          %1420 = dma.done [#allocation28], 1024
        $region232: #{conditional_attention_forward.1} parent=147 // pred_fallthru
          _
        // Predicated region
        $region233: #{conditional_attention_forward.1} parent=147 // pred_check
          %p1421 = pneg %p752
        $region234: #{conditional_attention_forward.1} parent=147 // pred_check_branch
          %1423 = sbr.rel (%p1421) target = $region236
        $region235: #{conditional_attention_forward.1} parent=147 // pred_region
          %1424 = dma.done [#allocation28], 16
        $region236: #{conditional_attention_forward.1} parent=147 // pred_fallthru
          _
        // Predicated region
        $region237: #{conditional_attention_forward.1} parent=147 // pred_check
          %p1425 = pneg %p836
        $region238: #{conditional_attention_forward.1} parent=147 // pred_check_branch
          %1427 = sbr.rel (%p1425) target = $region240
        $region239: #{conditional_attention_forward.1} parent=147 // pred_region
          %1428 = dma.done [#allocation31], 16
        $region240: #{conditional_attention_forward.1} parent=147 // pred_fallthru
          _
        %s1429 = smul.u32 8, %s86
        %p1430 = scmp.lt.s32.totalorder %s1429, 15
        %s1431 = scalar_select %p1430, %s1429, 15
        %s1432 = smul.addr %s1431, 8
        %s1433 = scalar_lea.vmem %s1, %s1432
        %p1434 = pneg %p115
        %p1435 = pneg %p112
        %s1436 = smul.u32 8, %s86
        %p1437 = scmp.lt.s32.totalorder %s1436, 15
        %s1438 = scalar_select %p1437, %s1436, 15
        %s1439 = smul.addr %s1438, 8
        %s1440 = scalar_lea.vmem %s3, %s1439
        %p1441 = pneg %p141
        %p1442 = pneg %p138
        %s1443 = smul.u32 8, %s86
        %p1444 = scmp.lt.s32.totalorder %s1443, 15
        %s1445 = scalar_select %p1444, %s1443, 15
        %s1446 = smul.addr %s1445, 8
        %s1447 = scalar_lea.vmem %s5, %s1446
        %p1448 = pneg %p167
        %p1449 = pneg %p164
        %p1450 = pneg %p188
        %p1451 = pneg %p185
        %p1452 = pneg %p209
        %p1453 = pneg %p206
        %p1454 = pneg %p230
        %p1455 = pneg %p227
        %p1456 = pneg %p251
        %p1457 = pneg %p248
        %p1458 = pneg %p272
        %p1459 = pneg %p269
        %p1460 = pneg %p293
        %p1461 = pneg %p290
        %p1462 = pneg %p314
        %p1463 = pneg %p311
        %s1464 = sand.u32 %s82, 1
        %s1465 = scalar_lea.sflag [#allocation4], %s1464
        %s1466 = sand.u32 %s327, 1
        %s1467 = smul.addr %s1466, 192
        %s1468 = scalar_lea.vmem [#allocation13], %s1467
        %p1469 = pneg %p340
        %p1470 = pneg %p337
        %s1471 = sand.u32 %s82, 1
        %s1472 = scalar_lea.sflag [#allocation4], %s1471
        %s1473 = sand.u32 %s353, 1
        %s1474 = smul.addr %s1473, 3
        %s1475 = scalar_lea.vmem [#allocation14], %s1474
        %p1476 = pneg %p366
        %p1477 = pneg %p363
        %s1478 = sand.u32 %s82, 1
        %s1479 = scalar_lea.sflag [#allocation4], %s1478
        %s1480 = sand.u32 %s379, 1
        %s1481 = smul.addr %s1480, 64
        %s1482 = scalar_lea.vmem [#allocation15], %s1481
        %p1483 = pneg %p392
        %p1484 = pneg %p389
        %p1485 = scmp.lt.s32.totalorder %s87, 1
        %s1486 = scalar_select %p1485, %s87, 1
        %s1487 = scalar_lea.vmem %s27, %s1486
        %p1488 = pneg %p418
        %p1489 = pneg %p415
        %s1490 = sand.u32 %s82, 1
        %s1491 = scalar_lea.sflag [#allocation4], %s1490
        %s1492 = sand.u32 %s431, 1
        %s1493 = smul.addr %s1492, 1024
        %s1494 = scalar_lea.vmem [#allocation16], %s1493
        %p1495 = pneg %p444
        %p1496 = pneg %p441
        %s1497 = sand.u32 %s82, 1
        %s1498 = scalar_lea.sflag [#allocation4], %s1497
        %s1499 = sand.u32 %s457, 1
        %s1500 = smul.addr %s1499, 16
        %s1501 = scalar_lea.vmem [#allocation17], %s1500
        %p1502 = pneg %p470
        %p1503 = pneg %p467
        %s1504 = sand.u32 %s82, 1
        %s1505 = scalar_lea.sflag [#allocation4], %s1504
        %s1506 = sand.u32 %s483, 1
        %s1507 = smul.addr %s1506, 1024
        %s1508 = scalar_lea.vmem [#allocation18], %s1507
        %p1509 = pneg %p496
        %p1510 = pneg %p493
        %s1511 = sand.u32 %s82, 1
        %s1512 = scalar_lea.sflag [#allocation4], %s1511
        %s1513 = sand.u32 %s509, 1
        %s1514 = scalar_lea.vmem [#allocation19], %s1513
        %p1515 = pneg %p522
        %p1516 = pneg %p519
        %s1517 = sand.u32 %s82, 1
        %s1518 = scalar_lea.sflag [#allocation4], %s1517
        %s1519 = sand.u32 %s535, 1
        %s1520 = scalar_lea.vmem [#allocation20], %s1519
        %p1521 = pneg %p548
        %p1522 = pneg %p545
        %s1523 = sand.u32 %s82, 1
        %s1524 = scalar_lea.sflag [#allocation4], %s1523
        %s1525 = sand.u32 %s561, 1
        %s1526 = scalar_lea.vmem [#allocation21], %s1525
        %p1527 = pneg %p574
        %p1528 = pneg %p571
        %s1529 = sand.u32 %s82, 1
        %s1530 = scalar_lea.sflag [#allocation4], %s1529
        %s1531 = sand.u32 %s587, 1
        %s1532 = scalar_lea.vmem [#allocation22], %s1531
        %p1533 = pneg %p600
        %p1534 = pneg %p597
        %s1535 = sand.u32 %s82, 1
        %s1536 = scalar_lea.sflag [#allocation4], %s1535
        %s1537 = sand.u32 %s613, 1
        %s1538 = scalar_lea.vmem [#allocation23], %s1537
        %p1539 = pneg %p626
        %p1540 = pneg %p623
        %p1541 = pneg %p647
        %p1542 = pneg %p644
        %p1543 = pneg %p668
        %p1544 = pneg %p665
        %p1545 = pneg %p689
        %p1546 = pneg %p686
        %p1547 = pneg %p710
        %p1548 = pneg %p707
        %p1549 = pneg %p731
        %p1550 = pneg %p728
        %p1551 = pneg %p752
        %p1552 = pneg %p749
        %p1553 = pneg %p773
        %p1554 = pneg %p770
        %p1555 = pneg %p794
        %p1556 = pneg %p791
        %p1557 = pneg %p815
        %p1558 = pneg %p812
        %p1559 = pneg %p836
        %p1560 = pneg %p833
        %p1561 = pneg %p862
        %p1562 = pneg %p859
        %s1563 = smul.u32 8, %s86
        %p1564 = scmp.lt.s32.totalorder %s1563, 15
        %s1565 = scalar_select %p1564, %s1563, 15
        %s1566 = smul.addr %s1565, 8
        %s1567 = scalar_lea.vmem %s65, %s1566
        %s1568 = smul.u32 8, %s86
        %p1569 = scmp.lt.s32.totalorder %s1568, 15
        %s1570 = scalar_select %p1569, %s1568, 15
        %s1571 = smul.addr %s1570, 8
        %s1572 = scalar_lea.vmem %s1, %s1571
        %s1573 = smul.u32 8, %s86
        %s1574 = smul.u32 8, %s86
        %p1575 = scmp.lt.s32.totalorder %s1574, 15
        %s1576 = scalar_select %p1575, %s1574, 15
        %s1577 = smul.addr %s1576, 8
        %s1578 = scalar_lea.vmem %s3, %s1577
        %s1579 = smul.u32 8, %s86
        %s1580 = smul.u32 8, %s86
        %p1581 = scmp.lt.s32.totalorder %s1580, 15
        %s1582 = scalar_select %p1581, %s1580, 15
        %s1583 = smul.addr %s1582, 8
        %s1584 = scalar_lea.vmem %s5, %s1583
        %s1585 = smul.u32 8, %s86
        %p1586 = scmp.lt.s32.totalorder %s87, 1
        %s1587 = scalar_select %p1586, %s87, 1
        %s1588 = scalar_lea.vmem %s27, %s1587
        %s1589 = smul.u32 8, %s86
        %p1590 = scmp.lt.s32.totalorder %s1589, 15
        %s1591 = scalar_select %p1590, %s1589, 15
        %s1592 = smul.addr %s1591, 8
        %s1593 = scalar_lea.vmem %s65, %s1592
        %s1594 = smul.u32 8, %s86
        %p1596 = scmp.eq.s32.totalorder %s87, 0
        // Predicated region
        $region241: #{conditional_attention_forward.1} parent=147 // pred_check
          %p1597 = pneg %p1596
        $region242: #{conditional_attention_forward.1} parent=147 // pred_check_branch
          %1599 = sbr.rel (%p1597) target = $region244
        $region243: #{conditional_attention_forward.1} parent=147 // pred_region
          %v1600 = vld [vmem:[%s1584] sm:$0xff]
          %v1601 = vld [vmem:[%s1584 + $0x8] sm:$0xff]
          %v1602 = vld [vmem:[%s1584 + $0x10] sm:$0xff]
          %v1603 = vld [vmem:[%s1584 + $0x18] sm:$0xff]
          %v1604 = vld [vmem:[%s1584 + $0x20] sm:$0xff]
          %v1605 = vld [vmem:[%s1584 + $0x28] sm:$0xff]
          %v1606 = vld [vmem:[%s1584 + $0x30] sm:$0xff]
          %v1607 = vld [vmem:[%s1584 + $0x38] sm:$0xff]
          %v1608 = vld [vmem:[#allocation3] sm:$0x1]
          %1610 = vset.pattern.permute.xlu0 0
          %1611 = vperm.xlu0 %1610, %v1600
          %v1612 = vpop.permute.xlu0 %1611
          %1615 = vset.pattern.permute.xlu0 0
          %1616 = vperm.xlu0 %1615, %v1601
          %v1617 = vpop.permute.xlu0 %1616
          %1620 = vset.pattern.permute.xlu0 0
          %1621 = vperm.xlu0 %1620, %v1602
          %v1622 = vpop.permute.xlu0 %1621
          %1625 = vset.pattern.permute.xlu0 0
          %1626 = vperm.xlu0 %1625, %v1603
          %v1627 = vpop.permute.xlu0 %1626
          %1630 = vset.pattern.permute.xlu0 0
          %1631 = vperm.xlu0 %1630, %v1604
          %v1632 = vpop.permute.xlu0 %1631
          %1635 = vset.pattern.permute.xlu0 0
          %1636 = vperm.xlu0 %1635, %v1605
          %v1637 = vpop.permute.xlu0 %1636
          %1640 = vset.pattern.permute.xlu0 0
          %1641 = vperm.xlu0 %1640, %v1606
          %v1642 = vpop.permute.xlu0 %1641
          %1645 = vset.pattern.permute.xlu0 0
          %1646 = vperm.xlu0 %1645, %v1607
          %v1647 = vpop.permute.xlu0 %1646
          %v1650 = vlaneseq
          %v1651 = vshrl.u32 %v1650, 7
          %v1652 = vsub.s32 0, %v1651
          %v1653 = vrot.slane %v1608, %v1652
          %v1655 = vmul.f32 %v1612, %v1653
          %v1656 = vmul.f32 %v1617, %v1653
          %v1657 = vmul.f32 %v1622, %v1653
          %v1658 = vmul.f32 %v1627, %v1653
          %v1659 = vmul.f32 %v1632, %v1653
          %v1660 = vmul.f32 %v1637, %v1653
          %v1661 = vmul.f32 %v1642, %v1653
          %v1662 = vmul.f32 %v1647, %v1653
          %v1663 = vld [vmem:[%s1572] sm:$0xff]
          %v1664 = vld [vmem:[%s1572 + $0x8] sm:$0xff]
          %v1665 = vld [vmem:[%s1572 + $0x10] sm:$0xff]
          %v1666 = vld [vmem:[%s1572 + $0x18] sm:$0xff]
          %v1667 = vld [vmem:[%s1572 + $0x20] sm:$0xff]
          %v1668 = vld [vmem:[%s1572 + $0x28] sm:$0xff]
          %v1669 = vld [vmem:[%s1572 + $0x30] sm:$0xff]
          %v1670 = vld [vmem:[%s1572 + $0x38] sm:$0xff]
          %v1671 = vpack.c.bf16 %v1664, %v1663
          %v1672 = vpack.c.bf16 %v1666, %v1665
          %v1673 = vpack.c.bf16 %v1668, %v1667
          %v1674 = vpack.c.bf16 %v1670, %v1669
          %v1675 = vld [vmem:[#allocation5] sm:$0xf]
          %v1676 = vld [vmem:[#allocation5 + $0x4] sm:$0xf]
          %v1677 = vld [vmem:[%s1578] sm:$0xff]
          %v1678 = vld [vmem:[%s1578 + $0x8] sm:$0xff]
          %v1679 = vld [vmem:[%s1578 + $0x10] sm:$0xff]
          %v1680 = vld [vmem:[%s1578 + $0x18] sm:$0xff]
          %v1681 = vld [vmem:[%s1578 + $0x20] sm:$0xff]
          %v1682 = vld [vmem:[%s1578 + $0x28] sm:$0xff]
          %v1683 = vld [vmem:[%s1578 + $0x30] sm:$0xff]
          %v1684 = vld [vmem:[%s1578 + $0x38] sm:$0xff]
          %v1685 = vpack.c.bf16 %v1678, %v1677
          %v1686 = vpack.c.bf16 %v1680, %v1679
          %v1687 = vpack.c.bf16 %v1682, %v1681
          %v1688 = vpack.c.bf16 %v1684, %v1683
          %v1689 = vld [vmem:[#allocation7] sm:$0xf]
          %v1690 = vld [vmem:[#allocation7 + $0x4] sm:$0xf]
          %v1691 = vld [vmem:[#allocation7 + $0x8] sm:$0xf]
          %v1692 = vld [vmem:[#allocation7 + $0xc] sm:$0xf]
          %v1693 = vld [vmem:[#allocation7 + $0x10] sm:$0xf]
          %v1694 = vld [vmem:[#allocation7 + $0x14] sm:$0xf]
          %v1695 = vld [vmem:[#allocation7 + $0x18] sm:$0xf]
          %v1696 = vld [vmem:[#allocation7 + $0x1c] sm:$0xf]
          %v1705 = vunpack.c.l.b16 %v1689
          %v1706 = vunpack.c.l.b16 %v1690
          %v1707 = vunpack.c.l.b16 %v1691
          %v1708 = vunpack.c.l.b16 %v1692
          %v1709 = vunpack.c.l.b16 %v1693
          %v1710 = vunpack.c.l.b16 %v1694
          %v1711 = vunpack.c.l.b16 %v1695
          %v1712 = vunpack.c.l.b16 %v1696
          %v1713 = vpack.c.b16 %v1706, %v1705
          %v1714 = vpack.c.b16 %v1708, %v1707
          %v1715 = vpack.c.b16 %v1710, %v1709
          %v1716 = vpack.c.b16 %v1712, %v1711
          %vm1721 = vcmask 523264
          %v1723 = vsel %vm1721, %v1685, 0
          %v1726 = vsel %vm1721, %v1686, 0
          %v1729 = vsel %vm1721, %v1687, 0
          %v1732 = vsel %vm1721, %v1688, 0
          %1734 = vmatprep.subr.bf16.mxu0 0
          %1735 = vmatpush1.bf16.msra.mxu0 %v1713
          %1736 = vmatprep.subr.bf16.mxu0 0
          %1737 = vmatpush1.bf16.msra.mxu0 %v1714
          %1738 = vmatprep.subr.bf16.mxu0 0
          %1739 = vmatpush1.bf16.msra.mxu0 %v1715
          %1740 = vmatprep.subr.bf16.mxu0 0
          %1741 = vmatpush1.bf16.msra.mxu0 %v1716
          %1742 = vmatprep.subr.bf16.mxu0 0
          %1743 = vmatpush1.bf16.msra.mxu0 0
          %1744 = vmatprep.subr.bf16.mxu0 0
          %1745 = vmatpush1.bf16.msra.mxu0 0
          %1746 = vmatprep.subr.bf16.mxu0 0
          %1747 = vmatpush1.bf16.msra.mxu0 0
          %1748 = vmatprep.subr.bf16.mxu0 0
          %1749 = vmatpush1.bf16.msra.mxu0 0
          %1750 = vmatprep.subr.bf16.mxu0 0
          %1751 = vmatpush1.bf16.msra.mxu0 0
          %1752 = vmatprep.subr.bf16.mxu0 0
          %1753 = vmatpush1.bf16.msra.mxu0 0
          %1754 = vmatprep.subr.bf16.mxu0 0
          %1755 = vmatpush1.bf16.msra.mxu0 0
          %1756 = vmatprep.subr.bf16.mxu0 0
          %1757 = vmatpush1.bf16.msra.mxu0 0
          %1758 = vmatprep.subr.bf16.mxu0 0
          %1759 = vmatpush1.bf16.msra.mxu0 0
          %1760 = vmatprep.subr.bf16.mxu0 0
          %1761 = vmatpush1.bf16.msra.mxu0 0
          %1762 = vmatprep.subr.bf16.mxu0 0
          %1763 = vmatpush1.bf16.msra.mxu0 0
          %1764 = vmatprep.subr.bf16.mxu0 0
          %1765 = vmatpush1.bf16.msra.mxu0 0
          %1766 = vmatprep.mubr.bf16.mxu0 0
          %1767 = vmatmul.mubr.bf16.gmra.mrb[0].mxu0 %v1723
          %v1768 = vpop.f32.mrb[0].mxu0
          %v1769 = vadd.f32 0.0, %v1768
          %v1770 = vpop.f32.mrb[0].mxu0
          %v1771 = vpop.f32.mrb[0].mxu0
          %v1772 = vadd.f32 0.0, %v1771
          %v1773 = vpop.f32.mrb[0].mxu0
          %1774 = vmatprep.mubr.bf16.mxu0 0
          %1775 = vmatmul.mubr.bf16.gmra.mrb[0].mxu0 %v1726
          %v1776 = vpop.f32.mrb[0].mxu0
          %v1777 = vadd.f32 0.0, %v1776
          %v1778 = vpop.f32.mrb[0].mxu0
          %v1779 = vpop.f32.mrb[0].mxu0
          %v1780 = vadd.f32 0.0, %v1779
          %v1781 = vpop.f32.mrb[0].mxu0
          %1782 = vmatprep.mubr.bf16.mxu0 0
          %1783 = vmatmul.mubr.bf16.gmra.mrb[0].mxu0 %v1729
          %v1784 = vpop.f32.mrb[0].mxu0
          %v1785 = vadd.f32 0.0, %v1784
          %v1786 = vpop.f32.mrb[0].mxu0
          %v1787 = vpop.f32.mrb[0].mxu0
          %v1788 = vadd.f32 0.0, %v1787
          %v1789 = vpop.f32.mrb[0].mxu0
          %1790 = vmatprep.mubr.bf16.mxu0 0
          %1791 = vmatmul.mubr.bf16.gmra.mrb[0].mxu0 %v1732
          %v1792 = vpop.f32.mrb[0].mxu0
          %v1793 = vadd.f32 0.0, %v1792
          %v1794 = vpop.f32.mrb[0].mxu0
          %v1795 = vpop.f32.mrb[0].mxu0
          %v1796 = vadd.f32 0.0, %v1795
          %v1797 = vpop.f32.mrb[0].mxu0
          %1798 = vdwg.mxu0
          %v1801 = vunpack.c.l.b16 %v1675
          %v1802 = vunpack.c.l.b16 %v1676
          %v1803 = vpack.c.b16 %v1802, %v1801
          %vm1805 = vcmask 130048
          %v1807 = vsel %vm1805, %v1671, 0
          %v1810 = vsel %vm1805, %v1672, 0
          %v1813 = vsel %vm1805, %v1673, 0
          %v1816 = vsel %vm1805, %v1674, 0
          %1818 = vmatprep.subr.bf16.mxu0 0
          %1819 = vmatpush1.bf16.msra.mxu0 %v1803
          %1820 = vmatprep.subr.bf16.mxu0 0
          %1821 = vmatpush1.bf16.msra.mxu0 0
          %1822 = vmatprep.subr.bf16.mxu0 0
          %1823 = vmatpush1.bf16.msra.mxu0 0
          %1824 = vmatprep.subr.bf16.mxu0 0
          %1825 = vmatpush1.bf16.msra.mxu0 0
          %1826 = vmatprep.subr.bf16.mxu0 0
          %1827 = vmatpush1.bf16.msra.mxu0 0
          %1828 = vmatprep.subr.bf16.mxu0 0
          %1829 = vmatpush1.bf16.msra.mxu0 0
          %1830 = vmatprep.subr.bf16.mxu0 0
          %1831 = vmatpush1.bf16.msra.mxu0 0
          %1832 = vmatprep.subr.bf16.mxu0 0
          %1833 = vmatpush1.bf16.msra.mxu0 0
          %1834 = vmatprep.subr.bf16.mxu0 0
          %1835 = vmatpush1.bf16.msra.mxu0 0
          %1836 = vmatprep.subr.bf16.mxu0 0
          %1837 = vmatpush1.bf16.msra.mxu0 0
          %1838 = vmatprep.subr.bf16.mxu0 0
          %1839 = vmatpush1.bf16.msra.mxu0 0
          %1840 = vmatprep.subr.bf16.mxu0 0
          %1841 = vmatpush1.bf16.msra.mxu0 0
          %1842 = vmatprep.subr.bf16.mxu0 0
          %1843 = vmatpush1.bf16.msra.mxu0 0
          %1844 = vmatprep.subr.bf16.mxu0 0
          %1845 = vmatpush1.bf16.msra.mxu0 0
          %1846 = vmatprep.subr.bf16.mxu0 0
          %1847 = vmatpush1.bf16.msra.mxu0 0
          %1848 = vmatprep.subr.bf16.mxu0 0
          %1849 = vmatpush1.bf16.msra.mxu0 0
          %1850 = vmatprep.mubr.bf16.mxu0 0
          %1851 = vmatmul.mubr.bf16.gmra.mrb[0].mxu0 %v1807
          %v1852 = vpop.f32.mrb[0].mxu0
          %v1853 = vadd.f32 %v1769, %v1852
          %v1854 = vpop.f32.mrb[0].mxu0
          %v1855 = vpop.f32.mrb[0].mxu0
          %v1856 = vadd.f32 %v1772, %v1855
          %v1857 = vpop.f32.mrb[0].mxu0
          %1858 = vmatprep.mubr.bf16.mxu0 0
          %1859 = vmatmul.mubr.bf16.gmra.mrb[0].mxu0 %v1810
          %v1860 = vpop.f32.mrb[0].mxu0
          %v1861 = vadd.f32 %v1777, %v1860
          %v1862 = vpop.f32.mrb[0].mxu0
          %v1863 = vpop.f32.mrb[0].mxu0
          %v1864 = vadd.f32 %v1780, %v1863
          %v1865 = vpop.f32.mrb[0].mxu0
          %1866 = vmatprep.mubr.bf16.mxu0 0
          %1867 = vmatmul.mubr.bf16.gmra.mrb[0].mxu0 %v1813
          %v1868 = vpop.f32.mrb[0].mxu0
          %v1869 = vadd.f32 %v1785, %v1868
          %v1870 = vpop.f32.mrb[0].mxu0
          %v1871 = vpop.f32.mrb[0].mxu0
          %v1872 = vadd.f32 %v1788, %v1871
          %v1873 = vpop.f32.mrb[0].mxu0
          %1874 = vmatprep.mubr.bf16.mxu0 0
          %1875 = vmatmul.mubr.bf16.gmra.mrb[0].mxu0 %v1816
          %v1876 = vpop.f32.mrb[0].mxu0
          %v1877 = vadd.f32 %v1793, %v1876
          %v1878 = vpop.f32.mrb[0].mxu0
          %v1879 = vpop.f32.mrb[0].mxu0
          %v1880 = vadd.f32 %v1796, %v1879
          %v1881 = vpop.f32.mrb[0].mxu0
          %1882 = vdwg.mxu0
          %v1883 = vand.u32 2147483647, %v1655
          %vm1884 = vcmp.le.f32.partialorder %v1883, 0.7853982
          %vm1885 = vcmp.lt.s32.totalorder %v1655, 0
          %v1886 = vand.u32 %v1655, 2139095040
          %v1887 = vshrl.u32 %v1886, 23
          %v1888 = vsub.s32 %v1887, 127
          %v1889 = vand.u32 2147483647, %v1655
          %v1890 = vand.u32 %v1889, 8388607
          %v1891 = vor.u32 %v1890, 8388608
          %v1892 = vsub.s32 0, %v1891
          %v1893 = vadd.s32 %v1888, 1
          %vm1894 = vcmp.gt.s32.totalorder %v1893, 0
          %v1895 = vsel %vm1894, %v1893, 0
          %v1896 = vshrl.u32 %v1895, 5
          %v1897 = vand.u32 %v1895, 31
          %v1898 = vsub.s32 32, %v1897
          %v1899 = vshrl.u32 683565275, %v1898
          %v1900 = vshll.u32 683565275, %v1897
          %v1901 = vshrl.u32 2475754826, %v1898
          %v1902 = vor.u32 %v1900, %v1901
          %v1903 = vshll.u32 2475754826, %v1897
          %v1904 = vshrl.u32 2131351028, %v1898
          %v1905 = vor.u32 %v1903, %v1904
          %v1906 = vshll.u32 2131351028, %v1897
          %v1907 = vshrl.u32 2102212464, %v1898
          %v1908 = vor.u32 %v1906, %v1907
          %v1909 = vshll.u32 2102212464, %v1897
          %v1910 = vshrl.u32 920167782, %v1898
          %v1911 = vor.u32 %v1909, %v1910
          %v1912 = vshll.u32 920167782, %v1897
          %v1913 = vshrl.u32 1326507024, %v1898
          %v1914 = vor.u32 %v1912, %v1913
          %vm1915 = vcmp.lt.s32.totalorder %v1896, 1
          %vm1916 = vcmp.lt.s32.totalorder %v1896, 2
          %vm1917 = vcmp.lt.s32.totalorder %v1896, 3
          %vm1918 = vcmp.lt.s32.totalorder %v1896, 4
          %v1919 = vsel %vm1915, %v1899, %v1902
          %v1920 = vsel %vm1918, %v1908, 2102212464
          %v1921 = vsel %vm1917, %v1905, %v1920
          %v1922 = vsel %vm1916, %v1919, %v1921
          %v1923 = vsel %vm1915, %v1902, %v1905
          %v1924 = vsel %vm1918, %v1911, 920167782
          %v1925 = vsel %vm1917, %v1908, %v1924
          %v1926 = vsel %vm1916, %v1923, %v1925
          %v1927 = vsel %vm1915, %v1905, %v1908
          %v1928 = vsel %vm1918, %v1914, 1326507024
          %v1929 = vsel %vm1917, %v1911, %v1928
          %v1930 = vsel %vm1916, %v1927, %v1929
          %v1931 = vshll.u32 %v1891, 8
          %v1932 = vmul.u32.u64.compose %v1931, %v1930
          %v1933 = vextract.low.u32 %v1932
          %v1934 = vextract.high.u32 %v1932
          %v1935 = vmul.u32.u64.compose %v1931, %v1926
          %v1936 = vextract.low.u32 %v1935
          %v1937 = vextract.high.u32 %v1935
          %v1938 = vmul.u32 %v1931, %v1922
          %v1939 = vadd.s32 %v1934, %v1936
          %vm1940 = vc.u32 %v1934, %v1936
          %v1941 = vadd.s32 %v1937, 1
          %v1942 = vsel %vm1940, %v1941, %v1937
          %v1943 = vadd.s32 %v1938, %v1942
          %v1944 = vadd.s32 %v1943, 536870912
          %v1945 = vshrl.u32 %v1944, 30
          %v1946 = vshll.u32 %v1945, 30
          %v1947 = vsub.s32 %v1943, %v1946
          %vm1948 = vcmp.lt.s32.totalorder %v1947, 0
          %v1949 = vsub.s32 0, %v1947
          %v1950 = vsel %vm1948, %v1949, %v1947
          %v1951 = vclz %v1950
          %v1952 = vsub.s32 %v1951, 2
          %vm1953 = vcmp.gt.s32.totalorder 0, %v1952
          %v1954 = vsel %vm1953, 0, %v1952
          %v1955 = vsub.s32 32, %v1954
          %v1956 = vshll.u32 %v1947, %v1954
          %v1957 = vshrl.u32 %v1939, %v1955
          %v1958 = vor.u32 %v1956, %v1957
          %v1959 = vsub.s32 4294967266, %v1954
          %v1960 = vadd.s32 %v1959, 127
          %v1961 = vshll.u32 %v1960, 23
          %v1962 = vor.u32 4788187, %v1961
          %v1963 = vand.u32 2147483647, %v1962
          %v1965 = vcvt.s32.f32 %v1958
          %v1966 = vmul.f32 %v1965, %v1963
          %v1967 = vxor.u32 %v1966, 2147483648
          %v1968 = vsel %vm1885, %v1967, %v1966
          %v1969 = vsub.s32 4, %v1945
          %v1970 = vsel %vm1885, %v1969, %v1945
          %v1971 = vsel %vm1884, %v1655, %v1968
          %v1972 = vsel %vm1884, 0, %v1970
          %v1973 = vcosq.f32.pop %v1971
          %v1974 = vsinq.f32.pop %v1971
          %vm1975 = vweird.f32 %v1655
          %v1976 = vand.u32 %v1972, 3
          %vm1977 = vcmp.lt.s32.totalorder %v1976, 2
          %vm1978 = vcmp.eq.s32.totalorder %v1976, 0
          %v1979 = vxor.u32 %v1974, 2147483648
          %v1980 = vsel %vm1978, %v1973, %v1979
          %vm1981 = vcmp.eq.s32.totalorder %v1976, 2
          %v1982 = vxor.u32 %v1973, 2147483648
          %v1983 = vsel %vm1981, %v1982, %v1974
          %v1984 = vsel %vm1977, %v1980, %v1983
          %v1985 = vsel %vm1975, nan, %v1984
          %v1986 = vand.u32 2147483647, %v1656
          %vm1987 = vcmp.le.f32.partialorder %v1986, 0.7853982
          %vm1988 = vcmp.lt.s32.totalorder %v1656, 0
          %v1989 = vand.u32 %v1656, 2139095040
          %v1990 = vshrl.u32 %v1989, 23
          %v1991 = vsub.s32 %v1990, 127
          %v1992 = vand.u32 2147483647, %v1656
          %v1993 = vand.u32 %v1992, 8388607
          %v1994 = vor.u32 %v1993, 8388608
          %v1995 = vsub.s32 0, %v1994
          %v1996 = vadd.s32 %v1991, 1
          %vm1997 = vcmp.gt.s32.totalorder %v1996, 0
          %v1998 = vsel %vm1997, %v1996, 0
          %v1999 = vshrl.u32 %v1998, 5
          %v2000 = vand.u32 %v1998, 31
          %v2001 = vsub.s32 32, %v2000
          %v2002 = vshrl.u32 683565275, %v2001
          %v2003 = vshll.u32 683565275, %v2000
          %v2004 = vshrl.u32 2475754826, %v2001
          %v2005 = vor.u32 %v2003, %v2004
          %v2006 = vshll.u32 2475754826, %v2000
          %v2007 = vshrl.u32 2131351028, %v2001
          %v2008 = vor.u32 %v2006, %v2007
          %v2009 = vshll.u32 2131351028, %v2000
          %v2010 = vshrl.u32 2102212464, %v2001
          %v2011 = vor.u32 %v2009, %v2010
          %v2012 = vshll.u32 2102212464, %v2000
          %v2013 = vshrl.u32 920167782, %v2001
          %v2014 = vor.u32 %v2012, %v2013
          %v2015 = vshll.u32 920167782, %v2000
          %v2016 = vshrl.u32 1326507024, %v2001
          %v2017 = vor.u32 %v2015, %v2016
          %vm2018 = vcmp.lt.s32.totalorder %v1999, 1
          %vm2019 = vcmp.lt.s32.totalorder %v1999, 2
          %vm2020 = vcmp.lt.s32.totalorder %v1999, 3
          %vm2021 = vcmp.lt.s32.totalorder %v1999, 4
          %v2022 = vsel %vm2018, %v2002, %v2005
          %v2023 = vsel %vm2021, %v2011, 2102212464
          %v2024 = vsel %vm2020, %v2008, %v2023
          %v2025 = vsel %vm2019, %v2022, %v2024
          %v2026 = vsel %vm2018, %v2005, %v2008
          %v2027 = vsel %vm2021, %v2014, 920167782
          %v2028 = vsel %vm2020, %v2011, %v2027
          %v2029 = vsel %vm2019, %v2026, %v2028
          %v2030 = vsel %vm2018, %v2008, %v2011
          %v2031 = vsel %vm2021, %v2017, 1326507024
          %v2032 = vsel %vm2020, %v2014, %v2031
          %v2033 = vsel %vm2019, %v2030, %v2032
          %v2034 = vshll.u32 %v1994, 8
          %v2035 = vmul.u32.u64.compose %v2034, %v2033
          %v2036 = vextract.low.u32 %v2035
          %v2037 = vextract.high.u32 %v2035
          %v2038 = vmul.u32.u64.compose %v2034, %v2029
          %v2039 = vextract.low.u32 %v2038
          %v2040 = vextract.high.u32 %v2038
          %v2041 = vmul.u32 %v2034, %v2025
          %v2042 = vadd.s32 %v2037, %v2039
          %vm2043 = vc.u32 %v2037, %v2039
          %v2044 = vadd.s32 %v2040, 1
          %v2045 = vsel %vm2043, %v2044, %v2040
          %v2046 = vadd.s32 %v2041, %v2045
          %v2047 = vadd.s32 %v2046, 536870912
          %v2048 = vshrl.u32 %v2047, 30
          %v2049 = vshll.u32 %v2048, 30
          %v2050 = vsub.s32 %v2046, %v2049
          %vm2051 = vcmp.lt.s32.totalorder %v2050, 0
          %v2052 = vsub.s32 0, %v2050
          %v2053 = vsel %vm2051, %v2052, %v2050
          %v2054 = vclz %v2053
          %v2055 = vsub.s32 %v2054, 2
          %vm2056 = vcmp.gt.s32.totalorder 0, %v2055
          %v2057 = vsel %vm2056, 0, %v2055
          %v2058 = vsub.s32 32, %v2057
          %v2059 = vshll.u32 %v2050, %v2057
          %v2060 = vshrl.u32 %v2042, %v2058
          %v2061 = vor.u32 %v2059, %v2060
          %v2062 = vsub.s32 4294967266, %v2057
          %v2063 = vadd.s32 %v2062, 127
          %v2064 = vshll.u32 %v2063, 23
          %v2065 = vor.u32 4788187, %v2064
          %v2066 = vand.u32 2147483647, %v2065
          %v2068 = vcvt.s32.f32 %v2061
          %v2069 = vmul.f32 %v2068, %v2066
          %v2070 = vxor.u32 %v2069, 2147483648
          %v2071 = vsel %vm1988, %v2070, %v2069
          %v2072 = vsub.s32 4, %v2048
          %v2073 = vsel %vm1988, %v2072, %v2048
          %v2074 = vsel %vm1987, %v1656, %v2071
          %v2075 = vsel %vm1987, 0, %v2073
          %v2076 = vcosq.f32.pop %v2074
          %v2077 = vsinq.f32.pop %v2074
          %vm2078 = vweird.f32 %v1656
          %v2079 = vand.u32 %v2075, 3
          %vm2080 = vcmp.lt.s32.totalorder %v2079, 2
          %vm2081 = vcmp.eq.s32.totalorder %v2079, 0
          %v2082 = vxor.u32 %v2077, 2147483648
          %v2083 = vsel %vm2081, %v2076, %v2082
          %vm2084 = vcmp.eq.s32.totalorder %v2079, 2
          %v2085 = vxor.u32 %v2076, 2147483648
          %v2086 = vsel %vm2084, %v2085, %v2077
          %v2087 = vsel %vm2080, %v2083, %v2086
          %v2088 = vsel %vm2078, nan, %v2087
          %v2089 = vand.u32 2147483647, %v1657
          %vm2090 = vcmp.le.f32.partialorder %v2089, 0.7853982
          %vm2091 = vcmp.lt.s32.totalorder %v1657, 0
          %v2092 = vand.u32 %v1657, 2139095040
          %v2093 = vshrl.u32 %v2092, 23
          %v2094 = vsub.s32 %v2093, 127
          %v2095 = vand.u32 2147483647, %v1657
          %v2096 = vand.u32 %v2095, 8388607
          %v2097 = vor.u32 %v2096, 8388608
          %v2098 = vsub.s32 0, %v2097
          %v2099 = vadd.s32 %v2094, 1
          %vm2100 = vcmp.gt.s32.totalorder %v2099, 0
          %v2101 = vsel %vm2100, %v2099, 0
          %v2102 = vshrl.u32 %v2101, 5
          %v2103 = vand.u32 %v2101, 31
          %v2104 = vsub.s32 32, %v2103
          %v2105 = vshrl.u32 683565275, %v2104
          %v2106 = vshll.u32 683565275, %v2103
          %v2107 = vshrl.u32 2475754826, %v2104
          %v2108 = vor.u32 %v2106, %v2107
          %v2109 = vshll.u32 2475754826, %v2103
          %v2110 = vshrl.u32 2131351028, %v2104
          %v2111 = vor.u32 %v2109, %v2110
          %v2112 = vshll.u32 2131351028, %v2103
          %v2113 = vshrl.u32 2102212464, %v2104
          %v2114 = vor.u32 %v2112, %v2113
          %v2115 = vshll.u32 2102212464, %v2103
          %v2116 = vshrl.u32 920167782, %v2104
          %v2117 = vor.u32 %v2115, %v2116
          %v2118 = vshll.u32 920167782, %v2103
          %v2119 = vshrl.u32 1326507024, %v2104
          %v2120 = vor.u32 %v2118, %v2119
          %vm2121 = vcmp.lt.s32.totalorder %v2102, 1
          %vm2122 = vcmp.lt.s32.totalorder %v2102, 2
          %vm2123 = vcmp.lt.s32.totalorder %v2102, 3
          %vm2124 = vcmp.lt.s32.totalorder %v2102, 4
          %v2125 = vsel %vm2121, %v2105, %v2108
          %v2126 = vsel %vm2124, %v2114, 2102212464
          %v2127 = vsel %vm2123, %v2111, %v2126
          %v2128 = vsel %vm2122, %v2125, %v2127
          %v2129 = vsel %vm2121, %v2108, %v2111
          %v2130 = vsel %vm2124, %v2117, 920167782
          %v2131 = vsel %vm2123, %v2114, %v2130
          %v2132 = vsel %vm2122, %v2129, %v2131
          %v2133 = vsel %vm2121, %v2111, %v2114
          %v2134 = vsel %vm2124, %v2120, 1326507024
          %v2135 = vsel %vm2123, %v2117, %v2134
          %v2136 = vsel %vm2122, %v2133, %v2135
          %v2137 = vshll.u32 %v2097, 8
          %v2138 = vmul.u32.u64.compose %v2137, %v2136
          %v2139 = vextract.low.u32 %v2138
          %v2140 = vextract.high.u32 %v2138
          %v2141 = vmul.u32.u64.compose %v2137, %v2132
          %v2142 = vextract.low.u32 %v2141
          %v2143 = vextract.high.u32 %v2141
          %v2144 = vmul.u32 %v2137, %v2128
          %v2145 = vadd.s32 %v2140, %v2142
          %vm2146 = vc.u32 %v2140, %v2142
          %v2147 = vadd.s32 %v2143, 1
          %v2148 = vsel %vm2146, %v2147, %v2143
          %v2149 = vadd.s32 %v2144, %v2148
          %v2150 = vadd.s32 %v2149, 536870912
          %v2151 = vshrl.u32 %v2150, 30
          %v2152 = vshll.u32 %v2151, 30
          %v2153 = vsub.s32 %v2149, %v2152
          %vm2154 = vcmp.lt.s32.totalorder %v2153, 0
          %v2155 = vsub.s32 0, %v2153
          %v2156 = vsel %vm2154, %v2155, %v2153
          %v2157 = vclz %v2156
          %v2158 = vsub.s32 %v2157, 2
          %vm2159 = vcmp.gt.s32.totalorder 0, %v2158
          %v2160 = vsel %vm2159, 0, %v2158
          %v2161 = vsub.s32 32, %v2160
          %v2162 = vshll.u32 %v2153, %v2160
          %v2163 = vshrl.u32 %v2145, %v2161
          %v2164 = vor.u32 %v2162, %v2163
          %v2165 = vsub.s32 4294967266, %v2160
          %v2166 = vadd.s32 %v2165, 127
          %v2167 = vshll.u32 %v2166, 23
          %v2168 = vor.u32 4788187, %v2167
          %v2169 = vand.u32 2147483647, %v2168
          %v2171 = vcvt.s32.f32 %v2164
          %v2172 = vmul.f32 %v2171, %v2169
          %v2173 = vxor.u32 %v2172, 2147483648
          %v2174 = vsel %vm2091, %v2173, %v2172
          %v2175 = vsub.s32 4, %v2151
          %v2176 = vsel %vm2091, %v2175, %v2151
          %v2177 = vsel %vm2090, %v1657, %v2174
          %v2178 = vsel %vm2090, 0, %v2176
          %v2179 = vcosq.f32.pop %v2177
          %v2180 = vsinq.f32.pop %v2177
          %vm2181 = vweird.f32 %v1657
          %v2182 = vand.u32 %v2178, 3
          %vm2183 = vcmp.lt.s32.totalorder %v2182, 2
          %vm2184 = vcmp.eq.s32.totalorder %v2182, 0
          %v2185 = vxor.u32 %v2180, 2147483648
          %v2186 = vsel %vm2184, %v2179, %v2185
          %vm2187 = vcmp.eq.s32.totalorder %v2182, 2
          %v2188 = vxor.u32 %v2179, 2147483648
          %v2189 = vsel %vm2187, %v2188, %v2180
          %v2190 = vsel %vm2183, %v2186, %v2189
          %v2191 = vsel %vm2181, nan, %v2190
          %v2192 = vand.u32 2147483647, %v1658
          %vm2193 = vcmp.le.f32.partialorder %v2192, 0.7853982
          %vm2194 = vcmp.lt.s32.totalorder %v1658, 0
          %v2195 = vand.u32 %v1658, 2139095040
          %v2196 = vshrl.u32 %v2195, 23
          %v2197 = vsub.s32 %v2196, 127
          %v2198 = vand.u32 2147483647, %v1658
          %v2199 = vand.u32 %v2198, 8388607
          %v2200 = vor.u32 %v2199, 8388608
          %v2201 = vsub.s32 0, %v2200
          %v2202 = vadd.s32 %v2197, 1
          %vm2203 = vcmp.gt.s32.totalorder %v2202, 0
          %v2204 = vsel %vm2203, %v2202, 0
          %v2205 = vshrl.u32 %v2204, 5
          %v2206 = vand.u32 %v2204, 31
          %v2207 = vsub.s32 32, %v2206
          %v2208 = vshrl.u32 683565275, %v2207
          %v2209 = vshll.u32 683565275, %v2206
          %v2210 = vshrl.u32 2475754826, %v2207
          %v2211 = vor.u32 %v2209, %v2210
          %v2212 = vshll.u32 2475754826, %v2206
          %v2213 = vshrl.u32 2131351028, %v2207
          %v2214 = vor.u32 %v2212, %v2213
          %v2215 = vshll.u32 2131351028, %v2206
          %v2216 = vshrl.u32 2102212464, %v2207
          %v2217 = vor.u32 %v2215, %v2216
          %v2218 = vshll.u32 2102212464, %v2206
          %v2219 = vshrl.u32 920167782, %v2207
          %v2220 = vor.u32 %v2218, %v2219
          %v2221 = vshll.u32 920167782, %v2206
          %v2222 = vshrl.u32 1326507024, %v2207
          %v2223 = vor.u32 %v2221, %v2222
          %vm2224 = vcmp.lt.s32.totalorder %v2205, 1
          %vm2225 = vcmp.lt.s32.totalorder %v2205, 2
          %vm2226 = vcmp.lt.s32.totalorder %v2205, 3
          %vm2227 = vcmp.lt.s32.totalorder %v2205, 4
          %v2228 = vsel %vm2224, %v2208, %v2211
          %v2229 = vsel %vm2227, %v2217, 2102212464
          %v2230 = vsel %vm2226, %v2214, %v2229
          %v2231 = vsel %vm2225, %v2228, %v2230
          %v2232 = vsel %vm2224, %v2211, %v2214
          %v2233 = vsel %vm2227, %v2220, 920167782
          %v2234 = vsel %vm2226, %v2217, %v2233
          %v2235 = vsel %vm2225, %v2232, %v2234
          %v2236 = vsel %vm2224, %v2214, %v2217
          %v2237 = vsel %vm2227, %v2223, 1326507024
          %v2238 = vsel %vm2226, %v2220, %v2237
          %v2239 = vsel %vm2225, %v2236, %v2238
          %v2240 = vshll.u32 %v2200, 8
          %v2241 = vmul.u32.u64.compose %v2240, %v2239
          %v2242 = vextract.low.u32 %v2241
          %v2243 = vextract.high.u32 %v2241
          %v2244 = vmul.u32.u64.compose %v2240, %v2235
          %v2245 = vextract.low.u32 %v2244
          %v2246 = vextract.high.u32 %v2244
          %v2247 = vmul.u32 %v2240, %v2231
          %v2248 = vadd.s32 %v2243, %v2245
          %vm2249 = vc.u32 %v2243, %v2245
          %v2250 = vadd.s32 %v2246, 1
          %v2251 = vsel %vm2249, %v2250, %v2246
          %v2252 = vadd.s32 %v2247, %v2251
          %v2253 = vadd.s32 %v2252, 536870912
          %v2254 = vshrl.u32 %v2253, 30
          %v2255 = vshll.u32 %v2254, 30
          %v2256 = vsub.s32 %v2252, %v2255
          %vm2257 = vcmp.lt.s32.totalorder %v2256, 0
          %v2258 = vsub.s32 0, %v2256
          %v2259 = vsel %vm2257, %v2258, %v2256
          %v2260 = vclz %v2259
          %v2261 = vsub.s32 %v2260, 2
          %vm2262 = vcmp.gt.s32.totalorder 0, %v2261
          %v2263 = vsel %vm2262, 0, %v2261
          %v2264 = vsub.s32 32, %v2263
          %v2265 = vshll.u32 %v2256, %v2263
          %v2266 = vshrl.u32 %v2248, %v2264
          %v2267 = vor.u32 %v2265, %v2266
          %v2268 = vsub.s32 4294967266, %v2263
          %v2269 = vadd.s32 %v2268, 127
          %v2270 = vshll.u32 %v2269, 23
          %v2271 = vor.u32 4788187, %v2270
          %v2272 = vand.u32 2147483647, %v2271
          %v2274 = vcvt.s32.f32 %v2267
          %v2275 = vmul.f32 %v2274, %v2272
          %v2276 = vxor.u32 %v2275, 2147483648
          %v2277 = vsel %vm2194, %v2276, %v2275
          %v2278 = vsub.s32 4, %v2254
          %v2279 = vsel %vm2194, %v2278, %v2254
          %v2280 = vsel %vm2193, %v1658, %v2277
          %v2281 = vsel %vm2193, 0, %v2279
          %v2282 = vcosq.f32.pop %v2280
          %v2283 = vsinq.f32.pop %v2280
          %vm2284 = vweird.f32 %v1658
          %v2285 = vand.u32 %v2281, 3
          %vm2286 = vcmp.lt.s32.totalorder %v2285, 2
          %vm2287 = vcmp.eq.s32.totalorder %v2285, 0
          %v2288 = vxor.u32 %v2283, 2147483648
          %v2289 = vsel %vm2287, %v2282, %v2288
          %vm2290 = vcmp.eq.s32.totalorder %v2285, 2
          %v2291 = vxor.u32 %v2282, 2147483648
          %v2292 = vsel %vm2290, %v2291, %v2283
          %v2293 = vsel %vm2286, %v2289, %v2292
          %v2294 = vsel %vm2284, nan, %v2293
          %v2295 = vand.u32 2147483647, %v1659
          %vm2296 = vcmp.le.f32.partialorder %v2295, 0.7853982
          %vm2297 = vcmp.lt.s32.totalorder %v1659, 0
          %v2298 = vand.u32 %v1659, 2139095040
          %v2299 = vshrl.u32 %v2298, 23
          %v2300 = vsub.s32 %v2299, 127
          %v2301 = vand.u32 2147483647, %v1659
          %v2302 = vand.u32 %v2301, 8388607
          %v2303 = vor.u32 %v2302, 8388608
          %v2304 = vsub.s32 0, %v2303
          %v2305 = vadd.s32 %v2300, 1
          %vm2306 = vcmp.gt.s32.totalorder %v2305, 0
          %v2307 = vsel %vm2306, %v2305, 0
          %v2308 = vshrl.u32 %v2307, 5
          %v2309 = vand.u32 %v2307, 31
          %v2310 = vsub.s32 32, %v2309
          %v2311 = vshrl.u32 683565275, %v2310
          %v2312 = vshll.u32 683565275, %v2309
          %v2313 = vshrl.u32 2475754826, %v2310
          %v2314 = vor.u32 %v2312, %v2313
          %v2315 = vshll.u32 2475754826, %v2309
          %v2316 = vshrl.u32 2131351028, %v2310
          %v2317 = vor.u32 %v2315, %v2316
          %v2318 = vshll.u32 2131351028, %v2309
          %v2319 = vshrl.u32 2102212464, %v2310
          %v2320 = vor.u32 %v2318, %v2319
          %v2321 = vshll.u32 2102212464, %v2309
          %v2322 = vshrl.u32 920167782, %v2310
          %v2323 = vor.u32 %v2321, %v2322
          %v2324 = vshll.u32 920167782, %v2309
          %v2325 = vshrl.u32 1326507024, %v2310
          %v2326 = vor.u32 %v2324, %v2325
          %vm2327 = vcmp.lt.s32.totalorder %v2308, 1
          %vm2328 = vcmp.lt.s32.totalorder %v2308, 2
          %vm2329 = vcmp.lt.s32.totalorder %v2308, 3
          %vm2330 = vcmp.lt.s32.totalorder %v2308, 4
          %v2331 = vsel %vm2327, %v2311, %v2314
          %v2332 = vsel %vm2330, %v2320, 2102212464
          %v2333 = vsel %vm2329, %v2317, %v2332
          %v2334 = vsel %vm2328, %v2331, %v2333
          %v2335 = vsel %vm2327, %v2314, %v2317
          %v2336 = vsel %vm2330, %v2323, 920167782
          %v2337 = vsel %vm2329, %v2320, %v2336
          %v2338 = vsel %vm2328, %v2335, %v2337
          %v2339 = vsel %vm2327, %v2317, %v2320
          %v2340 = vsel %vm2330, %v2326, 1326507024
          %v2341 = vsel %vm2329, %v2323, %v2340
          %v2342 = vsel %vm2328, %v2339, %v2341
          %v2343 = vshll.u32 %v2303, 8
          %v2344 = vmul.u32.u64.compose %v2343, %v2342
          %v2345 = vextract.low.u32 %v2344
          %v2346 = vextract.high.u32 %v2344
          %v2347 = vmul.u32.u64.compose %v2343, %v2338
          %v2348 = vextract.low.u32 %v2347
          %v2349 = vextract.high.u32 %v2347
          %v2350 = vmul.u32 %v2343, %v2334
          %v2351 = vadd.s32 %v2346, %v2348
          %vm2352 = vc.u32 %v2346, %v2348
          %v2353 = vadd.s32 %v2349, 1
          %v2354 = vsel %vm2352, %v2353, %v2349
          %v2355 = vadd.s32 %v2350, %v2354
          %v2356 = vadd.s32 %v2355, 536870912
          %v2357 = vshrl.u32 %v2356, 30
          %v2358 = vshll.u32 %v2357, 30
          %v2359 = vsub.s32 %v2355, %v2358
          %vm2360 = vcmp.lt.s32.totalorder %v2359, 0
          %v2361 = vsub.s32 0, %v2359
          %v2362 = vsel %vm2360, %v2361, %v2359
          %v2363 = vclz %v2362
          %v2364 = vsub.s32 %v2363, 2
          %vm2365 = vcmp.gt.s32.totalorder 0, %v2364
          %v2366 = vsel %vm2365, 0, %v2364
          %v2367 = vsub.s32 32, %v2366
          %v2368 = vshll.u32 %v2359, %v2366
          %v2369 = vshrl.u32 %v2351, %v2367
          %v2370 = vor.u32 %v2368, %v2369
          %v2371 = vsub.s32 4294967266, %v2366
          %v2372 = vadd.s32 %v2371, 127
          %v2373 = vshll.u32 %v2372, 23
          %v2374 = vor.u32 4788187, %v2373
          %v2375 = vand.u32 2147483647, %v2374
          %v2377 = vcvt.s32.f32 %v2370
          %v2378 = vmul.f32 %v2377, %v2375
          %v2379 = vxor.u32 %v2378, 2147483648
          %v2380 = vsel %vm2297, %v2379, %v2378
          %v2381 = vsub.s32 4, %v2357
          %v2382 = vsel %vm2297, %v2381, %v2357
          %v2383 = vsel %vm2296, %v1659, %v2380
          %v2384 = vsel %vm2296, 0, %v2382
          %v2385 = vcosq.f32.pop %v2383
          %v2386 = vsinq.f32.pop %v2383
          %vm2387 = vweird.f32 %v1659
          %v2388 = vand.u32 %v2384, 3
          %vm2389 = vcmp.lt.s32.totalorder %v2388, 2
          %vm2390 = vcmp.eq.s32.totalorder %v2388, 0
          %v2391 = vxor.u32 %v2386, 2147483648
          %v2392 = vsel %vm2390, %v2385, %v2391
          %vm2393 = vcmp.eq.s32.totalorder %v2388, 2
          %v2394 = vxor.u32 %v2385, 2147483648
          %v2395 = vsel %vm2393, %v2394, %v2386
          %v2396 = vsel %vm2389, %v2392, %v2395
          %v2397 = vsel %vm2387, nan, %v2396
          %v2398 = vand.u32 2147483647, %v1660
          %vm2399 = vcmp.le.f32.partialorder %v2398, 0.7853982
          %vm2400 = vcmp.lt.s32.totalorder %v1660, 0
          %v2401 = vand.u32 %v1660, 2139095040
          %v2402 = vshrl.u32 %v2401, 23
          %v2403 = vsub.s32 %v2402, 127
          %v2404 = vand.u32 2147483647, %v1660
          %v2405 = vand.u32 %v2404, 8388607
          %v2406 = vor.u32 %v2405, 8388608
          %v2407 = vsub.s32 0, %v2406
          %v2408 = vadd.s32 %v2403, 1
          %vm2409 = vcmp.gt.s32.totalorder %v2408, 0
          %v2410 = vsel %vm2409, %v2408, 0
          %v2411 = vshrl.u32 %v2410, 5
          %v2412 = vand.u32 %v2410, 31
          %v2413 = vsub.s32 32, %v2412
          %v2414 = vshrl.u32 683565275, %v2413
          %v2415 = vshll.u32 683565275, %v2412
          %v2416 = vshrl.u32 2475754826, %v2413
          %v2417 = vor.u32 %v2415, %v2416
          %v2418 = vshll.u32 2475754826, %v2412
          %v2419 = vshrl.u32 2131351028, %v2413
          %v2420 = vor.u32 %v2418, %v2419
          %v2421 = vshll.u32 2131351028, %v2412
          %v2422 = vshrl.u32 2102212464, %v2413
          %v2423 = vor.u32 %v2421, %v2422
          %v2424 = vshll.u32 2102212464, %v2412
          %v2425 = vshrl.u32 920167782, %v2413
          %v2426 = vor.u32 %v2424, %v2425
          %v2427 = vshll.u32 920167782, %v2412
          %v2428 = vshrl.u32 1326507024, %v2413
          %v2429 = vor.u32 %v2427, %v2428
          %vm2430 = vcmp.lt.s32.totalorder %v2411, 1
          %vm2431 = vcmp.lt.s32.totalorder %v2411, 2
          %vm2432 = vcmp.lt.s32.totalorder %v2411, 3
          %vm2433 = vcmp.lt.s32.totalorder %v2411, 4
          %v2434 = vsel %vm2430, %v2414, %v2417
          %v2435 = vsel %vm2433, %v2423, 2102212464
          %v2436 = vsel %vm2432, %v2420, %v2435
          %v2437 = vsel %vm2431, %v2434, %v2436
          %v2438 = vsel %vm2430, %v2417, %v2420
          %v2439 = vsel %vm2433, %v2426, 920167782
          %v2440 = vsel %vm2432, %v2423, %v2439
          %v2441 = vsel %vm2431, %v2438, %v2440
          %v2442 = vsel %vm2430, %v2420, %v2423
          %v2443 = vsel %vm2433, %v2429, 1326507024
          %v2444 = vsel %vm2432, %v2426, %v2443
          %v2445 = vsel %vm2431, %v2442, %v2444
          %v2446 = vshll.u32 %v2406, 8
          %v2447 = vmul.u32.u64.compose %v2446, %v2445
          %v2448 = vextract.low.u32 %v2447
          %v2449 = vextract.high.u32 %v2447
          %v2450 = vmul.u32.u64.compose %v2446, %v2441
          %v2451 = vextract.low.u32 %v2450
          %v2452 = vextract.high.u32 %v2450
          %v2453 = vmul.u32 %v2446, %v2437
          %v2454 = vadd.s32 %v2449, %v2451
          %vm2455 = vc.u32 %v2449, %v2451
          %v2456 = vadd.s32 %v2452, 1
          %v2457 = vsel %vm2455, %v2456, %v2452
          %v2458 = vadd.s32 %v2453, %v2457
          %v2459 = vadd.s32 %v2458, 536870912
          %v2460 = vshrl.u32 %v2459, 30
          %v2461 = vshll.u32 %v2460, 30
          %v2462 = vsub.s32 %v2458, %v2461
          %vm2463 = vcmp.lt.s32.totalorder %v2462, 0
          %v2464 = vsub.s32 0, %v2462
          %v2465 = vsel %vm2463, %v2464, %v2462
          %v2466 = vclz %v2465
          %v2467 = vsub.s32 %v2466, 2
          %vm2468 = vcmp.gt.s32.totalorder 0, %v2467
          %v2469 = vsel %vm2468, 0, %v2467
          %v2470 = vsub.s32 32, %v2469
          %v2471 = vshll.u32 %v2462, %v2469
          %v2472 = vshrl.u32 %v2454, %v2470
          %v2473 = vor.u32 %v2471, %v2472
          %v2474 = vsub.s32 4294967266, %v2469
          %v2475 = vadd.s32 %v2474, 127
          %v2476 = vshll.u32 %v2475, 23
          %v2477 = vor.u32 4788187, %v2476
          %v2478 = vand.u32 2147483647, %v2477
          %v2480 = vcvt.s32.f32 %v2473
          %v2481 = vmul.f32 %v2480, %v2478
          %v2482 = vxor.u32 %v2481, 2147483648
          %v2483 = vsel %vm2400, %v2482, %v2481
          %v2484 = vsub.s32 4, %v2460
          %v2485 = vsel %vm2400, %v2484, %v2460
          %v2486 = vsel %vm2399, %v1660, %v2483
          %v2487 = vsel %vm2399, 0, %v2485
          %v2488 = vcosq.f32.pop %v2486
          %v2489 = vsinq.f32.pop %v2486
          %vm2490 = vweird.f32 %v1660
          %v2491 = vand.u32 %v2487, 3
          %vm2492 = vcmp.lt.s32.totalorder %v2491, 2
          %vm2493 = vcmp.eq.s32.totalorder %v2491, 0
          %v2494 = vxor.u32 %v2489, 2147483648
          %v2495 = vsel %vm2493, %v2488, %v2494
          %vm2496 = vcmp.eq.s32.totalorder %v2491, 2
          %v2497 = vxor.u32 %v2488, 2147483648
          %v2498 = vsel %vm2496, %v2497, %v2489
          %v2499 = vsel %vm2492, %v2495, %v2498
          %v2500 = vsel %vm2490, nan, %v2499
          %v2501 = vand.u32 2147483647, %v1661
          %vm2502 = vcmp.le.f32.partialorder %v2501, 0.7853982
          %vm2503 = vcmp.lt.s32.totalorder %v1661, 0
          %v2504 = vand.u32 %v1661, 2139095040
          %v2505 = vshrl.u32 %v2504, 23
          %v2506 = vsub.s32 %v2505, 127
          %v2507 = vand.u32 2147483647, %v1661
          %v2508 = vand.u32 %v2507, 8388607
          %v2509 = vor.u32 %v2508, 8388608
          %v2510 = vsub.s32 0, %v2509
          %v2511 = vadd.s32 %v2506, 1
          %vm2512 = vcmp.gt.s32.totalorder %v2511, 0
          %v2513 = vsel %vm2512, %v2511, 0
          %v2514 = vshrl.u32 %v2513, 5
          %v2515 = vand.u32 %v2513, 31
          %v2516 = vsub.s32 32, %v2515
          %v2517 = vshrl.u32 683565275, %v2516
          %v2518 = vshll.u32 683565275, %v2515
          %v2519 = vshrl.u32 2475754826, %v2516
          %v2520 = vor.u32 %v2518, %v2519
          %v2521 = vshll.u32 2475754826, %v2515
          %v2522 = vshrl.u32 2131351028, %v2516
          %v2523 = vor.u32 %v2521, %v2522
          %v2524 = vshll.u32 2131351028, %v2515
          %v2525 = vshrl.u32 2102212464, %v2516
          %v2526 = vor.u32 %v2524, %v2525
          %v2527 = vshll.u32 2102212464, %v2515
          %v2528 = vshrl.u32 920167782, %v2516
          %v2529 = vor.u32 %v2527, %v2528
          %v2530 = vshll.u32 920167782, %v2515
          %v2531 = vshrl.u32 1326507024, %v2516
          %v2532 = vor.u32 %v2530, %v2531
          %vm2533 = vcmp.lt.s32.totalorder %v2514, 1
          %vm2534 = vcmp.lt.s32.totalorder %v2514, 2
          %vm2535 = vcmp.lt.s32.totalorder %v2514, 3
          %vm2536 = vcmp.lt.s32.totalorder %v2514, 4
          %v2537 = vsel %vm2533, %v2517, %v2520
          %v2538 = vsel %vm2536, %v2526, 2102212464
          %v2539 = vsel %vm2535, %v2523, %v2538
          %v2540 = vsel %vm2534, %v2537, %v2539
          %v2541 = vsel %vm2533, %v2520, %v2523
          %v2542 = vsel %vm2536, %v2529, 920167782
          %v2543 = vsel %vm2535, %v2526, %v2542
          %v2544 = vsel %vm2534, %v2541, %v2543
          %v2545 = vsel %vm2533, %v2523, %v2526
          %v2546 = vsel %vm2536, %v2532, 1326507024
          %v2547 = vsel %vm2535, %v2529, %v2546
          %v2548 = vsel %vm2534, %v2545, %v2547
          %v2549 = vshll.u32 %v2509, 8
          %v2550 = vmul.u32.u64.compose %v2549, %v2548
          %v2551 = vextract.low.u32 %v2550
          %v2552 = vextract.high.u32 %v2550
          %v2553 = vmul.u32.u64.compose %v2549, %v2544
          %v2554 = vextract.low.u32 %v2553
          %v2555 = vextract.high.u32 %v2553
          %v2556 = vmul.u32 %v2549, %v2540
          %v2557 = vadd.s32 %v2552, %v2554
          %vm2558 = vc.u32 %v2552, %v2554
          %v2559 = vadd.s32 %v2555, 1
          %v2560 = vsel %vm2558, %v2559, %v2555
          %v2561 = vadd.s32 %v2556, %v2560
          %v2562 = vadd.s32 %v2561, 536870912
          %v2563 = vshrl.u32 %v2562, 30
          %v2564 = vshll.u32 %v2563, 30
          %v2565 = vsub.s32 %v2561, %v2564
          %vm2566 = vcmp.lt.s32.totalorder %v2565, 0
          %v2567 = vsub.s32 0, %v2565
          %v2568 = vsel %vm2566, %v2567, %v2565
          %v2569 = vclz %v2568
          %v2570 = vsub.s32 %v2569, 2
          %vm2571 = vcmp.gt.s32.totalorder 0, %v2570
          %v2572 = vsel %vm2571, 0, %v2570
          %v2573 = vsub.s32 32, %v2572
          %v2574 = vshll.u32 %v2565, %v2572
          %v2575 = vshrl.u32 %v2557, %v2573
          %v2576 = vor.u32 %v2574, %v2575
          %v2577 = vsub.s32 4294967266, %v2572
          %v2578 = vadd.s32 %v2577, 127
          %v2579 = vshll.u32 %v2578, 23
          %v2580 = vor.u32 4788187, %v2579
          %v2581 = vand.u32 2147483647, %v2580
          %v2583 = vcvt.s32.f32 %v2576
          %v2584 = vmul.f32 %v2583, %v2581
          %v2585 = vxor.u32 %v2584, 2147483648
          %v2586 = vsel %vm2503, %v2585, %v2584
          %v2587 = vsub.s32 4, %v2563
          %v2588 = vsel %vm2503, %v2587, %v2563
          %v2589 = vsel %vm2502, %v1661, %v2586
          %v2590 = vsel %vm2502, 0, %v2588
          %v2591 = vcosq.f32.pop %v2589
          %v2592 = vsinq.f32.pop %v2589
          %vm2593 = vweird.f32 %v1661
          %v2594 = vand.u32 %v2590, 3
          %vm2595 = vcmp.lt.s32.totalorder %v2594, 2
          %vm2596 = vcmp.eq.s32.totalorder %v2594, 0
          %v2597 = vxor.u32 %v2592, 2147483648
          %v2598 = vsel %vm2596, %v2591, %v2597
          %vm2599 = vcmp.eq.s32.totalorder %v2594, 2
          %v2600 = vxor.u32 %v2591, 2147483648
          %v2601 = vsel %vm2599, %v2600, %v2592
          %v2602 = vsel %vm2595, %v2598, %v2601
          %v2603 = vsel %vm2593, nan, %v2602
          %v2604 = vand.u32 2147483647, %v1662
          %vm2605 = vcmp.le.f32.partialorder %v2604, 0.7853982
          %vm2606 = vcmp.lt.s32.totalorder %v1662, 0
          %v2607 = vand.u32 %v1662, 2139095040
          %v2608 = vshrl.u32 %v2607, 23
          %v2609 = vsub.s32 %v2608, 127
          %v2610 = vand.u32 2147483647, %v1662
          %v2611 = vand.u32 %v2610, 8388607
          %v2612 = vor.u32 %v2611, 8388608
          %v2613 = vsub.s32 0, %v2612
          %v2614 = vadd.s32 %v2609, 1
          %vm2615 = vcmp.gt.s32.totalorder %v2614, 0
          %v2616 = vsel %vm2615, %v2614, 0
          %v2617 = vshrl.u32 %v2616, 5
          %v2618 = vand.u32 %v2616, 31
          %v2619 = vsub.s32 32, %v2618
          %v2620 = vshrl.u32 683565275, %v2619
          %v2621 = vshll.u32 683565275, %v2618
          %v2622 = vshrl.u32 2475754826, %v2619
          %v2623 = vor.u32 %v2621, %v2622
          %v2624 = vshll.u32 2475754826, %v2618
          %v2625 = vshrl.u32 2131351028, %v2619
          %v2626 = vor.u32 %v2624, %v2625
          %v2627 = vshll.u32 2131351028, %v2618
          %v2628 = vshrl.u32 2102212464, %v2619
          %v2629 = vor.u32 %v2627, %v2628
          %v2630 = vshll.u32 2102212464, %v2618
          %v2631 = vshrl.u32 920167782, %v2619
          %v2632 = vor.u32 %v2630, %v2631
          %v2633 = vshll.u32 920167782, %v2618
          %v2634 = vshrl.u32 1326507024, %v2619
          %v2635 = vor.u32 %v2633, %v2634
          %vm2636 = vcmp.lt.s32.totalorder %v2617, 1
          %vm2637 = vcmp.lt.s32.totalorder %v2617, 2
          %vm2638 = vcmp.lt.s32.totalorder %v2617, 3
          %vm2639 = vcmp.lt.s32.totalorder %v2617, 4
          %v2640 = vsel %vm2636, %v2620, %v2623
          %v2641 = vsel %vm2639, %v2629, 2102212464
          %v2642 = vsel %vm2638, %v2626, %v2641
          %v2643 = vsel %vm2637, %v2640, %v2642
          %v2644 = vsel %vm2636, %v2623, %v2626
          %v2645 = vsel %vm2639, %v2632, 920167782
          %v2646 = vsel %vm2638, %v2629, %v2645
          %v2647 = vsel %vm2637, %v2644, %v2646
          %v2648 = vsel %vm2636, %v2626, %v2629
          %v2649 = vsel %vm2639, %v2635, 1326507024
          %v2650 = vsel %vm2638, %v2632, %v2649
          %v2651 = vsel %vm2637, %v2648, %v2650
          %v2652 = vshll.u32 %v2612, 8
          %v2653 = vmul.u32.u64.compose %v2652, %v2651
          %v2654 = vextract.low.u32 %v2653
          %v2655 = vextract.high.u32 %v2653
          %v2656 = vmul.u32.u64.compose %v2652, %v2647
          %v2657 = vextract.low.u32 %v2656
          %v2658 = vextract.high.u32 %v2656
          %v2659 = vmul.u32 %v2652, %v2643
          %v2660 = vadd.s32 %v2655, %v2657
          %vm2661 = vc.u32 %v2655, %v2657
          %v2662 = vadd.s32 %v2658, 1
          %v2663 = vsel %vm2661, %v2662, %v2658
          %v2664 = vadd.s32 %v2659, %v2663
          %v2665 = vadd.s32 %v2664, 536870912
          %v2666 = vshrl.u32 %v2665, 30
          %v2667 = vshll.u32 %v2666, 30
          %v2668 = vsub.s32 %v2664, %v2667
          %vm2669 = vcmp.lt.s32.totalorder %v2668, 0
          %v2670 = vsub.s32 0, %v2668
          %v2671 = vsel %vm2669, %v2670, %v2668
          %v2672 = vclz %v2671
          %v2673 = vsub.s32 %v2672, 2
          %vm2674 = vcmp.gt.s32.totalorder 0, %v2673
          %v2675 = vsel %vm2674, 0, %v2673
          %v2676 = vsub.s32 32, %v2675
          %v2677 = vshll.u32 %v2668, %v2675
          %v2678 = vshrl.u32 %v2660, %v2676
          %v2679 = vor.u32 %v2677, %v2678
          %v2680 = vsub.s32 4294967266, %v2675
          %v2681 = vadd.s32 %v2680, 127
          %v2682 = vshll.u32 %v2681, 23
          %v2683 = vor.u32 4788187, %v2682
          %v2684 = vand.u32 2147483647, %v2683
          %v2686 = vcvt.s32.f32 %v2679
          %v2687 = vmul.f32 %v2686, %v2684
          %v2688 = vxor.u32 %v2687, 2147483648
          %v2689 = vsel %vm2606, %v2688, %v2687
          %v2690 = vsub.s32 4, %v2666
          %v2691 = vsel %vm2606, %v2690, %v2666
          %v2692 = vsel %vm2605, %v1662, %v2689
          %v2693 = vsel %vm2605, 0, %v2691
          %v2694 = vcosq.f32.pop %v2692
          %v2695 = vsinq.f32.pop %v2692
          %vm2696 = vweird.f32 %v1662
          %v2697 = vand.u32 %v2693, 3
          %vm2698 = vcmp.lt.s32.totalorder %v2697, 2
          %vm2699 = vcmp.eq.s32.totalorder %v2697, 0
          %v2700 = vxor.u32 %v2695, 2147483648
          %v2701 = vsel %vm2699, %v2694, %v2700
          %vm2702 = vcmp.eq.s32.totalorder %v2697, 2
          %v2703 = vxor.u32 %v2694, 2147483648
          %v2704 = vsel %vm2702, %v2703, %v2695
          %v2705 = vsel %vm2698, %v2701, %v2704
          %v2706 = vsel %vm2696, nan, %v2705
          %v2707 = vpack.c.bf16 %v2088, %v1985
          %v2708 = vpack.c.bf16 %v2294, %v2191
          %v2709 = vpack.c.bf16 %v2500, %v2397
          %v2710 = vpack.c.bf16 %v2706, %v2603
          %v2711 = vld [vmem:[#allocation8] sm:$0xf]
          %v2712 = vld [vmem:[#allocation8 + $0x4] sm:$0xf]
          %v2715 = vunpack.c.l.b16 %v2711
          %v2716 = vunpack.c.l.b16 %v2712
          %v2717 = vpack.c.b16 %v2716, %v2715
          %v2720 = vsel %vm1805, %v2707, 0
          %v2723 = vsel %vm1805, %v2708, 0
          %v2726 = vsel %vm1805, %v2709, 0
          %v2729 = vsel %vm1805, %v2710, 0
          %2731 = vmatprep.subr.bf16.mxu0 0
          %2732 = vmatpush1.bf16.msra.mxu0 %v2717
          %2733 = vmatprep.subr.bf16.mxu0 0
          %2734 = vmatpush1.bf16.msra.mxu0 0
          %2735 = vmatprep.subr.bf16.mxu0 0
          %2736 = vmatpush1.bf16.msra.mxu0 0
          %2737 = vmatprep.subr.bf16.mxu0 0
          %2738 = vmatpush1.bf16.msra.mxu0 0
          %2739 = vmatprep.subr.bf16.mxu0 0
          %2740 = vmatpush1.bf16.msra.mxu0 0
          %2741 = vmatprep.subr.bf16.mxu0 0
          %2742 = vmatpush1.bf16.msra.mxu0 0
          %2743 = vmatprep.subr.bf16.mxu0 0
          %2744 = vmatpush1.bf16.msra.mxu0 0
          %2745 = vmatprep.subr.bf16.mxu0 0
          %2746 = vmatpush1.bf16.msra.mxu0 0
          %2747 = vmatprep.subr.bf16.mxu0 0
          %2748 = vmatpush1.bf16.msra.mxu0 0
          %2749 = vmatprep.subr.bf16.mxu0 0
          %2750 = vmatpush1.bf16.msra.mxu0 0
          %2751 = vmatprep.subr.bf16.mxu0 0
          %2752 = vmatpush1.bf16.msra.mxu0 0
          %2753 = vmatprep.subr.bf16.mxu0 0
          %2754 = vmatpush1.bf16.msra.mxu0 0
          %2755 = vmatprep.subr.bf16.mxu0 0
          %2756 = vmatpush1.bf16.msra.mxu0 0
          %2757 = vmatprep.subr.bf16.mxu0 0
          %2758 = vmatpush1.bf16.msra.mxu0 0
          %2759 = vmatprep.subr.bf16.mxu0 0
          %2760 = vmatpush1.bf16.msra.mxu0 0
          %2761 = vmatprep.subr.bf16.mxu0 0
          %2762 = vmatpush1.bf16.msra.mxu0 0
          %2763 = vmatprep.mubr.bf16.mxu0 0
          %2764 = vmatmul.mubr.bf16.gmra.mrb[0].mxu0 %v2720
          %v2765 = vpop.f32.mrb[0].mxu0
          %v2766 = vadd.f32 0.0, %v2765
          %v2767 = vpop.f32.mrb[0].mxu0
          %v2768 = vpop.f32.mrb[0].mxu0
          %v2769 = vadd.f32 0.0, %v2768
          %v2770 = vpop.f32.mrb[0].mxu0
          %2771 = vmatprep.mubr.bf16.mxu0 0
          %2772 = vmatmul.mubr.bf16.gmra.mrb[0].mxu0 %v2723
          %v2773 = vpop.f32.mrb[0].mxu0
          %v2774 = vadd.f32 0.0, %v2773
          %v2775 = vpop.f32.mrb[0].mxu0
          %v2776 = vpop.f32.mrb[0].mxu0
          %v2777 = vadd.f32 0.0, %v2776
          %v2778 = vpop.f32.mrb[0].mxu0
          %2779 = vmatprep.mubr.bf16.mxu0 0
          %2780 = vmatmul.mubr.bf16.gmra.mrb[0].mxu0 %v2726
          %v2781 = vpop.f32.mrb[0].mxu0
          %v2782 = vadd.f32 0.0, %v2781
          %v2783 = vpop.f32.mrb[0].mxu0
          %v2784 = vpop.f32.mrb[0].mxu0
          %v2785 = vadd.f32 0.0, %v2784
          %v2786 = vpop.f32.mrb[0].mxu0
          %2787 = vmatprep.mubr.bf16.mxu0 0
          %2788 = vmatmul.mubr.bf16.gmra.mrb[0].mxu0 %v2729
          %v2789 = vpop.f32.mrb[0].mxu0
          %v2790 = vadd.f32 0.0, %v2789
          %v2791 = vpop.f32.mrb[0].mxu0
          %v2792 = vpop.f32.mrb[0].mxu0
          %v2793 = vadd.f32 0.0, %v2792
          %v2794 = vpop.f32.mrb[0].mxu0
          %2795 = vdwg.mxu0
          %v2796 = vadd.f32 %v1853, %v2766
          %v2797 = vadd.f32 %v1856, %v2769
          %v2798 = vadd.f32 %v1861, %v2774
          %v2799 = vadd.f32 %v1864, %v2777
          %v2800 = vadd.f32 %v1869, %v2782
          %v2801 = vadd.f32 %v1872, %v2785
          %v2802 = vadd.f32 %v1877, %v2790
          %v2803 = vadd.f32 %v1880, %v2793
          %v2804 = vand.u32 2147483647, %v1655
          %vm2805 = vcmp.le.f32.partialorder %v2804, 0.7853982
          %vm2806 = vcmp.lt.s32.totalorder %v1655, 0
          %v2807 = vand.u32 %v1655, 2139095040
          %v2808 = vshrl.u32 %v2807, 23
          %v2809 = vsub.s32 %v2808, 127
          %v2810 = vand.u32 2147483647, %v1655
          %v2811 = vand.u32 %v2810, 8388607
          %v2812 = vor.u32 %v2811, 8388608
          %v2813 = vsub.s32 0, %v2812
          %v2814 = vadd.s32 %v2809, 1
          %vm2815 = vcmp.gt.s32.totalorder %v2814, 0
          %v2816 = vsel %vm2815, %v2814, 0
          %v2817 = vshrl.u32 %v2816, 5
          %v2818 = vand.u32 %v2816, 31
          %v2819 = vsub.s32 32, %v2818
          %v2820 = vshrl.u32 683565275, %v2819
          %v2821 = vshll.u32 683565275, %v2818
          %v2822 = vshrl.u32 2475754826, %v2819
          %v2823 = vor.u32 %v2821, %v2822
          %v2824 = vshll.u32 2475754826, %v2818
          %v2825 = vshrl.u32 2131351028, %v2819
          %v2826 = vor.u32 %v2824, %v2825
          %v2827 = vshll.u32 2131351028, %v2818
          %v2828 = vshrl.u32 2102212464, %v2819
          %v2829 = vor.u32 %v2827, %v2828
          %v2830 = vshll.u32 2102212464, %v2818
          %v2831 = vshrl.u32 920167782, %v2819
          %v2832 = vor.u32 %v2830, %v2831
          %v2833 = vshll.u32 920167782, %v2818
          %v2834 = vshrl.u32 1326507024, %v2819
          %v2835 = vor.u32 %v2833, %v2834
          %vm2836 = vcmp.lt.s32.totalorder %v2817, 1
          %vm2837 = vcmp.lt.s32.totalorder %v2817, 2
          %vm2838 = vcmp.lt.s32.totalorder %v2817, 3
          %vm2839 = vcmp.lt.s32.totalorder %v2817, 4
          %v2840 = vsel %vm2836, %v2820, %v2823
          %v2841 = vsel %vm2839, %v2829, 2102212464
          %v2842 = vsel %vm2838, %v2826, %v2841
          %v2843 = vsel %vm2837, %v2840, %v2842
          %v2844 = vsel %vm2836, %v2823, %v2826
          %v2845 = vsel %vm2839, %v2832, 920167782
          %v2846 = vsel %vm2838, %v2829, %v2845
          %v2847 = vsel %vm2837, %v2844, %v2846
          %v2848 = vsel %vm2836, %v2826, %v2829
          %v2849 = vsel %vm2839, %v2835, 1326507024
          %v2850 = vsel %vm2838, %v2832, %v2849
          %v2851 = vsel %vm2837, %v2848, %v2850
          %v2852 = vshll.u32 %v2812, 8
          %v2853 = vmul.u32.u64.compose %v2852, %v2851
          %v2854 = vextract.low.u32 %v2853
          %v2855 = vextract.high.u32 %v2853
          %v2856 = vmul.u32.u64.compose %v2852, %v2847
          %v2857 = vextract.low.u32 %v2856
          %v2858 = vextract.high.u32 %v2856
          %v2859 = vmul.u32 %v2852, %v2843
          %v2860 = vadd.s32 %v2855, %v2857
          %vm2861 = vc.u32 %v2855, %v2857
          %v2862 = vadd.s32 %v2858, 1
          %v2863 = vsel %vm2861, %v2862, %v2858
          %v2864 = vadd.s32 %v2859, %v2863
          %v2865 = vadd.s32 %v2864, 536870912
          %v2866 = vshrl.u32 %v2865, 30
          %v2867 = vshll.u32 %v2866, 30
          %v2868 = vsub.s32 %v2864, %v2867
          %vm2869 = vcmp.lt.s32.totalorder %v2868, 0
          %v2870 = vsub.s32 0, %v2868
          %v2871 = vsel %vm2869, %v2870, %v2868
          %v2872 = vclz %v2871
          %v2873 = vsub.s32 %v2872, 2
          %vm2874 = vcmp.gt.s32.totalorder 0, %v2873
          %v2875 = vsel %vm2874, 0, %v2873
          %v2876 = vsub.s32 32, %v2875
          %v2877 = vshll.u32 %v2868, %v2875
          %v2878 = vshrl.u32 %v2860, %v2876
          %v2879 = vor.u32 %v2877, %v2878
          %v2880 = vsub.s32 4294967266, %v2875
          %v2881 = vadd.s32 %v2880, 127
          %v2882 = vshll.u32 %v2881, 23
          %v2883 = vor.u32 4788187, %v2882
          %v2884 = vand.u32 2147483647, %v2883
          %v2886 = vcvt.s32.f32 %v2879
          %v2887 = vmul.f32 %v2886, %v2884
          %v2888 = vxor.u32 %v2887, 2147483648
          %v2889 = vsel %vm2806, %v2888, %v2887
          %v2890 = vsub.s32 4, %v2866
          %v2891 = vsel %vm2806, %v2890, %v2866
          %v2892 = vsel %vm2805, %v1655, %v2889
          %v2893 = vsel %vm2805, 0, %v2891
          %v2894 = vcosq.f32.pop %v2892
          %v2895 = vsinq.f32.pop %v2892
          %vm2896 = vweird.f32 %v1655
          %v2897 = vadd.s32 %v2893, 3
          %v2898 = vand.u32 %v2897, 3
          %vm2899 = vcmp.lt.s32.totalorder %v2898, 2
          %vm2900 = vcmp.eq.s32.totalorder %v2898, 0
          %v2901 = vxor.u32 %v2895, 2147483648
          %v2902 = vsel %vm2900, %v2894, %v2901
          %vm2903 = vcmp.eq.s32.totalorder %v2898, 2
          %v2904 = vxor.u32 %v2894, 2147483648
          %v2905 = vsel %vm2903, %v2904, %v2895
          %v2906 = vsel %vm2899, %v2902, %v2905
          %v2907 = vsel %vm2896, nan, %v2906
          %v2908 = vand.u32 2147483647, %v1656
          %vm2909 = vcmp.le.f32.partialorder %v2908, 0.7853982
          %vm2910 = vcmp.lt.s32.totalorder %v1656, 0
          %v2911 = vand.u32 %v1656, 2139095040
          %v2912 = vshrl.u32 %v2911, 23
          %v2913 = vsub.s32 %v2912, 127
          %v2914 = vand.u32 2147483647, %v1656
          %v2915 = vand.u32 %v2914, 8388607
          %v2916 = vor.u32 %v2915, 8388608
          %v2917 = vsub.s32 0, %v2916
          %v2918 = vadd.s32 %v2913, 1
          %vm2919 = vcmp.gt.s32.totalorder %v2918, 0
          %v2920 = vsel %vm2919, %v2918, 0
          %v2921 = vshrl.u32 %v2920, 5
          %v2922 = vand.u32 %v2920, 31
          %v2923 = vsub.s32 32, %v2922
          %v2924 = vshrl.u32 683565275, %v2923
          %v2925 = vshll.u32 683565275, %v2922
          %v2926 = vshrl.u32 2475754826, %v2923
          %v2927 = vor.u32 %v2925, %v2926
          %v2928 = vshll.u32 2475754826, %v2922
          %v2929 = vshrl.u32 2131351028, %v2923
          %v2930 = vor.u32 %v2928, %v2929
          %v2931 = vshll.u32 2131351028, %v2922
          %v2932 = vshrl.u32 2102212464, %v2923
          %v2933 = vor.u32 %v2931, %v2932
          %v2934 = vshll.u32 2102212464, %v2922
          %v2935 = vshrl.u32 920167782, %v2923
          %v2936 = vor.u32 %v2934, %v2935
          %v2937 = vshll.u32 920167782, %v2922
          %v2938 = vshrl.u32 1326507024, %v2923
          %v2939 = vor.u32 %v2937, %v2938
          %vm2940 = vcmp.lt.s32.totalorder %v2921, 1
          %vm2941 = vcmp.lt.s32.totalorder %v2921, 2
          %vm2942 = vcmp.lt.s32.totalorder %v2921, 3
          %vm2943 = vcmp.lt.s32.totalorder %v2921, 4
          %v2944 = vsel %vm2940, %v2924, %v2927
          %v2945 = vsel %vm2943, %v2933, 2102212464
          %v2946 = vsel %vm2942, %v2930, %v2945
          %v2947 = vsel %vm2941, %v2944, %v2946
          %v2948 = vsel %vm2940, %v2927, %v2930
          %v2949 = vsel %vm2943, %v2936, 920167782
          %v2950 = vsel %vm2942, %v2933, %v2949
          %v2951 = vsel %vm2941, %v2948, %v2950
          %v2952 = vsel %vm2940, %v2930, %v2933
          %v2953 = vsel %vm2943, %v2939, 1326507024
          %v2954 = vsel %vm2942, %v2936, %v2953
          %v2955 = vsel %vm2941, %v2952, %v2954
          %v2956 = vshll.u32 %v2916, 8
          %v2957 = vmul.u32.u64.compose %v2956, %v2955
          %v2958 = vextract.low.u32 %v2957
          %v2959 = vextract.high.u32 %v2957
          %v2960 = vmul.u32.u64.compose %v2956, %v2951
          %v2961 = vextract.low.u32 %v2960
          %v2962 = vextract.high.u32 %v2960
          %v2963 = vmul.u32 %v2956, %v2947
          %v2964 = vadd.s32 %v2959, %v2961
          %vm2965 = vc.u32 %v2959, %v2961
          %v2966 = vadd.s32 %v2962, 1
          %v2967 = vsel %vm2965, %v2966, %v2962
          %v2968 = vadd.s32 %v2963, %v2967
          %v2969 = vadd.s32 %v2968, 536870912
          %v2970 = vshrl.u32 %v2969, 30
          %v2971 = vshll.u32 %v2970, 30
          %v2972 = vsub.s32 %v2968, %v2971
          %vm2973 = vcmp.lt.s32.totalorder %v2972, 0
          %v2974 = vsub.s32 0, %v2972
          %v2975 = vsel %vm2973, %v2974, %v2972
          %v2976 = vclz %v2975
          %v2977 = vsub.s32 %v2976, 2
          %vm2978 = vcmp.gt.s32.totalorder 0, %v2977
          %v2979 = vsel %vm2978, 0, %v2977
          %v2980 = vsub.s32 32, %v2979
          %v2981 = vshll.u32 %v2972, %v2979
          %v2982 = vshrl.u32 %v2964, %v2980
          %v2983 = vor.u32 %v2981, %v2982
          %v2984 = vsub.s32 4294967266, %v2979
          %v2985 = vadd.s32 %v2984, 127
          %v2986 = vshll.u32 %v2985, 23
          %v2987 = vor.u32 4788187, %v2986
          %v2988 = vand.u32 2147483647, %v2987
          %v2990 = vcvt.s32.f32 %v2983
          %v2991 = vmul.f32 %v2990, %v2988
          %v2992 = vxor.u32 %v2991, 2147483648
          %v2993 = vsel %vm2910, %v2992, %v2991
          %v2994 = vsub.s32 4, %v2970
          %v2995 = vsel %vm2910, %v2994, %v2970
          %v2996 = vsel %vm2909, %v1656, %v2993
          %v2997 = vsel %vm2909, 0, %v2995
          %v2998 = vcosq.f32.pop %v2996
          %v2999 = vsinq.f32.pop %v2996
          %vm3000 = vweird.f32 %v1656
          %v3001 = vadd.s32 %v2997, 3
          %v3002 = vand.u32 %v3001, 3
          %vm3003 = vcmp.lt.s32.totalorder %v3002, 2
          %vm3004 = vcmp.eq.s32.totalorder %v3002, 0
          %v3005 = vxor.u32 %v2999, 2147483648
          %v3006 = vsel %vm3004, %v2998, %v3005
          %vm3007 = vcmp.eq.s32.totalorder %v3002, 2
          %v3008 = vxor.u32 %v2998, 2147483648
          %v3009 = vsel %vm3007, %v3008, %v2999
          %v3010 = vsel %vm3003, %v3006, %v3009
          %v3011 = vsel %vm3000, nan, %v3010
          %v3012 = vand.u32 2147483647, %v1657
          %vm3013 = vcmp.le.f32.partialorder %v3012, 0.7853982
          %vm3014 = vcmp.lt.s32.totalorder %v1657, 0
          %v3015 = vand.u32 %v1657, 2139095040
          %v3016 = vshrl.u32 %v3015, 23
          %v3017 = vsub.s32 %v3016, 127
          %v3018 = vand.u32 2147483647, %v1657
          %v3019 = vand.u32 %v3018, 8388607
          %v3020 = vor.u32 %v3019, 8388608
          %v3021 = vsub.s32 0, %v3020
          %v3022 = vadd.s32 %v3017, 1
          %vm3023 = vcmp.gt.s32.totalorder %v3022, 0
          %v3024 = vsel %vm3023, %v3022, 0
          %v3025 = vshrl.u32 %v3024, 5
          %v3026 = vand.u32 %v3024, 31
          %v3027 = vsub.s32 32, %v3026
          %v3028 = vshrl.u32 683565275, %v3027
          %v3029 = vshll.u32 683565275, %v3026
          %v3030 = vshrl.u32 2475754826, %v3027
          %v3031 = vor.u32 %v3029, %v3030
          %v3032 = vshll.u32 2475754826, %v3026
          %v3033 = vshrl.u32 2131351028, %v3027
          %v3034 = vor.u32 %v3032, %v3033
          %v3035 = vshll.u32 2131351028, %v3026
          %v3036 = vshrl.u32 2102212464, %v3027
          %v3037 = vor.u32 %v3035, %v3036
          %v3038 = vshll.u32 2102212464, %v3026
          %v3039 = vshrl.u32 920167782, %v3027
          %v3040 = vor.u32 %v3038, %v3039
          %v3041 = vshll.u32 920167782, %v3026
          %v3042 = vshrl.u32 1326507024, %v3027
          %v3043 = vor.u32 %v3041, %v3042
          %vm3044 = vcmp.lt.s32.totalorder %v3025, 1
          %vm3045 = vcmp.lt.s32.totalorder %v3025, 2
          %vm3046 = vcmp.lt.s32.totalorder %v3025, 3
          %vm3047 = vcmp.lt.s32.totalorder %v3025, 4
          %v3048 = vsel %vm3044, %v3028, %v3031
          %v3049 = vsel %vm3047, %v3037, 2102212464
          %v3050 = vsel %vm3046, %v3034, %v3049
          %v3051 = vsel %vm3045, %v3048, %v3050
          %v3052 = vsel %vm3044, %v3031, %v3034
          %v3053 = vsel %vm3047, %v3040, 920167782
          %v3054 = vsel %vm3046, %v3037, %v3053
          %v3055 = vsel %vm3045, %v3052, %v3054
          %v3056 = vsel %vm3044, %v3034, %v3037
          %v3057 = vsel %vm3047, %v3043, 1326507024
          %v3058 = vsel %vm3046, %v3040, %v3057
          %v3059 = vsel %vm3045, %v3056, %v3058
          %v3060 = vshll.u32 %v3020, 8
          %v3061 = vmul.u32.u64.compose %v3060, %v3059
          %v3062 = vextract.low.u32 %v3061
          %v3063 = vextract.high.u32 %v3061
          %v3064 = vmul.u32.u64.compose %v3060, %v3055
          %v3065 = vextract.low.u32 %v3064
          %v3066 = vextract.high.u32 %v3064
          %v3067 = vmul.u32 %v3060, %v3051
          %v3068 = vadd.s32 %v3063, %v3065
          %vm3069 = vc.u32 %v3063, %v3065
          %v3070 = vadd.s32 %v3066, 1
          %v3071 = vsel %vm3069, %v3070, %v3066
          %v3072 = vadd.s32 %v3067, %v3071
          %v3073 = vadd.s32 %v3072, 536870912
          %v3074 = vshrl.u32 %v3073, 30
          %v3075 = vshll.u32 %v3074, 30
          %v3076 = vsub.s32 %v3072, %v3075
          %vm3077 = vcmp.lt.s32.totalorder %v3076, 0
          %v3078 = vsub.s32 0, %v3076
          %v3079 = vsel %vm3077, %v3078, %v3076
          %v3080 = vclz %v3079
          %v3081 = vsub.s32 %v3080, 2
          %vm3082 = vcmp.gt.s32.totalorder 0, %v3081
          %v3083 = vsel %vm3082, 0, %v3081
          %v3084 = vsub.s32 32, %v3083
          %v3085 = vshll.u32 %v3076, %v3083
          %v3086 = vshrl.u32 %v3068, %v3084
          %v3087 = vor.u32 %v3085, %v3086
          %v3088 = vsub.s32 4294967266, %v3083
          %v3089 = vadd.s32 %v3088, 127
          %v3090 = vshll.u32 %v3089, 23
          %v3091 = vor.u32 4788187, %v3090
          %v3092 = vand.u32 2147483647, %v3091
          %v3094 = vcvt.s32.f32 %v3087
          %v3095 = vmul.f32 %v3094, %v3092
          %v3096 = vxor.u32 %v3095, 2147483648
          %v3097 = vsel %vm3014, %v3096, %v3095
          %v3098 = vsub.s32 4, %v3074
          %v3099 = vsel %vm3014, %v3098, %v3074
          %v3100 = vsel %vm3013, %v1657, %v3097
          %v3101 = vsel %vm3013, 0, %v3099
          %v3102 = vcosq.f32.pop %v3100
          %v3103 = vsinq.f32.pop %v3100
          %vm3104 = vweird.f32 %v1657
          %v3105 = vadd.s32 %v3101, 3
          %v3106 = vand.u32 %v3105, 3
          %vm3107 = vcmp.lt.s32.totalorder %v3106, 2
          %vm3108 = vcmp.eq.s32.totalorder %v3106, 0
          %v3109 = vxor.u32 %v3103, 2147483648
          %v3110 = vsel %vm3108, %v3102, %v3109
          %vm3111 = vcmp.eq.s32.totalorder %v3106, 2
          %v3112 = vxor.u32 %v3102, 2147483648
          %v3113 = vsel %vm3111, %v3112, %v3103
          %v3114 = vsel %vm3107, %v3110, %v3113
          %v3115 = vsel %vm3104, nan, %v3114
          %v3116 = vand.u32 2147483647, %v1658
          %vm3117 = vcmp.le.f32.partialorder %v3116, 0.7853982
          %vm3118 = vcmp.lt.s32.totalorder %v1658, 0
          %v3119 = vand.u32 %v1658, 2139095040
          %v3120 = vshrl.u32 %v3119, 23
          %v3121 = vsub.s32 %v3120, 127
          %v3122 = vand.u32 2147483647, %v1658
          %v3123 = vand.u32 %v3122, 8388607
          %v3124 = vor.u32 %v3123, 8388608
          %v3125 = vsub.s32 0, %v3124
          %v3126 = vadd.s32 %v3121, 1
          %vm3127 = vcmp.gt.s32.totalorder %v3126, 0
          %v3128 = vsel %vm3127, %v3126, 0
          %v3129 = vshrl.u32 %v3128, 5
          %v3130 = vand.u32 %v3128, 31
          %v3131 = vsub.s32 32, %v3130
          %v3132 = vshrl.u32 683565275, %v3131
          %v3133 = vshll.u32 683565275, %v3130
          %v3134 = vshrl.u32 2475754826, %v3131
          %v3135 = vor.u32 %v3133, %v3134
          %v3136 = vshll.u32 2475754826, %v3130
          %v3137 = vshrl.u32 2131351028, %v3131
          %v3138 = vor.u32 %v3136, %v3137
          %v3139 = vshll.u32 2131351028, %v3130
          %v3140 = vshrl.u32 2102212464, %v3131
          %v3141 = vor.u32 %v3139, %v3140
          %v3142 = vshll.u32 2102212464, %v3130
          %v3143 = vshrl.u32 920167782, %v3131
          %v3144 = vor.u32 %v3142, %v3143
          %v3145 = vshll.u32 920167782, %v3130
          %v3146 = vshrl.u32 1326507024, %v3131
          %v3147 = vor.u32 %v3145, %v3146
          %vm3148 = vcmp.lt.s32.totalorder %v3129, 1
          %vm3149 = vcmp.lt.s32.totalorder %v3129, 2
          %vm3150 = vcmp.lt.s32.totalorder %v3129, 3
          %vm3151 = vcmp.lt.s32.totalorder %v3129, 4
          %v3152 = vsel %vm3148, %v3132, %v3135
          %v3153 = vsel %vm3151, %v3141, 2102212464
          %v3154 = vsel %vm3150, %v3138, %v3153
          %v3155 = vsel %vm3149, %v3152, %v3154
          %v3156 = vsel %vm3148, %v3135, %v3138
          %v3157 = vsel %vm3151, %v3144, 920167782
          %v3158 = vsel %vm3150, %v3141, %v3157
          %v3159 = vsel %vm3149, %v3156, %v3158
          %v3160 = vsel %vm3148, %v3138, %v3141
          %v3161 = vsel %vm3151, %v3147, 1326507024
          %v3162 = vsel %vm3150, %v3144, %v3161
          %v3163 = vsel %vm3149, %v3160, %v3162
          %v3164 = vshll.u32 %v3124, 8
          %v3165 = vmul.u32.u64.compose %v3164, %v3163
          %v3166 = vextract.low.u32 %v3165
          %v3167 = vextract.high.u32 %v3165
          %v3168 = vmul.u32.u64.compose %v3164, %v3159
          %v3169 = vextract.low.u32 %v3168
          %v3170 = vextract.high.u32 %v3168
          %v3171 = vmul.u32 %v3164, %v3155
          %v3172 = vadd.s32 %v3167, %v3169
          %vm3173 = vc.u32 %v3167, %v3169
          %v3174 = vadd.s32 %v3170, 1
          %v3175 = vsel %vm3173, %v3174, %v3170
          %v3176 = vadd.s32 %v3171, %v3175
          %v3177 = vadd.s32 %v3176, 536870912
          %v3178 = vshrl.u32 %v3177, 30
          %v3179 = vshll.u32 %v3178, 30
          %v3180 = vsub.s32 %v3176, %v3179
          %vm3181 = vcmp.lt.s32.totalorder %v3180, 0
          %v3182 = vsub.s32 0, %v3180
          %v3183 = vsel %vm3181, %v3182, %v3180
          %v3184 = vclz %v3183
          %v3185 = vsub.s32 %v3184, 2
          %vm3186 = vcmp.gt.s32.totalorder 0, %v3185
          %v3187 = vsel %vm3186, 0, %v3185
          %v3188 = vsub.s32 32, %v3187
          %v3189 = vshll.u32 %v3180, %v3187
          %v3190 = vshrl.u32 %v3172, %v3188
          %v3191 = vor.u32 %v3189, %v3190
          %v3192 = vsub.s32 4294967266, %v3187
          %v3193 = vadd.s32 %v3192, 127
          %v3194 = vshll.u32 %v3193, 23
          %v3195 = vor.u32 4788187, %v3194
          %v3196 = vand.u32 2147483647, %v3195
          %v3198 = vcvt.s32.f32 %v3191
          %v3199 = vmul.f32 %v3198, %v3196
          %v3200 = vxor.u32 %v3199, 2147483648
          %v3201 = vsel %vm3118, %v3200, %v3199
          %v3202 = vsub.s32 4, %v3178
          %v3203 = vsel %vm3118, %v3202, %v3178
          %v3204 = vsel %vm3117, %v1658, %v3201
          %v3205 = vsel %vm3117, 0, %v3203
          %v3206 = vcosq.f32.pop %v3204
          %v3207 = vsinq.f32.pop %v3204
          %vm3208 = vweird.f32 %v1658
          %v3209 = vadd.s32 %v3205, 3
          %v3210 = vand.u32 %v3209, 3
          %vm3211 = vcmp.lt.s32.totalorder %v3210, 2
          %vm3212 = vcmp.eq.s32.totalorder %v3210, 0
          %v3213 = vxor.u32 %v3207, 2147483648
          %v3214 = vsel %vm3212, %v3206, %v3213
          %vm3215 = vcmp.eq.s32.totalorder %v3210, 2
          %v3216 = vxor.u32 %v3206, 2147483648
          %v3217 = vsel %vm3215, %v3216, %v3207
          %v3218 = vsel %vm3211, %v3214, %v3217
          %v3219 = vsel %vm3208, nan, %v3218
          %v3220 = vand.u32 2147483647, %v1659
          %vm3221 = vcmp.le.f32.partialorder %v3220, 0.7853982
          %vm3222 = vcmp.lt.s32.totalorder %v1659, 0
          %v3223 = vand.u32 %v1659, 2139095040
          %v3224 = vshrl.u32 %v3223, 23
          %v3225 = vsub.s32 %v3224, 127
          %v3226 = vand.u32 2147483647, %v1659
          %v3227 = vand.u32 %v3226, 8388607
          %v3228 = vor.u32 %v3227, 8388608
          %v3229 = vsub.s32 0, %v3228
          %v3230 = vadd.s32 %v3225, 1
          %vm3231 = vcmp.gt.s32.totalorder %v3230, 0
          %v3232 = vsel %vm3231, %v3230, 0
          %v3233 = vshrl.u32 %v3232, 5
          %v3234 = vand.u32 %v3232, 31
          %v3235 = vsub.s32 32, %v3234
          %v3236 = vshrl.u32 683565275, %v3235
          %v3237 = vshll.u32 683565275, %v3234
          %v3238 = vshrl.u32 2475754826, %v3235
          %v3239 = vor.u32 %v3237, %v3238
          %v3240 = vshll.u32 2475754826, %v3234
          %v3241 = vshrl.u32 2131351028, %v3235
          %v3242 = vor.u32 %v3240, %v3241
          %v3243 = vshll.u32 2131351028, %v3234
          %v3244 = vshrl.u32 2102212464, %v3235
          %v3245 = vor.u32 %v3243, %v3244
          %v3246 = vshll.u32 2102212464, %v3234
          %v3247 = vshrl.u32 920167782, %v3235
          %v3248 = vor.u32 %v3246, %v3247
          %v3249 = vshll.u32 920167782, %v3234
          %v3250 = vshrl.u32 1326507024, %v3235
          %v3251 = vor.u32 %v3249, %v3250
          %vm3252 = vcmp.lt.s32.totalorder %v3233, 1
          %vm3253 = vcmp.lt.s32.totalorder %v3233, 2
          %vm3254 = vcmp.lt.s32.totalorder %v3233, 3
          %vm3255 = vcmp.lt.s32.totalorder %v3233, 4
          %v3256 = vsel %vm3252, %v3236, %v3239
          %v3257 = vsel %vm3255, %v3245, 2102212464
          %v3258 = vsel %vm3254, %v3242, %v3257
          %v3259 = vsel %vm3253, %v3256, %v3258
          %v3260 = vsel %vm3252, %v3239, %v3242
          %v3261 = vsel %vm3255, %v3248, 920167782
          %v3262 = vsel %vm3254, %v3245, %v3261
          %v3263 = vsel %vm3253, %v3260, %v3262
          %v3264 = vsel %vm3252, %v3242, %v3245
          %v3265 = vsel %vm3255, %v3251, 1326507024
          %v3266 = vsel %vm3254, %v3248, %v3265
          %v3267 = vsel %vm3253, %v3264, %v3266
          %v3268 = vshll.u32 %v3228, 8
          %v3269 = vmul.u32.u64.compose %v3268, %v3267
          %v3270 = vextract.low.u32 %v3269
          %v3271 = vextract.high.u32 %v3269
          %v3272 = vmul.u32.u64.compose %v3268, %v3263
          %v3273 = vextract.low.u32 %v3272
          %v3274 = vextract.high.u32 %v3272
          %v3275 = vmul.u32 %v3268, %v3259
          %v3276 = vadd.s32 %v3271, %v3273
          %vm3277 = vc.u32 %v3271, %v3273
          %v3278 = vadd.s32 %v3274, 1
          %v3279 = vsel %vm3277, %v3278, %v3274
          %v3280 = vadd.s32 %v3275, %v3279
          %v3281 = vadd.s32 %v3280, 536870912
          %v3282 = vshrl.u32 %v3281, 30
          %v3283 = vshll.u32 %v3282, 30
          %v3284 = vsub.s32 %v3280, %v3283
          %vm3285 = vcmp.lt.s32.totalorder %v3284, 0
          %v3286 = vsub.s32 0, %v3284
          %v3287 = vsel %vm3285, %v3286, %v3284
          %v3288 = vclz %v3287
          %v3289 = vsub.s32 %v3288, 2
          %vm3290 = vcmp.gt.s32.totalorder 0, %v3289
          %v3291 = vsel %vm3290, 0, %v3289
          %v3292 = vsub.s32 32, %v3291
          %v3293 = vshll.u32 %v3284, %v3291
          %v3294 = vshrl.u32 %v3276, %v3292
          %v3295 = vor.u32 %v3293, %v3294
          %v3296 = vsub.s32 4294967266, %v3291
          %v3297 = vadd.s32 %v3296, 127
          %v3298 = vshll.u32 %v3297, 23
          %v3299 = vor.u32 4788187, %v3298
          %v3300 = vand.u32 2147483647, %v3299
          %v3302 = vcvt.s32.f32 %v3295
          %v3303 = vmul.f32 %v3302, %v3300
          %v3304 = vxor.u32 %v3303, 2147483648
          %v3305 = vsel %vm3222, %v3304, %v3303
          %v3306 = vsub.s32 4, %v3282
          %v3307 = vsel %vm3222, %v3306, %v3282
          %v3308 = vsel %vm3221, %v1659, %v3305
          %v3309 = vsel %vm3221, 0, %v3307
          %v3310 = vcosq.f32.pop %v3308
          %v3311 = vsinq.f32.pop %v3308
          %vm3312 = vweird.f32 %v1659
          %v3313 = vadd.s32 %v3309, 3
          %v3314 = vand.u32 %v3313, 3
          %vm3315 = vcmp.lt.s32.totalorder %v3314, 2
          %vm3316 = vcmp.eq.s32.totalorder %v3314, 0
          %v3317 = vxor.u32 %v3311, 2147483648
          %v3318 = vsel %vm3316, %v3310, %v3317
          %vm3319 = vcmp.eq.s32.totalorder %v3314, 2
          %v3320 = vxor.u32 %v3310, 2147483648
          %v3321 = vsel %vm3319, %v3320, %v3311
          %v3322 = vsel %vm3315, %v3318, %v3321
          %v3323 = vsel %vm3312, nan, %v3322
          %v3324 = vand.u32 2147483647, %v1660
          %vm3325 = vcmp.le.f32.partialorder %v3324, 0.7853982
          %vm3326 = vcmp.lt.s32.totalorder %v1660, 0
          %v3327 = vand.u32 %v1660, 2139095040
          %v3328 = vshrl.u32 %v3327, 23
          %v3329 = vsub.s32 %v3328, 127
          %v3330 = vand.u32 2147483647, %v1660
          %v3331 = vand.u32 %v3330, 8388607
          %v3332 = vor.u32 %v3331, 8388608
          %v3333 = vsub.s32 0, %v3332
          %v3334 = vadd.s32 %v3329, 1
          %vm3335 = vcmp.gt.s32.totalorder %v3334, 0
          %v3336 = vsel %vm3335, %v3334, 0
          %v3337 = vshrl.u32 %v3336, 5
          %v3338 = vand.u32 %v3336, 31
          %v3339 = vsub.s32 32, %v3338
          %v3340 = vshrl.u32 683565275, %v3339
          %v3341 = vshll.u32 683565275, %v3338
          %v3342 = vshrl.u32 2475754826, %v3339
          %v3343 = vor.u32 %v3341, %v3342
          %v3344 = vshll.u32 2475754826, %v3338
          %v3345 = vshrl.u32 2131351028, %v3339
          %v3346 = vor.u32 %v3344, %v3345
          %v3347 = vshll.u32 2131351028, %v3338
          %v3348 = vshrl.u32 2102212464, %v3339
          %v3349 = vor.u32 %v3347, %v3348
          %v3350 = vshll.u32 2102212464, %v3338
          %v3351 = vshrl.u32 920167782, %v3339
          %v3352 = vor.u32 %v3350, %v3351
          %v3353 = vshll.u32 920167782, %v3338
          %v3354 = vshrl.u32 1326507024, %v3339
          %v3355 = vor.u32 %v3353, %v3354
          %vm3356 = vcmp.lt.s32.totalorder %v3337, 1
          %vm3357 = vcmp.lt.s32.totalorder %v3337, 2
          %vm3358 = vcmp.lt.s32.totalorder %v3337, 3
          %vm3359 = vcmp.lt.s32.totalorder %v3337, 4
          %v3360 = vsel %vm3356, %v3340, %v3343
          %v3361 = vsel %vm3359, %v3349, 2102212464
          %v3362 = vsel %vm3358, %v3346, %v3361
          %v3363 = vsel %vm3357, %v3360, %v3362
          %v3364 = vsel %vm3356, %v3343, %v3346
          %v3365 = vsel %vm3359, %v3352, 920167782
          %v3366 = vsel %vm3358, %v3349, %v3365
          %v3367 = vsel %vm3357, %v3364, %v3366
          %v3368 = vsel %vm3356, %v3346, %v3349
          %v3369 = vsel %vm3359, %v3355, 1326507024
          %v3370 = vsel %vm3358, %v3352, %v3369
          %v3371 = vsel %vm3357, %v3368, %v3370
          %v3372 = vshll.u32 %v3332, 8
          %v3373 = vmul.u32.u64.compose %v3372, %v3371
          %v3374 = vextract.low.u32 %v3373
          %v3375 = vextract.high.u32 %v3373
          %v3376 = vmul.u32.u64.compose %v3372, %v3367
          %v3377 = vextract.low.u32 %v3376
          %v3378 = vextract.high.u32 %v3376
          %v3379 = vmul.u32 %v3372, %v3363
          %v3380 = vadd.s32 %v3375, %v3377
          %vm3381 = vc.u32 %v3375, %v3377
          %v3382 = vadd.s32 %v3378, 1
          %v3383 = vsel %vm3381, %v3382, %v3378
          %v3384 = vadd.s32 %v3379, %v3383
          %v3385 = vadd.s32 %v3384, 536870912
          %v3386 = vshrl.u32 %v3385, 30
          %v3387 = vshll.u32 %v3386, 30
          %v3388 = vsub.s32 %v3384, %v3387
          %vm3389 = vcmp.lt.s32.totalorder %v3388, 0
          %v3390 = vsub.s32 0, %v3388
          %v3391 = vsel %vm3389, %v3390, %v3388
          %v3392 = vclz %v3391
          %v3393 = vsub.s32 %v3392, 2
          %vm3394 = vcmp.gt.s32.totalorder 0, %v3393
          %v3395 = vsel %vm3394, 0, %v3393
          %v3396 = vsub.s32 32, %v3395
          %v3397 = vshll.u32 %v3388, %v3395
          %v3398 = vshrl.u32 %v3380, %v3396
          %v3399 = vor.u32 %v3397, %v3398
          %v3400 = vsub.s32 4294967266, %v3395
          %v3401 = vadd.s32 %v3400, 127
          %v3402 = vshll.u32 %v3401, 23
          %v3403 = vor.u32 4788187, %v3402
          %v3404 = vand.u32 2147483647, %v3403
          %v3406 = vcvt.s32.f32 %v3399
          %v3407 = vmul.f32 %v3406, %v3404
          %v3408 = vxor.u32 %v3407, 2147483648
          %v3409 = vsel %vm3326, %v3408, %v3407
          %v3410 = vsub.s32 4, %v3386
          %v3411 = vsel %vm3326, %v3410, %v3386
          %v3412 = vsel %vm3325, %v1660, %v3409
          %v3413 = vsel %vm3325, 0, %v3411
          %v3414 = vcosq.f32.pop %v3412
          %v3415 = vsinq.f32.pop %v3412
          %vm3416 = vweird.f32 %v1660
          %v3417 = vadd.s32 %v3413, 3
          %v3418 = vand.u32 %v3417, 3
          %vm3419 = vcmp.lt.s32.totalorder %v3418, 2
          %vm3420 = vcmp.eq.s32.totalorder %v3418, 0
          %v3421 = vxor.u32 %v3415, 2147483648
          %v3422 = vsel %vm3420, %v3414, %v3421
          %vm3423 = vcmp.eq.s32.totalorder %v3418, 2
          %v3424 = vxor.u32 %v3414, 2147483648
          %v3425 = vsel %vm3423, %v3424, %v3415
          %v3426 = vsel %vm3419, %v3422, %v3425
          %v3427 = vsel %vm3416, nan, %v3426
          %v3428 = vand.u32 2147483647, %v1661
          %vm3429 = vcmp.le.f32.partialorder %v3428, 0.7853982
          %vm3430 = vcmp.lt.s32.totalorder %v1661, 0
          %v3431 = vand.u32 %v1661, 2139095040
          %v3432 = vshrl.u32 %v3431, 23
          %v3433 = vsub.s32 %v3432, 127
          %v3434 = vand.u32 2147483647, %v1661
          %v3435 = vand.u32 %v3434, 8388607
          %v3436 = vor.u32 %v3435, 8388608
          %v3437 = vsub.s32 0, %v3436
          %v3438 = vadd.s32 %v3433, 1
          %vm3439 = vcmp.gt.s32.totalorder %v3438, 0
          %v3440 = vsel %vm3439, %v3438, 0
          %v3441 = vshrl.u32 %v3440, 5
          %v3442 = vand.u32 %v3440, 31
          %v3443 = vsub.s32 32, %v3442
          %v3444 = vshrl.u32 683565275, %v3443
          %v3445 = vshll.u32 683565275, %v3442
          %v3446 = vshrl.u32 2475754826, %v3443
          %v3447 = vor.u32 %v3445, %v3446
          %v3448 = vshll.u32 2475754826, %v3442
          %v3449 = vshrl.u32 2131351028, %v3443
          %v3450 = vor.u32 %v3448, %v3449
          %v3451 = vshll.u32 2131351028, %v3442
          %v3452 = vshrl.u32 2102212464, %v3443
          %v3453 = vor.u32 %v3451, %v3452
          %v3454 = vshll.u32 2102212464, %v3442
          %v3455 = vshrl.u32 920167782, %v3443
          %v3456 = vor.u32 %v3454, %v3455
          %v3457 = vshll.u32 920167782, %v3442
          %v3458 = vshrl.u32 1326507024, %v3443
          %v3459 = vor.u32 %v3457, %v3458
          %vm3460 = vcmp.lt.s32.totalorder %v3441, 1
          %vm3461 = vcmp.lt.s32.totalorder %v3441, 2
          %vm3462 = vcmp.lt.s32.totalorder %v3441, 3
          %vm3463 = vcmp.lt.s32.totalorder %v3441, 4
          %v3464 = vsel %vm3460, %v3444, %v3447
          %v3465 = vsel %vm3463, %v3453, 2102212464
          %v3466 = vsel %vm3462, %v3450, %v3465
          %v3467 = vsel %vm3461, %v3464, %v3466
          %v3468 = vsel %vm3460, %v3447, %v3450
          %v3469 = vsel %vm3463, %v3456, 920167782
          %v3470 = vsel %vm3462, %v3453, %v3469
          %v3471 = vsel %vm3461, %v3468, %v3470
          %v3472 = vsel %vm3460, %v3450, %v3453
          %v3473 = vsel %vm3463, %v3459, 1326507024
          %v3474 = vsel %vm3462, %v3456, %v3473
          %v3475 = vsel %vm3461, %v3472, %v3474
          %v3476 = vshll.u32 %v3436, 8
          %v3477 = vmul.u32.u64.compose %v3476, %v3475
          %v3478 = vextract.low.u32 %v3477
          %v3479 = vextract.high.u32 %v3477
          %v3480 = vmul.u32.u64.compose %v3476, %v3471
          %v3481 = vextract.low.u32 %v3480
          %v3482 = vextract.high.u32 %v3480
          %v3483 = vmul.u32 %v3476, %v3467
          %v3484 = vadd.s32 %v3479, %v3481
          %vm3485 = vc.u32 %v3479, %v3481
          %v3486 = vadd.s32 %v3482, 1
          %v3487 = vsel %vm3485, %v3486, %v3482
          %v3488 = vadd.s32 %v3483, %v3487
          %v3489 = vadd.s32 %v3488, 536870912
          %v3490 = vshrl.u32 %v3489, 30
          %v3491 = vshll.u32 %v3490, 30
          %v3492 = vsub.s32 %v3488, %v3491
          %vm3493 = vcmp.lt.s32.totalorder %v3492, 0
          %v3494 = vsub.s32 0, %v3492
          %v3495 = vsel %vm3493, %v3494, %v3492
          %v3496 = vclz %v3495
          %v3497 = vsub.s32 %v3496, 2
          %vm3498 = vcmp.gt.s32.totalorder 0, %v3497
          %v3499 = vsel %vm3498, 0, %v3497
          %v3500 = vsub.s32 32, %v3499
          %v3501 = vshll.u32 %v3492, %v3499
          %v3502 = vshrl.u32 %v3484, %v3500
          %v3503 = vor.u32 %v3501, %v3502
          %v3504 = vsub.s32 4294967266, %v3499
          %v3505 = vadd.s32 %v3504, 127
          %v3506 = vshll.u32 %v3505, 23
          %v3507 = vor.u32 4788187, %v3506
          %v3508 = vand.u32 2147483647, %v3507
          %v3510 = vcvt.s32.f32 %v3503
          %v3511 = vmul.f32 %v3510, %v3508
          %v3512 = vxor.u32 %v3511, 2147483648
          %v3513 = vsel %vm3430, %v3512, %v3511
          %v3514 = vsub.s32 4, %v3490
          %v3515 = vsel %vm3430, %v3514, %v3490
          %v3516 = vsel %vm3429, %v1661, %v3513
          %v3517 = vsel %vm3429, 0, %v3515
          %v3518 = vcosq.f32.pop %v3516
          %v3519 = vsinq.f32.pop %v3516
          %vm3520 = vweird.f32 %v1661
          %v3521 = vadd.s32 %v3517, 3
          %v3522 = vand.u32 %v3521, 3
          %vm3523 = vcmp.lt.s32.totalorder %v3522, 2
          %vm3524 = vcmp.eq.s32.totalorder %v3522, 0
          %v3525 = vxor.u32 %v3519, 2147483648
          %v3526 = vsel %vm3524, %v3518, %v3525
          %vm3527 = vcmp.eq.s32.totalorder %v3522, 2
          %v3528 = vxor.u32 %v3518, 2147483648
          %v3529 = vsel %vm3527, %v3528, %v3519
          %v3530 = vsel %vm3523, %v3526, %v3529
          %v3531 = vsel %vm3520, nan, %v3530
          %v3532 = vand.u32 2147483647, %v1662
          %vm3533 = vcmp.le.f32.partialorder %v3532, 0.7853982
          %vm3534 = vcmp.lt.s32.totalorder %v1662, 0
          %v3535 = vand.u32 %v1662, 2139095040
          %v3536 = vshrl.u32 %v3535, 23
          %v3537 = vsub.s32 %v3536, 127
          %v3538 = vand.u32 2147483647, %v1662
          %v3539 = vand.u32 %v3538, 8388607
          %v3540 = vor.u32 %v3539, 8388608
          %v3541 = vsub.s32 0, %v3540
          %v3542 = vadd.s32 %v3537, 1
          %vm3543 = vcmp.gt.s32.totalorder %v3542, 0
          %v3544 = vsel %vm3543, %v3542, 0
          %v3545 = vshrl.u32 %v3544, 5
          %v3546 = vand.u32 %v3544, 31
          %v3547 = vsub.s32 32, %v3546
          %v3548 = vshrl.u32 683565275, %v3547
          %v3549 = vshll.u32 683565275, %v3546
          %v3550 = vshrl.u32 2475754826, %v3547
          %v3551 = vor.u32 %v3549, %v3550
          %v3552 = vshll.u32 2475754826, %v3546
          %v3553 = vshrl.u32 2131351028, %v3547
          %v3554 = vor.u32 %v3552, %v3553
          %v3555 = vshll.u32 2131351028, %v3546
          %v3556 = vshrl.u32 2102212464, %v3547
          %v3557 = vor.u32 %v3555, %v3556
          %v3558 = vshll.u32 2102212464, %v3546
          %v3559 = vshrl.u32 920167782, %v3547
          %v3560 = vor.u32 %v3558, %v3559
          %v3561 = vshll.u32 920167782, %v3546
          %v3562 = vshrl.u32 1326507024, %v3547
          %v3563 = vor.u32 %v3561, %v3562
          %vm3564 = vcmp.lt.s32.totalorder %v3545, 1
          %vm3565 = vcmp.lt.s32.totalorder %v3545, 2
          %vm3566 = vcmp.lt.s32.totalorder %v3545, 3
          %vm3567 = vcmp.lt.s32.totalorder %v3545, 4
          %v3568 = vsel %vm3564, %v3548, %v3551
          %v3569 = vsel %vm3567, %v3557, 2102212464
          %v3570 = vsel %vm3566, %v3554, %v3569
          %v3571 = vsel %vm3565, %v3568, %v3570
          %v3572 = vsel %vm3564, %v3551, %v3554
          %v3573 = vsel %vm3567, %v3560, 920167782
          %v3574 = vsel %vm3566, %v3557, %v3573
          %v3575 = vsel %vm3565, %v3572, %v3574
          %v3576 = vsel %vm3564, %v3554, %v3557
          %v3577 = vsel %vm3567, %v3563, 1326507024
          %v3578 = vsel %vm3566, %v3560, %v3577
          %v3579 = vsel %vm3565, %v3576, %v3578
          %v3580 = vshll.u32 %v3540, 8
          %v3581 = vmul.u32.u64.compose %v3580, %v3579
          %v3582 = vextract.low.u32 %v3581
          %v3583 = vextract.high.u32 %v3581
          %v3584 = vmul.u32.u64.compose %v3580, %v3575
          %v3585 = vextract.low.u32 %v3584
          %v3586 = vextract.high.u32 %v3584
          %v3587 = vmul.u32 %v3580, %v3571
          %v3588 = vadd.s32 %v3583, %v3585
          %vm3589 = vc.u32 %v3583, %v3585
          %v3590 = vadd.s32 %v3586, 1
          %v3591 = vsel %vm3589, %v3590, %v3586
          %v3592 = vadd.s32 %v3587, %v3591
          %v3593 = vadd.s32 %v3592, 536870912
          %v3594 = vshrl.u32 %v3593, 30
          %v3595 = vshll.u32 %v3594, 30
          %v3596 = vsub.s32 %v3592, %v3595
          %vm3597 = vcmp.lt.s32.totalorder %v3596, 0
          %v3598 = vsub.s32 0, %v3596
          %v3599 = vsel %vm3597, %v3598, %v3596
          %v3600 = vclz %v3599
          %v3601 = vsub.s32 %v3600, 2
          %vm3602 = vcmp.gt.s32.totalorder 0, %v3601
          %v3603 = vsel %vm3602, 0, %v3601
          %v3604 = vsub.s32 32, %v3603
          %v3605 = vshll.u32 %v3596, %v3603
          %v3606 = vshrl.u32 %v3588, %v3604
          %v3607 = vor.u32 %v3605, %v3606
          %v3608 = vsub.s32 4294967266, %v3603
          %v3609 = vadd.s32 %v3608, 127
          %v3610 = vshll.u32 %v3609, 23
          %v3611 = vor.u32 4788187, %v3610
          %v3612 = vand.u32 2147483647, %v3611
          %v3614 = vcvt.s32.f32 %v3607
          %v3615 = vmul.f32 %v3614, %v3612
          %v3616 = vxor.u32 %v3615, 2147483648
          %v3617 = vsel %vm3534, %v3616, %v3615
          %v3618 = vsub.s32 4, %v3594
          %v3619 = vsel %vm3534, %v3618, %v3594
          %v3620 = vsel %vm3533, %v1662, %v3617
          %v3621 = vsel %vm3533, 0, %v3619
          %v3622 = vcosq.f32.pop %v3620
          %v3623 = vsinq.f32.pop %v3620
          %vm3624 = vweird.f32 %v1662
          %v3625 = vadd.s32 %v3621, 3
          %v3626 = vand.u32 %v3625, 3
          %vm3627 = vcmp.lt.s32.totalorder %v3626, 2
          %vm3628 = vcmp.eq.s32.totalorder %v3626, 0
          %v3629 = vxor.u32 %v3623, 2147483648
          %v3630 = vsel %vm3628, %v3622, %v3629
          %vm3631 = vcmp.eq.s32.totalorder %v3626, 2
          %v3632 = vxor.u32 %v3622, 2147483648
          %v3633 = vsel %vm3631, %v3632, %v3623
          %v3634 = vsel %vm3627, %v3630, %v3633
          %v3635 = vsel %vm3624, nan, %v3634
          %v3636 = vpack.c.bf16 %v3011, %v2907
          %v3637 = vpack.c.bf16 %v3219, %v3115
          %v3638 = vpack.c.bf16 %v3427, %v3323
          %v3639 = vpack.c.bf16 %v3635, %v3531
          %v3640 = vld [vmem:[#allocation10] sm:$0xf]
          %v3641 = vld [vmem:[#allocation10 + $0x4] sm:$0xf]
          %v3644 = vunpack.c.l.b16 %v3640
          %v3645 = vunpack.c.l.b16 %v3641
          %v3646 = vpack.c.b16 %v3645, %v3644
          %v3649 = vsel %vm1805, %v3636, 0
          %v3652 = vsel %vm1805, %v3637, 0
          %v3655 = vsel %vm1805, %v3638, 0
          %v3658 = vsel %vm1805, %v3639, 0
          %3660 = vmatprep.subr.bf16.mxu0 0
          %3661 = vmatpush1.bf16.msra.mxu0 %v3646
          %3662 = vmatprep.subr.bf16.mxu0 0
          %3663 = vmatpush1.bf16.msra.mxu0 0
          %3664 = vmatprep.subr.bf16.mxu0 0
          %3665 = vmatpush1.bf16.msra.mxu0 0
          %3666 = vmatprep.subr.bf16.mxu0 0
          %3667 = vmatpush1.bf16.msra.mxu0 0
          %3668 = vmatprep.subr.bf16.mxu0 0
          %3669 = vmatpush1.bf16.msra.mxu0 0
          %3670 = vmatprep.subr.bf16.mxu0 0
          %3671 = vmatpush1.bf16.msra.mxu0 0
          %3672 = vmatprep.subr.bf16.mxu0 0
          %3673 = vmatpush1.bf16.msra.mxu0 0
          %3674 = vmatprep.subr.bf16.mxu0 0
          %3675 = vmatpush1.bf16.msra.mxu0 0
          %3676 = vmatprep.subr.bf16.mxu0 0
          %3677 = vmatpush1.bf16.msra.mxu0 0
          %3678 = vmatprep.subr.bf16.mxu0 0
          %3679 = vmatpush1.bf16.msra.mxu0 0
          %3680 = vmatprep.subr.bf16.mxu0 0
          %3681 = vmatpush1.bf16.msra.mxu0 0
          %3682 = vmatprep.subr.bf16.mxu0 0
          %3683 = vmatpush1.bf16.msra.mxu0 0
          %3684 = vmatprep.subr.bf16.mxu0 0
          %3685 = vmatpush1.bf16.msra.mxu0 0
          %3686 = vmatprep.subr.bf16.mxu0 0
          %3687 = vmatpush1.bf16.msra.mxu0 0
          %3688 = vmatprep.subr.bf16.mxu0 0
          %3689 = vmatpush1.bf16.msra.mxu0 0
          %3690 = vmatprep.subr.bf16.mxu0 0
          %3691 = vmatpush1.bf16.msra.mxu0 0
          %3692 = vmatprep.mubr.bf16.mxu0 0
          %3693 = vmatmul.mubr.bf16.gmra.mrb[0].mxu0 %v3649
          %v3694 = vpop.f32.mrb[0].mxu0
          %v3695 = vadd.f32 0.0, %v3694
          %v3696 = vpop.f32.mrb[0].mxu0
          %v3697 = vpop.f32.mrb[0].mxu0
          %v3698 = vadd.f32 0.0, %v3697
          %v3699 = vpop.f32.mrb[0].mxu0
          %3700 = vmatprep.mubr.bf16.mxu0 0
          %3701 = vmatmul.mubr.bf16.gmra.mrb[0].mxu0 %v3652
          %v3702 = vpop.f32.mrb[0].mxu0
          %v3703 = vadd.f32 0.0, %v3702
          %v3704 = vpop.f32.mrb[0].mxu0
          %v3705 = vpop.f32.mrb[0].mxu0
          %v3706 = vadd.f32 0.0, %v3705
          %v3707 = vpop.f32.mrb[0].mxu0
          %3708 = vmatprep.mubr.bf16.mxu0 0
          %3709 = vmatmul.mubr.bf16.gmra.mrb[0].mxu0 %v3655
          %v3710 = vpop.f32.mrb[0].mxu0
          %v3711 = vadd.f32 0.0, %v3710
          %v3712 = vpop.f32.mrb[0].mxu0
          %v3713 = vpop.f32.mrb[0].mxu0
          %v3714 = vadd.f32 0.0, %v3713
          %v3715 = vpop.f32.mrb[0].mxu0
          %3716 = vmatprep.mubr.bf16.mxu0 0
          %3717 = vmatmul.mubr.bf16.gmra.mrb[0].mxu0 %v3658
          %v3718 = vpop.f32.mrb[0].mxu0
          %v3719 = vadd.f32 0.0, %v3718
          %v3720 = vpop.f32.mrb[0].mxu0
          %v3721 = vpop.f32.mrb[0].mxu0
          %v3722 = vadd.f32 0.0, %v3721
          %v3723 = vpop.f32.mrb[0].mxu0
          %3724 = vdwg.mxu0
          %v3725 = vadd.f32 %v2796, %v3695
          %v3726 = vadd.f32 %v2797, %v3698
          %v3727 = vadd.f32 %v2798, %v3703
          %v3728 = vadd.f32 %v2799, %v3706
          %v3729 = vadd.f32 %v2800, %v3711
          %v3730 = vadd.f32 %v2801, %v3714
          %v3731 = vadd.f32 %v2802, %v3719
          %v3732 = vadd.f32 %v2803, %v3722
          %v3733 = vld [vmem:[#allocation11] sm:$0x1]
          %v3735 = vlaneseq
          %v3736 = vshrl.u32 %v3735, 7
          %v3737 = vsub.s32 0, %v3736
          %v3738 = vrot.slane %v3733, %v3737
          %v3740 = vadd.f32 %v3725, %v3738
          %v3741 = vadd.f32 %v3726, %v3738
          %v3742 = vadd.f32 %v3727, %v3738
          %v3743 = vadd.f32 %v3728, %v3738
          %v3744 = vadd.f32 %v3729, %v3738
          %v3745 = vadd.f32 %v3730, %v3738
          %v3746 = vadd.f32 %v3731, %v3738
          %v3747 = vadd.f32 %v3732, %v3738
          %v3748 = vmul.f32 %v3740, 0.5
          %v3749 = vmul.f32 %v3741, 0.5
          %v3750 = vmul.f32 %v3742, 0.5
          %v3751 = vmul.f32 %v3743, 0.5
          %v3752 = vmul.f32 %v3744, 0.5
          %v3753 = vmul.f32 %v3745, 0.5
          %v3754 = vmul.f32 %v3746, 0.5
          %v3755 = vmul.f32 %v3747, 0.5
          %v3756 = vtanh.pop %v3748
          %v3757 = vtanh.pop %v3749
          %v3758 = vtanh.pop %v3750
          %v3759 = vtanh.pop %v3751
          %v3760 = vtanh.pop %v3752
          %v3761 = vtanh.pop %v3753
          %v3762 = vtanh.pop %v3754
          %v3763 = vtanh.pop %v3755
          %v3764 = vadd.f32 %v3756, 1.0
          %v3765 = vadd.f32 %v3757, 1.0
          %v3766 = vadd.f32 %v3758, 1.0
          %v3767 = vadd.f32 %v3759, 1.0
          %v3768 = vadd.f32 %v3760, 1.0
          %v3769 = vadd.f32 %v3761, 1.0
          %v3770 = vadd.f32 %v3762, 1.0
          %v3771 = vadd.f32 %v3763, 1.0
          %v3772 = vmul.f32 %v3764, 0.5
          %v3773 = vmul.f32 %v3765, 0.5
          %v3774 = vmul.f32 %v3766, 0.5
          %v3775 = vmul.f32 %v3767, 0.5
          %v3776 = vmul.f32 %v3768, 0.5
          %v3777 = vmul.f32 %v3769, 0.5
          %v3778 = vmul.f32 %v3770, 0.5
          %v3779 = vmul.f32 %v3771, 0.5
          %v3780 = vmul.f32 %v3740, %v3772
          %v3781 = vmul.f32 %v3741, %v3773
          %v3782 = vmul.f32 %v3742, %v3774
          %v3783 = vmul.f32 %v3743, %v3775
          %v3784 = vmul.f32 %v3744, %v3776
          %v3785 = vmul.f32 %v3745, %v3777
          %v3786 = vmul.f32 %v3746, %v3778
          %v3787 = vmul.f32 %v3747, %v3779
          %3788 = vst [vmem:[#allocation2] sm:$0xff] %v3780
          %3789 = vst [vmem:[#allocation2 + $0x8] sm:$0xff] %v3781
          %3790 = vst [vmem:[#allocation2 + $0x10] sm:$0xff] %v3782
          %3791 = vst [vmem:[#allocation2 + $0x18] sm:$0xff] %v3783
          %3792 = vst [vmem:[#allocation2 + $0x20] sm:$0xff] %v3784
          %3793 = vst [vmem:[#allocation2 + $0x28] sm:$0xff] %v3785
          %3794 = vst [vmem:[#allocation2 + $0x30] sm:$0xff] %v3786
          %3795 = vst [vmem:[#allocation2 + $0x38] sm:$0xff] %v3787
        $region244: #{conditional_attention_forward.1} parent=147 // pred_fallthru
          _
        %v3796 = vld [vmem:[#allocation2] sm:$0xff]
        %v3797 = vld [vmem:[#allocation2 + $0x8] sm:$0xff]
        %v3798 = vld [vmem:[#allocation2 + $0x10] sm:$0xff]
        %v3799 = vld [vmem:[#allocation2 + $0x18] sm:$0xff]
        %v3800 = vld [vmem:[#allocation2 + $0x20] sm:$0xff]
        %v3801 = vld [vmem:[#allocation2 + $0x28] sm:$0xff]
        %v3802 = vld [vmem:[#allocation2 + $0x30] sm:$0xff]
        %v3803 = vld [vmem:[#allocation2 + $0x38] sm:$0xff]
        %v3804 = vpack.c.bf16 %v3797, %v3796
        %v3805 = vpack.c.bf16 %v3799, %v3798
        %v3806 = vpack.c.bf16 %v3801, %v3800
        %v3807 = vpack.c.bf16 %v3803, %v3802
        %v3808 = vld [vmem:[%s1315] sm:$0xff]
        %v3809 = vld [vmem:[%s1315 + $0x8] sm:$0xf]
        %v3810 = vld [vmem:[%s1315 + $0xc] sm:$0xff]
        %v3811 = vld [vmem:[%s1315 + $0x14] sm:$0xf]
        %v3812 = vld [vmem:[%s1315 + $0x18] sm:$0xff]
        %v3813 = vld [vmem:[%s1315 + $0x20] sm:$0xf]
        %v3814 = vld [vmem:[%s1315 + $0x24] sm:$0xff]
        %v3815 = vld [vmem:[%s1315 + $0x2c] sm:$0xf]
        %v3816 = vld [vmem:[%s1315 + $0x30] sm:$0xff]
        %v3817 = vld [vmem:[%s1315 + $0x38] sm:$0xf]
        %v3818 = vld [vmem:[%s1315 + $0x3c] sm:$0xff]
        %v3819 = vld [vmem:[%s1315 + $0x44] sm:$0xf]
        %v3820 = vld [vmem:[%s1315 + $0x48] sm:$0xff]
        %v3821 = vld [vmem:[%s1315 + $0x50] sm:$0xf]
        %v3822 = vld [vmem:[%s1315 + $0x54] sm:$0xff]
        %v3823 = vld [vmem:[%s1315 + $0x5c] sm:$0xf]
        %v3824 = vld [vmem:[%s1315 + $0x60] sm:$0xff]
        %v3825 = vld [vmem:[%s1315 + $0x68] sm:$0xf]
        %v3826 = vld [vmem:[%s1315 + $0x6c] sm:$0xff]
        %v3827 = vld [vmem:[%s1315 + $0x74] sm:$0xf]
        %v3828 = vld [vmem:[%s1315 + $0x78] sm:$0xff]
        %v3829 = vld [vmem:[%s1315 + $0x80] sm:$0xf]
        %v3830 = vld [vmem:[%s1315 + $0x84] sm:$0xff]
        %v3831 = vld [vmem:[%s1315 + $0x8c] sm:$0xf]
        %v3832 = vld [vmem:[%s1315 + $0x90] sm:$0xff]
        %v3833 = vld [vmem:[%s1315 + $0x98] sm:$0xf]
        %v3834 = vld [vmem:[%s1315 + $0x9c] sm:$0xff]
        %v3835 = vld [vmem:[%s1315 + $0xa4] sm:$0xf]
        %v3836 = vld [vmem:[%s1315 + $0xa8] sm:$0xff]
        %v3837 = vld [vmem:[%s1315 + $0xb0] sm:$0xf]
        %v3838 = vld [vmem:[%s1315 + $0xb4] sm:$0xff]
        %v3839 = vld [vmem:[%s1315 + $0xbc] sm:$0xf]
        %v3840 = vld [vmem:[%s1324] sm:$0x7]
        %v3842 = vlaneseq
        %v3843 = vshrl.u32 %v3842, 7
        %v3844 = vsub.s32 0, %v3843
        %v3845 = vrot.slane %v3840, %v3844
        %v3846 = vlaneseq
        %v3847 = vshrl.u32 %v3846, 7
        %v3848 = vsub.s32 1, %v3847
        %v3849 = vrot.slane %v3840, %v3848
        %v3850 = vlaneseq
        %v3851 = vshrl.u32 %v3850, 7
        %v3852 = vsub.s32 2, %v3851
        %v3853 = vrot.slane %v3840, %v3852
        %v3889 = vunpack.c.l.b16 %v3808
        %v3890 = vunpack.c.h.b16 %v3808
        %v3891 = vunpack.c.l.b16 %v3809
        %v3892 = vunpack.c.l.b16 %v3810
        %v3893 = vunpack.c.h.b16 %v3810
        %v3894 = vunpack.c.l.b16 %v3811
        %v3895 = vunpack.c.l.b16 %v3812
        %v3896 = vunpack.c.h.b16 %v3812
        %v3897 = vunpack.c.l.b16 %v3813
        %v3898 = vunpack.c.l.b16 %v3814
        %v3899 = vunpack.c.h.b16 %v3814
        %v3900 = vunpack.c.l.b16 %v3815
        %v3901 = vunpack.c.l.b16 %v3816
        %v3902 = vunpack.c.h.b16 %v3816
        %v3903 = vunpack.c.l.b16 %v3817
        %v3904 = vunpack.c.l.b16 %v3818
        %v3905 = vunpack.c.h.b16 %v3818
        %v3906 = vunpack.c.l.b16 %v3819
        %v3907 = vunpack.c.l.b16 %v3820
        %v3908 = vunpack.c.h.b16 %v3820
        %v3909 = vunpack.c.l.b16 %v3821
        %v3910 = vunpack.c.l.b16 %v3822
        %v3911 = vunpack.c.h.b16 %v3822
        %v3912 = vunpack.c.l.b16 %v3823
        %v3913 = vunpack.c.l.b16 %v3824
        %v3914 = vunpack.c.h.b16 %v3824
        %v3915 = vunpack.c.l.b16 %v3825
        %v3916 = vunpack.c.l.b16 %v3826
        %v3917 = vunpack.c.h.b16 %v3826
        %v3918 = vunpack.c.l.b16 %v3827
        %v3919 = vunpack.c.l.b16 %v3828
        %v3920 = vunpack.c.h.b16 %v3828
        %v3921 = vunpack.c.l.b16 %v3829
        %v3922 = vunpack.c.l.b16 %v3830
        %v3923 = vunpack.c.h.b16 %v3830
        %v3924 = vunpack.c.l.b16 %v3831
        %v3925 = vunpack.c.l.b16 %v3832
        %v3926 = vunpack.c.h.b16 %v3832
        %v3927 = vunpack.c.l.b16 %v3833
        %v3928 = vunpack.c.l.b16 %v3834
        %v3929 = vunpack.c.h.b16 %v3834
        %v3930 = vunpack.c.l.b16 %v3835
        %v3931 = vunpack.c.l.b16 %v3836
        %v3932 = vunpack.c.h.b16 %v3836
        %v3933 = vunpack.c.l.b16 %v3837
        %v3934 = vunpack.c.l.b16 %v3838
        %v3935 = vunpack.c.h.b16 %v3838
        %v3936 = vunpack.c.l.b16 %v3839
        %v3937 = vpack.c.b16 %v3892, %v3889
        %v3938 = vpack.c.b16 %v3893, %v3890
        %v3939 = vpack.c.b16 %v3894, %v3891
        %v3940 = vpack.c.b16 %v3898, %v3895
        %v3941 = vpack.c.b16 %v3899, %v3896
        %v3942 = vpack.c.b16 %v3900, %v3897
        %v3943 = vpack.c.b16 %v3904, %v3901
        %v3944 = vpack.c.b16 %v3905, %v3902
        %v3945 = vpack.c.b16 %v3906, %v3903
        %v3946 = vpack.c.b16 %v3910, %v3907
        %v3947 = vpack.c.b16 %v3911, %v3908
        %v3948 = vpack.c.b16 %v3912, %v3909
        %v3949 = vpack.c.b16 %v3916, %v3913
        %v3950 = vpack.c.b16 %v3917, %v3914
        %v3951 = vpack.c.b16 %v3918, %v3915
        %v3952 = vpack.c.b16 %v3922, %v3919
        %v3953 = vpack.c.b16 %v3923, %v3920
        %v3954 = vpack.c.b16 %v3924, %v3921
        %v3955 = vpack.c.b16 %v3928, %v3925
        %v3956 = vpack.c.b16 %v3929, %v3926
        %v3957 = vpack.c.b16 %v3930, %v3927
        %v3958 = vpack.c.b16 %v3934, %v3931
        %v3959 = vpack.c.b16 %v3935, %v3932
        %v3960 = vpack.c.b16 %v3936, %v3933
        %3985 = vmatprep.subr.bf16.mxu0 %v3938
        %3986 = vmatpush1.bf16.msra.mxu0 %v3937
        %3987 = vmatprep.subr.bf16.mxu0 %v3941
        %3988 = vmatpush1.bf16.msra.mxu0 %v3940
        %3989 = vmatprep.subr.bf16.mxu0 %v3944
        %3990 = vmatpush1.bf16.msra.mxu0 %v3943
        %3991 = vmatprep.subr.bf16.mxu0 %v3947
        %3992 = vmatpush1.bf16.msra.mxu0 %v3946
        %3993 = vmatprep.subr.bf16.mxu0 %v3950
        %3994 = vmatpush1.bf16.msra.mxu0 %v3949
        %3995 = vmatprep.subr.bf16.mxu0 %v3953
        %3996 = vmatpush1.bf16.msra.mxu0 %v3952
        %3997 = vmatprep.subr.bf16.mxu0 %v3956
        %3998 = vmatpush1.bf16.msra.mxu0 %v3955
        %3999 = vmatprep.subr.bf16.mxu0 %v3959
        %4000 = vmatpush1.bf16.msra.mxu0 %v3958
        %4001 = vmatprep.subr.bf16.mxu0 0
        %4002 = vmatpush1.bf16.msra.mxu0 0
        %4003 = vmatprep.subr.bf16.mxu0 0
        %4004 = vmatpush1.bf16.msra.mxu0 0
        %4005 = vmatprep.subr.bf16.mxu0 0
        %4006 = vmatpush1.bf16.msra.mxu0 0
        %4007 = vmatprep.subr.bf16.mxu0 0
        %4008 = vmatpush1.bf16.msra.mxu0 0
        %4009 = vmatprep.subr.bf16.mxu0 0
        %4010 = vmatpush1.bf16.msra.mxu0 0
        %4011 = vmatprep.subr.bf16.mxu0 0
        %4012 = vmatpush1.bf16.msra.mxu0 0
        %4013 = vmatprep.subr.bf16.mxu0 0
        %4014 = vmatpush1.bf16.msra.mxu0 0
        %4015 = vmatprep.subr.bf16.mxu0 0
        %4016 = vmatpush1.bf16.msra.mxu0 0
        %4017 = vmatprep.mubr.bf16.mxu0 0
        %4018 = vmatmul.mubr.bf16.gmra.mrb[0].mxu0 %v3804
        %v4019 = vpop.f32.mrb[0].mxu0
        %v4020 = vadd.f32 %v3845, %v4019
        %v4021 = vpop.f32.mrb[0].mxu0
        %v4022 = vadd.f32 %v3849, %v4021
        %v4023 = vpop.f32.mrb[0].mxu0
        %v4024 = vadd.f32 %v3845, %v4023
        %v4025 = vpop.f32.mrb[0].mxu0
        %v4026 = vadd.f32 %v3849, %v4025
        %4027 = vmatprep.mubr.bf16.mxu0 0
        %4028 = vmatmul.mubr.bf16.gmra.mrb[0].mxu0 %v3805
        %v4029 = vpop.f32.mrb[0].mxu0
        %v4030 = vadd.f32 %v3845, %v4029
        %v4031 = vpop.f32.mrb[0].mxu0
        %v4032 = vadd.f32 %v3849, %v4031
        %v4033 = vpop.f32.mrb[0].mxu0
        %v4034 = vadd.f32 %v3845, %v4033
        %v4035 = vpop.f32.mrb[0].mxu0
        %v4036 = vadd.f32 %v3849, %v4035
        %4037 = vmatprep.mubr.bf16.mxu0 0
        %4038 = vmatmul.mubr.bf16.gmra.mrb[0].mxu0 %v3806
        %v4039 = vpop.f32.mrb[0].mxu0
        %v4040 = vadd.f32 %v3845, %v4039
        %v4041 = vpop.f32.mrb[0].mxu0
        %v4042 = vadd.f32 %v3849, %v4041
        %v4043 = vpop.f32.mrb[0].mxu0
        %v4044 = vadd.f32 %v3845, %v4043
        %v4045 = vpop.f32.mrb[0].mxu0
        %v4046 = vadd.f32 %v3849, %v4045
        %4047 = vmatprep.mubr.bf16.mxu0 0
        %4048 = vmatmul.mubr.bf16.gmra.mrb[0].mxu0 %v3807
        %v4049 = vpop.f32.mrb[0].mxu0
        %v4050 = vadd.f32 %v3845, %v4049
        %v4051 = vpop.f32.mrb[0].mxu0
        %v4052 = vadd.f32 %v3849, %v4051
        %v4053 = vpop.f32.mrb[0].mxu0
        %v4054 = vadd.f32 %v3845, %v4053
        %v4055 = vpop.f32.mrb[0].mxu0
        %v4056 = vadd.f32 %v3849, %v4055
        %4057 = vdwg.mxu0
        %4058 = vmatprep.subr.bf16.mxu0 0
        %4059 = vmatpush1.bf16.msra.mxu0 %v3939
        %4060 = vmatprep.subr.bf16.mxu0 0
        %4061 = vmatpush1.bf16.msra.mxu0 %v3942
        %4062 = vmatprep.subr.bf16.mxu0 0
        %4063 = vmatpush1.bf16.msra.mxu0 %v3945
        %4064 = vmatprep.subr.bf16.mxu0 0
        %4065 = vmatpush1.bf16.msra.mxu0 %v3948
        %4066 = vmatprep.subr.bf16.mxu0 0
        %4067 = vmatpush1.bf16.msra.mxu0 %v3951
        %4068 = vmatprep.subr.bf16.mxu0 0
        %4069 = vmatpush1.bf16.msra.mxu0 %v3954
        %4070 = vmatprep.subr.bf16.mxu0 0
        %4071 = vmatpush1.bf16.msra.mxu0 %v3957
        %4072 = vmatprep.subr.bf16.mxu0 0
        %4073 = vmatpush1.bf16.msra.mxu0 %v3960
        %4074 = vmatprep.subr.bf16.mxu0 0
        %4075 = vmatpush1.bf16.msra.mxu0 0
        %4076 = vmatprep.subr.bf16.mxu0 0
        %4077 = vmatpush1.bf16.msra.mxu0 0
        %4078 = vmatprep.subr.bf16.mxu0 0
        %4079 = vmatpush1.bf16.msra.mxu0 0
        %4080 = vmatprep.subr.bf16.mxu0 0
        %4081 = vmatpush1.bf16.msra.mxu0 0
        %4082 = vmatprep.subr.bf16.mxu0 0
        %4083 = vmatpush1.bf16.msra.mxu0 0
        %4084 = vmatprep.subr.bf16.mxu0 0
        %4085 = vmatpush1.bf16.msra.mxu0 0
        %4086 = vmatprep.subr.bf16.mxu0 0
        %4087 = vmatpush1.bf16.msra.mxu0 0
        %4088 = vmatprep.subr.bf16.mxu0 0
        %4089 = vmatpush1.bf16.msra.mxu0 0
        %4090 = vmatprep.mubr.bf16.mxu0 0
        %4091 = vmatmul.mubr.bf16.gmra.mrb[0].mxu0 %v3804
        %v4092 = vpop.f32.mrb[0].mxu0
        %v4093 = vadd.f32 %v3853, %v4092
        %v4094 = vpop.f32.mrb[0].mxu0
        %v4095 = vpop.f32.mrb[0].mxu0
        %v4096 = vadd.f32 %v3853, %v4095
        %v4097 = vpop.f32.mrb[0].mxu0
        %4098 = vmatprep.mubr.bf16.mxu0 0
        %4099 = vmatmul.mubr.bf16.gmra.mrb[0].mxu0 %v3805
        %v4100 = vpop.f32.mrb[0].mxu0
        %v4101 = vadd.f32 %v3853, %v4100
        %v4102 = vpop.f32.mrb[0].mxu0
        %v4103 = vpop.f32.mrb[0].mxu0
        %v4104 = vadd.f32 %v3853, %v4103
        %v4105 = vpop.f32.mrb[0].mxu0
        %4106 = vmatprep.mubr.bf16.mxu0 0
        %4107 = vmatmul.mubr.bf16.gmra.mrb[0].mxu0 %v3806
        %v4108 = vpop.f32.mrb[0].mxu0
        %v4109 = vadd.f32 %v3853, %v4108
        %v4110 = vpop.f32.mrb[0].mxu0
        %v4111 = vpop.f32.mrb[0].mxu0
        %v4112 = vadd.f32 %v3853, %v4111
        %v4113 = vpop.f32.mrb[0].mxu0
        %4114 = vmatprep.mubr.bf16.mxu0 0
        %4115 = vmatmul.mubr.bf16.gmra.mrb[0].mxu0 %v3807
        %v4116 = vpop.f32.mrb[0].mxu0
        %v4117 = vadd.f32 %v3853, %v4116
        %v4118 = vpop.f32.mrb[0].mxu0
        %v4119 = vpop.f32.mrb[0].mxu0
        %v4120 = vadd.f32 %v3853, %v4119
        %v4121 = vpop.f32.mrb[0].mxu0
        %4122 = vdwg.mxu0
        %v4123 = vld [vmem:[%s9] sm:$0xff]
        %v4124 = vld [vmem:[%s9 + $0x8] sm:$0xff]
        %v4125 = vld [vmem:[%s9 + $0x10] sm:$0xff]
        %v4126 = vld [vmem:[%s9 + $0x18] sm:$0xff]
        %v4127 = vld [vmem:[%s9 + $0x20] sm:$0xff]
        %v4128 = vld [vmem:[%s9 + $0x28] sm:$0xff]
        %v4129 = vld [vmem:[%s9 + $0x30] sm:$0xff]
        %v4130 = vld [vmem:[%s9 + $0x38] sm:$0xff]
        %v4131 = vpack.c.bf16 %v4024, %v4020
        %v4132 = vpack.c.bf16 %v4034, %v4030
        %v4133 = vpack.c.bf16 %v4044, %v4040
        %v4134 = vpack.c.bf16 %v4054, %v4050
        %v4135 = vpack.c.bf16 %v4026, %v4022
        %v4136 = vpack.c.bf16 %v4036, %v4032
        %v4137 = vpack.c.bf16 %v4046, %v4042
        %v4138 = vpack.c.bf16 %v4056, %v4052
        %v4139 = vpack.c.bf16 %v4096, %v4093
        %v4140 = vpack.c.bf16 %v4104, %v4101
        %v4141 = vpack.c.bf16 %v4112, %v4109
        %v4142 = vpack.c.bf16 %v4120, %v4117
        %vm4143 = vcmask 261120
        %v4145 = vsel %vm4143, %v4131, 0
        %v4148 = vsel %vm4143, %v4132, 0
        %v4151 = vsel %vm4143, %v4133, 0
        %v4154 = vsel %vm4143, %v4134, 0
        %v4157 = vsel %vm4143, %v4135, 0
        %v4160 = vsel %vm4143, %v4136, 0
        %v4163 = vsel %vm4143, %v4137, 0
        %v4166 = vsel %vm4143, %v4138, 0
        %4168 = vmatprep.subr.bf16.mxu0 0
        %4169 = vmatpush1.bf16.xpose.msra.mxu0 %v4157
        %4170 = vmatprep.subr.bf16.mxu0 0
        %4171 = vmatpush1.bf16.xpose.msra.mxu0 %v4160
        %4172 = vmatprep.subr.bf16.mxu0 0
        %4173 = vmatpush1.bf16.xpose.msra.mxu0 %v4163
        %4174 = vmatprep.subr.bf16.mxu0 0
        %4175 = vmatpush1.bf16.xpose.msra.mxu0 %v4166
        %4176 = vmatprep.subr.bf16.mxu0 0
        %4177 = vmatpush1.bf16.xpose.msra.mxu0 0
        %4178 = vmatprep.subr.bf16.mxu0 0
        %4179 = vmatpush1.bf16.xpose.msra.mxu0 0
        %4180 = vmatprep.subr.bf16.mxu0 0
        %4181 = vmatpush1.bf16.xpose.msra.mxu0 0
        %4182 = vmatprep.subr.bf16.mxu0 0
        %4183 = vmatpush1.bf16.xpose.msra.mxu0 0
        %4184 = vmatprep.subr.bf16.mxu0 0
        %4185 = vmatpush1.bf16.xpose.msra.mxu0 0
        %4186 = vmatprep.subr.bf16.mxu0 0
        %4187 = vmatpush1.bf16.xpose.msra.mxu0 0
        %4188 = vmatprep.subr.bf16.mxu0 0
        %4189 = vmatpush1.bf16.xpose.msra.mxu0 0
        %4190 = vmatprep.subr.bf16.mxu0 0
        %4191 = vmatpush1.bf16.xpose.msra.mxu0 0
        %4192 = vmatprep.subr.bf16.mxu0 0
        %4193 = vmatpush1.bf16.xpose.msra.mxu0 0
        %4194 = vmatprep.subr.bf16.mxu0 0
        %4195 = vmatpush1.bf16.xpose.msra.mxu0 0
        %4196 = vmatprep.subr.bf16.mxu0 0
        %4197 = vmatpush1.bf16.xpose.msra.mxu0 0
        %4198 = vmatprep.subr.bf16.mxu0 0
        %4199 = vmatpush1.bf16.xpose.msra.mxu0 0
        %4200 = vmatprep.mubr.bf16.mxu0 0
        %4201 = vmatmul.mubr.bf16.gmra.mrb[0].mxu0 %v4145
        %v4202 = vpop.f32.mrb[0].mxu0
        %v4203 = vadd.f32 %v4123, %v4202
        %v4204 = vpop.f32.mrb[0].mxu0
        %v4205 = vpop.f32.mrb[0].mxu0
        %v4206 = vadd.f32 %v4124, %v4205
        %v4207 = vpop.f32.mrb[0].mxu0
        %4208 = vmatprep.mubr.bf16.mxu0 0
        %4209 = vmatmul.mubr.bf16.gmra.mrb[0].mxu0 %v4148
        %v4210 = vpop.f32.mrb[0].mxu0
        %v4211 = vadd.f32 %v4125, %v4210
        %v4212 = vpop.f32.mrb[0].mxu0
        %v4213 = vpop.f32.mrb[0].mxu0
        %v4214 = vadd.f32 %v4126, %v4213
        %v4215 = vpop.f32.mrb[0].mxu0
        %4216 = vmatprep.mubr.bf16.mxu0 0
        %4217 = vmatmul.mubr.bf16.gmra.mrb[0].mxu0 %v4151
        %v4218 = vpop.f32.mrb[0].mxu0
        %v4219 = vadd.f32 %v4127, %v4218
        %v4220 = vpop.f32.mrb[0].mxu0
        %v4221 = vpop.f32.mrb[0].mxu0
        %v4222 = vadd.f32 %v4128, %v4221
        %v4223 = vpop.f32.mrb[0].mxu0
        %4224 = vmatprep.mubr.bf16.mxu0 0
        %4225 = vmatmul.mubr.bf16.gmra.mrb[0].mxu0 %v4154
        %v4226 = vpop.f32.mrb[0].mxu0
        %v4227 = vadd.f32 %v4129, %v4226
        %v4228 = vpop.f32.mrb[0].mxu0
        %v4229 = vpop.f32.mrb[0].mxu0
        %v4230 = vadd.f32 %v4130, %v4229
        %v4231 = vpop.f32.mrb[0].mxu0
        %4232 = vdwg.mxu0
        %vm4233 = vcmask 523264
        %v4234 = vsel %vm4233, %v4203, -inf
        %4235 = vmax.xlane.f32.xlu0 %v4234
        %v4236 = vpop.xlane.xlu0 %4235
        %v4237 = vsel %vm4233, %v4206, -inf
        %4238 = vmax.xlane.f32.xlu0 %v4237
        %v4239 = vpop.xlane.xlu0 %4238
        %v4240 = vsel %vm4233, %v4211, -inf
        %4241 = vmax.xlane.f32.xlu0 %v4240
        %v4242 = vpop.xlane.xlu0 %4241
        %v4243 = vsel %vm4233, %v4214, -inf
        %4244 = vmax.xlane.f32.xlu0 %v4243
        %v4245 = vpop.xlane.xlu0 %4244
        %v4246 = vsel %vm4233, %v4219, -inf
        %4247 = vmax.xlane.f32.xlu0 %v4246
        %v4248 = vpop.xlane.xlu0 %4247
        %v4249 = vsel %vm4233, %v4222, -inf
        %4250 = vmax.xlane.f32.xlu0 %v4249
        %v4251 = vpop.xlane.xlu0 %4250
        %v4252 = vsel %vm4233, %v4227, -inf
        %4253 = vmax.xlane.f32.xlu0 %v4252
        %v4254 = vpop.xlane.xlu0 %4253
        %v4255 = vsel %vm4233, %v4230, -inf
        %4256 = vmax.xlane.f32.xlu0 %v4255
        %v4257 = vpop.xlane.xlu0 %4256
        %v4258 = vsub.f32 %v4203, %v4236
        %v4259 = vsub.f32 %v4206, %v4239
        %v4260 = vsub.f32 %v4211, %v4242
        %v4261 = vsub.f32 %v4214, %v4245
        %v4262 = vsub.f32 %v4219, %v4248
        %v4263 = vsub.f32 %v4222, %v4251
        %v4264 = vsub.f32 %v4227, %v4254
        %v4265 = vsub.f32 %v4230, %v4257
        %v4266 = vmul.f32 %v4258, 1.442695
        %v4267 = vpow.pop %v4266
        %v4268 = vmul.f32 %v4259, 1.442695
        %v4269 = vpow.pop %v4268
        %v4270 = vmul.f32 %v4260, 1.442695
        %v4271 = vpow.pop %v4270
        %v4272 = vmul.f32 %v4261, 1.442695
        %v4273 = vpow.pop %v4272
        %v4274 = vmul.f32 %v4262, 1.442695
        %v4275 = vpow.pop %v4274
        %v4276 = vmul.f32 %v4263, 1.442695
        %v4277 = vpow.pop %v4276
        %v4278 = vmul.f32 %v4264, 1.442695
        %v4279 = vpow.pop %v4278
        %v4280 = vmul.f32 %v4265, 1.442695
        %v4281 = vpow.pop %v4280
        %v4282 = vsel %vm4233, %v4267, 0.0
        %4283 = vadd.xlane.f32.xlu0 %v4282
        %v4284 = vpop.xlane.xlu0 %4283
        %v4285 = vsel %vm4233, %v4269, 0.0
        %4286 = vadd.xlane.f32.xlu0 %v4285
        %v4287 = vpop.xlane.xlu0 %4286
        %v4288 = vsel %vm4233, %v4271, 0.0
        %4289 = vadd.xlane.f32.xlu0 %v4288
        %v4290 = vpop.xlane.xlu0 %4289
        %v4291 = vsel %vm4233, %v4273, 0.0
        %4292 = vadd.xlane.f32.xlu0 %v4291
        %v4293 = vpop.xlane.xlu0 %4292
        %v4294 = vsel %vm4233, %v4275, 0.0
        %4295 = vadd.xlane.f32.xlu0 %v4294
        %v4296 = vpop.xlane.xlu0 %4295
        %v4297 = vsel %vm4233, %v4277, 0.0
        %4298 = vadd.xlane.f32.xlu0 %v4297
        %v4299 = vpop.xlane.xlu0 %4298
        %v4300 = vsel %vm4233, %v4279, 0.0
        %4301 = vadd.xlane.f32.xlu0 %v4300
        %v4302 = vpop.xlane.xlu0 %4301
        %v4303 = vsel %vm4233, %v4281, 0.0
        %4304 = vadd.xlane.f32.xlu0 %v4303
        %v4305 = vpop.xlane.xlu0 %4304
        %v4306 = vrcp.pop %v4284
        %v4307 = vrcp.pop %v4287
        %v4308 = vrcp.pop %v4290
        %v4309 = vrcp.pop %v4293
        %v4310 = vrcp.pop %v4296
        %v4311 = vrcp.pop %v4299
        %v4312 = vrcp.pop %v4302
        %v4313 = vrcp.pop %v4305
        %v4314 = vmul.f32 %v4267, %v4306
        %v4315 = vmul.f32 %v4269, %v4307
        %v4316 = vmul.f32 %v4271, %v4308
        %v4317 = vmul.f32 %v4273, %v4309
        %v4318 = vmul.f32 %v4275, %v4310
        %v4319 = vmul.f32 %v4277, %v4311
        %v4320 = vmul.f32 %v4279, %v4312
        %v4321 = vmul.f32 %v4281, %v4313
        %v4322 = vpack.c.bf16 %v4315, %v4314
        %v4323 = vpack.c.bf16 %v4317, %v4316
        %v4324 = vpack.c.bf16 %v4319, %v4318
        %v4325 = vpack.c.bf16 %v4321, %v4320
        %v4327 = vsel %vm4233, %v4322, 0
        %v4330 = vsel %vm4233, %v4323, 0
        %v4333 = vsel %vm4233, %v4324, 0
        %v4336 = vsel %vm4233, %v4325, 0
        %4338 = vmatprep.subr.bf16.mxu0 0
        %4339 = vmatpush1.bf16.msra.mxu0 %v4139
        %4340 = vmatprep.subr.bf16.mxu0 0
        %4341 = vmatpush1.bf16.msra.mxu0 %v4140
        %4342 = vmatprep.subr.bf16.mxu0 0
        %4343 = vmatpush1.bf16.msra.mxu0 %v4141
        %4344 = vmatprep.subr.bf16.mxu0 0
        %4345 = vmatpush1.bf16.msra.mxu0 %v4142
        %4346 = vmatprep.subr.bf16.mxu0 0
        %4347 = vmatpush1.bf16.msra.mxu0 0
        %4348 = vmatprep.subr.bf16.mxu0 0
        %4349 = vmatpush1.bf16.msra.mxu0 0
        %4350 = vmatprep.subr.bf16.mxu0 0
        %4351 = vmatpush1.bf16.msra.mxu0 0
        %4352 = vmatprep.subr.bf16.mxu0 0
        %4353 = vmatpush1.bf16.msra.mxu0 0
        %4354 = vmatprep.subr.bf16.mxu0 0
        %4355 = vmatpush1.bf16.msra.mxu0 0
        %4356 = vmatprep.subr.bf16.mxu0 0
        %4357 = vmatpush1.bf16.msra.mxu0 0
        %4358 = vmatprep.subr.bf16.mxu0 0
        %4359 = vmatpush1.bf16.msra.mxu0 0
        %4360 = vmatprep.subr.bf16.mxu0 0
        %4361 = vmatpush1.bf16.msra.mxu0 0
        %4362 = vmatprep.subr.bf16.mxu0 0
        %4363 = vmatpush1.bf16.msra.mxu0 0
        %4364 = vmatprep.subr.bf16.mxu0 0
        %4365 = vmatpush1.bf16.msra.mxu0 0
        %4366 = vmatprep.subr.bf16.mxu0 0
        %4367 = vmatpush1.bf16.msra.mxu0 0
        %4368 = vmatprep.subr.bf16.mxu0 0
        %4369 = vmatpush1.bf16.msra.mxu0 0
        %4370 = vmatprep.mubr.bf16.mxu0 0
        %4371 = vmatmul.mubr.bf16.gmra.mrb[0].mxu0 %v4327
        %v4372 = vpop.f32.mrb[0].mxu0
        %v4373 = vadd.f32 0.0, %v4372
        %v4374 = vpop.f32.mrb[0].mxu0
        %v4375 = vpop.f32.mrb[0].mxu0
        %v4376 = vadd.f32 0.0, %v4375
        %v4377 = vpop.f32.mrb[0].mxu0
        %4378 = vmatprep.mubr.bf16.mxu0 0
        %4379 = vmatmul.mubr.bf16.gmra.mrb[0].mxu0 %v4330
        %v4380 = vpop.f32.mrb[0].mxu0
        %v4381 = vadd.f32 0.0, %v4380
        %v4382 = vpop.f32.mrb[0].mxu0
        %v4383 = vpop.f32.mrb[0].mxu0
        %v4384 = vadd.f32 0.0, %v4383
        %v4385 = vpop.f32.mrb[0].mxu0
        %4386 = vmatprep.mubr.bf16.mxu0 0
        %4387 = vmatmul.mubr.bf16.gmra.mrb[0].mxu0 %v4333
        %v4388 = vpop.f32.mrb[0].mxu0
        %v4389 = vadd.f32 0.0, %v4388
        %v4390 = vpop.f32.mrb[0].mxu0
        %v4391 = vpop.f32.mrb[0].mxu0
        %v4392 = vadd.f32 0.0, %v4391
        %v4393 = vpop.f32.mrb[0].mxu0
        %4394 = vmatprep.mubr.bf16.mxu0 0
        %4395 = vmatmul.mubr.bf16.gmra.mrb[0].mxu0 %v4336
        %v4396 = vpop.f32.mrb[0].mxu0
        %v4397 = vadd.f32 0.0, %v4396
        %v4398 = vpop.f32.mrb[0].mxu0
        %v4399 = vpop.f32.mrb[0].mxu0
        %v4400 = vadd.f32 0.0, %v4399
        %v4401 = vpop.f32.mrb[0].mxu0
        %4402 = vdwg.mxu0
        %4407 = vrot.lane.b32.xlu0 %v4131, 96
        %v4408 = vpop.permute.xlu0 %4407
        %4409 = vrot.lane.b32.xlu0 %v4132, 96
        %v4410 = vpop.permute.xlu0 %4409
        %4411 = vrot.lane.b32.xlu0 %v4133, 96
        %v4412 = vpop.permute.xlu0 %4411
        %4413 = vrot.lane.b32.xlu0 %v4134, 96
        %v4414 = vpop.permute.xlu0 %4413
        %4419 = vrot.lane.b32.xlu0 %v4135, 96
        %v4420 = vpop.permute.xlu0 %4419
        %4421 = vrot.lane.b32.xlu0 %v4136, 96
        %v4422 = vpop.permute.xlu0 %4421
        %4423 = vrot.lane.b32.xlu0 %v4137, 96
        %v4424 = vpop.permute.xlu0 %4423
        %4425 = vrot.lane.b32.xlu0 %v4138, 96
        %v4426 = vpop.permute.xlu0 %4425
        %v4428 = vsel %vm4143, %v4408, 0
        %v4431 = vsel %vm4143, %v4410, 0
        %v4434 = vsel %vm4143, %v4412, 0
        %v4437 = vsel %vm4143, %v4414, 0
        %v4440 = vsel %vm4143, %v4420, 0
        %v4443 = vsel %vm4143, %v4422, 0
        %v4446 = vsel %vm4143, %v4424, 0
        %v4449 = vsel %vm4143, %v4426, 0
        %4451 = vmatprep.subr.bf16.mxu0 0
        %4452 = vmatpush1.bf16.xpose.msra.mxu0 %v4440
        %4453 = vmatprep.subr.bf16.mxu0 0
        %4454 = vmatpush1.bf16.xpose.msra.mxu0 %v4443
        %4455 = vmatprep.subr.bf16.mxu0 0
        %4456 = vmatpush1.bf16.xpose.msra.mxu0 %v4446
        %4457 = vmatprep.subr.bf16.mxu0 0
        %4458 = vmatpush1.bf16.xpose.msra.mxu0 %v4449
        %4459 = vmatprep.subr.bf16.mxu0 0
        %4460 = vmatpush1.bf16.xpose.msra.mxu0 0
        %4461 = vmatprep.subr.bf16.mxu0 0
        %4462 = vmatpush1.bf16.xpose.msra.mxu0 0
        %4463 = vmatprep.subr.bf16.mxu0 0
        %4464 = vmatpush1.bf16.xpose.msra.mxu0 0
        %4465 = vmatprep.subr.bf16.mxu0 0
        %4466 = vmatpush1.bf16.xpose.msra.mxu0 0
        %4467 = vmatprep.subr.bf16.mxu0 0
        %4468 = vmatpush1.bf16.xpose.msra.mxu0 0
        %4469 = vmatprep.subr.bf16.mxu0 0
        %4470 = vmatpush1.bf16.xpose.msra.mxu0 0
        %4471 = vmatprep.subr.bf16.mxu0 0
        %4472 = vmatpush1.bf16.xpose.msra.mxu0 0
        %4473 = vmatprep.subr.bf16.mxu0 0
        %4474 = vmatpush1.bf16.xpose.msra.mxu0 0
        %4475 = vmatprep.subr.bf16.mxu0 0
        %4476 = vmatpush1.bf16.xpose.msra.mxu0 0
        %4477 = vmatprep.subr.bf16.mxu0 0
        %4478 = vmatpush1.bf16.xpose.msra.mxu0 0
        %4479 = vmatprep.subr.bf16.mxu0 0
        %4480 = vmatpush1.bf16.xpose.msra.mxu0 0
        %4481 = vmatprep.subr.bf16.mxu0 0
        %4482 = vmatpush1.bf16.xpose.msra.mxu0 0
        %4483 = vmatprep.mubr.bf16.mxu0 0
        %4484 = vmatmul.mubr.bf16.gmra.mrb[0].mxu0 %v4428
        %v4485 = vpop.f32.mrb[0].mxu0
        %v4486 = vadd.f32 %v4123, %v4485
        %v4487 = vpop.f32.mrb[0].mxu0
        %v4488 = vpop.f32.mrb[0].mxu0
        %v4489 = vadd.f32 %v4124, %v4488
        %v4490 = vpop.f32.mrb[0].mxu0
        %4491 = vmatprep.mubr.bf16.mxu0 0
        %4492 = vmatmul.mubr.bf16.gmra.mrb[0].mxu0 %v4431
        %v4493 = vpop.f32.mrb[0].mxu0
        %v4494 = vadd.f32 %v4125, %v4493
        %v4495 = vpop.f32.mrb[0].mxu0
        %v4496 = vpop.f32.mrb[0].mxu0
        %v4497 = vadd.f32 %v4126, %v4496
        %v4498 = vpop.f32.mrb[0].mxu0
        %4499 = vmatprep.mubr.bf16.mxu0 0
        %4500 = vmatmul.mubr.bf16.gmra.mrb[0].mxu0 %v4434
        %v4501 = vpop.f32.mrb[0].mxu0
        %v4502 = vadd.f32 %v4127, %v4501
        %v4503 = vpop.f32.mrb[0].mxu0
        %v4504 = vpop.f32.mrb[0].mxu0
        %v4505 = vadd.f32 %v4128, %v4504
        %v4506 = vpop.f32.mrb[0].mxu0
        %4507 = vmatprep.mubr.bf16.mxu0 0
        %4508 = vmatmul.mubr.bf16.gmra.mrb[0].mxu0 %v4437
        %v4509 = vpop.f32.mrb[0].mxu0
        %v4510 = vadd.f32 %v4129, %v4509
        %v4511 = vpop.f32.mrb[0].mxu0
        %v4512 = vpop.f32.mrb[0].mxu0
        %v4513 = vadd.f32 %v4130, %v4512
        %v4514 = vpop.f32.mrb[0].mxu0
        %4515 = vdwg.mxu0
        %v4516 = vsel %vm4233, %v4486, -inf
        %4517 = vmax.xlane.f32.xlu0 %v4516
        %v4518 = vpop.xlane.xlu0 %4517
        %v4519 = vsel %vm4233, %v4489, -inf
        %4520 = vmax.xlane.f32.xlu0 %v4519
        %v4521 = vpop.xlane.xlu0 %4520
        %v4522 = vsel %vm4233, %v4494, -inf
        %4523 = vmax.xlane.f32.xlu0 %v4522
        %v4524 = vpop.xlane.xlu0 %4523
        %v4525 = vsel %vm4233, %v4497, -inf
        %4526 = vmax.xlane.f32.xlu0 %v4525
        %v4527 = vpop.xlane.xlu0 %4526
        %v4528 = vsel %vm4233, %v4502, -inf
        %4529 = vmax.xlane.f32.xlu0 %v4528
        %v4530 = vpop.xlane.xlu0 %4529
        %v4531 = vsel %vm4233, %v4505, -inf
        %4532 = vmax.xlane.f32.xlu0 %v4531
        %v4533 = vpop.xlane.xlu0 %4532
        %v4534 = vsel %vm4233, %v4510, -inf
        %4535 = vmax.xlane.f32.xlu0 %v4534
        %v4536 = vpop.xlane.xlu0 %4535
        %v4537 = vsel %vm4233, %v4513, -inf
        %4538 = vmax.xlane.f32.xlu0 %v4537
        %v4539 = vpop.xlane.xlu0 %4538
        %v4540 = vsub.f32 %v4486, %v4518
        %v4541 = vsub.f32 %v4489, %v4521
        %v4542 = vsub.f32 %v4494, %v4524
        %v4543 = vsub.f32 %v4497, %v4527
        %v4544 = vsub.f32 %v4502, %v4530
        %v4545 = vsub.f32 %v4505, %v4533
        %v4546 = vsub.f32 %v4510, %v4536
        %v4547 = vsub.f32 %v4513, %v4539
        %v4548 = vmul.f32 %v4540, 1.442695
        %v4549 = vpow.pop %v4548
        %v4550 = vmul.f32 %v4541, 1.442695
        %v4551 = vpow.pop %v4550
        %v4552 = vmul.f32 %v4542, 1.442695
        %v4553 = vpow.pop %v4552
        %v4554 = vmul.f32 %v4543, 1.442695
        %v4555 = vpow.pop %v4554
        %v4556 = vmul.f32 %v4544, 1.442695
        %v4557 = vpow.pop %v4556
        %v4558 = vmul.f32 %v4545, 1.442695
        %v4559 = vpow.pop %v4558
        %v4560 = vmul.f32 %v4546, 1.442695
        %v4561 = vpow.pop %v4560
        %v4562 = vmul.f32 %v4547, 1.442695
        %v4563 = vpow.pop %v4562
        %v4564 = vsel %vm4233, %v4549, 0.0
        %4565 = vadd.xlane.f32.xlu0 %v4564
        %v4566 = vpop.xlane.xlu0 %4565
        %v4567 = vsel %vm4233, %v4551, 0.0
        %4568 = vadd.xlane.f32.xlu0 %v4567
        %v4569 = vpop.xlane.xlu0 %4568
        %v4570 = vsel %vm4233, %v4553, 0.0
        %4571 = vadd.xlane.f32.xlu0 %v4570
        %v4572 = vpop.xlane.xlu0 %4571
        %v4573 = vsel %vm4233, %v4555, 0.0
        %4574 = vadd.xlane.f32.xlu0 %v4573
        %v4575 = vpop.xlane.xlu0 %4574
        %v4576 = vsel %vm4233, %v4557, 0.0
        %4577 = vadd.xlane.f32.xlu0 %v4576
        %v4578 = vpop.xlane.xlu0 %4577
        %v4579 = vsel %vm4233, %v4559, 0.0
        %4580 = vadd.xlane.f32.xlu0 %v4579
        %v4581 = vpop.xlane.xlu0 %4580
        %v4582 = vsel %vm4233, %v4561, 0.0
        %4583 = vadd.xlane.f32.xlu0 %v4582
        %v4584 = vpop.xlane.xlu0 %4583
        %v4585 = vsel %vm4233, %v4563, 0.0
        %4586 = vadd.xlane.f32.xlu0 %v4585
        %v4587 = vpop.xlane.xlu0 %4586
        %v4588 = vrcp.pop %v4566
        %v4589 = vrcp.pop %v4569
        %v4590 = vrcp.pop %v4572
        %v4591 = vrcp.pop %v4575
        %v4592 = vrcp.pop %v4578
        %v4593 = vrcp.pop %v4581
        %v4594 = vrcp.pop %v4584
        %v4595 = vrcp.pop %v4587
        %v4596 = vmul.f32 %v4549, %v4588
        %v4597 = vmul.f32 %v4551, %v4589
        %v4598 = vmul.f32 %v4553, %v4590
        %v4599 = vmul.f32 %v4555, %v4591
        %v4600 = vmul.f32 %v4557, %v4592
        %v4601 = vmul.f32 %v4559, %v4593
        %v4602 = vmul.f32 %v4561, %v4594
        %v4603 = vmul.f32 %v4563, %v4595
        %v4604 = vpack.c.bf16 %v4597, %v4596
        %v4605 = vpack.c.bf16 %v4599, %v4598
        %v4606 = vpack.c.bf16 %v4601, %v4600
        %v4607 = vpack.c.bf16 %v4603, %v4602
        %4612 = vrot.lane.b32.xlu0 %v4139, 96
        %v4613 = vpop.permute.xlu0 %4612
        %4614 = vrot.lane.b32.xlu0 %v4140, 96
        %v4615 = vpop.permute.xlu0 %4614
        %4616 = vrot.lane.b32.xlu0 %v4141, 96
        %v4617 = vpop.permute.xlu0 %4616
        %4618 = vrot.lane.b32.xlu0 %v4142, 96
        %v4619 = vpop.permute.xlu0 %4618
        %v4625 = vsel %vm4233, %v4604, 0
        %v4628 = vsel %vm4233, %v4605, 0
        %v4631 = vsel %vm4233, %v4606, 0
        %v4634 = vsel %vm4233, %v4607, 0
        %4636 = vmatprep.subr.bf16.mxu0 0
        %4637 = vmatpush1.bf16.msra.mxu0 %v4613
        %4638 = vmatprep.subr.bf16.mxu0 0
        %4639 = vmatpush1.bf16.msra.mxu0 %v4615
        %4640 = vmatprep.subr.bf16.mxu0 0
        %4641 = vmatpush1.bf16.msra.mxu0 %v4617
        %4642 = vmatprep.subr.bf16.mxu0 0
        %4643 = vmatpush1.bf16.msra.mxu0 %v4619
        %4644 = vmatprep.subr.bf16.mxu0 0
        %4645 = vmatpush1.bf16.msra.mxu0 0
        %4646 = vmatprep.subr.bf16.mxu0 0
        %4647 = vmatpush1.bf16.msra.mxu0 0
        %4648 = vmatprep.subr.bf16.mxu0 0
        %4649 = vmatpush1.bf16.msra.mxu0 0
        %4650 = vmatprep.subr.bf16.mxu0 0
        %4651 = vmatpush1.bf16.msra.mxu0 0
        %4652 = vmatprep.subr.bf16.mxu0 0
        %4653 = vmatpush1.bf16.msra.mxu0 0
        %4654 = vmatprep.subr.bf16.mxu0 0
        %4655 = vmatpush1.bf16.msra.mxu0 0
        %4656 = vmatprep.subr.bf16.mxu0 0
        %4657 = vmatpush1.bf16.msra.mxu0 0
        %4658 = vmatprep.subr.bf16.mxu0 0
        %4659 = vmatpush1.bf16.msra.mxu0 0
        %4660 = vmatprep.subr.bf16.mxu0 0
        %4661 = vmatpush1.bf16.msra.mxu0 0
        %4662 = vmatprep.subr.bf16.mxu0 0
        %4663 = vmatpush1.bf16.msra.mxu0 0
        %4664 = vmatprep.subr.bf16.mxu0 0
        %4665 = vmatpush1.bf16.msra.mxu0 0
        %4666 = vmatprep.subr.bf16.mxu0 0
        %4667 = vmatpush1.bf16.msra.mxu0 0
        %4668 = vmatprep.mubr.bf16.mxu0 0
        %4669 = vmatmul.mubr.bf16.gmra.mrb[0].mxu0 %v4625
        %v4670 = vpop.f32.mrb[0].mxu0
        %v4671 = vadd.f32 0.0, %v4670
        %v4672 = vpop.f32.mrb[0].mxu0
        %v4673 = vpop.f32.mrb[0].mxu0
        %v4674 = vadd.f32 0.0, %v4673
        %v4675 = vpop.f32.mrb[0].mxu0
        %4676 = vmatprep.mubr.bf16.mxu0 0
        %4677 = vmatmul.mubr.bf16.gmra.mrb[0].mxu0 %v4628
        %v4678 = vpop.f32.mrb[0].mxu0
        %v4679 = vadd.f32 0.0, %v4678
        %v4680 = vpop.f32.mrb[0].mxu0
        %v4681 = vpop.f32.mrb[0].mxu0
        %v4682 = vadd.f32 0.0, %v4681
        %v4683 = vpop.f32.mrb[0].mxu0
        %4684 = vmatprep.mubr.bf16.mxu0 0
        %4685 = vmatmul.mubr.bf16.gmra.mrb[0].mxu0 %v4631
        %v4686 = vpop.f32.mrb[0].mxu0
        %v4687 = vadd.f32 0.0, %v4686
        %v4688 = vpop.f32.mrb[0].mxu0
        %v4689 = vpop.f32.mrb[0].mxu0
        %v4690 = vadd.f32 0.0, %v4689
        %v4691 = vpop.f32.mrb[0].mxu0
        %4692 = vmatprep.mubr.bf16.mxu0 0
        %4693 = vmatmul.mubr.bf16.gmra.mrb[0].mxu0 %v4634
        %v4694 = vpop.f32.mrb[0].mxu0
        %v4695 = vadd.f32 0.0, %v4694
        %v4696 = vpop.f32.mrb[0].mxu0
        %v4697 = vpop.f32.mrb[0].mxu0
        %v4698 = vadd.f32 0.0, %v4697
        %v4699 = vpop.f32.mrb[0].mxu0
        %4700 = vdwg.mxu0
        %4701 = vrot.lane.b32.xlu0 %v4131, 64
        %v4702 = vpop.permute.xlu0 %4701
        %4703 = vrot.lane.b32.xlu0 %v4132, 64
        %v4704 = vpop.permute.xlu0 %4703
        %4705 = vrot.lane.b32.xlu0 %v4133, 64
        %v4706 = vpop.permute.xlu0 %4705
        %4707 = vrot.lane.b32.xlu0 %v4134, 64
        %v4708 = vpop.permute.xlu0 %4707
        %4709 = vrot.lane.b32.xlu0 %v4135, 64
        %v4710 = vpop.permute.xlu0 %4709
        %4711 = vrot.lane.b32.xlu0 %v4136, 64
        %v4712 = vpop.permute.xlu0 %4711
        %4713 = vrot.lane.b32.xlu0 %v4137, 64
        %v4714 = vpop.permute.xlu0 %4713
        %4715 = vrot.lane.b32.xlu0 %v4138, 64
        %v4716 = vpop.permute.xlu0 %4715
        %v4718 = vsel %vm4143, %v4702, 0
        %v4721 = vsel %vm4143, %v4704, 0
        %v4724 = vsel %vm4143, %v4706, 0
        %v4727 = vsel %vm4143, %v4708, 0
        %v4730 = vsel %vm4143, %v4710, 0
        %v4733 = vsel %vm4143, %v4712, 0
        %v4736 = vsel %vm4143, %v4714, 0
        %v4739 = vsel %vm4143, %v4716, 0
        %4741 = vmatprep.subr.bf16.mxu0 0
        %4742 = vmatpush1.bf16.xpose.msra.mxu0 %v4730
        %4743 = vmatprep.subr.bf16.mxu0 0
        %4744 = vmatpush1.bf16.xpose.msra.mxu0 %v4733
        %4745 = vmatprep.subr.bf16.mxu0 0
        %4746 = vmatpush1.bf16.xpose.msra.mxu0 %v4736
        %4747 = vmatprep.subr.bf16.mxu0 0
        %4748 = vmatpush1.bf16.xpose.msra.mxu0 %v4739
        %4749 = vmatprep.subr.bf16.mxu0 0
        %4750 = vmatpush1.bf16.xpose.msra.mxu0 0
        %4751 = vmatprep.subr.bf16.mxu0 0
        %4752 = vmatpush1.bf16.xpose.msra.mxu0 0
        %4753 = vmatprep.subr.bf16.mxu0 0
        %4754 = vmatpush1.bf16.xpose.msra.mxu0 0
        %4755 = vmatprep.subr.bf16.mxu0 0
        %4756 = vmatpush1.bf16.xpose.msra.mxu0 0
        %4757 = vmatprep.subr.bf16.mxu0 0
        %4758 = vmatpush1.bf16.xpose.msra.mxu0 0
        %4759 = vmatprep.subr.bf16.mxu0 0
        %4760 = vmatpush1.bf16.xpose.msra.mxu0 0
        %4761 = vmatprep.subr.bf16.mxu0 0
        %4762 = vmatpush1.bf16.xpose.msra.mxu0 0
        %4763 = vmatprep.subr.bf16.mxu0 0
        %4764 = vmatpush1.bf16.xpose.msra.mxu0 0
        %4765 = vmatprep.subr.bf16.mxu0 0
        %4766 = vmatpush1.bf16.xpose.msra.mxu0 0
        %4767 = vmatprep.subr.bf16.mxu0 0
        %4768 = vmatpush1.bf16.xpose.msra.mxu0 0
        %4769 = vmatprep.subr.bf16.mxu0 0
        %4770 = vmatpush1.bf16.xpose.msra.mxu0 0
        %4771 = vmatprep.subr.bf16.mxu0 0
        %4772 = vmatpush1.bf16.xpose.msra.mxu0 0
        %4773 = vmatprep.mubr.bf16.mxu0 0
        %4774 = vmatmul.mubr.bf16.gmra.mrb[0].mxu0 %v4718
        %v4775 = vpop.f32.mrb[0].mxu0
        %v4776 = vadd.f32 %v4123, %v4775
        %v4777 = vpop.f32.mrb[0].mxu0
        %v4778 = vpop.f32.mrb[0].mxu0
        %v4779 = vadd.f32 %v4124, %v4778
        %v4780 = vpop.f32.mrb[0].mxu0
        %4781 = vmatprep.mubr.bf16.mxu0 0
        %4782 = vmatmul.mubr.bf16.gmra.mrb[0].mxu0 %v4721
        %v4783 = vpop.f32.mrb[0].mxu0
        %v4784 = vadd.f32 %v4125, %v4783
        %v4785 = vpop.f32.mrb[0].mxu0
        %v4786 = vpop.f32.mrb[0].mxu0
        %v4787 = vadd.f32 %v4126, %v4786
        %v4788 = vpop.f32.mrb[0].mxu0
        %4789 = vmatprep.mubr.bf16.mxu0 0
        %4790 = vmatmul.mubr.bf16.gmra.mrb[0].mxu0 %v4724
        %v4791 = vpop.f32.mrb[0].mxu0
        %v4792 = vadd.f32 %v4127, %v4791
        %v4793 = vpop.f32.mrb[0].mxu0
        %v4794 = vpop.f32.mrb[0].mxu0
        %v4795 = vadd.f32 %v4128, %v4794
        %v4796 = vpop.f32.mrb[0].mxu0
        %4797 = vmatprep.mubr.bf16.mxu0 0
        %4798 = vmatmul.mubr.bf16.gmra.mrb[0].mxu0 %v4727
        %v4799 = vpop.f32.mrb[0].mxu0
        %v4800 = vadd.f32 %v4129, %v4799
        %v4801 = vpop.f32.mrb[0].mxu0
        %v4802 = vpop.f32.mrb[0].mxu0
        %v4803 = vadd.f32 %v4130, %v4802
        %v4804 = vpop.f32.mrb[0].mxu0
        %4805 = vdwg.mxu0
        %v4806 = vsel %vm4233, %v4776, -inf
        %4807 = vmax.xlane.f32.xlu0 %v4806
        %v4808 = vpop.xlane.xlu0 %4807
        %v4809 = vsel %vm4233, %v4779, -inf
        %4810 = vmax.xlane.f32.xlu0 %v4809
        %v4811 = vpop.xlane.xlu0 %4810
        %v4812 = vsel %vm4233, %v4784, -inf
        %4813 = vmax.xlane.f32.xlu0 %v4812
        %v4814 = vpop.xlane.xlu0 %4813
        %v4815 = vsel %vm4233, %v4787, -inf
        %4816 = vmax.xlane.f32.xlu0 %v4815
        %v4817 = vpop.xlane.xlu0 %4816
        %v4818 = vsel %vm4233, %v4792, -inf
        %4819 = vmax.xlane.f32.xlu0 %v4818
        %v4820 = vpop.xlane.xlu0 %4819
        %v4821 = vsel %vm4233, %v4795, -inf
        %4822 = vmax.xlane.f32.xlu0 %v4821
        %v4823 = vpop.xlane.xlu0 %4822
        %v4824 = vsel %vm4233, %v4800, -inf
        %4825 = vmax.xlane.f32.xlu0 %v4824
        %v4826 = vpop.xlane.xlu0 %4825
        %v4827 = vsel %vm4233, %v4803, -inf
        %4828 = vmax.xlane.f32.xlu0 %v4827
        %v4829 = vpop.xlane.xlu0 %4828
        %v4830 = vsub.f32 %v4776, %v4808
        %v4831 = vsub.f32 %v4779, %v4811
        %v4832 = vsub.f32 %v4784, %v4814
        %v4833 = vsub.f32 %v4787, %v4817
        %v4834 = vsub.f32 %v4792, %v4820
        %v4835 = vsub.f32 %v4795, %v4823
        %v4836 = vsub.f32 %v4800, %v4826
        %v4837 = vsub.f32 %v4803, %v4829
        %v4838 = vmul.f32 %v4830, 1.442695
        %v4839 = vpow.pop %v4838
        %v4840 = vmul.f32 %v4831, 1.442695
        %v4841 = vpow.pop %v4840
        %v4842 = vmul.f32 %v4832, 1.442695
        %v4843 = vpow.pop %v4842
        %v4844 = vmul.f32 %v4833, 1.442695
        %v4845 = vpow.pop %v4844
        %v4846 = vmul.f32 %v4834, 1.442695
        %v4847 = vpow.pop %v4846
        %v4848 = vmul.f32 %v4835, 1.442695
        %v4849 = vpow.pop %v4848
        %v4850 = vmul.f32 %v4836, 1.442695
        %v4851 = vpow.pop %v4850
        %v4852 = vmul.f32 %v4837, 1.442695
        %v4853 = vpow.pop %v4852
        %v4854 = vsel %vm4233, %v4839, 0.0
        %4855 = vadd.xlane.f32.xlu0 %v4854
        %v4856 = vpop.xlane.xlu0 %4855
        %v4857 = vsel %vm4233, %v4841, 0.0
        %4858 = vadd.xlane.f32.xlu0 %v4857
        %v4859 = vpop.xlane.xlu0 %4858
        %v4860 = vsel %vm4233, %v4843, 0.0
        %4861 = vadd.xlane.f32.xlu0 %v4860
        %v4862 = vpop.xlane.xlu0 %4861
        %v4863 = vsel %vm4233, %v4845, 0.0
        %4864 = vadd.xlane.f32.xlu0 %v4863
        %v4865 = vpop.xlane.xlu0 %4864
        %v4866 = vsel %vm4233, %v4847, 0.0
        %4867 = vadd.xlane.f32.xlu0 %v4866
        %v4868 = vpop.xlane.xlu0 %4867
        %v4869 = vsel %vm4233, %v4849, 0.0
        %4870 = vadd.xlane.f32.xlu0 %v4869
        %v4871 = vpop.xlane.xlu0 %4870
        %v4872 = vsel %vm4233, %v4851, 0.0
        %4873 = vadd.xlane.f32.xlu0 %v4872
        %v4874 = vpop.xlane.xlu0 %4873
        %v4875 = vsel %vm4233, %v4853, 0.0
        %4876 = vadd.xlane.f32.xlu0 %v4875
        %v4877 = vpop.xlane.xlu0 %4876
        %v4878 = vrcp.pop %v4856
        %v4879 = vrcp.pop %v4859
        %v4880 = vrcp.pop %v4862
        %v4881 = vrcp.pop %v4865
        %v4882 = vrcp.pop %v4868
        %v4883 = vrcp.pop %v4871
        %v4884 = vrcp.pop %v4874
        %v4885 = vrcp.pop %v4877
        %v4886 = vmul.f32 %v4839, %v4878
        %v4887 = vmul.f32 %v4841, %v4879
        %v4888 = vmul.f32 %v4843, %v4880
        %v4889 = vmul.f32 %v4845, %v4881
        %v4890 = vmul.f32 %v4847, %v4882
        %v4891 = vmul.f32 %v4849, %v4883
        %v4892 = vmul.f32 %v4851, %v4884
        %v4893 = vmul.f32 %v4853, %v4885
        %v4894 = vpack.c.bf16 %v4887, %v4886
        %v4895 = vpack.c.bf16 %v4889, %v4888
        %v4896 = vpack.c.bf16 %v4891, %v4890
        %v4897 = vpack.c.bf16 %v4893, %v4892
        %4898 = vrot.lane.b32.xlu0 %v4139, 64
        %v4899 = vpop.permute.xlu0 %4898
        %4900 = vrot.lane.b32.xlu0 %v4140, 64
        %v4901 = vpop.permute.xlu0 %4900
        %4902 = vrot.lane.b32.xlu0 %v4141, 64
        %v4903 = vpop.permute.xlu0 %4902
        %4904 = vrot.lane.b32.xlu0 %v4142, 64
        %v4905 = vpop.permute.xlu0 %4904
        %v4911 = vsel %vm4233, %v4894, 0
        %v4914 = vsel %vm4233, %v4895, 0
        %v4917 = vsel %vm4233, %v4896, 0
        %v4920 = vsel %vm4233, %v4897, 0
        %4922 = vmatprep.subr.bf16.mxu0 0
        %4923 = vmatpush1.bf16.msra.mxu0 %v4899
        %4924 = vmatprep.subr.bf16.mxu0 0
        %4925 = vmatpush1.bf16.msra.mxu0 %v4901
        %4926 = vmatprep.subr.bf16.mxu0 0
        %4927 = vmatpush1.bf16.msra.mxu0 %v4903
        %4928 = vmatprep.subr.bf16.mxu0 0
        %4929 = vmatpush1.bf16.msra.mxu0 %v4905
        %4930 = vmatprep.subr.bf16.mxu0 0
        %4931 = vmatpush1.bf16.msra.mxu0 0
        %4932 = vmatprep.subr.bf16.mxu0 0
        %4933 = vmatpush1.bf16.msra.mxu0 0
        %4934 = vmatprep.subr.bf16.mxu0 0
        %4935 = vmatpush1.bf16.msra.mxu0 0
        %4936 = vmatprep.subr.bf16.mxu0 0
        %4937 = vmatpush1.bf16.msra.mxu0 0
        %4938 = vmatprep.subr.bf16.mxu0 0
        %4939 = vmatpush1.bf16.msra.mxu0 0
        %4940 = vmatprep.subr.bf16.mxu0 0
        %4941 = vmatpush1.bf16.msra.mxu0 0
        %4942 = vmatprep.subr.bf16.mxu0 0
        %4943 = vmatpush1.bf16.msra.mxu0 0
        %4944 = vmatprep.subr.bf16.mxu0 0
        %4945 = vmatpush1.bf16.msra.mxu0 0
        %4946 = vmatprep.subr.bf16.mxu0 0
        %4947 = vmatpush1.bf16.msra.mxu0 0
        %4948 = vmatprep.subr.bf16.mxu0 0
        %4949 = vmatpush1.bf16.msra.mxu0 0
        %4950 = vmatprep.subr.bf16.mxu0 0
        %4951 = vmatpush1.bf16.msra.mxu0 0
        %4952 = vmatprep.subr.bf16.mxu0 0
        %4953 = vmatpush1.bf16.msra.mxu0 0
        %4954 = vmatprep.mubr.bf16.mxu0 0
        %4955 = vmatmul.mubr.bf16.gmra.mrb[0].mxu0 %v4911
        %v4956 = vpop.f32.mrb[0].mxu0
        %v4957 = vadd.f32 0.0, %v4956
        %v4958 = vpop.f32.mrb[0].mxu0
        %v4959 = vpop.f32.mrb[0].mxu0
        %v4960 = vadd.f32 0.0, %v4959
        %v4961 = vpop.f32.mrb[0].mxu0
        %4962 = vmatprep.mubr.bf16.mxu0 0
        %4963 = vmatmul.mubr.bf16.gmra.mrb[0].mxu0 %v4914
        %v4964 = vpop.f32.mrb[0].mxu0
        %v4965 = vadd.f32 0.0, %v4964
        %v4966 = vpop.f32.mrb[0].mxu0
        %v4967 = vpop.f32.mrb[0].mxu0
        %v4968 = vadd.f32 0.0, %v4967
        %v4969 = vpop.f32.mrb[0].mxu0
        %4970 = vmatprep.mubr.bf16.mxu0 0
        %4971 = vmatmul.mubr.bf16.gmra.mrb[0].mxu0 %v4917
        %v4972 = vpop.f32.mrb[0].mxu0
        %v4973 = vadd.f32 0.0, %v4972
        %v4974 = vpop.f32.mrb[0].mxu0
        %v4975 = vpop.f32.mrb[0].mxu0
        %v4976 = vadd.f32 0.0, %v4975
        %v4977 = vpop.f32.mrb[0].mxu0
        %4978 = vmatprep.mubr.bf16.mxu0 0
        %4979 = vmatmul.mubr.bf16.gmra.mrb[0].mxu0 %v4920
        %v4980 = vpop.f32.mrb[0].mxu0
        %v4981 = vadd.f32 0.0, %v4980
        %v4982 = vpop.f32.mrb[0].mxu0
        %v4983 = vpop.f32.mrb[0].mxu0
        %v4984 = vadd.f32 0.0, %v4983
        %v4985 = vpop.f32.mrb[0].mxu0
        %4986 = vdwg.mxu0
        %4987 = vrot.lane.b32.xlu0 %v4131, 32
        %v4988 = vpop.permute.xlu0 %4987
        %4989 = vrot.lane.b32.xlu0 %v4132, 32
        %v4990 = vpop.permute.xlu0 %4989
        %4991 = vrot.lane.b32.xlu0 %v4133, 32
        %v4992 = vpop.permute.xlu0 %4991
        %4993 = vrot.lane.b32.xlu0 %v4134, 32
        %v4994 = vpop.permute.xlu0 %4993
        %4995 = vrot.lane.b32.xlu0 %v4135, 32
        %v4996 = vpop.permute.xlu0 %4995
        %4997 = vrot.lane.b32.xlu0 %v4136, 32
        %v4998 = vpop.permute.xlu0 %4997
        %4999 = vrot.lane.b32.xlu0 %v4137, 32
        %v5000 = vpop.permute.xlu0 %4999
        %5001 = vrot.lane.b32.xlu0 %v4138, 32
        %v5002 = vpop.permute.xlu0 %5001
        %v5004 = vsel %vm4143, %v4988, 0
        %v5007 = vsel %vm4143, %v4990, 0
        %v5010 = vsel %vm4143, %v4992, 0
        %v5013 = vsel %vm4143, %v4994, 0
        %v5016 = vsel %vm4143, %v4996, 0
        %v5019 = vsel %vm4143, %v4998, 0
        %v5022 = vsel %vm4143, %v5000, 0
        %v5025 = vsel %vm4143, %v5002, 0
        %5027 = vmatprep.subr.bf16.mxu0 0
        %5028 = vmatpush1.bf16.xpose.msra.mxu0 %v5016
        %5029 = vmatprep.subr.bf16.mxu0 0
        %5030 = vmatpush1.bf16.xpose.msra.mxu0 %v5019
        %5031 = vmatprep.subr.bf16.mxu0 0
        %5032 = vmatpush1.bf16.xpose.msra.mxu0 %v5022
        %5033 = vmatprep.subr.bf16.mxu0 0
        %5034 = vmatpush1.bf16.xpose.msra.mxu0 %v5025
        %5035 = vmatprep.subr.bf16.mxu0 0
        %5036 = vmatpush1.bf16.xpose.msra.mxu0 0
        %5037 = vmatprep.subr.bf16.mxu0 0
        %5038 = vmatpush1.bf16.xpose.msra.mxu0 0
        %5039 = vmatprep.subr.bf16.mxu0 0
        %5040 = vmatpush1.bf16.xpose.msra.mxu0 0
        %5041 = vmatprep.subr.bf16.mxu0 0
        %5042 = vmatpush1.bf16.xpose.msra.mxu0 0
        %5043 = vmatprep.subr.bf16.mxu0 0
        %5044 = vmatpush1.bf16.xpose.msra.mxu0 0
        %5045 = vmatprep.subr.bf16.mxu0 0
        %5046 = vmatpush1.bf16.xpose.msra.mxu0 0
        %5047 = vmatprep.subr.bf16.mxu0 0
        %5048 = vmatpush1.bf16.xpose.msra.mxu0 0
        %5049 = vmatprep.subr.bf16.mxu0 0
        %5050 = vmatpush1.bf16.xpose.msra.mxu0 0
        %5051 = vmatprep.subr.bf16.mxu0 0
        %5052 = vmatpush1.bf16.xpose.msra.mxu0 0
        %5053 = vmatprep.subr.bf16.mxu0 0
        %5054 = vmatpush1.bf16.xpose.msra.mxu0 0
        %5055 = vmatprep.subr.bf16.mxu0 0
        %5056 = vmatpush1.bf16.xpose.msra.mxu0 0
        %5057 = vmatprep.subr.bf16.mxu0 0
        %5058 = vmatpush1.bf16.xpose.msra.mxu0 0
        %5059 = vmatprep.mubr.bf16.mxu0 0
        %5060 = vmatmul.mubr.bf16.gmra.mrb[0].mxu0 %v5004
        %v5061 = vpop.f32.mrb[0].mxu0
        %v5062 = vadd.f32 %v4123, %v5061
        %v5063 = vpop.f32.mrb[0].mxu0
        %v5064 = vpop.f32.mrb[0].mxu0
        %v5065 = vadd.f32 %v4124, %v5064
        %v5066 = vpop.f32.mrb[0].mxu0
        %5067 = vmatprep.mubr.bf16.mxu0 0
        %5068 = vmatmul.mubr.bf16.gmra.mrb[0].mxu0 %v5007
        %v5069 = vpop.f32.mrb[0].mxu0
        %v5070 = vadd.f32 %v4125, %v5069
        %v5071 = vpop.f32.mrb[0].mxu0
        %v5072 = vpop.f32.mrb[0].mxu0
        %v5073 = vadd.f32 %v4126, %v5072
        %v5074 = vpop.f32.mrb[0].mxu0
        %5075 = vmatprep.mubr.bf16.mxu0 0
        %5076 = vmatmul.mubr.bf16.gmra.mrb[0].mxu0 %v5010
        %v5077 = vpop.f32.mrb[0].mxu0
        %v5078 = vadd.f32 %v4127, %v5077
        %v5079 = vpop.f32.mrb[0].mxu0
        %v5080 = vpop.f32.mrb[0].mxu0
        %v5081 = vadd.f32 %v4128, %v5080
        %v5082 = vpop.f32.mrb[0].mxu0
        %5083 = vmatprep.mubr.bf16.mxu0 0
        %5084 = vmatmul.mubr.bf16.gmra.mrb[0].mxu0 %v5013
        %v5085 = vpop.f32.mrb[0].mxu0
        %v5086 = vadd.f32 %v4129, %v5085
        %v5087 = vpop.f32.mrb[0].mxu0
        %v5088 = vpop.f32.mrb[0].mxu0
        %v5089 = vadd.f32 %v4130, %v5088
        %v5090 = vpop.f32.mrb[0].mxu0
        %5091 = vdwg.mxu0
        %v5092 = vsel %vm4233, %v5062, -inf
        %5093 = vmax.xlane.f32.xlu0 %v5092
        %v5094 = vpop.xlane.xlu0 %5093
        %v5095 = vsel %vm4233, %v5065, -inf
        %5096 = vmax.xlane.f32.xlu0 %v5095
        %v5097 = vpop.xlane.xlu0 %5096
        %v5098 = vsel %vm4233, %v5070, -inf
        %5099 = vmax.xlane.f32.xlu0 %v5098
        %v5100 = vpop.xlane.xlu0 %5099
        %v5101 = vsel %vm4233, %v5073, -inf
        %5102 = vmax.xlane.f32.xlu0 %v5101
        %v5103 = vpop.xlane.xlu0 %5102
        %v5104 = vsel %vm4233, %v5078, -inf
        %5105 = vmax.xlane.f32.xlu0 %v5104
        %v5106 = vpop.xlane.xlu0 %5105
        %v5107 = vsel %vm4233, %v5081, -inf
        %5108 = vmax.xlane.f32.xlu0 %v5107
        %v5109 = vpop.xlane.xlu0 %5108
        %v5110 = vsel %vm4233, %v5086, -inf
        %5111 = vmax.xlane.f32.xlu0 %v5110
        %v5112 = vpop.xlane.xlu0 %5111
        %v5113 = vsel %vm4233, %v5089, -inf
        %5114 = vmax.xlane.f32.xlu0 %v5113
        %v5115 = vpop.xlane.xlu0 %5114
        %v5116 = vsub.f32 %v5062, %v5094
        %v5117 = vsub.f32 %v5065, %v5097
        %v5118 = vsub.f32 %v5070, %v5100
        %v5119 = vsub.f32 %v5073, %v5103
        %v5120 = vsub.f32 %v5078, %v5106
        %v5121 = vsub.f32 %v5081, %v5109
        %v5122 = vsub.f32 %v5086, %v5112
        %v5123 = vsub.f32 %v5089, %v5115
        %v5124 = vmul.f32 %v5116, 1.442695
        %v5125 = vpow.pop %v5124
        %v5126 = vmul.f32 %v5117, 1.442695
        %v5127 = vpow.pop %v5126
        %v5128 = vmul.f32 %v5118, 1.442695
        %v5129 = vpow.pop %v5128
        %v5130 = vmul.f32 %v5119, 1.442695
        %v5131 = vpow.pop %v5130
        %v5132 = vmul.f32 %v5120, 1.442695
        %v5133 = vpow.pop %v5132
        %v5134 = vmul.f32 %v5121, 1.442695
        %v5135 = vpow.pop %v5134
        %v5136 = vmul.f32 %v5122, 1.442695
        %v5137 = vpow.pop %v5136
        %v5138 = vmul.f32 %v5123, 1.442695
        %v5139 = vpow.pop %v5138
        %v5140 = vsel %vm4233, %v5125, 0.0
        %5141 = vadd.xlane.f32.xlu0 %v5140
        %v5142 = vpop.xlane.xlu0 %5141
        %v5143 = vsel %vm4233, %v5127, 0.0
        %5144 = vadd.xlane.f32.xlu0 %v5143
        %v5145 = vpop.xlane.xlu0 %5144
        %v5146 = vsel %vm4233, %v5129, 0.0
        %5147 = vadd.xlane.f32.xlu0 %v5146
        %v5148 = vpop.xlane.xlu0 %5147
        %v5149 = vsel %vm4233, %v5131, 0.0
        %5150 = vadd.xlane.f32.xlu0 %v5149
        %v5151 = vpop.xlane.xlu0 %5150
        %v5152 = vsel %vm4233, %v5133, 0.0
        %5153 = vadd.xlane.f32.xlu0 %v5152
        %v5154 = vpop.xlane.xlu0 %5153
        %v5155 = vsel %vm4233, %v5135, 0.0
        %5156 = vadd.xlane.f32.xlu0 %v5155
        %v5157 = vpop.xlane.xlu0 %5156
        %v5158 = vsel %vm4233, %v5137, 0.0
        %5159 = vadd.xlane.f32.xlu0 %v5158
        %v5160 = vpop.xlane.xlu0 %5159
        %v5161 = vsel %vm4233, %v5139, 0.0
        %5162 = vadd.xlane.f32.xlu0 %v5161
        %v5163 = vpop.xlane.xlu0 %5162
        %v5164 = vrcp.pop %v5142
        %v5165 = vrcp.pop %v5145
        %v5166 = vrcp.pop %v5148
        %v5167 = vrcp.pop %v5151
        %v5168 = vrcp.pop %v5154
        %v5169 = vrcp.pop %v5157
        %v5170 = vrcp.pop %v5160
        %v5171 = vrcp.pop %v5163
        %v5172 = vmul.f32 %v5125, %v5164
        %v5173 = vmul.f32 %v5127, %v5165
        %v5174 = vmul.f32 %v5129, %v5166
        %v5175 = vmul.f32 %v5131, %v5167
        %v5176 = vmul.f32 %v5133, %v5168
        %v5177 = vmul.f32 %v5135, %v5169
        %v5178 = vmul.f32 %v5137, %v5170
        %v5179 = vmul.f32 %v5139, %v5171
        %v5180 = vpack.c.bf16 %v5173, %v5172
        %v5181 = vpack.c.bf16 %v5175, %v5174
        %v5182 = vpack.c.bf16 %v5177, %v5176
        %v5183 = vpack.c.bf16 %v5179, %v5178
        %5184 = vrot.lane.b32.xlu0 %v4139, 32
        %v5185 = vpop.permute.xlu0 %5184
        %5186 = vrot.lane.b32.xlu0 %v4140, 32
        %v5187 = vpop.permute.xlu0 %5186
        %5188 = vrot.lane.b32.xlu0 %v4141, 32
        %v5189 = vpop.permute.xlu0 %5188
        %5190 = vrot.lane.b32.xlu0 %v4142, 32
        %v5191 = vpop.permute.xlu0 %5190
        %v5197 = vsel %vm4233, %v5180, 0
        %v5200 = vsel %vm4233, %v5181, 0
        %v5203 = vsel %vm4233, %v5182, 0
        %v5206 = vsel %vm4233, %v5183, 0
        %5208 = vmatprep.subr.bf16.mxu0 0
        %5209 = vmatpush1.bf16.msra.mxu0 %v5185
        %5210 = vmatprep.subr.bf16.mxu0 0
        %5211 = vmatpush1.bf16.msra.mxu0 %v5187
        %5212 = vmatprep.subr.bf16.mxu0 0
        %5213 = vmatpush1.bf16.msra.mxu0 %v5189
        %5214 = vmatprep.subr.bf16.mxu0 0
        %5215 = vmatpush1.bf16.msra.mxu0 %v5191
        %5216 = vmatprep.subr.bf16.mxu0 0
        %5217 = vmatpush1.bf16.msra.mxu0 0
        %5218 = vmatprep.subr.bf16.mxu0 0
        %5219 = vmatpush1.bf16.msra.mxu0 0
        %5220 = vmatprep.subr.bf16.mxu0 0
        %5221 = vmatpush1.bf16.msra.mxu0 0
        %5222 = vmatprep.subr.bf16.mxu0 0
        %5223 = vmatpush1.bf16.msra.mxu0 0
        %5224 = vmatprep.subr.bf16.mxu0 0
        %5225 = vmatpush1.bf16.msra.mxu0 0
        %5226 = vmatprep.subr.bf16.mxu0 0
        %5227 = vmatpush1.bf16.msra.mxu0 0
        %5228 = vmatprep.subr.bf16.mxu0 0
        %5229 = vmatpush1.bf16.msra.mxu0 0
        %5230 = vmatprep.subr.bf16.mxu0 0
        %5231 = vmatpush1.bf16.msra.mxu0 0
        %5232 = vmatprep.subr.bf16.mxu0 0
        %5233 = vmatpush1.bf16.msra.mxu0 0
        %5234 = vmatprep.subr.bf16.mxu0 0
        %5235 = vmatpush1.bf16.msra.mxu0 0
        %5236 = vmatprep.subr.bf16.mxu0 0
        %5237 = vmatpush1.bf16.msra.mxu0 0
        %5238 = vmatprep.subr.bf16.mxu0 0
        %5239 = vmatpush1.bf16.msra.mxu0 0
        %5240 = vmatprep.mubr.bf16.mxu0 0
        %5241 = vmatmul.mubr.bf16.gmra.mrb[0].mxu0 %v5197
        %v5242 = vpop.f32.mrb[0].mxu0
        %v5243 = vadd.f32 0.0, %v5242
        %v5244 = vpop.f32.mrb[0].mxu0
        %v5245 = vpop.f32.mrb[0].mxu0
        %v5246 = vadd.f32 0.0, %v5245
        %v5247 = vpop.f32.mrb[0].mxu0
        %5248 = vmatprep.mubr.bf16.mxu0 0
        %5249 = vmatmul.mubr.bf16.gmra.mrb[0].mxu0 %v5200
        %v5250 = vpop.f32.mrb[0].mxu0
        %v5251 = vadd.f32 0.0, %v5250
        %v5252 = vpop.f32.mrb[0].mxu0
        %v5253 = vpop.f32.mrb[0].mxu0
        %v5254 = vadd.f32 0.0, %v5253
        %v5255 = vpop.f32.mrb[0].mxu0
        %5256 = vmatprep.mubr.bf16.mxu0 0
        %5257 = vmatmul.mubr.bf16.gmra.mrb[0].mxu0 %v5203
        %v5258 = vpop.f32.mrb[0].mxu0
        %v5259 = vadd.f32 0.0, %v5258
        %v5260 = vpop.f32.mrb[0].mxu0
        %v5261 = vpop.f32.mrb[0].mxu0
        %v5262 = vadd.f32 0.0, %v5261
        %v5263 = vpop.f32.mrb[0].mxu0
        %5264 = vmatprep.mubr.bf16.mxu0 0
        %5265 = vmatmul.mubr.bf16.gmra.mrb[0].mxu0 %v5206
        %v5266 = vpop.f32.mrb[0].mxu0
        %v5267 = vadd.f32 0.0, %v5266
        %v5268 = vpop.f32.mrb[0].mxu0
        %v5269 = vpop.f32.mrb[0].mxu0
        %v5270 = vadd.f32 0.0, %v5269
        %v5271 = vpop.f32.mrb[0].mxu0
        %5272 = vdwg.mxu0
        %5281 = vrot.lane.b32.xlu0 %v4671, 32
        %v5282 = vpop.permute.xlu0 %5281
        %5283 = vrot.lane.b32.xlu0 %v4674, 32
        %v5284 = vpop.permute.xlu0 %5283
        %5285 = vrot.lane.b32.xlu0 %v4679, 32
        %v5286 = vpop.permute.xlu0 %5285
        %5287 = vrot.lane.b32.xlu0 %v4682, 32
        %v5288 = vpop.permute.xlu0 %5287
        %5289 = vrot.lane.b32.xlu0 %v4687, 32
        %v5290 = vpop.permute.xlu0 %5289
        %5291 = vrot.lane.b32.xlu0 %v4690, 32
        %v5292 = vpop.permute.xlu0 %5291
        %5293 = vrot.lane.b32.xlu0 %v4695, 32
        %v5294 = vpop.permute.xlu0 %5293
        %5295 = vrot.lane.b32.xlu0 %v4698, 32
        %v5296 = vpop.permute.xlu0 %5295
        %5313 = vrot.lane.b32.xlu0 %v4957, 64
        %v5314 = vpop.permute.xlu0 %5313
        %5315 = vrot.lane.b32.xlu0 %v4960, 64
        %v5316 = vpop.permute.xlu0 %5315
        %5317 = vrot.lane.b32.xlu0 %v4965, 64
        %v5318 = vpop.permute.xlu0 %5317
        %5319 = vrot.lane.b32.xlu0 %v4968, 64
        %v5320 = vpop.permute.xlu0 %5319
        %5321 = vrot.lane.b32.xlu0 %v4973, 64
        %v5322 = vpop.permute.xlu0 %5321
        %5323 = vrot.lane.b32.xlu0 %v4976, 64
        %v5324 = vpop.permute.xlu0 %5323
        %5325 = vrot.lane.b32.xlu0 %v4981, 64
        %v5326 = vpop.permute.xlu0 %5325
        %5327 = vrot.lane.b32.xlu0 %v4984, 64
        %v5328 = vpop.permute.xlu0 %5327
        %5345 = vrot.lane.b32.xlu0 %v5243, 96
        %v5346 = vpop.permute.xlu0 %5345
        %5347 = vrot.lane.b32.xlu0 %v5246, 96
        %v5348 = vpop.permute.xlu0 %5347
        %5349 = vrot.lane.b32.xlu0 %v5251, 96
        %v5350 = vpop.permute.xlu0 %5349
        %5351 = vrot.lane.b32.xlu0 %v5254, 96
        %v5352 = vpop.permute.xlu0 %5351
        %5353 = vrot.lane.b32.xlu0 %v5259, 96
        %v5354 = vpop.permute.xlu0 %5353
        %5355 = vrot.lane.b32.xlu0 %v5262, 96
        %v5356 = vpop.permute.xlu0 %5355
        %5357 = vrot.lane.b32.xlu0 %v5267, 96
        %v5358 = vpop.permute.xlu0 %5357
        %5359 = vrot.lane.b32.xlu0 %v5270, 96
        %v5360 = vpop.permute.xlu0 %5359
        %v5369 = vsel %vm4143, %v4373, %v5282
        %v5370 = vsel %vm4143, %v4376, %v5284
        %v5371 = vsel %vm4143, %v4381, %v5286
        %v5372 = vsel %vm4143, %v4384, %v5288
        %v5373 = vsel %vm4143, %v4389, %v5290
        %v5374 = vsel %vm4143, %v4392, %v5292
        %v5375 = vsel %vm4143, %v4397, %v5294
        %v5376 = vsel %vm4143, %v4400, %v5296
        %v5377 = vsel %vm4233, %v5369, %v5314
        %v5378 = vsel %vm4233, %v5370, %v5316
        %v5379 = vsel %vm4233, %v5371, %v5318
        %v5380 = vsel %vm4233, %v5372, %v5320
        %v5381 = vsel %vm4233, %v5373, %v5322
        %v5382 = vsel %vm4233, %v5374, %v5324
        %v5383 = vsel %vm4233, %v5375, %v5326
        %v5384 = vsel %vm4233, %v5376, %v5328
        %vm5385 = vcmask 785408
        %v5386 = vsel %vm5385, %v5377, %v5346
        %v5387 = vsel %vm5385, %v5378, %v5348
        %v5388 = vsel %vm5385, %v5379, %v5350
        %v5389 = vsel %vm5385, %v5380, %v5352
        %v5390 = vsel %vm5385, %v5381, %v5354
        %v5391 = vsel %vm5385, %v5382, %v5356
        %v5392 = vsel %vm5385, %v5383, %v5358
        %v5393 = vsel %vm5385, %v5384, %v5360
        %v5394 = vpack.c.bf16 %v5387, %v5386
        %v5395 = vpack.c.bf16 %v5389, %v5388
        %v5396 = vpack.c.bf16 %v5391, %v5390
        %v5397 = vpack.c.bf16 %v5393, %v5392
        %v5398 = vld [vmem:[%s1333] sm:$0xf]
        %v5399 = vld [vmem:[%s1333 + $0x4] sm:$0xf]
        %v5400 = vld [vmem:[%s1333 + $0x8] sm:$0xf]
        %v5401 = vld [vmem:[%s1333 + $0xc] sm:$0xf]
        %v5402 = vld [vmem:[%s1333 + $0x10] sm:$0xf]
        %v5403 = vld [vmem:[%s1333 + $0x14] sm:$0xf]
        %v5404 = vld [vmem:[%s1333 + $0x18] sm:$0xf]
        %v5405 = vld [vmem:[%s1333 + $0x1c] sm:$0xf]
        %v5406 = vld [vmem:[%s1333 + $0x20] sm:$0xf]
        %v5407 = vld [vmem:[%s1333 + $0x24] sm:$0xf]
        %v5408 = vld [vmem:[%s1333 + $0x28] sm:$0xf]
        %v5409 = vld [vmem:[%s1333 + $0x2c] sm:$0xf]
        %v5410 = vld [vmem:[%s1333 + $0x30] sm:$0xf]
        %v5411 = vld [vmem:[%s1333 + $0x34] sm:$0xf]
        %v5412 = vld [vmem:[%s1333 + $0x38] sm:$0xf]
        %v5413 = vld [vmem:[%s1333 + $0x3c] sm:$0xf]
        %v5414 = vld [vmem:[%s1588] sm:$0x1]
        %v5416 = vlaneseq
        %v5417 = vshrl.u32 %v5416, 7
        %v5418 = vsub.s32 0, %v5417
        %v5419 = vrot.slane %v5414, %v5418
        %v5437 = vunpack.c.l.b16 %v5398
        %v5438 = vunpack.c.l.b16 %v5399
        %v5439 = vunpack.c.l.b16 %v5400
        %v5440 = vunpack.c.l.b16 %v5401
        %v5441 = vunpack.c.l.b16 %v5402
        %v5442 = vunpack.c.l.b16 %v5403
        %v5443 = vunpack.c.l.b16 %v5404
        %v5444 = vunpack.c.l.b16 %v5405
        %v5445 = vunpack.c.l.b16 %v5406
        %v5446 = vunpack.c.l.b16 %v5407
        %v5447 = vunpack.c.l.b16 %v5408
        %v5448 = vunpack.c.l.b16 %v5409
        %v5449 = vunpack.c.l.b16 %v5410
        %v5450 = vunpack.c.l.b16 %v5411
        %v5451 = vunpack.c.l.b16 %v5412
        %v5452 = vunpack.c.l.b16 %v5413
        %v5453 = vpack.c.b16 %v5438, %v5437
        %v5454 = vpack.c.b16 %v5440, %v5439
        %v5455 = vpack.c.b16 %v5442, %v5441
        %v5456 = vpack.c.b16 %v5444, %v5443
        %v5457 = vpack.c.b16 %v5446, %v5445
        %v5458 = vpack.c.b16 %v5448, %v5447
        %v5459 = vpack.c.b16 %v5450, %v5449
        %v5460 = vpack.c.b16 %v5452, %v5451
        %5469 = vmatprep.subr.bf16.mxu0 0
        %5470 = vmatpush1.bf16.msra.mxu0 %v5453
        %5471 = vmatprep.subr.bf16.mxu0 0
        %5472 = vmatpush1.bf16.msra.mxu0 %v5454
        %5473 = vmatprep.subr.bf16.mxu0 0
        %5474 = vmatpush1.bf16.msra.mxu0 %v5455
        %5475 = vmatprep.subr.bf16.mxu0 0
        %5476 = vmatpush1.bf16.msra.mxu0 %v5456
        %5477 = vmatprep.subr.bf16.mxu0 0
        %5478 = vmatpush1.bf16.msra.mxu0 %v5457
        %5479 = vmatprep.subr.bf16.mxu0 0
        %5480 = vmatpush1.bf16.msra.mxu0 %v5458
        %5481 = vmatprep.subr.bf16.mxu0 0
        %5482 = vmatpush1.bf16.msra.mxu0 %v5459
        %5483 = vmatprep.subr.bf16.mxu0 0
        %5484 = vmatpush1.bf16.msra.mxu0 %v5460
        %5485 = vmatprep.subr.bf16.mxu0 0
        %5486 = vmatpush1.bf16.msra.mxu0 0
        %5487 = vmatprep.subr.bf16.mxu0 0
        %5488 = vmatpush1.bf16.msra.mxu0 0
        %5489 = vmatprep.subr.bf16.mxu0 0
        %5490 = vmatpush1.bf16.msra.mxu0 0
        %5491 = vmatprep.subr.bf16.mxu0 0
        %5492 = vmatpush1.bf16.msra.mxu0 0
        %5493 = vmatprep.subr.bf16.mxu0 0
        %5494 = vmatpush1.bf16.msra.mxu0 0
        %5495 = vmatprep.subr.bf16.mxu0 0
        %5496 = vmatpush1.bf16.msra.mxu0 0
        %5497 = vmatprep.subr.bf16.mxu0 0
        %5498 = vmatpush1.bf16.msra.mxu0 0
        %5499 = vmatprep.subr.bf16.mxu0 0
        %5500 = vmatpush1.bf16.msra.mxu0 0
        %5501 = vmatprep.mubr.bf16.mxu0 0
        %5502 = vmatmul.mubr.bf16.gmra.mrb[0].mxu0 %v5394
        %v5503 = vpop.f32.mrb[0].mxu0
        %v5504 = vadd.f32 %v5419, %v5503
        %v5505 = vpop.f32.mrb[0].mxu0
        %v5506 = vpop.f32.mrb[0].mxu0
        %v5507 = vadd.f32 %v5419, %v5506
        %v5508 = vpop.f32.mrb[0].mxu0
        %5509 = vmatprep.mubr.bf16.mxu0 0
        %5510 = vmatmul.mubr.bf16.gmra.mrb[0].mxu0 %v5395
        %v5511 = vpop.f32.mrb[0].mxu0
        %v5512 = vadd.f32 %v5419, %v5511
        %v5513 = vpop.f32.mrb[0].mxu0
        %v5514 = vpop.f32.mrb[0].mxu0
        %v5515 = vadd.f32 %v5419, %v5514
        %v5516 = vpop.f32.mrb[0].mxu0
        %5517 = vmatprep.mubr.bf16.mxu0 0
        %5518 = vmatmul.mubr.bf16.gmra.mrb[0].mxu0 %v5396
        %v5519 = vpop.f32.mrb[0].mxu0
        %v5520 = vadd.f32 %v5419, %v5519
        %v5521 = vpop.f32.mrb[0].mxu0
        %v5522 = vpop.f32.mrb[0].mxu0
        %v5523 = vadd.f32 %v5419, %v5522
        %v5524 = vpop.f32.mrb[0].mxu0
        %5525 = vmatprep.mubr.bf16.mxu0 0
        %5526 = vmatmul.mubr.bf16.gmra.mrb[0].mxu0 %v5397
        %v5527 = vpop.f32.mrb[0].mxu0
        %v5528 = vadd.f32 %v5419, %v5527
        %v5529 = vpop.f32.mrb[0].mxu0
        %v5530 = vpop.f32.mrb[0].mxu0
        %v5531 = vadd.f32 %v5419, %v5530
        %v5532 = vpop.f32.mrb[0].mxu0
        %5533 = vdwg.mxu0
        %v5534 = vadd.f32 %v5504, %v3796
        %v5535 = vadd.f32 %v5507, %v3797
        %v5536 = vadd.f32 %v5512, %v3798
        %v5537 = vadd.f32 %v5515, %v3799
        %v5538 = vadd.f32 %v5520, %v3800
        %v5539 = vadd.f32 %v5523, %v3801
        %v5540 = vadd.f32 %v5528, %v3802
        %v5541 = vadd.f32 %v5531, %v3803
        %v5542 = vld [vmem:[%s1376] sm:$0x1]
        %v5543 = vld [vmem:[%s1384] sm:$0x1]
        %5544 = vadd.xlane.f32.xlu0 %v5534
        %v5545 = vpop.xlane.xlu0 %5544
        %5546 = vadd.xlane.f32.xlu0 %v5535
        %v5547 = vpop.xlane.xlu0 %5546
        %5548 = vadd.xlane.f32.xlu0 %v5536
        %v5549 = vpop.xlane.xlu0 %5548
        %5550 = vadd.xlane.f32.xlu0 %v5537
        %v5551 = vpop.xlane.xlu0 %5550
        %5552 = vadd.xlane.f32.xlu0 %v5538
        %v5553 = vpop.xlane.xlu0 %5552
        %5554 = vadd.xlane.f32.xlu0 %v5539
        %v5555 = vpop.xlane.xlu0 %5554
        %5556 = vadd.xlane.f32.xlu0 %v5540
        %v5557 = vpop.xlane.xlu0 %5556
        %5558 = vadd.xlane.f32.xlu0 %v5541
        %v5559 = vpop.xlane.xlu0 %5558
        %v5560 = vrcp.pop 128.0
        %v5561 = vmul.f32 %v5545, %v5560
        %v5562 = vmul.f32 %v5547, %v5560
        %v5563 = vmul.f32 %v5549, %v5560
        %v5564 = vmul.f32 %v5551, %v5560
        %v5565 = vmul.f32 %v5553, %v5560
        %v5566 = vmul.f32 %v5555, %v5560
        %v5567 = vmul.f32 %v5557, %v5560
        %v5568 = vmul.f32 %v5559, %v5560
        %v5569 = vsub.f32 %v5534, %v5561
        %v5570 = vsub.f32 %v5535, %v5562
        %v5571 = vsub.f32 %v5536, %v5563
        %v5572 = vsub.f32 %v5537, %v5564
        %v5573 = vsub.f32 %v5538, %v5565
        %v5574 = vsub.f32 %v5539, %v5566
        %v5575 = vsub.f32 %v5540, %v5567
        %v5576 = vsub.f32 %v5541, %v5568
        %v5577 = vmul.f32 %v5569, %v5569
        %v5578 = vmul.f32 %v5570, %v5570
        %v5579 = vmul.f32 %v5571, %v5571
        %v5580 = vmul.f32 %v5572, %v5572
        %v5581 = vmul.f32 %v5573, %v5573
        %v5582 = vmul.f32 %v5574, %v5574
        %v5583 = vmul.f32 %v5575, %v5575
        %v5584 = vmul.f32 %v5576, %v5576
        %5585 = vadd.xlane.f32.xlu0 %v5577
        %v5586 = vpop.xlane.xlu0 %5585
        %5587 = vadd.xlane.f32.xlu0 %v5578
        %v5588 = vpop.xlane.xlu0 %5587
        %5589 = vadd.xlane.f32.xlu0 %v5579
        %v5590 = vpop.xlane.xlu0 %5589
        %5591 = vadd.xlane.f32.xlu0 %v5580
        %v5592 = vpop.xlane.xlu0 %5591
        %5593 = vadd.xlane.f32.xlu0 %v5581
        %v5594 = vpop.xlane.xlu0 %5593
        %5595 = vadd.xlane.f32.xlu0 %v5582
        %v5596 = vpop.xlane.xlu0 %5595
        %5597 = vadd.xlane.f32.xlu0 %v5583
        %v5598 = vpop.xlane.xlu0 %5597
        %5599 = vadd.xlane.f32.xlu0 %v5584
        %v5600 = vpop.xlane.xlu0 %5599
        %v5601 = vmul.f32 %v5586, %v5560
        %v5602 = vmul.f32 %v5588, %v5560
        %v5603 = vmul.f32 %v5590, %v5560
        %v5604 = vmul.f32 %v5592, %v5560
        %v5605 = vmul.f32 %v5594, %v5560
        %v5606 = vmul.f32 %v5596, %v5560
        %v5607 = vmul.f32 %v5598, %v5560
        %v5608 = vmul.f32 %v5600, %v5560
        %v5609 = vadd.f32 %v5601, 1e-05
        %v5610 = vadd.f32 %v5602, 1e-05
        %v5611 = vadd.f32 %v5603, 1e-05
        %v5612 = vadd.f32 %v5604, 1e-05
        %v5613 = vadd.f32 %v5605, 1e-05
        %v5614 = vadd.f32 %v5606, 1e-05
        %v5615 = vadd.f32 %v5607, 1e-05
        %v5616 = vadd.f32 %v5608, 1e-05
        %v5617 = vrsqrt.pop %v5609
        %v5618 = vrsqrt.pop %v5610
        %v5619 = vrsqrt.pop %v5611
        %v5620 = vrsqrt.pop %v5612
        %v5621 = vrsqrt.pop %v5613
        %v5622 = vrsqrt.pop %v5614
        %v5623 = vrsqrt.pop %v5615
        %v5624 = vrsqrt.pop %v5616
        %v5625 = vmul.f32 %v5569, %v5617
        %v5626 = vmul.f32 %v5570, %v5618
        %v5627 = vmul.f32 %v5571, %v5619
        %v5628 = vmul.f32 %v5572, %v5620
        %v5629 = vmul.f32 %v5573, %v5621
        %v5630 = vmul.f32 %v5574, %v5622
        %v5631 = vmul.f32 %v5575, %v5623
        %v5632 = vmul.f32 %v5576, %v5624
        %v5634 = vlaneseq
        %v5635 = vshrl.u32 %v5634, 7
        %v5636 = vsub.s32 0, %v5635
        %v5637 = vrot.slane %v5542, %v5636
        %v5639 = vmul.f32 %v5625, %v5637
        %v5640 = vmul.f32 %v5626, %v5637
        %v5641 = vmul.f32 %v5627, %v5637
        %v5642 = vmul.f32 %v5628, %v5637
        %v5643 = vmul.f32 %v5629, %v5637
        %v5644 = vmul.f32 %v5630, %v5637
        %v5645 = vmul.f32 %v5631, %v5637
        %v5646 = vmul.f32 %v5632, %v5637
        %v5648 = vlaneseq
        %v5649 = vshrl.u32 %v5648, 7
        %v5650 = vsub.s32 0, %v5649
        %v5651 = vrot.slane %v5543, %v5650
        %v5653 = vadd.f32 %v5639, %v5651
        %v5654 = vadd.f32 %v5640, %v5651
        %v5655 = vadd.f32 %v5641, %v5651
        %v5656 = vadd.f32 %v5642, %v5651
        %v5657 = vadd.f32 %v5643, %v5651
        %v5658 = vadd.f32 %v5644, %v5651
        %v5659 = vadd.f32 %v5645, %v5651
        %v5660 = vadd.f32 %v5646, %v5651
        %v5661 = vpack.c.bf16 %v5654, %v5653
        %v5662 = vpack.c.bf16 %v5656, %v5655
        %v5663 = vpack.c.bf16 %v5658, %v5657
        %v5664 = vpack.c.bf16 %v5660, %v5659
        %v5665 = vld [vmem:[%s1342] sm:$0xff]
        %v5666 = vld [vmem:[%s1342 + $0x8] sm:$0xff]
        %v5667 = vld [vmem:[%s1342 + $0x10] sm:$0xff]
        %v5668 = vld [vmem:[%s1342 + $0x18] sm:$0xff]
        %v5669 = vld [vmem:[%s1342 + $0x20] sm:$0xff]
        %v5670 = vld [vmem:[%s1342 + $0x28] sm:$0xff]
        %v5671 = vld [vmem:[%s1342 + $0x30] sm:$0xff]
        %v5672 = vld [vmem:[%s1342 + $0x38] sm:$0xff]
        %v5673 = vld [vmem:[%s1342 + $0x40] sm:$0xff]
        %v5674 = vld [vmem:[%s1342 + $0x48] sm:$0xff]
        %v5675 = vld [vmem:[%s1342 + $0x50] sm:$0xff]
        %v5676 = vld [vmem:[%s1342 + $0x58] sm:$0xff]
        %v5677 = vld [vmem:[%s1342 + $0x60] sm:$0xff]
        %v5678 = vld [vmem:[%s1342 + $0x68] sm:$0xff]
        %v5679 = vld [vmem:[%s1342 + $0x70] sm:$0xff]
        %v5680 = vld [vmem:[%s1342 + $0x78] sm:$0xff]
        %v5681 = vld [vmem:[%s1342 + $0x80] sm:$0xff]
        %v5682 = vld [vmem:[%s1342 + $0x88] sm:$0xff]
        %v5683 = vld [vmem:[%s1342 + $0x90] sm:$0xff]
        %v5684 = vld [vmem:[%s1342 + $0x98] sm:$0xff]
        %v5685 = vld [vmem:[%s1342 + $0xa0] sm:$0xff]
        %v5686 = vld [vmem:[%s1342 + $0xa8] sm:$0xff]
        %v5687 = vld [vmem:[%s1342 + $0xb0] sm:$0xff]
        %v5688 = vld [vmem:[%s1342 + $0xb8] sm:$0xff]
        %v5689 = vld [vmem:[%s1342 + $0xc0] sm:$0xff]
        %v5690 = vld [vmem:[%s1342 + $0xc8] sm:$0xff]
        %v5691 = vld [vmem:[%s1342 + $0xd0] sm:$0xff]
        %v5692 = vld [vmem:[%s1342 + $0xd8] sm:$0xff]
        %v5693 = vld [vmem:[%s1342 + $0xe0] sm:$0xff]
        %v5694 = vld [vmem:[%s1342 + $0xe8] sm:$0xff]
        %v5695 = vld [vmem:[%s1342 + $0xf0] sm:$0xff]
        %v5696 = vld [vmem:[%s1342 + $0xf8] sm:$0xff]
        %v5697 = vld [vmem:[%s1342 + $0x100] sm:$0xff]
        %v5698 = vld [vmem:[%s1342 + $0x108] sm:$0xff]
        %v5699 = vld [vmem:[%s1342 + $0x110] sm:$0xff]
        %v5700 = vld [vmem:[%s1342 + $0x118] sm:$0xff]
        %v5701 = vld [vmem:[%s1342 + $0x120] sm:$0xff]
        %v5702 = vld [vmem:[%s1342 + $0x128] sm:$0xff]
        %v5703 = vld [vmem:[%s1342 + $0x130] sm:$0xff]
        %v5704 = vld [vmem:[%s1342 + $0x138] sm:$0xff]
        %v5705 = vld [vmem:[%s1342 + $0x140] sm:$0xff]
        %v5706 = vld [vmem:[%s1342 + $0x148] sm:$0xff]
        %v5707 = vld [vmem:[%s1342 + $0x150] sm:$0xff]
        %v5708 = vld [vmem:[%s1342 + $0x158] sm:$0xff]
        %v5709 = vld [vmem:[%s1342 + $0x160] sm:$0xff]
        %v5710 = vld [vmem:[%s1342 + $0x168] sm:$0xff]
        %v5711 = vld [vmem:[%s1342 + $0x170] sm:$0xff]
        %v5712 = vld [vmem:[%s1342 + $0x178] sm:$0xff]
        %v5713 = vld [vmem:[%s1342 + $0x180] sm:$0xff]
        %v5714 = vld [vmem:[%s1342 + $0x188] sm:$0xff]
        %v5715 = vld [vmem:[%s1342 + $0x190] sm:$0xff]
        %v5716 = vld [vmem:[%s1342 + $0x198] sm:$0xff]
        %v5717 = vld [vmem:[%s1342 + $0x1a0] sm:$0xff]
        %v5718 = vld [vmem:[%s1342 + $0x1a8] sm:$0xff]
        %v5719 = vld [vmem:[%s1342 + $0x1b0] sm:$0xff]
        %v5720 = vld [vmem:[%s1342 + $0x1b8] sm:$0xff]
        %v5721 = vld [vmem:[%s1342 + $0x1c0] sm:$0xff]
        %v5722 = vld [vmem:[%s1342 + $0x1c8] sm:$0xff]
        %v5723 = vld [vmem:[%s1342 + $0x1d0] sm:$0xff]
        %v5724 = vld [vmem:[%s1342 + $0x1d8] sm:$0xff]
        %v5725 = vld [vmem:[%s1342 + $0x1e0] sm:$0xff]
        %v5726 = vld [vmem:[%s1342 + $0x1e8] sm:$0xff]
        %v5727 = vld [vmem:[%s1342 + $0x1f0] sm:$0xff]
        %v5728 = vld [vmem:[%s1342 + $0x1f8] sm:$0xff]
        %v5729 = vld [vmem:[%s1342 + $0x200] sm:$0xff]
        %v5730 = vld [vmem:[%s1342 + $0x208] sm:$0xff]
        %v5731 = vld [vmem:[%s1342 + $0x210] sm:$0xff]
        %v5732 = vld [vmem:[%s1342 + $0x218] sm:$0xff]
        %v5733 = vld [vmem:[%s1342 + $0x220] sm:$0xff]
        %v5734 = vld [vmem:[%s1342 + $0x228] sm:$0xff]
        %v5735 = vld [vmem:[%s1342 + $0x230] sm:$0xff]
        %v5736 = vld [vmem:[%s1342 + $0x238] sm:$0xff]
        %v5737 = vld [vmem:[%s1342 + $0x240] sm:$0xff]
        %v5738 = vld [vmem:[%s1342 + $0x248] sm:$0xff]
        %v5739 = vld [vmem:[%s1342 + $0x250] sm:$0xff]
        %v5740 = vld [vmem:[%s1342 + $0x258] sm:$0xff]
        %v5741 = vld [vmem:[%s1342 + $0x260] sm:$0xff]
        %v5742 = vld [vmem:[%s1342 + $0x268] sm:$0xff]
        %v5743 = vld [vmem:[%s1342 + $0x270] sm:$0xff]
        %v5744 = vld [vmem:[%s1342 + $0x278] sm:$0xff]
        %v5745 = vld [vmem:[%s1342 + $0x280] sm:$0xff]
        %v5746 = vld [vmem:[%s1342 + $0x288] sm:$0xff]
        %v5747 = vld [vmem:[%s1342 + $0x290] sm:$0xff]
        %v5748 = vld [vmem:[%s1342 + $0x298] sm:$0xff]
        %v5749 = vld [vmem:[%s1342 + $0x2a0] sm:$0xff]
        %v5750 = vld [vmem:[%s1342 + $0x2a8] sm:$0xff]
        %v5751 = vld [vmem:[%s1342 + $0x2b0] sm:$0xff]
        %v5752 = vld [vmem:[%s1342 + $0x2b8] sm:$0xff]
        %v5753 = vld [vmem:[%s1342 + $0x2c0] sm:$0xff]
        %v5754 = vld [vmem:[%s1342 + $0x2c8] sm:$0xff]
        %v5755 = vld [vmem:[%s1342 + $0x2d0] sm:$0xff]
        %v5756 = vld [vmem:[%s1342 + $0x2d8] sm:$0xff]
        %v5757 = vld [vmem:[%s1342 + $0x2e0] sm:$0xff]
        %v5758 = vld [vmem:[%s1342 + $0x2e8] sm:$0xff]
        %v5759 = vld [vmem:[%s1342 + $0x2f0] sm:$0xff]
        %v5760 = vld [vmem:[%s1342 + $0x2f8] sm:$0xff]
        %v5761 = vld [vmem:[%s1342 + $0x300] sm:$0xff]
        %v5762 = vld [vmem:[%s1342 + $0x308] sm:$0xff]
        %v5763 = vld [vmem:[%s1342 + $0x310] sm:$0xff]
        %v5764 = vld [vmem:[%s1342 + $0x318] sm:$0xff]
        %v5765 = vld [vmem:[%s1342 + $0x320] sm:$0xff]
        %v5766 = vld [vmem:[%s1342 + $0x328] sm:$0xff]
        %v5767 = vld [vmem:[%s1342 + $0x330] sm:$0xff]
        %v5768 = vld [vmem:[%s1342 + $0x338] sm:$0xff]
        %v5769 = vld [vmem:[%s1342 + $0x340] sm:$0xff]
        %v5770 = vld [vmem:[%s1342 + $0x348] sm:$0xff]
        %v5771 = vld [vmem:[%s1342 + $0x350] sm:$0xff]
        %v5772 = vld [vmem:[%s1342 + $0x358] sm:$0xff]
        %v5773 = vld [vmem:[%s1342 + $0x360] sm:$0xff]
        %v5774 = vld [vmem:[%s1342 + $0x368] sm:$0xff]
        %v5775 = vld [vmem:[%s1342 + $0x370] sm:$0xff]
        %v5776 = vld [vmem:[%s1342 + $0x378] sm:$0xff]
        %v5777 = vld [vmem:[%s1342 + $0x380] sm:$0xff]
        %v5778 = vld [vmem:[%s1342 + $0x388] sm:$0xff]
        %v5779 = vld [vmem:[%s1342 + $0x390] sm:$0xff]
        %v5780 = vld [vmem:[%s1342 + $0x398] sm:$0xff]
        %v5781 = vld [vmem:[%s1342 + $0x3a0] sm:$0xff]
        %v5782 = vld [vmem:[%s1342 + $0x3a8] sm:$0xff]
        %v5783 = vld [vmem:[%s1342 + $0x3b0] sm:$0xff]
        %v5784 = vld [vmem:[%s1342 + $0x3b8] sm:$0xff]
        %v5785 = vld [vmem:[%s1342 + $0x3c0] sm:$0xff]
        %v5786 = vld [vmem:[%s1342 + $0x3c8] sm:$0xff]
        %v5787 = vld [vmem:[%s1342 + $0x3d0] sm:$0xff]
        %v5788 = vld [vmem:[%s1342 + $0x3d8] sm:$0xff]
        %v5789 = vld [vmem:[%s1342 + $0x3e0] sm:$0xff]
        %v5790 = vld [vmem:[%s1342 + $0x3e8] sm:$0xff]
        %v5791 = vld [vmem:[%s1342 + $0x3f0] sm:$0xff]
        %v5792 = vld [vmem:[%s1342 + $0x3f8] sm:$0xff]
        %v5793 = vld [vmem:[%s1351] sm:$0xff]
        %v5794 = vld [vmem:[%s1351 + $0x8] sm:$0xff]
        %v5797 = vlaneseq
        %v5798 = vshrl.u32 %v5797, 7
        %v5799 = vsub.s32 0, %v5798
        %v5800 = vrot.slane %v5793, %v5799
        %v5801 = vlaneseq
        %v5802 = vshrl.u32 %v5801, 7
        %v5803 = vsub.s32 1, %v5802
        %v5804 = vrot.slane %v5793, %v5803
        %v5805 = vlaneseq
        %v5806 = vshrl.u32 %v5805, 7
        %v5807 = vsub.s32 2, %v5806
        %v5808 = vrot.slane %v5793, %v5807
        %v5809 = vlaneseq
        %v5810 = vshrl.u32 %v5809, 7
        %v5811 = vsub.s32 3, %v5810
        %v5812 = vrot.slane %v5793, %v5811
        %v5813 = vlaneseq
        %v5814 = vshrl.u32 %v5813, 7
        %v5815 = vsub.s32 4, %v5814
        %v5816 = vrot.slane %v5793, %v5815
        %v5817 = vlaneseq
        %v5818 = vshrl.u32 %v5817, 7
        %v5819 = vsub.s32 5, %v5818
        %v5820 = vrot.slane %v5793, %v5819
        %v5821 = vlaneseq
        %v5822 = vshrl.u32 %v5821, 7
        %v5823 = vsub.s32 6, %v5822
        %v5824 = vrot.slane %v5793, %v5823
        %v5825 = vlaneseq
        %v5826 = vshrl.u32 %v5825, 7
        %v5827 = vsub.s32 7, %v5826
        %v5828 = vrot.slane %v5793, %v5827
        %v5829 = vlaneseq
        %v5830 = vshrl.u32 %v5829, 7
        %v5831 = vsub.s32 0, %v5830
        %v5832 = vrot.slane %v5794, %v5831
        %v5833 = vlaneseq
        %v5834 = vshrl.u32 %v5833, 7
        %v5835 = vsub.s32 1, %v5834
        %v5836 = vrot.slane %v5794, %v5835
        %v5837 = vlaneseq
        %v5838 = vshrl.u32 %v5837, 7
        %v5839 = vsub.s32 2, %v5838
        %v5840 = vrot.slane %v5794, %v5839
        %v5841 = vlaneseq
        %v5842 = vshrl.u32 %v5841, 7
        %v5843 = vsub.s32 3, %v5842
        %v5844 = vrot.slane %v5794, %v5843
        %v5845 = vlaneseq
        %v5846 = vshrl.u32 %v5845, 7
        %v5847 = vsub.s32 4, %v5846
        %v5848 = vrot.slane %v5794, %v5847
        %v5849 = vlaneseq
        %v5850 = vshrl.u32 %v5849, 7
        %v5851 = vsub.s32 5, %v5850
        %v5852 = vrot.slane %v5794, %v5851
        %v5853 = vlaneseq
        %v5854 = vshrl.u32 %v5853, 7
        %v5855 = vsub.s32 6, %v5854
        %v5856 = vrot.slane %v5794, %v5855
        %v5857 = vlaneseq
        %v5858 = vshrl.u32 %v5857, 7
        %v5859 = vsub.s32 7, %v5858
        %v5860 = vrot.slane %v5794, %v5859
        %v6005 = vunpack.c.l.b16 %v5665
        %v6006 = vunpack.c.h.b16 %v5665
        %v6007 = vunpack.c.l.b16 %v5666
        %v6008 = vunpack.c.h.b16 %v5666
        %v6009 = vunpack.c.l.b16 %v5667
        %v6010 = vunpack.c.h.b16 %v5667
        %v6011 = vunpack.c.l.b16 %v5668
        %v6012 = vunpack.c.h.b16 %v5668
        %v6013 = vunpack.c.l.b16 %v5669
        %v6014 = vunpack.c.h.b16 %v5669
        %v6015 = vunpack.c.l.b16 %v5670
        %v6016 = vunpack.c.h.b16 %v5670
        %v6017 = vunpack.c.l.b16 %v5671
        %v6018 = vunpack.c.h.b16 %v5671
        %v6019 = vunpack.c.l.b16 %v5672
        %v6020 = vunpack.c.h.b16 %v5672
        %v6021 = vunpack.c.l.b16 %v5673
        %v6022 = vunpack.c.h.b16 %v5673
        %v6023 = vunpack.c.l.b16 %v5674
        %v6024 = vunpack.c.h.b16 %v5674
        %v6025 = vunpack.c.l.b16 %v5675
        %v6026 = vunpack.c.h.b16 %v5675
        %v6027 = vunpack.c.l.b16 %v5676
        %v6028 = vunpack.c.h.b16 %v5676
        %v6029 = vunpack.c.l.b16 %v5677
        %v6030 = vunpack.c.h.b16 %v5677
        %v6031 = vunpack.c.l.b16 %v5678
        %v6032 = vunpack.c.h.b16 %v5678
        %v6033 = vunpack.c.l.b16 %v5679
        %v6034 = vunpack.c.h.b16 %v5679
        %v6035 = vunpack.c.l.b16 %v5680
        %v6036 = vunpack.c.h.b16 %v5680
        %v6037 = vunpack.c.l.b16 %v5681
        %v6038 = vunpack.c.h.b16 %v5681
        %v6039 = vunpack.c.l.b16 %v5682
        %v6040 = vunpack.c.h.b16 %v5682
        %v6041 = vunpack.c.l.b16 %v5683
        %v6042 = vunpack.c.h.b16 %v5683
        %v6043 = vunpack.c.l.b16 %v5684
        %v6044 = vunpack.c.h.b16 %v5684
        %v6045 = vunpack.c.l.b16 %v5685
        %v6046 = vunpack.c.h.b16 %v5685
        %v6047 = vunpack.c.l.b16 %v5686
        %v6048 = vunpack.c.h.b16 %v5686
        %v6049 = vunpack.c.l.b16 %v5687
        %v6050 = vunpack.c.h.b16 %v5687
        %v6051 = vunpack.c.l.b16 %v5688
        %v6052 = vunpack.c.h.b16 %v5688
        %v6053 = vunpack.c.l.b16 %v5689
        %v6054 = vunpack.c.h.b16 %v5689
        %v6055 = vunpack.c.l.b16 %v5690
        %v6056 = vunpack.c.h.b16 %v5690
        %v6057 = vunpack.c.l.b16 %v5691
        %v6058 = vunpack.c.h.b16 %v5691
        %v6059 = vunpack.c.l.b16 %v5692
        %v6060 = vunpack.c.h.b16 %v5692
        %v6061 = vunpack.c.l.b16 %v5693
        %v6062 = vunpack.c.h.b16 %v5693
        %v6063 = vunpack.c.l.b16 %v5694
        %v6064 = vunpack.c.h.b16 %v5694
        %v6065 = vunpack.c.l.b16 %v5695
        %v6066 = vunpack.c.h.b16 %v5695
        %v6067 = vunpack.c.l.b16 %v5696
        %v6068 = vunpack.c.h.b16 %v5696
        %v6069 = vunpack.c.l.b16 %v5697
        %v6070 = vunpack.c.h.b16 %v5697
        %v6071 = vunpack.c.l.b16 %v5698
        %v6072 = vunpack.c.h.b16 %v5698
        %v6073 = vunpack.c.l.b16 %v5699
        %v6074 = vunpack.c.h.b16 %v5699
        %v6075 = vunpack.c.l.b16 %v5700
        %v6076 = vunpack.c.h.b16 %v5700
        %v6077 = vunpack.c.l.b16 %v5701
        %v6078 = vunpack.c.h.b16 %v5701
        %v6079 = vunpack.c.l.b16 %v5702
        %v6080 = vunpack.c.h.b16 %v5702
        %v6081 = vunpack.c.l.b16 %v5703
        %v6082 = vunpack.c.h.b16 %v5703
        %v6083 = vunpack.c.l.b16 %v5704
        %v6084 = vunpack.c.h.b16 %v5704
        %v6085 = vunpack.c.l.b16 %v5705
        %v6086 = vunpack.c.h.b16 %v5705
        %v6087 = vunpack.c.l.b16 %v5706
        %v6088 = vunpack.c.h.b16 %v5706
        %v6089 = vunpack.c.l.b16 %v5707
        %v6090 = vunpack.c.h.b16 %v5707
        %v6091 = vunpack.c.l.b16 %v5708
        %v6092 = vunpack.c.h.b16 %v5708
        %v6093 = vunpack.c.l.b16 %v5709
        %v6094 = vunpack.c.h.b16 %v5709
        %v6095 = vunpack.c.l.b16 %v5710
        %v6096 = vunpack.c.h.b16 %v5710
        %v6097 = vunpack.c.l.b16 %v5711
        %v6098 = vunpack.c.h.b16 %v5711
        %v6099 = vunpack.c.l.b16 %v5712
        %v6100 = vunpack.c.h.b16 %v5712
        %v6101 = vunpack.c.l.b16 %v5713
        %v6102 = vunpack.c.h.b16 %v5713
        %v6103 = vunpack.c.l.b16 %v5714
        %v6104 = vunpack.c.h.b16 %v5714
        %v6105 = vunpack.c.l.b16 %v5715
        %v6106 = vunpack.c.h.b16 %v5715
        %v6107 = vunpack.c.l.b16 %v5716
        %v6108 = vunpack.c.h.b16 %v5716
        %v6109 = vunpack.c.l.b16 %v5717
        %v6110 = vunpack.c.h.b16 %v5717
        %v6111 = vunpack.c.l.b16 %v5718
        %v6112 = vunpack.c.h.b16 %v5718
        %v6113 = vunpack.c.l.b16 %v5719
        %v6114 = vunpack.c.h.b16 %v5719
        %v6115 = vunpack.c.l.b16 %v5720
        %v6116 = vunpack.c.h.b16 %v5720
        %v6117 = vunpack.c.l.b16 %v5721
        %v6118 = vunpack.c.h.b16 %v5721
        %v6119 = vunpack.c.l.b16 %v5722
        %v6120 = vunpack.c.h.b16 %v5722
        %v6121 = vunpack.c.l.b16 %v5723
        %v6122 = vunpack.c.h.b16 %v5723
        %v6123 = vunpack.c.l.b16 %v5724
        %v6124 = vunpack.c.h.b16 %v5724
        %v6125 = vunpack.c.l.b16 %v5725
        %v6126 = vunpack.c.h.b16 %v5725
        %v6127 = vunpack.c.l.b16 %v5726
        %v6128 = vunpack.c.h.b16 %v5726
        %v6129 = vunpack.c.l.b16 %v5727
        %v6130 = vunpack.c.h.b16 %v5727
        %v6131 = vunpack.c.l.b16 %v5728
        %v6132 = vunpack.c.h.b16 %v5728
        %v6133 = vunpack.c.l.b16 %v5729
        %v6134 = vunpack.c.h.b16 %v5729
        %v6135 = vunpack.c.l.b16 %v5730
        %v6136 = vunpack.c.h.b16 %v5730
        %v6137 = vunpack.c.l.b16 %v5731
        %v6138 = vunpack.c.h.b16 %v5731
        %v6139 = vunpack.c.l.b16 %v5732
        %v6140 = vunpack.c.h.b16 %v5732
        %v6141 = vunpack.c.l.b16 %v5733
        %v6142 = vunpack.c.h.b16 %v5733
        %v6143 = vunpack.c.l.b16 %v5734
        %v6144 = vunpack.c.h.b16 %v5734
        %v6145 = vunpack.c.l.b16 %v5735
        %v6146 = vunpack.c.h.b16 %v5735
        %v6147 = vunpack.c.l.b16 %v5736
        %v6148 = vunpack.c.h.b16 %v5736
        %v6149 = vunpack.c.l.b16 %v5737
        %v6150 = vunpack.c.h.b16 %v5737
        %v6151 = vunpack.c.l.b16 %v5738
        %v6152 = vunpack.c.h.b16 %v5738
        %v6153 = vunpack.c.l.b16 %v5739
        %v6154 = vunpack.c.h.b16 %v5739
        %v6155 = vunpack.c.l.b16 %v5740
        %v6156 = vunpack.c.h.b16 %v5740
        %v6157 = vunpack.c.l.b16 %v5741
        %v6158 = vunpack.c.h.b16 %v5741
        %v6159 = vunpack.c.l.b16 %v5742
        %v6160 = vunpack.c.h.b16 %v5742
        %v6161 = vunpack.c.l.b16 %v5743
        %v6162 = vunpack.c.h.b16 %v5743
        %v6163 = vunpack.c.l.b16 %v5744
        %v6164 = vunpack.c.h.b16 %v5744
        %v6165 = vunpack.c.l.b16 %v5745
        %v6166 = vunpack.c.h.b16 %v5745
        %v6167 = vunpack.c.l.b16 %v5746
        %v6168 = vunpack.c.h.b16 %v5746
        %v6169 = vunpack.c.l.b16 %v5747
        %v6170 = vunpack.c.h.b16 %v5747
        %v6171 = vunpack.c.l.b16 %v5748
        %v6172 = vunpack.c.h.b16 %v5748
        %v6173 = vunpack.c.l.b16 %v5749
        %v6174 = vunpack.c.h.b16 %v5749
        %v6175 = vunpack.c.l.b16 %v5750
        %v6176 = vunpack.c.h.b16 %v5750
        %v6177 = vunpack.c.l.b16 %v5751
        %v6178 = vunpack.c.h.b16 %v5751
        %v6179 = vunpack.c.l.b16 %v5752
        %v6180 = vunpack.c.h.b16 %v5752
        %v6181 = vunpack.c.l.b16 %v5753
        %v6182 = vunpack.c.h.b16 %v5753
        %v6183 = vunpack.c.l.b16 %v5754
        %v6184 = vunpack.c.h.b16 %v5754
        %v6185 = vunpack.c.l.b16 %v5755
        %v6186 = vunpack.c.h.b16 %v5755
        %v6187 = vunpack.c.l.b16 %v5756
        %v6188 = vunpack.c.h.b16 %v5756
        %v6189 = vunpack.c.l.b16 %v5757
        %v6190 = vunpack.c.h.b16 %v5757
        %v6191 = vunpack.c.l.b16 %v5758
        %v6192 = vunpack.c.h.b16 %v5758
        %v6193 = vunpack.c.l.b16 %v5759
        %v6194 = vunpack.c.h.b16 %v5759
        %v6195 = vunpack.c.l.b16 %v5760
        %v6196 = vunpack.c.h.b16 %v5760
        %v6197 = vunpack.c.l.b16 %v5761
        %v6198 = vunpack.c.h.b16 %v5761
        %v6199 = vunpack.c.l.b16 %v5762
        %v6200 = vunpack.c.h.b16 %v5762
        %v6201 = vunpack.c.l.b16 %v5763
        %v6202 = vunpack.c.h.b16 %v5763
        %v6203 = vunpack.c.l.b16 %v5764
        %v6204 = vunpack.c.h.b16 %v5764
        %v6205 = vunpack.c.l.b16 %v5765
        %v6206 = vunpack.c.h.b16 %v5765
        %v6207 = vunpack.c.l.b16 %v5766
        %v6208 = vunpack.c.h.b16 %v5766
        %v6209 = vunpack.c.l.b16 %v5767
        %v6210 = vunpack.c.h.b16 %v5767
        %v6211 = vunpack.c.l.b16 %v5768
        %v6212 = vunpack.c.h.b16 %v5768
        %v6213 = vunpack.c.l.b16 %v5769
        %v6214 = vunpack.c.h.b16 %v5769
        %v6215 = vunpack.c.l.b16 %v5770
        %v6216 = vunpack.c.h.b16 %v5770
        %v6217 = vunpack.c.l.b16 %v5771
        %v6218 = vunpack.c.h.b16 %v5771
        %v6219 = vunpack.c.l.b16 %v5772
        %v6220 = vunpack.c.h.b16 %v5772
        %v6221 = vunpack.c.l.b16 %v5773
        %v6222 = vunpack.c.h.b16 %v5773
        %v6223 = vunpack.c.l.b16 %v5774
        %v6224 = vunpack.c.h.b16 %v5774
        %v6225 = vunpack.c.l.b16 %v5775
        %v6226 = vunpack.c.h.b16 %v5775
        %v6227 = vunpack.c.l.b16 %v5776
        %v6228 = vunpack.c.h.b16 %v5776
        %v6229 = vunpack.c.l.b16 %v5777
        %v6230 = vunpack.c.h.b16 %v5777
        %v6231 = vunpack.c.l.b16 %v5778
        %v6232 = vunpack.c.h.b16 %v5778
        %v6233 = vunpack.c.l.b16 %v5779
        %v6234 = vunpack.c.h.b16 %v5779
        %v6235 = vunpack.c.l.b16 %v5780
        %v6236 = vunpack.c.h.b16 %v5780
        %v6237 = vunpack.c.l.b16 %v5781
        %v6238 = vunpack.c.h.b16 %v5781
        %v6239 = vunpack.c.l.b16 %v5782
        %v6240 = vunpack.c.h.b16 %v5782
        %v6241 = vunpack.c.l.b16 %v5783
        %v6242 = vunpack.c.h.b16 %v5783
        %v6243 = vunpack.c.l.b16 %v5784
        %v6244 = vunpack.c.h.b16 %v5784
        %v6245 = vunpack.c.l.b16 %v5785
        %v6246 = vunpack.c.h.b16 %v5785
        %v6247 = vunpack.c.l.b16 %v5786
        %v6248 = vunpack.c.h.b16 %v5786
        %v6249 = vunpack.c.l.b16 %v5787
        %v6250 = vunpack.c.h.b16 %v5787
        %v6251 = vunpack.c.l.b16 %v5788
        %v6252 = vunpack.c.h.b16 %v5788
        %v6253 = vunpack.c.l.b16 %v5789
        %v6254 = vunpack.c.h.b16 %v5789
        %v6255 = vunpack.c.l.b16 %v5790
        %v6256 = vunpack.c.h.b16 %v5790
        %v6257 = vunpack.c.l.b16 %v5791
        %v6258 = vunpack.c.h.b16 %v5791
        %v6259 = vunpack.c.l.b16 %v5792
        %v6260 = vunpack.c.h.b16 %v5792
        %v6261 = vpack.c.b16 %v6021, %v6005
        %v6262 = vpack.c.b16 %v6022, %v6006
        %v6263 = vpack.c.b16 %v6023, %v6007
        %v6264 = vpack.c.b16 %v6024, %v6008
        %v6265 = vpack.c.b16 %v6025, %v6009
        %v6266 = vpack.c.b16 %v6026, %v6010
        %v6267 = vpack.c.b16 %v6027, %v6011
        %v6268 = vpack.c.b16 %v6028, %v6012
        %v6269 = vpack.c.b16 %v6029, %v6013
        %v6270 = vpack.c.b16 %v6030, %v6014
        %v6271 = vpack.c.b16 %v6031, %v6015
        %v6272 = vpack.c.b16 %v6032, %v6016
        %v6273 = vpack.c.b16 %v6033, %v6017
        %v6274 = vpack.c.b16 %v6034, %v6018
        %v6275 = vpack.c.b16 %v6035, %v6019
        %v6276 = vpack.c.b16 %v6036, %v6020
        %v6277 = vpack.c.b16 %v6053, %v6037
        %v6278 = vpack.c.b16 %v6054, %v6038
        %v6279 = vpack.c.b16 %v6055, %v6039
        %v6280 = vpack.c.b16 %v6056, %v6040
        %v6281 = vpack.c.b16 %v6057, %v6041
        %v6282 = vpack.c.b16 %v6058, %v6042
        %v6283 = vpack.c.b16 %v6059, %v6043
        %v6284 = vpack.c.b16 %v6060, %v6044
        %v6285 = vpack.c.b16 %v6061, %v6045
        %v6286 = vpack.c.b16 %v6062, %v6046
        %v6287 = vpack.c.b16 %v6063, %v6047
        %v6288 = vpack.c.b16 %v6064, %v6048
        %v6289 = vpack.c.b16 %v6065, %v6049
        %v6290 = vpack.c.b16 %v6066, %v6050
        %v6291 = vpack.c.b16 %v6067, %v6051
        %v6292 = vpack.c.b16 %v6068, %v6052
        %v6293 = vpack.c.b16 %v6085, %v6069
        %v6294 = vpack.c.b16 %v6086, %v6070
        %v6295 = vpack.c.b16 %v6087, %v6071
        %v6296 = vpack.c.b16 %v6088, %v6072
        %v6297 = vpack.c.b16 %v6089, %v6073
        %v6298 = vpack.c.b16 %v6090, %v6074
        %v6299 = vpack.c.b16 %v6091, %v6075
        %v6300 = vpack.c.b16 %v6092, %v6076
        %v6301 = vpack.c.b16 %v6093, %v6077
        %v6302 = vpack.c.b16 %v6094, %v6078
        %v6303 = vpack.c.b16 %v6095, %v6079
        %v6304 = vpack.c.b16 %v6096, %v6080
        %v6305 = vpack.c.b16 %v6097, %v6081
        %v6306 = vpack.c.b16 %v6098, %v6082
        %v6307 = vpack.c.b16 %v6099, %v6083
        %v6308 = vpack.c.b16 %v6100, %v6084
        %v6309 = vpack.c.b16 %v6117, %v6101
        %v6310 = vpack.c.b16 %v6118, %v6102
        %v6311 = vpack.c.b16 %v6119, %v6103
        %v6312 = vpack.c.b16 %v6120, %v6104
        %v6313 = vpack.c.b16 %v6121, %v6105
        %v6314 = vpack.c.b16 %v6122, %v6106
        %v6315 = vpack.c.b16 %v6123, %v6107
        %v6316 = vpack.c.b16 %v6124, %v6108
        %v6317 = vpack.c.b16 %v6125, %v6109
        %v6318 = vpack.c.b16 %v6126, %v6110
        %v6319 = vpack.c.b16 %v6127, %v6111
        %v6320 = vpack.c.b16 %v6128, %v6112
        %v6321 = vpack.c.b16 %v6129, %v6113
        %v6322 = vpack.c.b16 %v6130, %v6114
        %v6323 = vpack.c.b16 %v6131, %v6115
        %v6324 = vpack.c.b16 %v6132, %v6116
        %v6325 = vpack.c.b16 %v6149, %v6133
        %v6326 = vpack.c.b16 %v6150, %v6134
        %v6327 = vpack.c.b16 %v6151, %v6135
        %v6328 = vpack.c.b16 %v6152, %v6136
        %v6329 = vpack.c.b16 %v6153, %v6137
        %v6330 = vpack.c.b16 %v6154, %v6138
        %v6331 = vpack.c.b16 %v6155, %v6139
        %v6332 = vpack.c.b16 %v6156, %v6140
        %v6333 = vpack.c.b16 %v6157, %v6141
        %v6334 = vpack.c.b16 %v6158, %v6142
        %v6335 = vpack.c.b16 %v6159, %v6143
        %v6336 = vpack.c.b16 %v6160, %v6144
        %v6337 = vpack.c.b16 %v6161, %v6145
        %v6338 = vpack.c.b16 %v6162, %v6146
        %v6339 = vpack.c.b16 %v6163, %v6147
        %v6340 = vpack.c.b16 %v6164, %v6148
        %v6341 = vpack.c.b16 %v6181, %v6165
        %v6342 = vpack.c.b16 %v6182, %v6166
        %v6343 = vpack.c.b16 %v6183, %v6167
        %v6344 = vpack.c.b16 %v6184, %v6168
        %v6345 = vpack.c.b16 %v6185, %v6169
        %v6346 = vpack.c.b16 %v6186, %v6170
        %v6347 = vpack.c.b16 %v6187, %v6171
        %v6348 = vpack.c.b16 %v6188, %v6172
        %v6349 = vpack.c.b16 %v6189, %v6173
        %v6350 = vpack.c.b16 %v6190, %v6174
        %v6351 = vpack.c.b16 %v6191, %v6175
        %v6352 = vpack.c.b16 %v6192, %v6176
        %v6353 = vpack.c.b16 %v6193, %v6177
        %v6354 = vpack.c.b16 %v6194, %v6178
        %v6355 = vpack.c.b16 %v6195, %v6179
        %v6356 = vpack.c.b16 %v6196, %v6180
        %v6357 = vpack.c.b16 %v6213, %v6197
        %v6358 = vpack.c.b16 %v6214, %v6198
        %v6359 = vpack.c.b16 %v6215, %v6199
        %v6360 = vpack.c.b16 %v6216, %v6200
        %v6361 = vpack.c.b16 %v6217, %v6201
        %v6362 = vpack.c.b16 %v6218, %v6202
        %v6363 = vpack.c.b16 %v6219, %v6203
        %v6364 = vpack.c.b16 %v6220, %v6204
        %v6365 = vpack.c.b16 %v6221, %v6205
        %v6366 = vpack.c.b16 %v6222, %v6206
        %v6367 = vpack.c.b16 %v6223, %v6207
        %v6368 = vpack.c.b16 %v6224, %v6208
        %v6369 = vpack.c.b16 %v6225, %v6209
        %v6370 = vpack.c.b16 %v6226, %v6210
        %v6371 = vpack.c.b16 %v6227, %v6211
        %v6372 = vpack.c.b16 %v6228, %v6212
        %v6373 = vpack.c.b16 %v6245, %v6229
        %v6374 = vpack.c.b16 %v6246, %v6230
        %v6375 = vpack.c.b16 %v6247, %v6231
        %v6376 = vpack.c.b16 %v6248, %v6232
        %v6377 = vpack.c.b16 %v6249, %v6233
        %v6378 = vpack.c.b16 %v6250, %v6234
        %v6379 = vpack.c.b16 %v6251, %v6235
        %v6380 = vpack.c.b16 %v6252, %v6236
        %v6381 = vpack.c.b16 %v6253, %v6237
        %v6382 = vpack.c.b16 %v6254, %v6238
        %v6383 = vpack.c.b16 %v6255, %v6239
        %v6384 = vpack.c.b16 %v6256, %v6240
        %v6385 = vpack.c.b16 %v6257, %v6241
        %v6386 = vpack.c.b16 %v6258, %v6242
        %v6387 = vpack.c.b16 %v6259, %v6243
        %v6388 = vpack.c.b16 %v6260, %v6244
        %6517 = vmatprep.subr.bf16.mxu0 %v6262
        %6518 = vmatpush1.bf16.msra.mxu0 %v6261
        %6519 = vmatprep.subr.bf16.mxu0 %v6278
        %6520 = vmatpush1.bf16.msra.mxu0 %v6277
        %6521 = vmatprep.subr.bf16.mxu0 %v6294
        %6522 = vmatpush1.bf16.msra.mxu0 %v6293
        %6523 = vmatprep.subr.bf16.mxu0 %v6310
        %6524 = vmatpush1.bf16.msra.mxu0 %v6309
        %6525 = vmatprep.subr.bf16.mxu0 %v6326
        %6526 = vmatpush1.bf16.msra.mxu0 %v6325
        %6527 = vmatprep.subr.bf16.mxu0 %v6342
        %6528 = vmatpush1.bf16.msra.mxu0 %v6341
        %6529 = vmatprep.subr.bf16.mxu0 %v6358
        %6530 = vmatpush1.bf16.msra.mxu0 %v6357
        %6531 = vmatprep.subr.bf16.mxu0 %v6374
        %6532 = vmatpush1.bf16.msra.mxu0 %v6373
        %6533 = vmatprep.subr.bf16.mxu0 0
        %6534 = vmatpush1.bf16.msra.mxu0 0
        %6535 = vmatprep.subr.bf16.mxu0 0
        %6536 = vmatpush1.bf16.msra.mxu0 0
        %6537 = vmatprep.subr.bf16.mxu0 0
        %6538 = vmatpush1.bf16.msra.mxu0 0
        %6539 = vmatprep.subr.bf16.mxu0 0
        %6540 = vmatpush1.bf16.msra.mxu0 0
        %6541 = vmatprep.subr.bf16.mxu0 0
        %6542 = vmatpush1.bf16.msra.mxu0 0
        %6543 = vmatprep.subr.bf16.mxu0 0
        %6544 = vmatpush1.bf16.msra.mxu0 0
        %6545 = vmatprep.subr.bf16.mxu0 0
        %6546 = vmatpush1.bf16.msra.mxu0 0
        %6547 = vmatprep.subr.bf16.mxu0 0
        %6548 = vmatpush1.bf16.msra.mxu0 0
        %6549 = vmatprep.mubr.bf16.mxu0 0
        %6550 = vmatmul.mubr.bf16.gmra.mrb[0].mxu0 %v5661
        %v6551 = vpop.f32.mrb[0].mxu0
        %v6552 = vadd.f32 %v5800, %v6551
        %v6553 = vpop.f32.mrb[0].mxu0
        %v6554 = vadd.f32 %v5804, %v6553
        %v6555 = vpop.f32.mrb[0].mxu0
        %v6556 = vadd.f32 %v5800, %v6555
        %v6557 = vpop.f32.mrb[0].mxu0
        %v6558 = vadd.f32 %v5804, %v6557
        %6559 = vmatprep.mubr.bf16.mxu0 0
        %6560 = vmatmul.mubr.bf16.gmra.mrb[0].mxu0 %v5662
        %v6561 = vpop.f32.mrb[0].mxu0
        %v6562 = vadd.f32 %v5800, %v6561
        %v6563 = vpop.f32.mrb[0].mxu0
        %v6564 = vadd.f32 %v5804, %v6563
        %v6565 = vpop.f32.mrb[0].mxu0
        %v6566 = vadd.f32 %v5800, %v6565
        %v6567 = vpop.f32.mrb[0].mxu0
        %v6568 = vadd.f32 %v5804, %v6567
        %6569 = vmatprep.mubr.bf16.mxu0 0
        %6570 = vmatmul.mubr.bf16.gmra.mrb[0].mxu0 %v5663
        %v6571 = vpop.f32.mrb[0].mxu0
        %v6572 = vadd.f32 %v5800, %v6571
        %v6573 = vpop.f32.mrb[0].mxu0
        %v6574 = vadd.f32 %v5804, %v6573
        %v6575 = vpop.f32.mrb[0].mxu0
        %v6576 = vadd.f32 %v5800, %v6575
        %v6577 = vpop.f32.mrb[0].mxu0
        %v6578 = vadd.f32 %v5804, %v6577
        %6579 = vmatprep.mubr.bf16.mxu0 0
        %6580 = vmatmul.mubr.bf16.gmra.mrb[0].mxu0 %v5664
        %v6581 = vpop.f32.mrb[0].mxu0
        %v6582 = vadd.f32 %v5800, %v6581
        %v6583 = vpop.f32.mrb[0].mxu0
        %v6584 = vadd.f32 %v5804, %v6583
        %v6585 = vpop.f32.mrb[0].mxu0
        %v6586 = vadd.f32 %v5800, %v6585
        %v6587 = vpop.f32.mrb[0].mxu0
        %v6588 = vadd.f32 %v5804, %v6587
        %6589 = vdwg.mxu0
        %6590 = vmatprep.subr.bf16.mxu0 %v6264
        %6591 = vmatpush1.bf16.msra.mxu0 %v6263
        %6592 = vmatprep.subr.bf16.mxu0 %v6280
        %6593 = vmatpush1.bf16.msra.mxu0 %v6279
        %6594 = vmatprep.subr.bf16.mxu0 %v6296
        %6595 = vmatpush1.bf16.msra.mxu0 %v6295
        %6596 = vmatprep.subr.bf16.mxu0 %v6312
        %6597 = vmatpush1.bf16.msra.mxu0 %v6311
        %6598 = vmatprep.subr.bf16.mxu0 %v6328
        %6599 = vmatpush1.bf16.msra.mxu0 %v6327
        %6600 = vmatprep.subr.bf16.mxu0 %v6344
        %6601 = vmatpush1.bf16.msra.mxu0 %v6343
        %6602 = vmatprep.subr.bf16.mxu0 %v6360
        %6603 = vmatpush1.bf16.msra.mxu0 %v6359
        %6604 = vmatprep.subr.bf16.mxu0 %v6376
        %6605 = vmatpush1.bf16.msra.mxu0 %v6375
        %6606 = vmatprep.subr.bf16.mxu0 0
        %6607 = vmatpush1.bf16.msra.mxu0 0
        %6608 = vmatprep.subr.bf16.mxu0 0
        %6609 = vmatpush1.bf16.msra.mxu0 0
        %6610 = vmatprep.subr.bf16.mxu0 0
        %6611 = vmatpush1.bf16.msra.mxu0 0
        %6612 = vmatprep.subr.bf16.mxu0 0
        %6613 = vmatpush1.bf16.msra.mxu0 0
        %6614 = vmatprep.subr.bf16.mxu0 0
        %6615 = vmatpush1.bf16.msra.mxu0 0
        %6616 = vmatprep.subr.bf16.mxu0 0
        %6617 = vmatpush1.bf16.msra.mxu0 0
        %6618 = vmatprep.subr.bf16.mxu0 0
        %6619 = vmatpush1.bf16.msra.mxu0 0
        %6620 = vmatprep.subr.bf16.mxu0 0
        %6621 = vmatpush1.bf16.msra.mxu0 0
        %6622 = vmatprep.mubr.bf16.mxu0 0
        %6623 = vmatmul.mubr.bf16.gmra.mrb[0].mxu0 %v5661
        %v6624 = vpop.f32.mrb[0].mxu0
        %v6625 = vadd.f32 %v5808, %v6624
        %v6626 = vpop.f32.mrb[0].mxu0
        %v6627 = vadd.f32 %v5812, %v6626
        %v6628 = vpop.f32.mrb[0].mxu0
        %v6629 = vadd.f32 %v5808, %v6628
        %v6630 = vpop.f32.mrb[0].mxu0
        %v6631 = vadd.f32 %v5812, %v6630
        %6632 = vmatprep.mubr.bf16.mxu0 0
        %6633 = vmatmul.mubr.bf16.gmra.mrb[0].mxu0 %v5662
        %v6634 = vpop.f32.mrb[0].mxu0
        %v6635 = vadd.f32 %v5808, %v6634
        %v6636 = vpop.f32.mrb[0].mxu0
        %v6637 = vadd.f32 %v5812, %v6636
        %v6638 = vpop.f32.mrb[0].mxu0
        %v6639 = vadd.f32 %v5808, %v6638
        %v6640 = vpop.f32.mrb[0].mxu0
        %v6641 = vadd.f32 %v5812, %v6640
        %6642 = vmatprep.mubr.bf16.mxu0 0
        %6643 = vmatmul.mubr.bf16.gmra.mrb[0].mxu0 %v5663
        %v6644 = vpop.f32.mrb[0].mxu0
        %v6645 = vadd.f32 %v5808, %v6644
        %v6646 = vpop.f32.mrb[0].mxu0
        %v6647 = vadd.f32 %v5812, %v6646
        %v6648 = vpop.f32.mrb[0].mxu0
        %v6649 = vadd.f32 %v5808, %v6648
        %v6650 = vpop.f32.mrb[0].mxu0
        %v6651 = vadd.f32 %v5812, %v6650
        %6652 = vmatprep.mubr.bf16.mxu0 0
        %6653 = vmatmul.mubr.bf16.gmra.mrb[0].mxu0 %v5664
        %v6654 = vpop.f32.mrb[0].mxu0
        %v6655 = vadd.f32 %v5808, %v6654
        %v6656 = vpop.f32.mrb[0].mxu0
        %v6657 = vadd.f32 %v5812, %v6656
        %v6658 = vpop.f32.mrb[0].mxu0
        %v6659 = vadd.f32 %v5808, %v6658
        %v6660 = vpop.f32.mrb[0].mxu0
        %v6661 = vadd.f32 %v5812, %v6660
        %6662 = vdwg.mxu0
        %6663 = vmatprep.subr.bf16.mxu0 %v6266
        %6664 = vmatpush1.bf16.msra.mxu0 %v6265
        %6665 = vmatprep.subr.bf16.mxu0 %v6282
        %6666 = vmatpush1.bf16.msra.mxu0 %v6281
        %6667 = vmatprep.subr.bf16.mxu0 %v6298
        %6668 = vmatpush1.bf16.msra.mxu0 %v6297
        %6669 = vmatprep.subr.bf16.mxu0 %v6314
        %6670 = vmatpush1.bf16.msra.mxu0 %v6313
        %6671 = vmatprep.subr.bf16.mxu0 %v6330
        %6672 = vmatpush1.bf16.msra.mxu0 %v6329
        %6673 = vmatprep.subr.bf16.mxu0 %v6346
        %6674 = vmatpush1.bf16.msra.mxu0 %v6345
        %6675 = vmatprep.subr.bf16.mxu0 %v6362
        %6676 = vmatpush1.bf16.msra.mxu0 %v6361
        %6677 = vmatprep.subr.bf16.mxu0 %v6378
        %6678 = vmatpush1.bf16.msra.mxu0 %v6377
        %6679 = vmatprep.subr.bf16.mxu0 0
        %6680 = vmatpush1.bf16.msra.mxu0 0
        %6681 = vmatprep.subr.bf16.mxu0 0
        %6682 = vmatpush1.bf16.msra.mxu0 0
        %6683 = vmatprep.subr.bf16.mxu0 0
        %6684 = vmatpush1.bf16.msra.mxu0 0
        %6685 = vmatprep.subr.bf16.mxu0 0
        %6686 = vmatpush1.bf16.msra.mxu0 0
        %6687 = vmatprep.subr.bf16.mxu0 0
        %6688 = vmatpush1.bf16.msra.mxu0 0
        %6689 = vmatprep.subr.bf16.mxu0 0
        %6690 = vmatpush1.bf16.msra.mxu0 0
        %6691 = vmatprep.subr.bf16.mxu0 0
        %6692 = vmatpush1.bf16.msra.mxu0 0
        %6693 = vmatprep.subr.bf16.mxu0 0
        %6694 = vmatpush1.bf16.msra.mxu0 0
        %6695 = vmatprep.mubr.bf16.mxu0 0
        %6696 = vmatmul.mubr.bf16.gmra.mrb[0].mxu0 %v5661
        %v6697 = vpop.f32.mrb[0].mxu0
        %v6698 = vadd.f32 %v5816, %v6697
        %v6699 = vpop.f32.mrb[0].mxu0
        %v6700 = vadd.f32 %v5820, %v6699
        %v6701 = vpop.f32.mrb[0].mxu0
        %v6702 = vadd.f32 %v5816, %v6701
        %v6703 = vpop.f32.mrb[0].mxu0
        %v6704 = vadd.f32 %v5820, %v6703
        %6705 = vmatprep.mubr.bf16.mxu0 0
        %6706 = vmatmul.mubr.bf16.gmra.mrb[0].mxu0 %v5662
        %v6707 = vpop.f32.mrb[0].mxu0
        %v6708 = vadd.f32 %v5816, %v6707
        %v6709 = vpop.f32.mrb[0].mxu0
        %v6710 = vadd.f32 %v5820, %v6709
        %v6711 = vpop.f32.mrb[0].mxu0
        %v6712 = vadd.f32 %v5816, %v6711
        %v6713 = vpop.f32.mrb[0].mxu0
        %v6714 = vadd.f32 %v5820, %v6713
        %6715 = vmatprep.mubr.bf16.mxu0 0
        %6716 = vmatmul.mubr.bf16.gmra.mrb[0].mxu0 %v5663
        %v6717 = vpop.f32.mrb[0].mxu0
        %v6718 = vadd.f32 %v5816, %v6717
        %v6719 = vpop.f32.mrb[0].mxu0
        %v6720 = vadd.f32 %v5820, %v6719
        %v6721 = vpop.f32.mrb[0].mxu0
        %v6722 = vadd.f32 %v5816, %v6721
        %v6723 = vpop.f32.mrb[0].mxu0
        %v6724 = vadd.f32 %v5820, %v6723
        %6725 = vmatprep.mubr.bf16.mxu0 0
        %6726 = vmatmul.mubr.bf16.gmra.mrb[0].mxu0 %v5664
        %v6727 = vpop.f32.mrb[0].mxu0
        %v6728 = vadd.f32 %v5816, %v6727
        %v6729 = vpop.f32.mrb[0].mxu0
        %v6730 = vadd.f32 %v5820, %v6729
        %v6731 = vpop.f32.mrb[0].mxu0
        %v6732 = vadd.f32 %v5816, %v6731
        %v6733 = vpop.f32.mrb[0].mxu0
        %v6734 = vadd.f32 %v5820, %v6733
        %6735 = vdwg.mxu0
        %6736 = vmatprep.subr.bf16.mxu0 %v6268
        %6737 = vmatpush1.bf16.msra.mxu0 %v6267
        %6738 = vmatprep.subr.bf16.mxu0 %v6284
        %6739 = vmatpush1.bf16.msra.mxu0 %v6283
        %6740 = vmatprep.subr.bf16.mxu0 %v6300
        %6741 = vmatpush1.bf16.msra.mxu0 %v6299
        %6742 = vmatprep.subr.bf16.mxu0 %v6316
        %6743 = vmatpush1.bf16.msra.mxu0 %v6315
        %6744 = vmatprep.subr.bf16.mxu0 %v6332
        %6745 = vmatpush1.bf16.msra.mxu0 %v6331
        %6746 = vmatprep.subr.bf16.mxu0 %v6348
        %6747 = vmatpush1.bf16.msra.mxu0 %v6347
        %6748 = vmatprep.subr.bf16.mxu0 %v6364
        %6749 = vmatpush1.bf16.msra.mxu0 %v6363
        %6750 = vmatprep.subr.bf16.mxu0 %v6380
        %6751 = vmatpush1.bf16.msra.mxu0 %v6379
        %6752 = vmatprep.subr.bf16.mxu0 0
        %6753 = vmatpush1.bf16.msra.mxu0 0
        %6754 = vmatprep.subr.bf16.mxu0 0
        %6755 = vmatpush1.bf16.msra.mxu0 0
        %6756 = vmatprep.subr.bf16.mxu0 0
        %6757 = vmatpush1.bf16.msra.mxu0 0
        %6758 = vmatprep.subr.bf16.mxu0 0
        %6759 = vmatpush1.bf16.msra.mxu0 0
        %6760 = vmatprep.subr.bf16.mxu0 0
        %6761 = vmatpush1.bf16.msra.mxu0 0
        %6762 = vmatprep.subr.bf16.mxu0 0
        %6763 = vmatpush1.bf16.msra.mxu0 0
        %6764 = vmatprep.subr.bf16.mxu0 0
        %6765 = vmatpush1.bf16.msra.mxu0 0
        %6766 = vmatprep.subr.bf16.mxu0 0
        %6767 = vmatpush1.bf16.msra.mxu0 0
        %6768 = vmatprep.mubr.bf16.mxu0 0
        %6769 = vmatmul.mubr.bf16.gmra.mrb[0].mxu0 %v5661
        %v6770 = vpop.f32.mrb[0].mxu0
        %v6771 = vadd.f32 %v5824, %v6770
        %v6772 = vpop.f32.mrb[0].mxu0
        %v6773 = vadd.f32 %v5828, %v6772
        %v6774 = vpop.f32.mrb[0].mxu0
        %v6775 = vadd.f32 %v5824, %v6774
        %v6776 = vpop.f32.mrb[0].mxu0
        %v6777 = vadd.f32 %v5828, %v6776
        %6778 = vmatprep.mubr.bf16.mxu0 0
        %6779 = vmatmul.mubr.bf16.gmra.mrb[0].mxu0 %v5662
        %v6780 = vpop.f32.mrb[0].mxu0
        %v6781 = vadd.f32 %v5824, %v6780
        %v6782 = vpop.f32.mrb[0].mxu0
        %v6783 = vadd.f32 %v5828, %v6782
        %v6784 = vpop.f32.mrb[0].mxu0
        %v6785 = vadd.f32 %v5824, %v6784
        %v6786 = vpop.f32.mrb[0].mxu0
        %v6787 = vadd.f32 %v5828, %v6786
        %6788 = vmatprep.mubr.bf16.mxu0 0
        %6789 = vmatmul.mubr.bf16.gmra.mrb[0].mxu0 %v5663
        %v6790 = vpop.f32.mrb[0].mxu0
        %v6791 = vadd.f32 %v5824, %v6790
        %v6792 = vpop.f32.mrb[0].mxu0
        %v6793 = vadd.f32 %v5828, %v6792
        %v6794 = vpop.f32.mrb[0].mxu0
        %v6795 = vadd.f32 %v5824, %v6794
        %v6796 = vpop.f32.mrb[0].mxu0
        %v6797 = vadd.f32 %v5828, %v6796
        %6798 = vmatprep.mubr.bf16.mxu0 0
        %6799 = vmatmul.mubr.bf16.gmra.mrb[0].mxu0 %v5664
        %v6800 = vpop.f32.mrb[0].mxu0
        %v6801 = vadd.f32 %v5824, %v6800
        %v6802 = vpop.f32.mrb[0].mxu0
        %v6803 = vadd.f32 %v5828, %v6802
        %v6804 = vpop.f32.mrb[0].mxu0
        %v6805 = vadd.f32 %v5824, %v6804
        %v6806 = vpop.f32.mrb[0].mxu0
        %v6807 = vadd.f32 %v5828, %v6806
        %6808 = vdwg.mxu0
        %6809 = vmatprep.subr.bf16.mxu0 %v6270
        %6810 = vmatpush1.bf16.msra.mxu0 %v6269
        %6811 = vmatprep.subr.bf16.mxu0 %v6286
        %6812 = vmatpush1.bf16.msra.mxu0 %v6285
        %6813 = vmatprep.subr.bf16.mxu0 %v6302
        %6814 = vmatpush1.bf16.msra.mxu0 %v6301
        %6815 = vmatprep.subr.bf16.mxu0 %v6318
        %6816 = vmatpush1.bf16.msra.mxu0 %v6317
        %6817 = vmatprep.subr.bf16.mxu0 %v6334
        %6818 = vmatpush1.bf16.msra.mxu0 %v6333
        %6819 = vmatprep.subr.bf16.mxu0 %v6350
        %6820 = vmatpush1.bf16.msra.mxu0 %v6349
        %6821 = vmatprep.subr.bf16.mxu0 %v6366
        %6822 = vmatpush1.bf16.msra.mxu0 %v6365
        %6823 = vmatprep.subr.bf16.mxu0 %v6382
        %6824 = vmatpush1.bf16.msra.mxu0 %v6381
        %6825 = vmatprep.subr.bf16.mxu0 0
        %6826 = vmatpush1.bf16.msra.mxu0 0
        %6827 = vmatprep.subr.bf16.mxu0 0
        %6828 = vmatpush1.bf16.msra.mxu0 0
        %6829 = vmatprep.subr.bf16.mxu0 0
        %6830 = vmatpush1.bf16.msra.mxu0 0
        %6831 = vmatprep.subr.bf16.mxu0 0
        %6832 = vmatpush1.bf16.msra.mxu0 0
        %6833 = vmatprep.subr.bf16.mxu0 0
        %6834 = vmatpush1.bf16.msra.mxu0 0
        %6835 = vmatprep.subr.bf16.mxu0 0
        %6836 = vmatpush1.bf16.msra.mxu0 0
        %6837 = vmatprep.subr.bf16.mxu0 0
        %6838 = vmatpush1.bf16.msra.mxu0 0
        %6839 = vmatprep.subr.bf16.mxu0 0
        %6840 = vmatpush1.bf16.msra.mxu0 0
        %6841 = vmatprep.mubr.bf16.mxu0 0
        %6842 = vmatmul.mubr.bf16.gmra.mrb[0].mxu0 %v5661
        %v6843 = vpop.f32.mrb[0].mxu0
        %v6844 = vadd.f32 %v5832, %v6843
        %v6845 = vpop.f32.mrb[0].mxu0
        %v6846 = vadd.f32 %v5836, %v6845
        %v6847 = vpop.f32.mrb[0].mxu0
        %v6848 = vadd.f32 %v5832, %v6847
        %v6849 = vpop.f32.mrb[0].mxu0
        %v6850 = vadd.f32 %v5836, %v6849
        %6851 = vmatprep.mubr.bf16.mxu0 0
        %6852 = vmatmul.mubr.bf16.gmra.mrb[0].mxu0 %v5662
        %v6853 = vpop.f32.mrb[0].mxu0
        %v6854 = vadd.f32 %v5832, %v6853
        %v6855 = vpop.f32.mrb[0].mxu0
        %v6856 = vadd.f32 %v5836, %v6855
        %v6857 = vpop.f32.mrb[0].mxu0
        %v6858 = vadd.f32 %v5832, %v6857
        %v6859 = vpop.f32.mrb[0].mxu0
        %v6860 = vadd.f32 %v5836, %v6859
        %6861 = vmatprep.mubr.bf16.mxu0 0
        %6862 = vmatmul.mubr.bf16.gmra.mrb[0].mxu0 %v5663
        %v6863 = vpop.f32.mrb[0].mxu0
        %v6864 = vadd.f32 %v5832, %v6863
        %v6865 = vpop.f32.mrb[0].mxu0
        %v6866 = vadd.f32 %v5836, %v6865
        %v6867 = vpop.f32.mrb[0].mxu0
        %v6868 = vadd.f32 %v5832, %v6867
        %v6869 = vpop.f32.mrb[0].mxu0
        %v6870 = vadd.f32 %v5836, %v6869
        %6871 = vmatprep.mubr.bf16.mxu0 0
        %6872 = vmatmul.mubr.bf16.gmra.mrb[0].mxu0 %v5664
        %v6873 = vpop.f32.mrb[0].mxu0
        %v6874 = vadd.f32 %v5832, %v6873
        %v6875 = vpop.f32.mrb[0].mxu0
        %v6876 = vadd.f32 %v5836, %v6875
        %v6877 = vpop.f32.mrb[0].mxu0
        %v6878 = vadd.f32 %v5832, %v6877
        %v6879 = vpop.f32.mrb[0].mxu0
        %v6880 = vadd.f32 %v5836, %v6879
        %6881 = vdwg.mxu0
        %6882 = vmatprep.subr.bf16.mxu0 %v6272
        %6883 = vmatpush1.bf16.msra.mxu0 %v6271
        %6884 = vmatprep.subr.bf16.mxu0 %v6288
        %6885 = vmatpush1.bf16.msra.mxu0 %v6287
        %6886 = vmatprep.subr.bf16.mxu0 %v6304
        %6887 = vmatpush1.bf16.msra.mxu0 %v6303
        %6888 = vmatprep.subr.bf16.mxu0 %v6320
        %6889 = vmatpush1.bf16.msra.mxu0 %v6319
        %6890 = vmatprep.subr.bf16.mxu0 %v6336
        %6891 = vmatpush1.bf16.msra.mxu0 %v6335
        %6892 = vmatprep.subr.bf16.mxu0 %v6352
        %6893 = vmatpush1.bf16.msra.mxu0 %v6351
        %6894 = vmatprep.subr.bf16.mxu0 %v6368
        %6895 = vmatpush1.bf16.msra.mxu0 %v6367
        %6896 = vmatprep.subr.bf16.mxu0 %v6384
        %6897 = vmatpush1.bf16.msra.mxu0 %v6383
        %6898 = vmatprep.subr.bf16.mxu0 0
        %6899 = vmatpush1.bf16.msra.mxu0 0
        %6900 = vmatprep.subr.bf16.mxu0 0
        %6901 = vmatpush1.bf16.msra.mxu0 0
        %6902 = vmatprep.subr.bf16.mxu0 0
        %6903 = vmatpush1.bf16.msra.mxu0 0
        %6904 = vmatprep.subr.bf16.mxu0 0
        %6905 = vmatpush1.bf16.msra.mxu0 0
        %6906 = vmatprep.subr.bf16.mxu0 0
        %6907 = vmatpush1.bf16.msra.mxu0 0
        %6908 = vmatprep.subr.bf16.mxu0 0
        %6909 = vmatpush1.bf16.msra.mxu0 0
        %6910 = vmatprep.subr.bf16.mxu0 0
        %6911 = vmatpush1.bf16.msra.mxu0 0
        %6912 = vmatprep.subr.bf16.mxu0 0
        %6913 = vmatpush1.bf16.msra.mxu0 0
        %6914 = vmatprep.mubr.bf16.mxu0 0
        %6915 = vmatmul.mubr.bf16.gmra.mrb[0].mxu0 %v5661
        %v6916 = vpop.f32.mrb[0].mxu0
        %v6917 = vadd.f32 %v5840, %v6916
        %v6918 = vpop.f32.mrb[0].mxu0
        %v6919 = vadd.f32 %v5844, %v6918
        %v6920 = vpop.f32.mrb[0].mxu0
        %v6921 = vadd.f32 %v5840, %v6920
        %v6922 = vpop.f32.mrb[0].mxu0
        %v6923 = vadd.f32 %v5844, %v6922
        %6924 = vmatprep.mubr.bf16.mxu0 0
        %6925 = vmatmul.mubr.bf16.gmra.mrb[0].mxu0 %v5662
        %v6926 = vpop.f32.mrb[0].mxu0
        %v6927 = vadd.f32 %v5840, %v6926
        %v6928 = vpop.f32.mrb[0].mxu0
        %v6929 = vadd.f32 %v5844, %v6928
        %v6930 = vpop.f32.mrb[0].mxu0
        %v6931 = vadd.f32 %v5840, %v6930
        %v6932 = vpop.f32.mrb[0].mxu0
        %v6933 = vadd.f32 %v5844, %v6932
        %6934 = vmatprep.mubr.bf16.mxu0 0
        %6935 = vmatmul.mubr.bf16.gmra.mrb[0].mxu0 %v5663
        %v6936 = vpop.f32.mrb[0].mxu0
        %v6937 = vadd.f32 %v5840, %v6936
        %v6938 = vpop.f32.mrb[0].mxu0
        %v6939 = vadd.f32 %v5844, %v6938
        %v6940 = vpop.f32.mrb[0].mxu0
        %v6941 = vadd.f32 %v5840, %v6940
        %v6942 = vpop.f32.mrb[0].mxu0
        %v6943 = vadd.f32 %v5844, %v6942
        %6944 = vmatprep.mubr.bf16.mxu0 0
        %6945 = vmatmul.mubr.bf16.gmra.mrb[0].mxu0 %v5664
        %v6946 = vpop.f32.mrb[0].mxu0
        %v6947 = vadd.f32 %v5840, %v6946
        %v6948 = vpop.f32.mrb[0].mxu0
        %v6949 = vadd.f32 %v5844, %v6948
        %v6950 = vpop.f32.mrb[0].mxu0
        %v6951 = vadd.f32 %v5840, %v6950
        %v6952 = vpop.f32.mrb[0].mxu0
        %v6953 = vadd.f32 %v5844, %v6952
        %6954 = vdwg.mxu0
        %6955 = vmatprep.subr.bf16.mxu0 %v6274
        %6956 = vmatpush1.bf16.msra.mxu0 %v6273
        %6957 = vmatprep.subr.bf16.mxu0 %v6290
        %6958 = vmatpush1.bf16.msra.mxu0 %v6289
        %6959 = vmatprep.subr.bf16.mxu0 %v6306
        %6960 = vmatpush1.bf16.msra.mxu0 %v6305
        %6961 = vmatprep.subr.bf16.mxu0 %v6322
        %6962 = vmatpush1.bf16.msra.mxu0 %v6321
        %6963 = vmatprep.subr.bf16.mxu0 %v6338
        %6964 = vmatpush1.bf16.msra.mxu0 %v6337
        %6965 = vmatprep.subr.bf16.mxu0 %v6354
        %6966 = vmatpush1.bf16.msra.mxu0 %v6353
        %6967 = vmatprep.subr.bf16.mxu0 %v6370
        %6968 = vmatpush1.bf16.msra.mxu0 %v6369
        %6969 = vmatprep.subr.bf16.mxu0 %v6386
        %6970 = vmatpush1.bf16.msra.mxu0 %v6385
        %6971 = vmatprep.subr.bf16.mxu0 0
        %6972 = vmatpush1.bf16.msra.mxu0 0
        %6973 = vmatprep.subr.bf16.mxu0 0
        %6974 = vmatpush1.bf16.msra.mxu0 0
        %6975 = vmatprep.subr.bf16.mxu0 0
        %6976 = vmatpush1.bf16.msra.mxu0 0
        %6977 = vmatprep.subr.bf16.mxu0 0
        %6978 = vmatpush1.bf16.msra.mxu0 0
        %6979 = vmatprep.subr.bf16.mxu0 0
        %6980 = vmatpush1.bf16.msra.mxu0 0
        %6981 = vmatprep.subr.bf16.mxu0 0
        %6982 = vmatpush1.bf16.msra.mxu0 0
        %6983 = vmatprep.subr.bf16.mxu0 0
        %6984 = vmatpush1.bf16.msra.mxu0 0
        %6985 = vmatprep.subr.bf16.mxu0 0
        %6986 = vmatpush1.bf16.msra.mxu0 0
        %6987 = vmatprep.mubr.bf16.mxu0 0
        %6988 = vmatmul.mubr.bf16.gmra.mrb[0].mxu0 %v5661
        %v6989 = vpop.f32.mrb[0].mxu0
        %v6990 = vadd.f32 %v5848, %v6989
        %v6991 = vpop.f32.mrb[0].mxu0
        %v6992 = vadd.f32 %v5852, %v6991
        %v6993 = vpop.f32.mrb[0].mxu0
        %v6994 = vadd.f32 %v5848, %v6993
        %v6995 = vpop.f32.mrb[0].mxu0
        %v6996 = vadd.f32 %v5852, %v6995
        %6997 = vmatprep.mubr.bf16.mxu0 0
        %6998 = vmatmul.mubr.bf16.gmra.mrb[0].mxu0 %v5662
        %v6999 = vpop.f32.mrb[0].mxu0
        %v7000 = vadd.f32 %v5848, %v6999
        %v7001 = vpop.f32.mrb[0].mxu0
        %v7002 = vadd.f32 %v5852, %v7001
        %v7003 = vpop.f32.mrb[0].mxu0
        %v7004 = vadd.f32 %v5848, %v7003
        %v7005 = vpop.f32.mrb[0].mxu0
        %v7006 = vadd.f32 %v5852, %v7005
        %7007 = vmatprep.mubr.bf16.mxu0 0
        %7008 = vmatmul.mubr.bf16.gmra.mrb[0].mxu0 %v5663
        %v7009 = vpop.f32.mrb[0].mxu0
        %v7010 = vadd.f32 %v5848, %v7009
        %v7011 = vpop.f32.mrb[0].mxu0
        %v7012 = vadd.f32 %v5852, %v7011
        %v7013 = vpop.f32.mrb[0].mxu0
        %v7014 = vadd.f32 %v5848, %v7013
        %v7015 = vpop.f32.mrb[0].mxu0
        %v7016 = vadd.f32 %v5852, %v7015
        %7017 = vmatprep.mubr.bf16.mxu0 0
        %7018 = vmatmul.mubr.bf16.gmra.mrb[0].mxu0 %v5664
        %v7019 = vpop.f32.mrb[0].mxu0
        %v7020 = vadd.f32 %v5848, %v7019
        %v7021 = vpop.f32.mrb[0].mxu0
        %v7022 = vadd.f32 %v5852, %v7021
        %v7023 = vpop.f32.mrb[0].mxu0
        %v7024 = vadd.f32 %v5848, %v7023
        %v7025 = vpop.f32.mrb[0].mxu0
        %v7026 = vadd.f32 %v5852, %v7025
        %7027 = vdwg.mxu0
        %7028 = vmatprep.subr.bf16.mxu0 %v6276
        %7029 = vmatpush1.bf16.msra.mxu0 %v6275
        %7030 = vmatprep.subr.bf16.mxu0 %v6292
        %7031 = vmatpush1.bf16.msra.mxu0 %v6291
        %7032 = vmatprep.subr.bf16.mxu0 %v6308
        %7033 = vmatpush1.bf16.msra.mxu0 %v6307
        %7034 = vmatprep.subr.bf16.mxu0 %v6324
        %7035 = vmatpush1.bf16.msra.mxu0 %v6323
        %7036 = vmatprep.subr.bf16.mxu0 %v6340
        %7037 = vmatpush1.bf16.msra.mxu0 %v6339
        %7038 = vmatprep.subr.bf16.mxu0 %v6356
        %7039 = vmatpush1.bf16.msra.mxu0 %v6355
        %7040 = vmatprep.subr.bf16.mxu0 %v6372
        %7041 = vmatpush1.bf16.msra.mxu0 %v6371
        %7042 = vmatprep.subr.bf16.mxu0 %v6388
        %7043 = vmatpush1.bf16.msra.mxu0 %v6387
        %7044 = vmatprep.subr.bf16.mxu0 0
        %7045 = vmatpush1.bf16.msra.mxu0 0
        %7046 = vmatprep.subr.bf16.mxu0 0
        %7047 = vmatpush1.bf16.msra.mxu0 0
        %7048 = vmatprep.subr.bf16.mxu0 0
        %7049 = vmatpush1.bf16.msra.mxu0 0
        %7050 = vmatprep.subr.bf16.mxu0 0
        %7051 = vmatpush1.bf16.msra.mxu0 0
        %7052 = vmatprep.subr.bf16.mxu0 0
        %7053 = vmatpush1.bf16.msra.mxu0 0
        %7054 = vmatprep.subr.bf16.mxu0 0
        %7055 = vmatpush1.bf16.msra.mxu0 0
        %7056 = vmatprep.subr.bf16.mxu0 0
        %7057 = vmatpush1.bf16.msra.mxu0 0
        %7058 = vmatprep.subr.bf16.mxu0 0
        %7059 = vmatpush1.bf16.msra.mxu0 0
        %7060 = vmatprep.mubr.bf16.mxu0 0
        %7061 = vmatmul.mubr.bf16.gmra.mrb[0].mxu0 %v5661
        %v7062 = vpop.f32.mrb[0].mxu0
        %v7063 = vadd.f32 %v5856, %v7062
        %v7064 = vpop.f32.mrb[0].mxu0
        %v7065 = vadd.f32 %v5860, %v7064
        %v7066 = vpop.f32.mrb[0].mxu0
        %v7067 = vadd.f32 %v5856, %v7066
        %v7068 = vpop.f32.mrb[0].mxu0
        %v7069 = vadd.f32 %v5860, %v7068
        %7070 = vmatprep.mubr.bf16.mxu0 0
        %7071 = vmatmul.mubr.bf16.gmra.mrb[0].mxu0 %v5662
        %v7072 = vpop.f32.mrb[0].mxu0
        %v7073 = vadd.f32 %v5856, %v7072
        %v7074 = vpop.f32.mrb[0].mxu0
        %v7075 = vadd.f32 %v5860, %v7074
        %v7076 = vpop.f32.mrb[0].mxu0
        %v7077 = vadd.f32 %v5856, %v7076
        %v7078 = vpop.f32.mrb[0].mxu0
        %v7079 = vadd.f32 %v5860, %v7078
        %7080 = vmatprep.mubr.bf16.mxu0 0
        %7081 = vmatmul.mubr.bf16.gmra.mrb[0].mxu0 %v5663
        %v7082 = vpop.f32.mrb[0].mxu0
        %v7083 = vadd.f32 %v5856, %v7082
        %v7084 = vpop.f32.mrb[0].mxu0
        %v7085 = vadd.f32 %v5860, %v7084
        %v7086 = vpop.f32.mrb[0].mxu0
        %v7087 = vadd.f32 %v5856, %v7086
        %v7088 = vpop.f32.mrb[0].mxu0
        %v7089 = vadd.f32 %v5860, %v7088
        %7090 = vmatprep.mubr.bf16.mxu0 0
        %7091 = vmatmul.mubr.bf16.gmra.mrb[0].mxu0 %v5664
        %v7092 = vpop.f32.mrb[0].mxu0
        %v7093 = vadd.f32 %v5856, %v7092
        %v7094 = vpop.f32.mrb[0].mxu0
        %v7095 = vadd.f32 %v5860, %v7094
        %v7096 = vpop.f32.mrb[0].mxu0
        %v7097 = vadd.f32 %v5856, %v7096
        %v7098 = vpop.f32.mrb[0].mxu0
        %v7099 = vadd.f32 %v5860, %v7098
        %7100 = vdwg.mxu0
        %v7101 = vmax.f32 %v6552, 0.0
        %v7102 = vmax.f32 %v6554, 0.0
        %v7103 = vmax.f32 %v6625, 0.0
        %v7104 = vmax.f32 %v6627, 0.0
        %v7105 = vmax.f32 %v6698, 0.0
        %v7106 = vmax.f32 %v6700, 0.0
        %v7107 = vmax.f32 %v6771, 0.0
        %v7108 = vmax.f32 %v6773, 0.0
        %v7109 = vmax.f32 %v6844, 0.0
        %v7110 = vmax.f32 %v6846, 0.0
        %v7111 = vmax.f32 %v6917, 0.0
        %v7112 = vmax.f32 %v6919, 0.0
        %v7113 = vmax.f32 %v6990, 0.0
        %v7114 = vmax.f32 %v6992, 0.0
        %v7115 = vmax.f32 %v7063, 0.0
        %v7116 = vmax.f32 %v7065, 0.0
        %v7117 = vmax.f32 %v6556, 0.0
        %v7118 = vmax.f32 %v6558, 0.0
        %v7119 = vmax.f32 %v6629, 0.0
        %v7120 = vmax.f32 %v6631, 0.0
        %v7121 = vmax.f32 %v6702, 0.0
        %v7122 = vmax.f32 %v6704, 0.0
        %v7123 = vmax.f32 %v6775, 0.0
        %v7124 = vmax.f32 %v6777, 0.0
        %v7125 = vmax.f32 %v6848, 0.0
        %v7126 = vmax.f32 %v6850, 0.0
        %v7127 = vmax.f32 %v6921, 0.0
        %v7128 = vmax.f32 %v6923, 0.0
        %v7129 = vmax.f32 %v6994, 0.0
        %v7130 = vmax.f32 %v6996, 0.0
        %v7131 = vmax.f32 %v7067, 0.0
        %v7132 = vmax.f32 %v7069, 0.0
        %v7133 = vmax.f32 %v6562, 0.0
        %v7134 = vmax.f32 %v6564, 0.0
        %v7135 = vmax.f32 %v6635, 0.0
        %v7136 = vmax.f32 %v6637, 0.0
        %v7137 = vmax.f32 %v6708, 0.0
        %v7138 = vmax.f32 %v6710, 0.0
        %v7139 = vmax.f32 %v6781, 0.0
        %v7140 = vmax.f32 %v6783, 0.0
        %v7141 = vmax.f32 %v6854, 0.0
        %v7142 = vmax.f32 %v6856, 0.0
        %v7143 = vmax.f32 %v6927, 0.0
        %v7144 = vmax.f32 %v6929, 0.0
        %v7145 = vmax.f32 %v7000, 0.0
        %v7146 = vmax.f32 %v7002, 0.0
        %v7147 = vmax.f32 %v7073, 0.0
        %v7148 = vmax.f32 %v7075, 0.0
        %v7149 = vmax.f32 %v6566, 0.0
        %v7150 = vmax.f32 %v6568, 0.0
        %v7151 = vmax.f32 %v6639, 0.0
        %v7152 = vmax.f32 %v6641, 0.0
        %v7153 = vmax.f32 %v6712, 0.0
        %v7154 = vmax.f32 %v6714, 0.0
        %v7155 = vmax.f32 %v6785, 0.0
        %v7156 = vmax.f32 %v6787, 0.0
        %v7157 = vmax.f32 %v6858, 0.0
        %v7158 = vmax.f32 %v6860, 0.0
        %v7159 = vmax.f32 %v6931, 0.0
        %v7160 = vmax.f32 %v6933, 0.0
        %v7161 = vmax.f32 %v7004, 0.0
        %v7162 = vmax.f32 %v7006, 0.0
        %v7163 = vmax.f32 %v7077, 0.0
        %v7164 = vmax.f32 %v7079, 0.0
        %v7165 = vmax.f32 %v6572, 0.0
        %v7166 = vmax.f32 %v6574, 0.0
        %v7167 = vmax.f32 %v6645, 0.0
        %v7168 = vmax.f32 %v6647, 0.0
        %v7169 = vmax.f32 %v6718, 0.0
        %v7170 = vmax.f32 %v6720, 0.0
        %v7171 = vmax.f32 %v6791, 0.0
        %v7172 = vmax.f32 %v6793, 0.0
        %v7173 = vmax.f32 %v6864, 0.0
        %v7174 = vmax.f32 %v6866, 0.0
        %v7175 = vmax.f32 %v6937, 0.0
        %v7176 = vmax.f32 %v6939, 0.0
        %v7177 = vmax.f32 %v7010, 0.0
        %v7178 = vmax.f32 %v7012, 0.0
        %v7179 = vmax.f32 %v7083, 0.0
        %v7180 = vmax.f32 %v7085, 0.0
        %v7181 = vmax.f32 %v6576, 0.0
        %v7182 = vmax.f32 %v6578, 0.0
        %v7183 = vmax.f32 %v6649, 0.0
        %v7184 = vmax.f32 %v6651, 0.0
        %v7185 = vmax.f32 %v6722, 0.0
        %v7186 = vmax.f32 %v6724, 0.0
        %v7187 = vmax.f32 %v6795, 0.0
        %v7188 = vmax.f32 %v6797, 0.0
        %v7189 = vmax.f32 %v6868, 0.0
        %v7190 = vmax.f32 %v6870, 0.0
        %v7191 = vmax.f32 %v6941, 0.0
        %v7192 = vmax.f32 %v6943, 0.0
        %v7193 = vmax.f32 %v7014, 0.0
        %v7194 = vmax.f32 %v7016, 0.0
        %v7195 = vmax.f32 %v7087, 0.0
        %v7196 = vmax.f32 %v7089, 0.0
        %v7197 = vmax.f32 %v6582, 0.0
        %v7198 = vmax.f32 %v6584, 0.0
        %v7199 = vmax.f32 %v6655, 0.0
        %v7200 = vmax.f32 %v6657, 0.0
        %v7201 = vmax.f32 %v6728, 0.0
        %v7202 = vmax.f32 %v6730, 0.0
        %v7203 = vmax.f32 %v6801, 0.0
        %v7204 = vmax.f32 %v6803, 0.0
        %v7205 = vmax.f32 %v6874, 0.0
        %v7206 = vmax.f32 %v6876, 0.0
        %v7207 = vmax.f32 %v6947, 0.0
        %v7208 = vmax.f32 %v6949, 0.0
        %v7209 = vmax.f32 %v7020, 0.0
        %v7210 = vmax.f32 %v7022, 0.0
        %v7211 = vmax.f32 %v7093, 0.0
        %v7212 = vmax.f32 %v7095, 0.0
        %v7213 = vmax.f32 %v6586, 0.0
        %v7214 = vmax.f32 %v6588, 0.0
        %v7215 = vmax.f32 %v6659, 0.0
        %v7216 = vmax.f32 %v6661, 0.0
        %v7217 = vmax.f32 %v6732, 0.0
        %v7218 = vmax.f32 %v6734, 0.0
        %v7219 = vmax.f32 %v6805, 0.0
        %v7220 = vmax.f32 %v6807, 0.0
        %v7221 = vmax.f32 %v6878, 0.0
        %v7222 = vmax.f32 %v6880, 0.0
        %v7223 = vmax.f32 %v6951, 0.0
        %v7224 = vmax.f32 %v6953, 0.0
        %v7225 = vmax.f32 %v7024, 0.0
        %v7226 = vmax.f32 %v7026, 0.0
        %v7227 = vmax.f32 %v7097, 0.0
        %v7228 = vmax.f32 %v7099, 0.0
        %v7229 = vpack.c.bf16 %v7117, %v7101
        %v7230 = vpack.c.bf16 %v7118, %v7102
        %v7231 = vpack.c.bf16 %v7119, %v7103
        %v7232 = vpack.c.bf16 %v7120, %v7104
        %v7233 = vpack.c.bf16 %v7121, %v7105
        %v7234 = vpack.c.bf16 %v7122, %v7106
        %v7235 = vpack.c.bf16 %v7123, %v7107
        %v7236 = vpack.c.bf16 %v7124, %v7108
        %v7237 = vpack.c.bf16 %v7125, %v7109
        %v7238 = vpack.c.bf16 %v7126, %v7110
        %v7239 = vpack.c.bf16 %v7127, %v7111
        %v7240 = vpack.c.bf16 %v7128, %v7112
        %v7241 = vpack.c.bf16 %v7129, %v7113
        %v7242 = vpack.c.bf16 %v7130, %v7114
        %v7243 = vpack.c.bf16 %v7131, %v7115
        %v7244 = vpack.c.bf16 %v7132, %v7116
        %v7245 = vpack.c.bf16 %v7149, %v7133
        %v7246 = vpack.c.bf16 %v7150, %v7134
        %v7247 = vpack.c.bf16 %v7151, %v7135
        %v7248 = vpack.c.bf16 %v7152, %v7136
        %v7249 = vpack.c.bf16 %v7153, %v7137
        %v7250 = vpack.c.bf16 %v7154, %v7138
        %v7251 = vpack.c.bf16 %v7155, %v7139
        %v7252 = vpack.c.bf16 %v7156, %v7140
        %v7253 = vpack.c.bf16 %v7157, %v7141
        %v7254 = vpack.c.bf16 %v7158, %v7142
        %v7255 = vpack.c.bf16 %v7159, %v7143
        %v7256 = vpack.c.bf16 %v7160, %v7144
        %v7257 = vpack.c.bf16 %v7161, %v7145
        %v7258 = vpack.c.bf16 %v7162, %v7146
        %v7259 = vpack.c.bf16 %v7163, %v7147
        %v7260 = vpack.c.bf16 %v7164, %v7148
        %v7261 = vpack.c.bf16 %v7181, %v7165
        %v7262 = vpack.c.bf16 %v7182, %v7166
        %v7263 = vpack.c.bf16 %v7183, %v7167
        %v7264 = vpack.c.bf16 %v7184, %v7168
        %v7265 = vpack.c.bf16 %v7185, %v7169
        %v7266 = vpack.c.bf16 %v7186, %v7170
        %v7267 = vpack.c.bf16 %v7187, %v7171
        %v7268 = vpack.c.bf16 %v7188, %v7172
        %v7269 = vpack.c.bf16 %v7189, %v7173
        %v7270 = vpack.c.bf16 %v7190, %v7174
        %v7271 = vpack.c.bf16 %v7191, %v7175
        %v7272 = vpack.c.bf16 %v7192, %v7176
        %v7273 = vpack.c.bf16 %v7193, %v7177
        %v7274 = vpack.c.bf16 %v7194, %v7178
        %v7275 = vpack.c.bf16 %v7195, %v7179
        %v7276 = vpack.c.bf16 %v7196, %v7180
        %v7277 = vpack.c.bf16 %v7213, %v7197
        %v7278 = vpack.c.bf16 %v7214, %v7198
        %v7279 = vpack.c.bf16 %v7215, %v7199
        %v7280 = vpack.c.bf16 %v7216, %v7200
        %v7281 = vpack.c.bf16 %v7217, %v7201
        %v7282 = vpack.c.bf16 %v7218, %v7202
        %v7283 = vpack.c.bf16 %v7219, %v7203
        %v7284 = vpack.c.bf16 %v7220, %v7204
        %v7285 = vpack.c.bf16 %v7221, %v7205
        %v7286 = vpack.c.bf16 %v7222, %v7206
        %v7287 = vpack.c.bf16 %v7223, %v7207
        %v7288 = vpack.c.bf16 %v7224, %v7208
        %v7289 = vpack.c.bf16 %v7225, %v7209
        %v7290 = vpack.c.bf16 %v7226, %v7210
        %v7291 = vpack.c.bf16 %v7227, %v7211
        %v7292 = vpack.c.bf16 %v7228, %v7212
        %v7293 = vld [vmem:[%s1360] sm:$0xf]
        %v7294 = vld [vmem:[%s1360 + $0x4] sm:$0xf]
        %v7295 = vld [vmem:[%s1360 + $0x8] sm:$0xf]
        %v7296 = vld [vmem:[%s1360 + $0xc] sm:$0xf]
        %v7297 = vld [vmem:[%s1360 + $0x10] sm:$0xf]
        %v7298 = vld [vmem:[%s1360 + $0x14] sm:$0xf]
        %v7299 = vld [vmem:[%s1360 + $0x18] sm:$0xf]
        %v7300 = vld [vmem:[%s1360 + $0x1c] sm:$0xf]
        %v7301 = vld [vmem:[%s1360 + $0x20] sm:$0xf]
        %v7302 = vld [vmem:[%s1360 + $0x24] sm:$0xf]
        %v7303 = vld [vmem:[%s1360 + $0x28] sm:$0xf]
        %v7304 = vld [vmem:[%s1360 + $0x2c] sm:$0xf]
        %v7305 = vld [vmem:[%s1360 + $0x30] sm:$0xf]
        %v7306 = vld [vmem:[%s1360 + $0x34] sm:$0xf]
        %v7307 = vld [vmem:[%s1360 + $0x38] sm:$0xf]
        %v7308 = vld [vmem:[%s1360 + $0x3c] sm:$0xf]
        %v7309 = vld [vmem:[%s1360 + $0x40] sm:$0xf]
        %v7310 = vld [vmem:[%s1360 + $0x44] sm:$0xf]
        %v7311 = vld [vmem:[%s1360 + $0x48] sm:$0xf]
        %v7312 = vld [vmem:[%s1360 + $0x4c] sm:$0xf]
        %v7313 = vld [vmem:[%s1360 + $0x50] sm:$0xf]
        %v7314 = vld [vmem:[%s1360 + $0x54] sm:$0xf]
        %v7315 = vld [vmem:[%s1360 + $0x58] sm:$0xf]
        %v7316 = vld [vmem:[%s1360 + $0x5c] sm:$0xf]
        %v7317 = vld [vmem:[%s1360 + $0x60] sm:$0xf]
        %v7318 = vld [vmem:[%s1360 + $0x64] sm:$0xf]
        %v7319 = vld [vmem:[%s1360 + $0x68] sm:$0xf]
        %v7320 = vld [vmem:[%s1360 + $0x6c] sm:$0xf]
        %v7321 = vld [vmem:[%s1360 + $0x70] sm:$0xf]
        %v7322 = vld [vmem:[%s1360 + $0x74] sm:$0xf]
        %v7323 = vld [vmem:[%s1360 + $0x78] sm:$0xf]
        %v7324 = vld [vmem:[%s1360 + $0x7c] sm:$0xf]
        %v7325 = vld [vmem:[%s1360 + $0x80] sm:$0xf]
        %v7326 = vld [vmem:[%s1360 + $0x84] sm:$0xf]
        %v7327 = vld [vmem:[%s1360 + $0x88] sm:$0xf]
        %v7328 = vld [vmem:[%s1360 + $0x8c] sm:$0xf]
        %v7329 = vld [vmem:[%s1360 + $0x90] sm:$0xf]
        %v7330 = vld [vmem:[%s1360 + $0x94] sm:$0xf]
        %v7331 = vld [vmem:[%s1360 + $0x98] sm:$0xf]
        %v7332 = vld [vmem:[%s1360 + $0x9c] sm:$0xf]
        %v7333 = vld [vmem:[%s1360 + $0xa0] sm:$0xf]
        %v7334 = vld [vmem:[%s1360 + $0xa4] sm:$0xf]
        %v7335 = vld [vmem:[%s1360 + $0xa8] sm:$0xf]
        %v7336 = vld [vmem:[%s1360 + $0xac] sm:$0xf]
        %v7337 = vld [vmem:[%s1360 + $0xb0] sm:$0xf]
        %v7338 = vld [vmem:[%s1360 + $0xb4] sm:$0xf]
        %v7339 = vld [vmem:[%s1360 + $0xb8] sm:$0xf]
        %v7340 = vld [vmem:[%s1360 + $0xbc] sm:$0xf]
        %v7341 = vld [vmem:[%s1360 + $0xc0] sm:$0xf]
        %v7342 = vld [vmem:[%s1360 + $0xc4] sm:$0xf]
        %v7343 = vld [vmem:[%s1360 + $0xc8] sm:$0xf]
        %v7344 = vld [vmem:[%s1360 + $0xcc] sm:$0xf]
        %v7345 = vld [vmem:[%s1360 + $0xd0] sm:$0xf]
        %v7346 = vld [vmem:[%s1360 + $0xd4] sm:$0xf]
        %v7347 = vld [vmem:[%s1360 + $0xd8] sm:$0xf]
        %v7348 = vld [vmem:[%s1360 + $0xdc] sm:$0xf]
        %v7349 = vld [vmem:[%s1360 + $0xe0] sm:$0xf]
        %v7350 = vld [vmem:[%s1360 + $0xe4] sm:$0xf]
        %v7351 = vld [vmem:[%s1360 + $0xe8] sm:$0xf]
        %v7352 = vld [vmem:[%s1360 + $0xec] sm:$0xf]
        %v7353 = vld [vmem:[%s1360 + $0xf0] sm:$0xf]
        %v7354 = vld [vmem:[%s1360 + $0xf4] sm:$0xf]
        %v7355 = vld [vmem:[%s1360 + $0xf8] sm:$0xf]
        %v7356 = vld [vmem:[%s1360 + $0xfc] sm:$0xf]
        %v7357 = vld [vmem:[%s1360 + $0x100] sm:$0xf]
        %v7358 = vld [vmem:[%s1360 + $0x104] sm:$0xf]
        %v7359 = vld [vmem:[%s1360 + $0x108] sm:$0xf]
        %v7360 = vld [vmem:[%s1360 + $0x10c] sm:$0xf]
        %v7361 = vld [vmem:[%s1360 + $0x110] sm:$0xf]
        %v7362 = vld [vmem:[%s1360 + $0x114] sm:$0xf]
        %v7363 = vld [vmem:[%s1360 + $0x118] sm:$0xf]
        %v7364 = vld [vmem:[%s1360 + $0x11c] sm:$0xf]
        %v7365 = vld [vmem:[%s1360 + $0x120] sm:$0xf]
        %v7366 = vld [vmem:[%s1360 + $0x124] sm:$0xf]
        %v7367 = vld [vmem:[%s1360 + $0x128] sm:$0xf]
        %v7368 = vld [vmem:[%s1360 + $0x12c] sm:$0xf]
        %v7369 = vld [vmem:[%s1360 + $0x130] sm:$0xf]
        %v7370 = vld [vmem:[%s1360 + $0x134] sm:$0xf]
        %v7371 = vld [vmem:[%s1360 + $0x138] sm:$0xf]
        %v7372 = vld [vmem:[%s1360 + $0x13c] sm:$0xf]
        %v7373 = vld [vmem:[%s1360 + $0x140] sm:$0xf]
        %v7374 = vld [vmem:[%s1360 + $0x144] sm:$0xf]
        %v7375 = vld [vmem:[%s1360 + $0x148] sm:$0xf]
        %v7376 = vld [vmem:[%s1360 + $0x14c] sm:$0xf]
        %v7377 = vld [vmem:[%s1360 + $0x150] sm:$0xf]
        %v7378 = vld [vmem:[%s1360 + $0x154] sm:$0xf]
        %v7379 = vld [vmem:[%s1360 + $0x158] sm:$0xf]
        %v7380 = vld [vmem:[%s1360 + $0x15c] sm:$0xf]
        %v7381 = vld [vmem:[%s1360 + $0x160] sm:$0xf]
        %v7382 = vld [vmem:[%s1360 + $0x164] sm:$0xf]
        %v7383 = vld [vmem:[%s1360 + $0x168] sm:$0xf]
        %v7384 = vld [vmem:[%s1360 + $0x16c] sm:$0xf]
        %v7385 = vld [vmem:[%s1360 + $0x170] sm:$0xf]
        %v7386 = vld [vmem:[%s1360 + $0x174] sm:$0xf]
        %v7387 = vld [vmem:[%s1360 + $0x178] sm:$0xf]
        %v7388 = vld [vmem:[%s1360 + $0x17c] sm:$0xf]
        %v7389 = vld [vmem:[%s1360 + $0x180] sm:$0xf]
        %v7390 = vld [vmem:[%s1360 + $0x184] sm:$0xf]
        %v7391 = vld [vmem:[%s1360 + $0x188] sm:$0xf]
        %v7392 = vld [vmem:[%s1360 + $0x18c] sm:$0xf]
        %v7393 = vld [vmem:[%s1360 + $0x190] sm:$0xf]
        %v7394 = vld [vmem:[%s1360 + $0x194] sm:$0xf]
        %v7395 = vld [vmem:[%s1360 + $0x198] sm:$0xf]
        %v7396 = vld [vmem:[%s1360 + $0x19c] sm:$0xf]
        %v7397 = vld [vmem:[%s1360 + $0x1a0] sm:$0xf]
        %v7398 = vld [vmem:[%s1360 + $0x1a4] sm:$0xf]
        %v7399 = vld [vmem:[%s1360 + $0x1a8] sm:$0xf]
        %v7400 = vld [vmem:[%s1360 + $0x1ac] sm:$0xf]
        %v7401 = vld [vmem:[%s1360 + $0x1b0] sm:$0xf]
        %v7402 = vld [vmem:[%s1360 + $0x1b4] sm:$0xf]
        %v7403 = vld [vmem:[%s1360 + $0x1b8] sm:$0xf]
        %v7404 = vld [vmem:[%s1360 + $0x1bc] sm:$0xf]
        %v7405 = vld [vmem:[%s1360 + $0x1c0] sm:$0xf]
        %v7406 = vld [vmem:[%s1360 + $0x1c4] sm:$0xf]
        %v7407 = vld [vmem:[%s1360 + $0x1c8] sm:$0xf]
        %v7408 = vld [vmem:[%s1360 + $0x1cc] sm:$0xf]
        %v7409 = vld [vmem:[%s1360 + $0x1d0] sm:$0xf]
        %v7410 = vld [vmem:[%s1360 + $0x1d4] sm:$0xf]
        %v7411 = vld [vmem:[%s1360 + $0x1d8] sm:$0xf]
        %v7412 = vld [vmem:[%s1360 + $0x1dc] sm:$0xf]
        %v7413 = vld [vmem:[%s1360 + $0x1e0] sm:$0xf]
        %v7414 = vld [vmem:[%s1360 + $0x1e4] sm:$0xf]
        %v7415 = vld [vmem:[%s1360 + $0x1e8] sm:$0xf]
        %v7416 = vld [vmem:[%s1360 + $0x1ec] sm:$0xf]
        %v7417 = vld [vmem:[%s1360 + $0x1f0] sm:$0xf]
        %v7418 = vld [vmem:[%s1360 + $0x1f4] sm:$0xf]
        %v7419 = vld [vmem:[%s1360 + $0x1f8] sm:$0xf]
        %v7420 = vld [vmem:[%s1360 + $0x1fc] sm:$0xf]
        %v7421 = vld [vmem:[%s1360 + $0x200] sm:$0xf]
        %v7422 = vld [vmem:[%s1360 + $0x204] sm:$0xf]
        %v7423 = vld [vmem:[%s1360 + $0x208] sm:$0xf]
        %v7424 = vld [vmem:[%s1360 + $0x20c] sm:$0xf]
        %v7425 = vld [vmem:[%s1360 + $0x210] sm:$0xf]
        %v7426 = vld [vmem:[%s1360 + $0x214] sm:$0xf]
        %v7427 = vld [vmem:[%s1360 + $0x218] sm:$0xf]
        %v7428 = vld [vmem:[%s1360 + $0x21c] sm:$0xf]
        %v7429 = vld [vmem:[%s1360 + $0x220] sm:$0xf]
        %v7430 = vld [vmem:[%s1360 + $0x224] sm:$0xf]
        %v7431 = vld [vmem:[%s1360 + $0x228] sm:$0xf]
        %v7432 = vld [vmem:[%s1360 + $0x22c] sm:$0xf]
        %v7433 = vld [vmem:[%s1360 + $0x230] sm:$0xf]
        %v7434 = vld [vmem:[%s1360 + $0x234] sm:$0xf]
        %v7435 = vld [vmem:[%s1360 + $0x238] sm:$0xf]
        %v7436 = vld [vmem:[%s1360 + $0x23c] sm:$0xf]
        %v7437 = vld [vmem:[%s1360 + $0x240] sm:$0xf]
        %v7438 = vld [vmem:[%s1360 + $0x244] sm:$0xf]
        %v7439 = vld [vmem:[%s1360 + $0x248] sm:$0xf]
        %v7440 = vld [vmem:[%s1360 + $0x24c] sm:$0xf]
        %v7441 = vld [vmem:[%s1360 + $0x250] sm:$0xf]
        %v7442 = vld [vmem:[%s1360 + $0x254] sm:$0xf]
        %v7443 = vld [vmem:[%s1360 + $0x258] sm:$0xf]
        %v7444 = vld [vmem:[%s1360 + $0x25c] sm:$0xf]
        %v7445 = vld [vmem:[%s1360 + $0x260] sm:$0xf]
        %v7446 = vld [vmem:[%s1360 + $0x264] sm:$0xf]
        %v7447 = vld [vmem:[%s1360 + $0x268] sm:$0xf]
        %v7448 = vld [vmem:[%s1360 + $0x26c] sm:$0xf]
        %v7449 = vld [vmem:[%s1360 + $0x270] sm:$0xf]
        %v7450 = vld [vmem:[%s1360 + $0x274] sm:$0xf]
        %v7451 = vld [vmem:[%s1360 + $0x278] sm:$0xf]
        %v7452 = vld [vmem:[%s1360 + $0x27c] sm:$0xf]
        %v7453 = vld [vmem:[%s1360 + $0x280] sm:$0xf]
        %v7454 = vld [vmem:[%s1360 + $0x284] sm:$0xf]
        %v7455 = vld [vmem:[%s1360 + $0x288] sm:$0xf]
        %v7456 = vld [vmem:[%s1360 + $0x28c] sm:$0xf]
        %v7457 = vld [vmem:[%s1360 + $0x290] sm:$0xf]
        %v7458 = vld [vmem:[%s1360 + $0x294] sm:$0xf]
        %v7459 = vld [vmem:[%s1360 + $0x298] sm:$0xf]
        %v7460 = vld [vmem:[%s1360 + $0x29c] sm:$0xf]
        %v7461 = vld [vmem:[%s1360 + $0x2a0] sm:$0xf]
        %v7462 = vld [vmem:[%s1360 + $0x2a4] sm:$0xf]
        %v7463 = vld [vmem:[%s1360 + $0x2a8] sm:$0xf]
        %v7464 = vld [vmem:[%s1360 + $0x2ac] sm:$0xf]
        %v7465 = vld [vmem:[%s1360 + $0x2b0] sm:$0xf]
        %v7466 = vld [vmem:[%s1360 + $0x2b4] sm:$0xf]
        %v7467 = vld [vmem:[%s1360 + $0x2b8] sm:$0xf]
        %v7468 = vld [vmem:[%s1360 + $0x2bc] sm:$0xf]
        %v7469 = vld [vmem:[%s1360 + $0x2c0] sm:$0xf]
        %v7470 = vld [vmem:[%s1360 + $0x2c4] sm:$0xf]
        %v7471 = vld [vmem:[%s1360 + $0x2c8] sm:$0xf]
        %v7472 = vld [vmem:[%s1360 + $0x2cc] sm:$0xf]
        %v7473 = vld [vmem:[%s1360 + $0x2d0] sm:$0xf]
        %v7474 = vld [vmem:[%s1360 + $0x2d4] sm:$0xf]
        %v7475 = vld [vmem:[%s1360 + $0x2d8] sm:$0xf]
        %v7476 = vld [vmem:[%s1360 + $0x2dc] sm:$0xf]
        %v7477 = vld [vmem:[%s1360 + $0x2e0] sm:$0xf]
        %v7478 = vld [vmem:[%s1360 + $0x2e4] sm:$0xf]
        %v7479 = vld [vmem:[%s1360 + $0x2e8] sm:$0xf]
        %v7480 = vld [vmem:[%s1360 + $0x2ec] sm:$0xf]
        %v7481 = vld [vmem:[%s1360 + $0x2f0] sm:$0xf]
        %v7482 = vld [vmem:[%s1360 + $0x2f4] sm:$0xf]
        %v7483 = vld [vmem:[%s1360 + $0x2f8] sm:$0xf]
        %v7484 = vld [vmem:[%s1360 + $0x2fc] sm:$0xf]
        %v7485 = vld [vmem:[%s1360 + $0x300] sm:$0xf]
        %v7486 = vld [vmem:[%s1360 + $0x304] sm:$0xf]
        %v7487 = vld [vmem:[%s1360 + $0x308] sm:$0xf]
        %v7488 = vld [vmem:[%s1360 + $0x30c] sm:$0xf]
        %v7489 = vld [vmem:[%s1360 + $0x310] sm:$0xf]
        %v7490 = vld [vmem:[%s1360 + $0x314] sm:$0xf]
        %v7491 = vld [vmem:[%s1360 + $0x318] sm:$0xf]
        %v7492 = vld [vmem:[%s1360 + $0x31c] sm:$0xf]
        %v7493 = vld [vmem:[%s1360 + $0x320] sm:$0xf]
        %v7494 = vld [vmem:[%s1360 + $0x324] sm:$0xf]
        %v7495 = vld [vmem:[%s1360 + $0x328] sm:$0xf]
        %v7496 = vld [vmem:[%s1360 + $0x32c] sm:$0xf]
        %v7497 = vld [vmem:[%s1360 + $0x330] sm:$0xf]
        %v7498 = vld [vmem:[%s1360 + $0x334] sm:$0xf]
        %v7499 = vld [vmem:[%s1360 + $0x338] sm:$0xf]
        %v7500 = vld [vmem:[%s1360 + $0x33c] sm:$0xf]
        %v7501 = vld [vmem:[%s1360 + $0x340] sm:$0xf]
        %v7502 = vld [vmem:[%s1360 + $0x344] sm:$0xf]
        %v7503 = vld [vmem:[%s1360 + $0x348] sm:$0xf]
        %v7504 = vld [vmem:[%s1360 + $0x34c] sm:$0xf]
        %v7505 = vld [vmem:[%s1360 + $0x350] sm:$0xf]
        %v7506 = vld [vmem:[%s1360 + $0x354] sm:$0xf]
        %v7507 = vld [vmem:[%s1360 + $0x358] sm:$0xf]
        %v7508 = vld [vmem:[%s1360 + $0x35c] sm:$0xf]
        %v7509 = vld [vmem:[%s1360 + $0x360] sm:$0xf]
        %v7510 = vld [vmem:[%s1360 + $0x364] sm:$0xf]
        %v7511 = vld [vmem:[%s1360 + $0x368] sm:$0xf]
        %v7512 = vld [vmem:[%s1360 + $0x36c] sm:$0xf]
        %v7513 = vld [vmem:[%s1360 + $0x370] sm:$0xf]
        %v7514 = vld [vmem:[%s1360 + $0x374] sm:$0xf]
        %v7515 = vld [vmem:[%s1360 + $0x378] sm:$0xf]
        %v7516 = vld [vmem:[%s1360 + $0x37c] sm:$0xf]
        %v7517 = vld [vmem:[%s1360 + $0x380] sm:$0xf]
        %v7518 = vld [vmem:[%s1360 + $0x384] sm:$0xf]
        %v7519 = vld [vmem:[%s1360 + $0x388] sm:$0xf]
        %v7520 = vld [vmem:[%s1360 + $0x38c] sm:$0xf]
        %v7521 = vld [vmem:[%s1360 + $0x390] sm:$0xf]
        %v7522 = vld [vmem:[%s1360 + $0x394] sm:$0xf]
        %v7523 = vld [vmem:[%s1360 + $0x398] sm:$0xf]
        %v7524 = vld [vmem:[%s1360 + $0x39c] sm:$0xf]
        %v7525 = vld [vmem:[%s1360 + $0x3a0] sm:$0xf]
        %v7526 = vld [vmem:[%s1360 + $0x3a4] sm:$0xf]
        %v7527 = vld [vmem:[%s1360 + $0x3a8] sm:$0xf]
        %v7528 = vld [vmem:[%s1360 + $0x3ac] sm:$0xf]
        %v7529 = vld [vmem:[%s1360 + $0x3b0] sm:$0xf]
        %v7530 = vld [vmem:[%s1360 + $0x3b4] sm:$0xf]
        %v7531 = vld [vmem:[%s1360 + $0x3b8] sm:$0xf]
        %v7532 = vld [vmem:[%s1360 + $0x3bc] sm:$0xf]
        %v7533 = vld [vmem:[%s1360 + $0x3c0] sm:$0xf]
        %v7534 = vld [vmem:[%s1360 + $0x3c4] sm:$0xf]
        %v7535 = vld [vmem:[%s1360 + $0x3c8] sm:$0xf]
        %v7536 = vld [vmem:[%s1360 + $0x3cc] sm:$0xf]
        %v7537 = vld [vmem:[%s1360 + $0x3d0] sm:$0xf]
        %v7538 = vld [vmem:[%s1360 + $0x3d4] sm:$0xf]
        %v7539 = vld [vmem:[%s1360 + $0x3d8] sm:$0xf]
        %v7540 = vld [vmem:[%s1360 + $0x3dc] sm:$0xf]
        %v7541 = vld [vmem:[%s1360 + $0x3e0] sm:$0xf]
        %v7542 = vld [vmem:[%s1360 + $0x3e4] sm:$0xf]
        %v7543 = vld [vmem:[%s1360 + $0x3e8] sm:$0xf]
        %v7544 = vld [vmem:[%s1360 + $0x3ec] sm:$0xf]
        %v7545 = vld [vmem:[%s1360 + $0x3f0] sm:$0xf]
        %v7546 = vld [vmem:[%s1360 + $0x3f4] sm:$0xf]
        %v7547 = vld [vmem:[%s1360 + $0x3f8] sm:$0xf]
        %v7548 = vld [vmem:[%s1360 + $0x3fc] sm:$0xf]
        %v7549 = vld [vmem:[%s1368] sm:$0x1]
        %v7551 = vlaneseq
        %v7552 = vshrl.u32 %v7551, 7
        %v7553 = vsub.s32 0, %v7552
        %v7554 = vrot.slane %v7549, %v7553
        %v7812 = vunpack.c.l.b16 %v7293
        %v7813 = vunpack.c.l.b16 %v7294
        %v7814 = vunpack.c.l.b16 %v7295
        %v7815 = vunpack.c.l.b16 %v7296
        %v7816 = vunpack.c.l.b16 %v7297
        %v7817 = vunpack.c.l.b16 %v7298
        %v7818 = vunpack.c.l.b16 %v7299
        %v7819 = vunpack.c.l.b16 %v7300
        %v7820 = vunpack.c.l.b16 %v7301
        %v7821 = vunpack.c.l.b16 %v7302
        %v7822 = vunpack.c.l.b16 %v7303
        %v7823 = vunpack.c.l.b16 %v7304
        %v7824 = vunpack.c.l.b16 %v7305
        %v7825 = vunpack.c.l.b16 %v7306
        %v7826 = vunpack.c.l.b16 %v7307
        %v7827 = vunpack.c.l.b16 %v7308
        %v7828 = vunpack.c.l.b16 %v7309
        %v7829 = vunpack.c.l.b16 %v7310
        %v7830 = vunpack.c.l.b16 %v7311
        %v7831 = vunpack.c.l.b16 %v7312
        %v7832 = vunpack.c.l.b16 %v7313
        %v7833 = vunpack.c.l.b16 %v7314
        %v7834 = vunpack.c.l.b16 %v7315
        %v7835 = vunpack.c.l.b16 %v7316
        %v7836 = vunpack.c.l.b16 %v7317
        %v7837 = vunpack.c.l.b16 %v7318
        %v7838 = vunpack.c.l.b16 %v7319
        %v7839 = vunpack.c.l.b16 %v7320
        %v7840 = vunpack.c.l.b16 %v7321
        %v7841 = vunpack.c.l.b16 %v7322
        %v7842 = vunpack.c.l.b16 %v7323
        %v7843 = vunpack.c.l.b16 %v7324
        %v7844 = vunpack.c.l.b16 %v7325
        %v7845 = vunpack.c.l.b16 %v7326
        %v7846 = vunpack.c.l.b16 %v7327
        %v7847 = vunpack.c.l.b16 %v7328
        %v7848 = vunpack.c.l.b16 %v7329
        %v7849 = vunpack.c.l.b16 %v7330
        %v7850 = vunpack.c.l.b16 %v7331
        %v7851 = vunpack.c.l.b16 %v7332
        %v7852 = vunpack.c.l.b16 %v7333
        %v7853 = vunpack.c.l.b16 %v7334
        %v7854 = vunpack.c.l.b16 %v7335
        %v7855 = vunpack.c.l.b16 %v7336
        %v7856 = vunpack.c.l.b16 %v7337
        %v7857 = vunpack.c.l.b16 %v7338
        %v7858 = vunpack.c.l.b16 %v7339
        %v7859 = vunpack.c.l.b16 %v7340
        %v7860 = vunpack.c.l.b16 %v7341
        %v7861 = vunpack.c.l.b16 %v7342
        %v7862 = vunpack.c.l.b16 %v7343
        %v7863 = vunpack.c.l.b16 %v7344
        %v7864 = vunpack.c.l.b16 %v7345
        %v7865 = vunpack.c.l.b16 %v7346
        %v7866 = vunpack.c.l.b16 %v7347
        %v7867 = vunpack.c.l.b16 %v7348
        %v7868 = vunpack.c.l.b16 %v7349
        %v7869 = vunpack.c.l.b16 %v7350
        %v7870 = vunpack.c.l.b16 %v7351
        %v7871 = vunpack.c.l.b16 %v7352
        %v7872 = vunpack.c.l.b16 %v7353
        %v7873 = vunpack.c.l.b16 %v7354
        %v7874 = vunpack.c.l.b16 %v7355
        %v7875 = vunpack.c.l.b16 %v7356
        %v7876 = vunpack.c.l.b16 %v7357
        %v7877 = vunpack.c.l.b16 %v7358
        %v7878 = vunpack.c.l.b16 %v7359
        %v7879 = vunpack.c.l.b16 %v7360
        %v7880 = vunpack.c.l.b16 %v7361
        %v7881 = vunpack.c.l.b16 %v7362
        %v7882 = vunpack.c.l.b16 %v7363
        %v7883 = vunpack.c.l.b16 %v7364
        %v7884 = vunpack.c.l.b16 %v7365
        %v7885 = vunpack.c.l.b16 %v7366
        %v7886 = vunpack.c.l.b16 %v7367
        %v7887 = vunpack.c.l.b16 %v7368
        %v7888 = vunpack.c.l.b16 %v7369
        %v7889 = vunpack.c.l.b16 %v7370
        %v7890 = vunpack.c.l.b16 %v7371
        %v7891 = vunpack.c.l.b16 %v7372
        %v7892 = vunpack.c.l.b16 %v7373
        %v7893 = vunpack.c.l.b16 %v7374
        %v7894 = vunpack.c.l.b16 %v7375
        %v7895 = vunpack.c.l.b16 %v7376
        %v7896 = vunpack.c.l.b16 %v7377
        %v7897 = vunpack.c.l.b16 %v7378
        %v7898 = vunpack.c.l.b16 %v7379
        %v7899 = vunpack.c.l.b16 %v7380
        %v7900 = vunpack.c.l.b16 %v7381
        %v7901 = vunpack.c.l.b16 %v7382
        %v7902 = vunpack.c.l.b16 %v7383
        %v7903 = vunpack.c.l.b16 %v7384
        %v7904 = vunpack.c.l.b16 %v7385
        %v7905 = vunpack.c.l.b16 %v7386
        %v7906 = vunpack.c.l.b16 %v7387
        %v7907 = vunpack.c.l.b16 %v7388
        %v7908 = vunpack.c.l.b16 %v7389
        %v7909 = vunpack.c.l.b16 %v7390
        %v7910 = vunpack.c.l.b16 %v7391
        %v7911 = vunpack.c.l.b16 %v7392
        %v7912 = vunpack.c.l.b16 %v7393
        %v7913 = vunpack.c.l.b16 %v7394
        %v7914 = vunpack.c.l.b16 %v7395
        %v7915 = vunpack.c.l.b16 %v7396
        %v7916 = vunpack.c.l.b16 %v7397
        %v7917 = vunpack.c.l.b16 %v7398
        %v7918 = vunpack.c.l.b16 %v7399
        %v7919 = vunpack.c.l.b16 %v7400
        %v7920 = vunpack.c.l.b16 %v7401
        %v7921 = vunpack.c.l.b16 %v7402
        %v7922 = vunpack.c.l.b16 %v7403
        %v7923 = vunpack.c.l.b16 %v7404
        %v7924 = vunpack.c.l.b16 %v7405
        %v7925 = vunpack.c.l.b16 %v7406
        %v7926 = vunpack.c.l.b16 %v7407
        %v7927 = vunpack.c.l.b16 %v7408
        %v7928 = vunpack.c.l.b16 %v7409
        %v7929 = vunpack.c.l.b16 %v7410
        %v7930 = vunpack.c.l.b16 %v7411
        %v7931 = vunpack.c.l.b16 %v7412
        %v7932 = vunpack.c.l.b16 %v7413
        %v7933 = vunpack.c.l.b16 %v7414
        %v7934 = vunpack.c.l.b16 %v7415
        %v7935 = vunpack.c.l.b16 %v7416
        %v7936 = vunpack.c.l.b16 %v7417
        %v7937 = vunpack.c.l.b16 %v7418
        %v7938 = vunpack.c.l.b16 %v7419
        %v7939 = vunpack.c.l.b16 %v7420
        %v7940 = vunpack.c.l.b16 %v7421
        %v7941 = vunpack.c.l.b16 %v7422
        %v7942 = vunpack.c.l.b16 %v7423
        %v7943 = vunpack.c.l.b16 %v7424
        %v7944 = vunpack.c.l.b16 %v7425
        %v7945 = vunpack.c.l.b16 %v7426
        %v7946 = vunpack.c.l.b16 %v7427
        %v7947 = vunpack.c.l.b16 %v7428
        %v7948 = vunpack.c.l.b16 %v7429
        %v7949 = vunpack.c.l.b16 %v7430
        %v7950 = vunpack.c.l.b16 %v7431
        %v7951 = vunpack.c.l.b16 %v7432
        %v7952 = vunpack.c.l.b16 %v7433
        %v7953 = vunpack.c.l.b16 %v7434
        %v7954 = vunpack.c.l.b16 %v7435
        %v7955 = vunpack.c.l.b16 %v7436
        %v7956 = vunpack.c.l.b16 %v7437
        %v7957 = vunpack.c.l.b16 %v7438
        %v7958 = vunpack.c.l.b16 %v7439
        %v7959 = vunpack.c.l.b16 %v7440
        %v7960 = vunpack.c.l.b16 %v7441
        %v7961 = vunpack.c.l.b16 %v7442
        %v7962 = vunpack.c.l.b16 %v7443
        %v7963 = vunpack.c.l.b16 %v7444
        %v7964 = vunpack.c.l.b16 %v7445
        %v7965 = vunpack.c.l.b16 %v7446
        %v7966 = vunpack.c.l.b16 %v7447
        %v7967 = vunpack.c.l.b16 %v7448
        %v7968 = vunpack.c.l.b16 %v7449
        %v7969 = vunpack.c.l.b16 %v7450
        %v7970 = vunpack.c.l.b16 %v7451
        %v7971 = vunpack.c.l.b16 %v7452
        %v7972 = vunpack.c.l.b16 %v7453
        %v7973 = vunpack.c.l.b16 %v7454
        %v7974 = vunpack.c.l.b16 %v7455
        %v7975 = vunpack.c.l.b16 %v7456
        %v7976 = vunpack.c.l.b16 %v7457
        %v7977 = vunpack.c.l.b16 %v7458
        %v7978 = vunpack.c.l.b16 %v7459
        %v7979 = vunpack.c.l.b16 %v7460
        %v7980 = vunpack.c.l.b16 %v7461
        %v7981 = vunpack.c.l.b16 %v7462
        %v7982 = vunpack.c.l.b16 %v7463
        %v7983 = vunpack.c.l.b16 %v7464
        %v7984 = vunpack.c.l.b16 %v7465
        %v7985 = vunpack.c.l.b16 %v7466
        %v7986 = vunpack.c.l.b16 %v7467
        %v7987 = vunpack.c.l.b16 %v7468
        %v7988 = vunpack.c.l.b16 %v7469
        %v7989 = vunpack.c.l.b16 %v7470
        %v7990 = vunpack.c.l.b16 %v7471
        %v7991 = vunpack.c.l.b16 %v7472
        %v7992 = vunpack.c.l.b16 %v7473
        %v7993 = vunpack.c.l.b16 %v7474
        %v7994 = vunpack.c.l.b16 %v7475
        %v7995 = vunpack.c.l.b16 %v7476
        %v7996 = vunpack.c.l.b16 %v7477
        %v7997 = vunpack.c.l.b16 %v7478
        %v7998 = vunpack.c.l.b16 %v7479
        %v7999 = vunpack.c.l.b16 %v7480
        %v8000 = vunpack.c.l.b16 %v7481
        %v8001 = vunpack.c.l.b16 %v7482
        %v8002 = vunpack.c.l.b16 %v7483
        %v8003 = vunpack.c.l.b16 %v7484
        %v8004 = vunpack.c.l.b16 %v7485
        %v8005 = vunpack.c.l.b16 %v7486
        %v8006 = vunpack.c.l.b16 %v7487
        %v8007 = vunpack.c.l.b16 %v7488
        %v8008 = vunpack.c.l.b16 %v7489
        %v8009 = vunpack.c.l.b16 %v7490
        %v8010 = vunpack.c.l.b16 %v7491
        %v8011 = vunpack.c.l.b16 %v7492
        %v8012 = vunpack.c.l.b16 %v7493
        %v8013 = vunpack.c.l.b16 %v7494
        %v8014 = vunpack.c.l.b16 %v7495
        %v8015 = vunpack.c.l.b16 %v7496
        %v8016 = vunpack.c.l.b16 %v7497
        %v8017 = vunpack.c.l.b16 %v7498
        %v8018 = vunpack.c.l.b16 %v7499
        %v8019 = vunpack.c.l.b16 %v7500
        %v8020 = vunpack.c.l.b16 %v7501
        %v8021 = vunpack.c.l.b16 %v7502
        %v8022 = vunpack.c.l.b16 %v7503
        %v8023 = vunpack.c.l.b16 %v7504
        %v8024 = vunpack.c.l.b16 %v7505
        %v8025 = vunpack.c.l.b16 %v7506
        %v8026 = vunpack.c.l.b16 %v7507
        %v8027 = vunpack.c.l.b16 %v7508
        %v8028 = vunpack.c.l.b16 %v7509
        %v8029 = vunpack.c.l.b16 %v7510
        %v8030 = vunpack.c.l.b16 %v7511
        %v8031 = vunpack.c.l.b16 %v7512
        %v8032 = vunpack.c.l.b16 %v7513
        %v8033 = vunpack.c.l.b16 %v7514
        %v8034 = vunpack.c.l.b16 %v7515
        %v8035 = vunpack.c.l.b16 %v7516
        %v8036 = vunpack.c.l.b16 %v7517
        %v8037 = vunpack.c.l.b16 %v7518
        %v8038 = vunpack.c.l.b16 %v7519
        %v8039 = vunpack.c.l.b16 %v7520
        %v8040 = vunpack.c.l.b16 %v7521
        %v8041 = vunpack.c.l.b16 %v7522
        %v8042 = vunpack.c.l.b16 %v7523
        %v8043 = vunpack.c.l.b16 %v7524
        %v8044 = vunpack.c.l.b16 %v7525
        %v8045 = vunpack.c.l.b16 %v7526
        %v8046 = vunpack.c.l.b16 %v7527
        %v8047 = vunpack.c.l.b16 %v7528
        %v8048 = vunpack.c.l.b16 %v7529
        %v8049 = vunpack.c.l.b16 %v7530
        %v8050 = vunpack.c.l.b16 %v7531
        %v8051 = vunpack.c.l.b16 %v7532
        %v8052 = vunpack.c.l.b16 %v7533
        %v8053 = vunpack.c.l.b16 %v7534
        %v8054 = vunpack.c.l.b16 %v7535
        %v8055 = vunpack.c.l.b16 %v7536
        %v8056 = vunpack.c.l.b16 %v7537
        %v8057 = vunpack.c.l.b16 %v7538
        %v8058 = vunpack.c.l.b16 %v7539
        %v8059 = vunpack.c.l.b16 %v7540
        %v8060 = vunpack.c.l.b16 %v7541
        %v8061 = vunpack.c.l.b16 %v7542
        %v8062 = vunpack.c.l.b16 %v7543
        %v8063 = vunpack.c.l.b16 %v7544
        %v8064 = vunpack.c.l.b16 %v7545
        %v8065 = vunpack.c.l.b16 %v7546
        %v8066 = vunpack.c.l.b16 %v7547
        %v8067 = vunpack.c.l.b16 %v7548
        %v8068 = vpack.c.b16 %v7813, %v7812
        %v8069 = vpack.c.b16 %v7815, %v7814
        %v8070 = vpack.c.b16 %v7817, %v7816
        %v8071 = vpack.c.b16 %v7819, %v7818
        %v8072 = vpack.c.b16 %v7821, %v7820
        %v8073 = vpack.c.b16 %v7823, %v7822
        %v8074 = vpack.c.b16 %v7825, %v7824
        %v8075 = vpack.c.b16 %v7827, %v7826
        %v8076 = vpack.c.b16 %v7829, %v7828
        %v8077 = vpack.c.b16 %v7831, %v7830
        %v8078 = vpack.c.b16 %v7833, %v7832
        %v8079 = vpack.c.b16 %v7835, %v7834
        %v8080 = vpack.c.b16 %v7837, %v7836
        %v8081 = vpack.c.b16 %v7839, %v7838
        %v8082 = vpack.c.b16 %v7841, %v7840
        %v8083 = vpack.c.b16 %v7843, %v7842
        %v8084 = vpack.c.b16 %v7845, %v7844
        %v8085 = vpack.c.b16 %v7847, %v7846
        %v8086 = vpack.c.b16 %v7849, %v7848
        %v8087 = vpack.c.b16 %v7851, %v7850
        %v8088 = vpack.c.b16 %v7853, %v7852
        %v8089 = vpack.c.b16 %v7855, %v7854
        %v8090 = vpack.c.b16 %v7857, %v7856
        %v8091 = vpack.c.b16 %v7859, %v7858
        %v8092 = vpack.c.b16 %v7861, %v7860
        %v8093 = vpack.c.b16 %v7863, %v7862
        %v8094 = vpack.c.b16 %v7865, %v7864
        %v8095 = vpack.c.b16 %v7867, %v7866
        %v8096 = vpack.c.b16 %v7869, %v7868
        %v8097 = vpack.c.b16 %v7871, %v7870
        %v8098 = vpack.c.b16 %v7873, %v7872
        %v8099 = vpack.c.b16 %v7875, %v7874
        %v8100 = vpack.c.b16 %v7877, %v7876
        %v8101 = vpack.c.b16 %v7879, %v7878
        %v8102 = vpack.c.b16 %v7881, %v7880
        %v8103 = vpack.c.b16 %v7883, %v7882
        %v8104 = vpack.c.b16 %v7885, %v7884
        %v8105 = vpack.c.b16 %v7887, %v7886
        %v8106 = vpack.c.b16 %v7889, %v7888
        %v8107 = vpack.c.b16 %v7891, %v7890
        %v8108 = vpack.c.b16 %v7893, %v7892
        %v8109 = vpack.c.b16 %v7895, %v7894
        %v8110 = vpack.c.b16 %v7897, %v7896
        %v8111 = vpack.c.b16 %v7899, %v7898
        %v8112 = vpack.c.b16 %v7901, %v7900
        %v8113 = vpack.c.b16 %v7903, %v7902
        %v8114 = vpack.c.b16 %v7905, %v7904
        %v8115 = vpack.c.b16 %v7907, %v7906
        %v8116 = vpack.c.b16 %v7909, %v7908
        %v8117 = vpack.c.b16 %v7911, %v7910
        %v8118 = vpack.c.b16 %v7913, %v7912
        %v8119 = vpack.c.b16 %v7915, %v7914
        %v8120 = vpack.c.b16 %v7917, %v7916
        %v8121 = vpack.c.b16 %v7919, %v7918
        %v8122 = vpack.c.b16 %v7921, %v7920
        %v8123 = vpack.c.b16 %v7923, %v7922
        %v8124 = vpack.c.b16 %v7925, %v7924
        %v8125 = vpack.c.b16 %v7927, %v7926
        %v8126 = vpack.c.b16 %v7929, %v7928
        %v8127 = vpack.c.b16 %v7931, %v7930
        %v8128 = vpack.c.b16 %v7933, %v7932
        %v8129 = vpack.c.b16 %v7935, %v7934
        %v8130 = vpack.c.b16 %v7937, %v7936
        %v8131 = vpack.c.b16 %v7939, %v7938
        %v8132 = vpack.c.b16 %v7941, %v7940
        %v8133 = vpack.c.b16 %v7943, %v7942
        %v8134 = vpack.c.b16 %v7945, %v7944
        %v8135 = vpack.c.b16 %v7947, %v7946
        %v8136 = vpack.c.b16 %v7949, %v7948
        %v8137 = vpack.c.b16 %v7951, %v7950
        %v8138 = vpack.c.b16 %v7953, %v7952
        %v8139 = vpack.c.b16 %v7955, %v7954
        %v8140 = vpack.c.b16 %v7957, %v7956
        %v8141 = vpack.c.b16 %v7959, %v7958
        %v8142 = vpack.c.b16 %v7961, %v7960
        %v8143 = vpack.c.b16 %v7963, %v7962
        %v8144 = vpack.c.b16 %v7965, %v7964
        %v8145 = vpack.c.b16 %v7967, %v7966
        %v8146 = vpack.c.b16 %v7969, %v7968
        %v8147 = vpack.c.b16 %v7971, %v7970
        %v8148 = vpack.c.b16 %v7973, %v7972
        %v8149 = vpack.c.b16 %v7975, %v7974
        %v8150 = vpack.c.b16 %v7977, %v7976
        %v8151 = vpack.c.b16 %v7979, %v7978
        %v8152 = vpack.c.b16 %v7981, %v7980
        %v8153 = vpack.c.b16 %v7983, %v7982
        %v8154 = vpack.c.b16 %v7985, %v7984
        %v8155 = vpack.c.b16 %v7987, %v7986
        %v8156 = vpack.c.b16 %v7989, %v7988
        %v8157 = vpack.c.b16 %v7991, %v7990
        %v8158 = vpack.c.b16 %v7993, %v7992
        %v8159 = vpack.c.b16 %v7995, %v7994
        %v8160 = vpack.c.b16 %v7997, %v7996
        %v8161 = vpack.c.b16 %v7999, %v7998
        %v8162 = vpack.c.b16 %v8001, %v8000
        %v8163 = vpack.c.b16 %v8003, %v8002
        %v8164 = vpack.c.b16 %v8005, %v8004
        %v8165 = vpack.c.b16 %v8007, %v8006
        %v8166 = vpack.c.b16 %v8009, %v8008
        %v8167 = vpack.c.b16 %v8011, %v8010
        %v8168 = vpack.c.b16 %v8013, %v8012
        %v8169 = vpack.c.b16 %v8015, %v8014
        %v8170 = vpack.c.b16 %v8017, %v8016
        %v8171 = vpack.c.b16 %v8019, %v8018
        %v8172 = vpack.c.b16 %v8021, %v8020
        %v8173 = vpack.c.b16 %v8023, %v8022
        %v8174 = vpack.c.b16 %v8025, %v8024
        %v8175 = vpack.c.b16 %v8027, %v8026
        %v8176 = vpack.c.b16 %v8029, %v8028
        %v8177 = vpack.c.b16 %v8031, %v8030
        %v8178 = vpack.c.b16 %v8033, %v8032
        %v8179 = vpack.c.b16 %v8035, %v8034
        %v8180 = vpack.c.b16 %v8037, %v8036
        %v8181 = vpack.c.b16 %v8039, %v8038
        %v8182 = vpack.c.b16 %v8041, %v8040
        %v8183 = vpack.c.b16 %v8043, %v8042
        %v8184 = vpack.c.b16 %v8045, %v8044
        %v8185 = vpack.c.b16 %v8047, %v8046
        %v8186 = vpack.c.b16 %v8049, %v8048
        %v8187 = vpack.c.b16 %v8051, %v8050
        %v8188 = vpack.c.b16 %v8053, %v8052
        %v8189 = vpack.c.b16 %v8055, %v8054
        %v8190 = vpack.c.b16 %v8057, %v8056
        %v8191 = vpack.c.b16 %v8059, %v8058
        %v8192 = vpack.c.b16 %v8061, %v8060
        %v8193 = vpack.c.b16 %v8063, %v8062
        %v8194 = vpack.c.b16 %v8065, %v8064
        %v8195 = vpack.c.b16 %v8067, %v8066
        %8324 = vmatprep.subr.bf16.mxu0 0
        %8325 = vmatpush1.bf16.msra.mxu0 %v8068
        %8326 = vmatprep.subr.bf16.mxu0 0
        %8327 = vmatpush1.bf16.msra.mxu0 %v8069
        %8328 = vmatprep.subr.bf16.mxu0 0
        %8329 = vmatpush1.bf16.msra.mxu0 %v8070
        %8330 = vmatprep.subr.bf16.mxu0 0
        %8331 = vmatpush1.bf16.msra.mxu0 %v8071
        %8332 = vmatprep.subr.bf16.mxu0 0
        %8333 = vmatpush1.bf16.msra.mxu0 %v8072
        %8334 = vmatprep.subr.bf16.mxu0 0
        %8335 = vmatpush1.bf16.msra.mxu0 %v8073
        %8336 = vmatprep.subr.bf16.mxu0 0
        %8337 = vmatpush1.bf16.msra.mxu0 %v8074
        %8338 = vmatprep.subr.bf16.mxu0 0
        %8339 = vmatpush1.bf16.msra.mxu0 %v8075
        %8340 = vmatprep.subr.bf16.mxu0 0
        %8341 = vmatpush1.bf16.msra.mxu0 %v8076
        %8342 = vmatprep.subr.bf16.mxu0 0
        %8343 = vmatpush1.bf16.msra.mxu0 %v8077
        %8344 = vmatprep.subr.bf16.mxu0 0
        %8345 = vmatpush1.bf16.msra.mxu0 %v8078
        %8346 = vmatprep.subr.bf16.mxu0 0
        %8347 = vmatpush1.bf16.msra.mxu0 %v8079
        %8348 = vmatprep.subr.bf16.mxu0 0
        %8349 = vmatpush1.bf16.msra.mxu0 %v8080
        %8350 = vmatprep.subr.bf16.mxu0 0
        %8351 = vmatpush1.bf16.msra.mxu0 %v8081
        %8352 = vmatprep.subr.bf16.mxu0 0
        %8353 = vmatpush1.bf16.msra.mxu0 %v8082
        %8354 = vmatprep.subr.bf16.mxu0 0
        %8355 = vmatpush1.bf16.msra.mxu0 %v8083
        %8356 = vmatprep.mubr.bf16.mxu0 %v7230
        %8357 = vmatmul.mubr.bf16.gmra.mrb[0].mxu0 %v7229
        %v8358 = vpop.f32.mrb[0].mxu0
        %v8359 = vadd.f32 %v7554, %v8358
        %v8360 = vpop.f32.mrb[0].mxu0
        %v8361 = vpop.f32.mrb[0].mxu0
        %v8362 = vadd.f32 %v7554, %v8361
        %v8363 = vpop.f32.mrb[0].mxu0
        %8364 = vmatprep.mubr.bf16.mxu0 %v7246
        %8365 = vmatmul.mubr.bf16.gmra.mrb[0].mxu0 %v7245
        %v8366 = vpop.f32.mrb[0].mxu0
        %v8367 = vadd.f32 %v7554, %v8366
        %v8368 = vpop.f32.mrb[0].mxu0
        %v8369 = vpop.f32.mrb[0].mxu0
        %v8370 = vadd.f32 %v7554, %v8369
        %v8371 = vpop.f32.mrb[0].mxu0
        %8372 = vmatprep.mubr.bf16.mxu0 %v7262
        %8373 = vmatmul.mubr.bf16.gmra.mrb[0].mxu0 %v7261
        %v8374 = vpop.f32.mrb[0].mxu0
        %v8375 = vadd.f32 %v7554, %v8374
        %v8376 = vpop.f32.mrb[0].mxu0
        %v8377 = vpop.f32.mrb[0].mxu0
        %v8378 = vadd.f32 %v7554, %v8377
        %v8379 = vpop.f32.mrb[0].mxu0
        %8380 = vmatprep.mubr.bf16.mxu0 %v7278
        %8381 = vmatmul.mubr.bf16.gmra.mrb[0].mxu0 %v7277
        %v8382 = vpop.f32.mrb[0].mxu0
        %v8383 = vadd.f32 %v7554, %v8382
        %v8384 = vpop.f32.mrb[0].mxu0
        %v8385 = vpop.f32.mrb[0].mxu0
        %v8386 = vadd.f32 %v7554, %v8385
        %v8387 = vpop.f32.mrb[0].mxu0
        %8388 = vdwg.mxu0
        %8389 = vmatprep.subr.bf16.mxu0 0
        %8390 = vmatpush1.bf16.msra.mxu0 %v8084
        %8391 = vmatprep.subr.bf16.mxu0 0
        %8392 = vmatpush1.bf16.msra.mxu0 %v8085
        %8393 = vmatprep.subr.bf16.mxu0 0
        %8394 = vmatpush1.bf16.msra.mxu0 %v8086
        %8395 = vmatprep.subr.bf16.mxu0 0
        %8396 = vmatpush1.bf16.msra.mxu0 %v8087
        %8397 = vmatprep.subr.bf16.mxu0 0
        %8398 = vmatpush1.bf16.msra.mxu0 %v8088
        %8399 = vmatprep.subr.bf16.mxu0 0
        %8400 = vmatpush1.bf16.msra.mxu0 %v8089
        %8401 = vmatprep.subr.bf16.mxu0 0
        %8402 = vmatpush1.bf16.msra.mxu0 %v8090
        %8403 = vmatprep.subr.bf16.mxu0 0
        %8404 = vmatpush1.bf16.msra.mxu0 %v8091
        %8405 = vmatprep.subr.bf16.mxu0 0
        %8406 = vmatpush1.bf16.msra.mxu0 %v8092
        %8407 = vmatprep.subr.bf16.mxu0 0
        %8408 = vmatpush1.bf16.msra.mxu0 %v8093
        %8409 = vmatprep.subr.bf16.mxu0 0
        %8410 = vmatpush1.bf16.msra.mxu0 %v8094
        %8411 = vmatprep.subr.bf16.mxu0 0
        %8412 = vmatpush1.bf16.msra.mxu0 %v8095
        %8413 = vmatprep.subr.bf16.mxu0 0
        %8414 = vmatpush1.bf16.msra.mxu0 %v8096
        %8415 = vmatprep.subr.bf16.mxu0 0
        %8416 = vmatpush1.bf16.msra.mxu0 %v8097
        %8417 = vmatprep.subr.bf16.mxu0 0
        %8418 = vmatpush1.bf16.msra.mxu0 %v8098
        %8419 = vmatprep.subr.bf16.mxu0 0
        %8420 = vmatpush1.bf16.msra.mxu0 %v8099
        %8421 = vmatprep.mubr.bf16.mxu0 %v7232
        %8422 = vmatmul.mubr.bf16.gmra.mrb[0].mxu0 %v7231
        %v8423 = vpop.f32.mrb[0].mxu0
        %v8424 = vadd.f32 %v8359, %v8423
        %v8425 = vpop.f32.mrb[0].mxu0
        %v8426 = vpop.f32.mrb[0].mxu0
        %v8427 = vadd.f32 %v8362, %v8426
        %v8428 = vpop.f32.mrb[0].mxu0
        %8429 = vmatprep.mubr.bf16.mxu0 %v7248
        %8430 = vmatmul.mubr.bf16.gmra.mrb[0].mxu0 %v7247
        %v8431 = vpop.f32.mrb[0].mxu0
        %v8432 = vadd.f32 %v8367, %v8431
        %v8433 = vpop.f32.mrb[0].mxu0
        %v8434 = vpop.f32.mrb[0].mxu0
        %v8435 = vadd.f32 %v8370, %v8434
        %v8436 = vpop.f32.mrb[0].mxu0
        %8437 = vmatprep.mubr.bf16.mxu0 %v7264
        %8438 = vmatmul.mubr.bf16.gmra.mrb[0].mxu0 %v7263
        %v8439 = vpop.f32.mrb[0].mxu0
        %v8440 = vadd.f32 %v8375, %v8439
        %v8441 = vpop.f32.mrb[0].mxu0
        %v8442 = vpop.f32.mrb[0].mxu0
        %v8443 = vadd.f32 %v8378, %v8442
        %v8444 = vpop.f32.mrb[0].mxu0
        %8445 = vmatprep.mubr.bf16.mxu0 %v7280
        %8446 = vmatmul.mubr.bf16.gmra.mrb[0].mxu0 %v7279
        %v8447 = vpop.f32.mrb[0].mxu0
        %v8448 = vadd.f32 %v8383, %v8447
        %v8449 = vpop.f32.mrb[0].mxu0
        %v8450 = vpop.f32.mrb[0].mxu0
        %v8451 = vadd.f32 %v8386, %v8450
        %v8452 = vpop.f32.mrb[0].mxu0
        %8453 = vdwg.mxu0
        %8454 = vmatprep.subr.bf16.mxu0 0
        %8455 = vmatpush1.bf16.msra.mxu0 %v8100
        %8456 = vmatprep.subr.bf16.mxu0 0
        %8457 = vmatpush1.bf16.msra.mxu0 %v8101
        %8458 = vmatprep.subr.bf16.mxu0 0
        %8459 = vmatpush1.bf16.msra.mxu0 %v8102
        %8460 = vmatprep.subr.bf16.mxu0 0
        %8461 = vmatpush1.bf16.msra.mxu0 %v8103
        %8462 = vmatprep.subr.bf16.mxu0 0
        %8463 = vmatpush1.bf16.msra.mxu0 %v8104
        %8464 = vmatprep.subr.bf16.mxu0 0
        %8465 = vmatpush1.bf16.msra.mxu0 %v8105
        %8466 = vmatprep.subr.bf16.mxu0 0
        %8467 = vmatpush1.bf16.msra.mxu0 %v8106
        %8468 = vmatprep.subr.bf16.mxu0 0
        %8469 = vmatpush1.bf16.msra.mxu0 %v8107
        %8470 = vmatprep.subr.bf16.mxu0 0
        %8471 = vmatpush1.bf16.msra.mxu0 %v8108
        %8472 = vmatprep.subr.bf16.mxu0 0
        %8473 = vmatpush1.bf16.msra.mxu0 %v8109
        %8474 = vmatprep.subr.bf16.mxu0 0
        %8475 = vmatpush1.bf16.msra.mxu0 %v8110
        %8476 = vmatprep.subr.bf16.mxu0 0
        %8477 = vmatpush1.bf16.msra.mxu0 %v8111
        %8478 = vmatprep.subr.bf16.mxu0 0
        %8479 = vmatpush1.bf16.msra.mxu0 %v8112
        %8480 = vmatprep.subr.bf16.mxu0 0
        %8481 = vmatpush1.bf16.msra.mxu0 %v8113
        %8482 = vmatprep.subr.bf16.mxu0 0
        %8483 = vmatpush1.bf16.msra.mxu0 %v8114
        %8484 = vmatprep.subr.bf16.mxu0 0
        %8485 = vmatpush1.bf16.msra.mxu0 %v8115
        %8486 = vmatprep.mubr.bf16.mxu0 %v7234
        %8487 = vmatmul.mubr.bf16.gmra.mrb[0].mxu0 %v7233
        %v8488 = vpop.f32.mrb[0].mxu0
        %v8489 = vadd.f32 %v8424, %v8488
        %v8490 = vpop.f32.mrb[0].mxu0
        %v8491 = vpop.f32.mrb[0].mxu0
        %v8492 = vadd.f32 %v8427, %v8491
        %v8493 = vpop.f32.mrb[0].mxu0
        %8494 = vmatprep.mubr.bf16.mxu0 %v7250
        %8495 = vmatmul.mubr.bf16.gmra.mrb[0].mxu0 %v7249
        %v8496 = vpop.f32.mrb[0].mxu0
        %v8497 = vadd.f32 %v8432, %v8496
        %v8498 = vpop.f32.mrb[0].mxu0
        %v8499 = vpop.f32.mrb[0].mxu0
        %v8500 = vadd.f32 %v8435, %v8499
        %v8501 = vpop.f32.mrb[0].mxu0
        %8502 = vmatprep.mubr.bf16.mxu0 %v7266
        %8503 = vmatmul.mubr.bf16.gmra.mrb[0].mxu0 %v7265
        %v8504 = vpop.f32.mrb[0].mxu0
        %v8505 = vadd.f32 %v8440, %v8504
        %v8506 = vpop.f32.mrb[0].mxu0
        %v8507 = vpop.f32.mrb[0].mxu0
        %v8508 = vadd.f32 %v8443, %v8507
        %v8509 = vpop.f32.mrb[0].mxu0
        %8510 = vmatprep.mubr.bf16.mxu0 %v7282
        %8511 = vmatmul.mubr.bf16.gmra.mrb[0].mxu0 %v7281
        %v8512 = vpop.f32.mrb[0].mxu0
        %v8513 = vadd.f32 %v8448, %v8512
        %v8514 = vpop.f32.mrb[0].mxu0
        %v8515 = vpop.f32.mrb[0].mxu0
        %v8516 = vadd.f32 %v8451, %v8515
        %v8517 = vpop.f32.mrb[0].mxu0
        %8518 = vdwg.mxu0
        %8519 = vmatprep.subr.bf16.mxu0 0
        %8520 = vmatpush1.bf16.msra.mxu0 %v8116
        %8521 = vmatprep.subr.bf16.mxu0 0
        %8522 = vmatpush1.bf16.msra.mxu0 %v8117
        %8523 = vmatprep.subr.bf16.mxu0 0
        %8524 = vmatpush1.bf16.msra.mxu0 %v8118
        %8525 = vmatprep.subr.bf16.mxu0 0
        %8526 = vmatpush1.bf16.msra.mxu0 %v8119
        %8527 = vmatprep.subr.bf16.mxu0 0
        %8528 = vmatpush1.bf16.msra.mxu0 %v8120
        %8529 = vmatprep.subr.bf16.mxu0 0
        %8530 = vmatpush1.bf16.msra.mxu0 %v8121
        %8531 = vmatprep.subr.bf16.mxu0 0
        %8532 = vmatpush1.bf16.msra.mxu0 %v8122
        %8533 = vmatprep.subr.bf16.mxu0 0
        %8534 = vmatpush1.bf16.msra.mxu0 %v8123
        %8535 = vmatprep.subr.bf16.mxu0 0
        %8536 = vmatpush1.bf16.msra.mxu0 %v8124
        %8537 = vmatprep.subr.bf16.mxu0 0
        %8538 = vmatpush1.bf16.msra.mxu0 %v8125
        %8539 = vmatprep.subr.bf16.mxu0 0
        %8540 = vmatpush1.bf16.msra.mxu0 %v8126
        %8541 = vmatprep.subr.bf16.mxu0 0
        %8542 = vmatpush1.bf16.msra.mxu0 %v8127
        %8543 = vmatprep.subr.bf16.mxu0 0
        %8544 = vmatpush1.bf16.msra.mxu0 %v8128
        %8545 = vmatprep.subr.bf16.mxu0 0
        %8546 = vmatpush1.bf16.msra.mxu0 %v8129
        %8547 = vmatprep.subr.bf16.mxu0 0
        %8548 = vmatpush1.bf16.msra.mxu0 %v8130
        %8549 = vmatprep.subr.bf16.mxu0 0
        %8550 = vmatpush1.bf16.msra.mxu0 %v8131
        %8551 = vmatprep.mubr.bf16.mxu0 %v7236
        %8552 = vmatmul.mubr.bf16.gmra.mrb[0].mxu0 %v7235
        %v8553 = vpop.f32.mrb[0].mxu0
        %v8554 = vadd.f32 %v8489, %v8553
        %v8555 = vpop.f32.mrb[0].mxu0
        %v8556 = vpop.f32.mrb[0].mxu0
        %v8557 = vadd.f32 %v8492, %v8556
        %v8558 = vpop.f32.mrb[0].mxu0
        %8559 = vmatprep.mubr.bf16.mxu0 %v7252
        %8560 = vmatmul.mubr.bf16.gmra.mrb[0].mxu0 %v7251
        %v8561 = vpop.f32.mrb[0].mxu0
        %v8562 = vadd.f32 %v8497, %v8561
        %v8563 = vpop.f32.mrb[0].mxu0
        %v8564 = vpop.f32.mrb[0].mxu0
        %v8565 = vadd.f32 %v8500, %v8564
        %v8566 = vpop.f32.mrb[0].mxu0
        %8567 = vmatprep.mubr.bf16.mxu0 %v7268
        %8568 = vmatmul.mubr.bf16.gmra.mrb[0].mxu0 %v7267
        %v8569 = vpop.f32.mrb[0].mxu0
        %v8570 = vadd.f32 %v8505, %v8569
        %v8571 = vpop.f32.mrb[0].mxu0
        %v8572 = vpop.f32.mrb[0].mxu0
        %v8573 = vadd.f32 %v8508, %v8572
        %v8574 = vpop.f32.mrb[0].mxu0
        %8575 = vmatprep.mubr.bf16.mxu0 %v7284
        %8576 = vmatmul.mubr.bf16.gmra.mrb[0].mxu0 %v7283
        %v8577 = vpop.f32.mrb[0].mxu0
        %v8578 = vadd.f32 %v8513, %v8577
        %v8579 = vpop.f32.mrb[0].mxu0
        %v8580 = vpop.f32.mrb[0].mxu0
        %v8581 = vadd.f32 %v8516, %v8580
        %v8582 = vpop.f32.mrb[0].mxu0
        %8583 = vdwg.mxu0
        %8584 = vmatprep.subr.bf16.mxu0 0
        %8585 = vmatpush1.bf16.msra.mxu0 %v8132
        %8586 = vmatprep.subr.bf16.mxu0 0
        %8587 = vmatpush1.bf16.msra.mxu0 %v8133
        %8588 = vmatprep.subr.bf16.mxu0 0
        %8589 = vmatpush1.bf16.msra.mxu0 %v8134
        %8590 = vmatprep.subr.bf16.mxu0 0
        %8591 = vmatpush1.bf16.msra.mxu0 %v8135
        %8592 = vmatprep.subr.bf16.mxu0 0
        %8593 = vmatpush1.bf16.msra.mxu0 %v8136
        %8594 = vmatprep.subr.bf16.mxu0 0
        %8595 = vmatpush1.bf16.msra.mxu0 %v8137
        %8596 = vmatprep.subr.bf16.mxu0 0
        %8597 = vmatpush1.bf16.msra.mxu0 %v8138
        %8598 = vmatprep.subr.bf16.mxu0 0
        %8599 = vmatpush1.bf16.msra.mxu0 %v8139
        %8600 = vmatprep.subr.bf16.mxu0 0
        %8601 = vmatpush1.bf16.msra.mxu0 %v8140
        %8602 = vmatprep.subr.bf16.mxu0 0
        %8603 = vmatpush1.bf16.msra.mxu0 %v8141
        %8604 = vmatprep.subr.bf16.mxu0 0
        %8605 = vmatpush1.bf16.msra.mxu0 %v8142
        %8606 = vmatprep.subr.bf16.mxu0 0
        %8607 = vmatpush1.bf16.msra.mxu0 %v8143
        %8608 = vmatprep.subr.bf16.mxu0 0
        %8609 = vmatpush1.bf16.msra.mxu0 %v8144
        %8610 = vmatprep.subr.bf16.mxu0 0
        %8611 = vmatpush1.bf16.msra.mxu0 %v8145
        %8612 = vmatprep.subr.bf16.mxu0 0
        %8613 = vmatpush1.bf16.msra.mxu0 %v8146
        %8614 = vmatprep.subr.bf16.mxu0 0
        %8615 = vmatpush1.bf16.msra.mxu0 %v8147
        %8616 = vmatprep.mubr.bf16.mxu0 %v7238
        %8617 = vmatmul.mubr.bf16.gmra.mrb[0].mxu0 %v7237
        %v8618 = vpop.f32.mrb[0].mxu0
        %v8619 = vadd.f32 %v8554, %v8618
        %v8620 = vpop.f32.mrb[0].mxu0
        %v8621 = vpop.f32.mrb[0].mxu0
        %v8622 = vadd.f32 %v8557, %v8621
        %v8623 = vpop.f32.mrb[0].mxu0
        %8624 = vmatprep.mubr.bf16.mxu0 %v7254
        %8625 = vmatmul.mubr.bf16.gmra.mrb[0].mxu0 %v7253
        %v8626 = vpop.f32.mrb[0].mxu0
        %v8627 = vadd.f32 %v8562, %v8626
        %v8628 = vpop.f32.mrb[0].mxu0
        %v8629 = vpop.f32.mrb[0].mxu0
        %v8630 = vadd.f32 %v8565, %v8629
        %v8631 = vpop.f32.mrb[0].mxu0
        %8632 = vmatprep.mubr.bf16.mxu0 %v7270
        %8633 = vmatmul.mubr.bf16.gmra.mrb[0].mxu0 %v7269
        %v8634 = vpop.f32.mrb[0].mxu0
        %v8635 = vadd.f32 %v8570, %v8634
        %v8636 = vpop.f32.mrb[0].mxu0
        %v8637 = vpop.f32.mrb[0].mxu0
        %v8638 = vadd.f32 %v8573, %v8637
        %v8639 = vpop.f32.mrb[0].mxu0
        %8640 = vmatprep.mubr.bf16.mxu0 %v7286
        %8641 = vmatmul.mubr.bf16.gmra.mrb[0].mxu0 %v7285
        %v8642 = vpop.f32.mrb[0].mxu0
        %v8643 = vadd.f32 %v8578, %v8642
        %v8644 = vpop.f32.mrb[0].mxu0
        %v8645 = vpop.f32.mrb[0].mxu0
        %v8646 = vadd.f32 %v8581, %v8645
        %v8647 = vpop.f32.mrb[0].mxu0
        %8648 = vdwg.mxu0
        %8649 = vmatprep.subr.bf16.mxu0 0
        %8650 = vmatpush1.bf16.msra.mxu0 %v8148
        %8651 = vmatprep.subr.bf16.mxu0 0
        %8652 = vmatpush1.bf16.msra.mxu0 %v8149
        %8653 = vmatprep.subr.bf16.mxu0 0
        %8654 = vmatpush1.bf16.msra.mxu0 %v8150
        %8655 = vmatprep.subr.bf16.mxu0 0
        %8656 = vmatpush1.bf16.msra.mxu0 %v8151
        %8657 = vmatprep.subr.bf16.mxu0 0
        %8658 = vmatpush1.bf16.msra.mxu0 %v8152
        %8659 = vmatprep.subr.bf16.mxu0 0
        %8660 = vmatpush1.bf16.msra.mxu0 %v8153
        %8661 = vmatprep.subr.bf16.mxu0 0
        %8662 = vmatpush1.bf16.msra.mxu0 %v8154
        %8663 = vmatprep.subr.bf16.mxu0 0
        %8664 = vmatpush1.bf16.msra.mxu0 %v8155
        %8665 = vmatprep.subr.bf16.mxu0 0
        %8666 = vmatpush1.bf16.msra.mxu0 %v8156
        %8667 = vmatprep.subr.bf16.mxu0 0
        %8668 = vmatpush1.bf16.msra.mxu0 %v8157
        %8669 = vmatprep.subr.bf16.mxu0 0
        %8670 = vmatpush1.bf16.msra.mxu0 %v8158
        %8671 = vmatprep.subr.bf16.mxu0 0
        %8672 = vmatpush1.bf16.msra.mxu0 %v8159
        %8673 = vmatprep.subr.bf16.mxu0 0
        %8674 = vmatpush1.bf16.msra.mxu0 %v8160
        %8675 = vmatprep.subr.bf16.mxu0 0
        %8676 = vmatpush1.bf16.msra.mxu0 %v8161
        %8677 = vmatprep.subr.bf16.mxu0 0
        %8678 = vmatpush1.bf16.msra.mxu0 %v8162
        %8679 = vmatprep.subr.bf16.mxu0 0
        %8680 = vmatpush1.bf16.msra.mxu0 %v8163
        %8681 = vmatprep.mubr.bf16.mxu0 %v7240
        %8682 = vmatmul.mubr.bf16.gmra.mrb[0].mxu0 %v7239
        %v8683 = vpop.f32.mrb[0].mxu0
        %v8684 = vadd.f32 %v8619, %v8683
        %v8685 = vpop.f32.mrb[0].mxu0
        %v8686 = vpop.f32.mrb[0].mxu0
        %v8687 = vadd.f32 %v8622, %v8686
        %v8688 = vpop.f32.mrb[0].mxu0
        %8689 = vmatprep.mubr.bf16.mxu0 %v7256
        %8690 = vmatmul.mubr.bf16.gmra.mrb[0].mxu0 %v7255
        %v8691 = vpop.f32.mrb[0].mxu0
        %v8692 = vadd.f32 %v8627, %v8691
        %v8693 = vpop.f32.mrb[0].mxu0
        %v8694 = vpop.f32.mrb[0].mxu0
        %v8695 = vadd.f32 %v8630, %v8694
        %v8696 = vpop.f32.mrb[0].mxu0
        %8697 = vmatprep.mubr.bf16.mxu0 %v7272
        %8698 = vmatmul.mubr.bf16.gmra.mrb[0].mxu0 %v7271
        %v8699 = vpop.f32.mrb[0].mxu0
        %v8700 = vadd.f32 %v8635, %v8699
        %v8701 = vpop.f32.mrb[0].mxu0
        %v8702 = vpop.f32.mrb[0].mxu0
        %v8703 = vadd.f32 %v8638, %v8702
        %v8704 = vpop.f32.mrb[0].mxu0
        %8705 = vmatprep.mubr.bf16.mxu0 %v7288
        %8706 = vmatmul.mubr.bf16.gmra.mrb[0].mxu0 %v7287
        %v8707 = vpop.f32.mrb[0].mxu0
        %v8708 = vadd.f32 %v8643, %v8707
        %v8709 = vpop.f32.mrb[0].mxu0
        %v8710 = vpop.f32.mrb[0].mxu0
        %v8711 = vadd.f32 %v8646, %v8710
        %v8712 = vpop.f32.mrb[0].mxu0
        %8713 = vdwg.mxu0
        %8714 = vmatprep.subr.bf16.mxu0 0
        %8715 = vmatpush1.bf16.msra.mxu0 %v8164
        %8716 = vmatprep.subr.bf16.mxu0 0
        %8717 = vmatpush1.bf16.msra.mxu0 %v8165
        %8718 = vmatprep.subr.bf16.mxu0 0
        %8719 = vmatpush1.bf16.msra.mxu0 %v8166
        %8720 = vmatprep.subr.bf16.mxu0 0
        %8721 = vmatpush1.bf16.msra.mxu0 %v8167
        %8722 = vmatprep.subr.bf16.mxu0 0
        %8723 = vmatpush1.bf16.msra.mxu0 %v8168
        %8724 = vmatprep.subr.bf16.mxu0 0
        %8725 = vmatpush1.bf16.msra.mxu0 %v8169
        %8726 = vmatprep.subr.bf16.mxu0 0
        %8727 = vmatpush1.bf16.msra.mxu0 %v8170
        %8728 = vmatprep.subr.bf16.mxu0 0
        %8729 = vmatpush1.bf16.msra.mxu0 %v8171
        %8730 = vmatprep.subr.bf16.mxu0 0
        %8731 = vmatpush1.bf16.msra.mxu0 %v8172
        %8732 = vmatprep.subr.bf16.mxu0 0
        %8733 = vmatpush1.bf16.msra.mxu0 %v8173
        %8734 = vmatprep.subr.bf16.mxu0 0
        %8735 = vmatpush1.bf16.msra.mxu0 %v8174
        %8736 = vmatprep.subr.bf16.mxu0 0
        %8737 = vmatpush1.bf16.msra.mxu0 %v8175
        %8738 = vmatprep.subr.bf16.mxu0 0
        %8739 = vmatpush1.bf16.msra.mxu0 %v8176
        %8740 = vmatprep.subr.bf16.mxu0 0
        %8741 = vmatpush1.bf16.msra.mxu0 %v8177
        %8742 = vmatprep.subr.bf16.mxu0 0
        %8743 = vmatpush1.bf16.msra.mxu0 %v8178
        %8744 = vmatprep.subr.bf16.mxu0 0
        %8745 = vmatpush1.bf16.msra.mxu0 %v8179
        %8746 = vmatprep.mubr.bf16.mxu0 %v7242
        %8747 = vmatmul.mubr.bf16.gmra.mrb[0].mxu0 %v7241
        %v8748 = vpop.f32.mrb[0].mxu0
        %v8749 = vadd.f32 %v8684, %v8748
        %v8750 = vpop.f32.mrb[0].mxu0
        %v8751 = vpop.f32.mrb[0].mxu0
        %v8752 = vadd.f32 %v8687, %v8751
        %v8753 = vpop.f32.mrb[0].mxu0
        %8754 = vmatprep.mubr.bf16.mxu0 %v7258
        %8755 = vmatmul.mubr.bf16.gmra.mrb[0].mxu0 %v7257
        %v8756 = vpop.f32.mrb[0].mxu0
        %v8757 = vadd.f32 %v8692, %v8756
        %v8758 = vpop.f32.mrb[0].mxu0
        %v8759 = vpop.f32.mrb[0].mxu0
        %v8760 = vadd.f32 %v8695, %v8759
        %v8761 = vpop.f32.mrb[0].mxu0
        %8762 = vmatprep.mubr.bf16.mxu0 %v7274
        %8763 = vmatmul.mubr.bf16.gmra.mrb[0].mxu0 %v7273
        %v8764 = vpop.f32.mrb[0].mxu0
        %v8765 = vadd.f32 %v8700, %v8764
        %v8766 = vpop.f32.mrb[0].mxu0
        %v8767 = vpop.f32.mrb[0].mxu0
        %v8768 = vadd.f32 %v8703, %v8767
        %v8769 = vpop.f32.mrb[0].mxu0
        %8770 = vmatprep.mubr.bf16.mxu0 %v7290
        %8771 = vmatmul.mubr.bf16.gmra.mrb[0].mxu0 %v7289
        %v8772 = vpop.f32.mrb[0].mxu0
        %v8773 = vadd.f32 %v8708, %v8772
        %v8774 = vpop.f32.mrb[0].mxu0
        %v8775 = vpop.f32.mrb[0].mxu0
        %v8776 = vadd.f32 %v8711, %v8775
        %v8777 = vpop.f32.mrb[0].mxu0
        %8778 = vdwg.mxu0
        %8779 = vmatprep.subr.bf16.mxu0 0
        %8780 = vmatpush1.bf16.msra.mxu0 %v8180
        %8781 = vmatprep.subr.bf16.mxu0 0
        %8782 = vmatpush1.bf16.msra.mxu0 %v8181
        %8783 = vmatprep.subr.bf16.mxu0 0
        %8784 = vmatpush1.bf16.msra.mxu0 %v8182
        %8785 = vmatprep.subr.bf16.mxu0 0
        %8786 = vmatpush1.bf16.msra.mxu0 %v8183
        %8787 = vmatprep.subr.bf16.mxu0 0
        %8788 = vmatpush1.bf16.msra.mxu0 %v8184
        %8789 = vmatprep.subr.bf16.mxu0 0
        %8790 = vmatpush1.bf16.msra.mxu0 %v8185
        %8791 = vmatprep.subr.bf16.mxu0 0
        %8792 = vmatpush1.bf16.msra.mxu0 %v8186
        %8793 = vmatprep.subr.bf16.mxu0 0
        %8794 = vmatpush1.bf16.msra.mxu0 %v8187
        %8795 = vmatprep.subr.bf16.mxu0 0
        %8796 = vmatpush1.bf16.msra.mxu0 %v8188
        %8797 = vmatprep.subr.bf16.mxu0 0
        %8798 = vmatpush1.bf16.msra.mxu0 %v8189
        %8799 = vmatprep.subr.bf16.mxu0 0
        %8800 = vmatpush1.bf16.msra.mxu0 %v8190
        %8801 = vmatprep.subr.bf16.mxu0 0
        %8802 = vmatpush1.bf16.msra.mxu0 %v8191
        %8803 = vmatprep.subr.bf16.mxu0 0
        %8804 = vmatpush1.bf16.msra.mxu0 %v8192
        %8805 = vmatprep.subr.bf16.mxu0 0
        %8806 = vmatpush1.bf16.msra.mxu0 %v8193
        %8807 = vmatprep.subr.bf16.mxu0 0
        %8808 = vmatpush1.bf16.msra.mxu0 %v8194
        %8809 = vmatprep.subr.bf16.mxu0 0
        %8810 = vmatpush1.bf16.msra.mxu0 %v8195
        %8811 = vmatprep.mubr.bf16.mxu0 %v7244
        %8812 = vmatmul.mubr.bf16.gmra.mrb[0].mxu0 %v7243
        %v8813 = vpop.f32.mrb[0].mxu0
        %v8814 = vadd.f32 %v8749, %v8813
        %v8815 = vpop.f32.mrb[0].mxu0
        %v8816 = vpop.f32.mrb[0].mxu0
        %v8817 = vadd.f32 %v8752, %v8816
        %v8818 = vpop.f32.mrb[0].mxu0
        %8819 = vmatprep.mubr.bf16.mxu0 %v7260
        %8820 = vmatmul.mubr.bf16.gmra.mrb[0].mxu0 %v7259
        %v8821 = vpop.f32.mrb[0].mxu0
        %v8822 = vadd.f32 %v8757, %v8821
        %v8823 = vpop.f32.mrb[0].mxu0
        %v8824 = vpop.f32.mrb[0].mxu0
        %v8825 = vadd.f32 %v8760, %v8824
        %v8826 = vpop.f32.mrb[0].mxu0
        %8827 = vmatprep.mubr.bf16.mxu0 %v7276
        %8828 = vmatmul.mubr.bf16.gmra.mrb[0].mxu0 %v7275
        %v8829 = vpop.f32.mrb[0].mxu0
        %v8830 = vadd.f32 %v8765, %v8829
        %v8831 = vpop.f32.mrb[0].mxu0
        %v8832 = vpop.f32.mrb[0].mxu0
        %v8833 = vadd.f32 %v8768, %v8832
        %v8834 = vpop.f32.mrb[0].mxu0
        %8835 = vmatprep.mubr.bf16.mxu0 %v7292
        %8836 = vmatmul.mubr.bf16.gmra.mrb[0].mxu0 %v7291
        %v8837 = vpop.f32.mrb[0].mxu0
        %v8838 = vadd.f32 %v8773, %v8837
        %v8839 = vpop.f32.mrb[0].mxu0
        %v8840 = vpop.f32.mrb[0].mxu0
        %v8841 = vadd.f32 %v8776, %v8840
        %v8842 = vpop.f32.mrb[0].mxu0
        %8843 = vdwg.mxu0
        %v8844 = vadd.f32 %v8814, %v5653
        %v8845 = vadd.f32 %v8817, %v5654
        %v8846 = vadd.f32 %v8822, %v5655
        %v8847 = vadd.f32 %v8825, %v5656
        %v8848 = vadd.f32 %v8830, %v5657
        %v8849 = vadd.f32 %v8833, %v5658
        %v8850 = vadd.f32 %v8838, %v5659
        %v8851 = vadd.f32 %v8841, %v5660
        %v8852 = vld [vmem:[%s1392] sm:$0x1]
        %v8853 = vld [vmem:[%s1400] sm:$0x1]
        %8854 = vadd.xlane.f32.xlu0 %v8844
        %v8855 = vpop.xlane.xlu0 %8854
        %8856 = vadd.xlane.f32.xlu0 %v8845
        %v8857 = vpop.xlane.xlu0 %8856
        %8858 = vadd.xlane.f32.xlu0 %v8846
        %v8859 = vpop.xlane.xlu0 %8858
        %8860 = vadd.xlane.f32.xlu0 %v8847
        %v8861 = vpop.xlane.xlu0 %8860
        %8862 = vadd.xlane.f32.xlu0 %v8848
        %v8863 = vpop.xlane.xlu0 %8862
        %8864 = vadd.xlane.f32.xlu0 %v8849
        %v8865 = vpop.xlane.xlu0 %8864
        %8866 = vadd.xlane.f32.xlu0 %v8850
        %v8867 = vpop.xlane.xlu0 %8866
        %8868 = vadd.xlane.f32.xlu0 %v8851
        %v8869 = vpop.xlane.xlu0 %8868
        %v8870 = vmul.f32 %v8855, %v5560
        %v8871 = vmul.f32 %v8857, %v5560
        %v8872 = vmul.f32 %v8859, %v5560
        %v8873 = vmul.f32 %v8861, %v5560
        %v8874 = vmul.f32 %v8863, %v5560
        %v8875 = vmul.f32 %v8865, %v5560
        %v8876 = vmul.f32 %v8867, %v5560
        %v8877 = vmul.f32 %v8869, %v5560
        %v8878 = vsub.f32 %v8844, %v8870
        %v8879 = vsub.f32 %v8845, %v8871
        %v8880 = vsub.f32 %v8846, %v8872
        %v8881 = vsub.f32 %v8847, %v8873
        %v8882 = vsub.f32 %v8848, %v8874
        %v8883 = vsub.f32 %v8849, %v8875
        %v8884 = vsub.f32 %v8850, %v8876
        %v8885 = vsub.f32 %v8851, %v8877
        %v8886 = vmul.f32 %v8878, %v8878
        %v8887 = vmul.f32 %v8879, %v8879
        %v8888 = vmul.f32 %v8880, %v8880
        %v8889 = vmul.f32 %v8881, %v8881
        %v8890 = vmul.f32 %v8882, %v8882
        %v8891 = vmul.f32 %v8883, %v8883
        %v8892 = vmul.f32 %v8884, %v8884
        %v8893 = vmul.f32 %v8885, %v8885
        %8894 = vadd.xlane.f32.xlu0 %v8886
        %v8895 = vpop.xlane.xlu0 %8894
        %8896 = vadd.xlane.f32.xlu0 %v8887
        %v8897 = vpop.xlane.xlu0 %8896
        %8898 = vadd.xlane.f32.xlu0 %v8888
        %v8899 = vpop.xlane.xlu0 %8898
        %8900 = vadd.xlane.f32.xlu0 %v8889
        %v8901 = vpop.xlane.xlu0 %8900
        %8902 = vadd.xlane.f32.xlu0 %v8890
        %v8903 = vpop.xlane.xlu0 %8902
        %8904 = vadd.xlane.f32.xlu0 %v8891
        %v8905 = vpop.xlane.xlu0 %8904
        %8906 = vadd.xlane.f32.xlu0 %v8892
        %v8907 = vpop.xlane.xlu0 %8906
        %8908 = vadd.xlane.f32.xlu0 %v8893
        %v8909 = vpop.xlane.xlu0 %8908
        %v8910 = vmul.f32 %v8895, %v5560
        %v8911 = vmul.f32 %v8897, %v5560
        %v8912 = vmul.f32 %v8899, %v5560
        %v8913 = vmul.f32 %v8901, %v5560
        %v8914 = vmul.f32 %v8903, %v5560
        %v8915 = vmul.f32 %v8905, %v5560
        %v8916 = vmul.f32 %v8907, %v5560
        %v8917 = vmul.f32 %v8909, %v5560
        %v8918 = vadd.f32 %v8910, 1e-05
        %v8919 = vadd.f32 %v8911, 1e-05
        %v8920 = vadd.f32 %v8912, 1e-05
        %v8921 = vadd.f32 %v8913, 1e-05
        %v8922 = vadd.f32 %v8914, 1e-05
        %v8923 = vadd.f32 %v8915, 1e-05
        %v8924 = vadd.f32 %v8916, 1e-05
        %v8925 = vadd.f32 %v8917, 1e-05
        %v8926 = vrsqrt.pop %v8918
        %v8927 = vrsqrt.pop %v8919
        %v8928 = vrsqrt.pop %v8920
        %v8929 = vrsqrt.pop %v8921
        %v8930 = vrsqrt.pop %v8922
        %v8931 = vrsqrt.pop %v8923
        %v8932 = vrsqrt.pop %v8924
        %v8933 = vrsqrt.pop %v8925
        %v8934 = vmul.f32 %v8878, %v8926
        %v8935 = vmul.f32 %v8879, %v8927
        %v8936 = vmul.f32 %v8880, %v8928
        %v8937 = vmul.f32 %v8881, %v8929
        %v8938 = vmul.f32 %v8882, %v8930
        %v8939 = vmul.f32 %v8883, %v8931
        %v8940 = vmul.f32 %v8884, %v8932
        %v8941 = vmul.f32 %v8885, %v8933
        %v8943 = vlaneseq
        %v8944 = vshrl.u32 %v8943, 7
        %v8945 = vsub.s32 0, %v8944
        %v8946 = vrot.slane %v8852, %v8945
        %v8948 = vmul.f32 %v8934, %v8946
        %v8949 = vmul.f32 %v8935, %v8946
        %v8950 = vmul.f32 %v8936, %v8946
        %v8951 = vmul.f32 %v8937, %v8946
        %v8952 = vmul.f32 %v8938, %v8946
        %v8953 = vmul.f32 %v8939, %v8946
        %v8954 = vmul.f32 %v8940, %v8946
        %v8955 = vmul.f32 %v8941, %v8946
        %v8957 = vlaneseq
        %v8958 = vshrl.u32 %v8957, 7
        %v8959 = vsub.s32 0, %v8958
        %v8960 = vrot.slane %v8853, %v8959
        %v8962 = vadd.f32 %v8948, %v8960
        %v8963 = vadd.f32 %v8949, %v8960
        %v8964 = vadd.f32 %v8950, %v8960
        %v8965 = vadd.f32 %v8951, %v8960
        %v8966 = vadd.f32 %v8952, %v8960
        %v8967 = vadd.f32 %v8953, %v8960
        %v8968 = vadd.f32 %v8954, %v8960
        %v8969 = vadd.f32 %v8955, %v8960
        %8970 = vst [vmem:[#allocation2] sm:$0xff] %v8962
        %8971 = vst [vmem:[#allocation2 + $0x8] sm:$0xff] %v8963
        %8972 = vst [vmem:[#allocation2 + $0x10] sm:$0xff] %v8964
        %8973 = vst [vmem:[#allocation2 + $0x18] sm:$0xff] %v8965
        %8974 = vst [vmem:[#allocation2 + $0x20] sm:$0xff] %v8966
        %8975 = vst [vmem:[#allocation2 + $0x28] sm:$0xff] %v8967
        %8976 = vst [vmem:[#allocation2 + $0x30] sm:$0xff] %v8968
        %8977 = vst [vmem:[#allocation2 + $0x38] sm:$0xff] %v8969
        %p8978 = scmp.eq.s32.totalorder %s87, 1
        // Predicated region
        $region245: #{conditional_attention_forward.1} parent=147 // pred_check
          %p8979 = pneg %p8978
        $region246: #{conditional_attention_forward.1} parent=147 // pred_check_branch
          %8981 = sbr.rel (%p8979) target = $region248
        $region247: #{conditional_attention_forward.1} parent=147 // pred_region
          %v8982 = vpack.c.bf16 %v8963, %v8962
          %v8983 = vpack.c.bf16 %v8965, %v8964
          %v8984 = vpack.c.bf16 %v8967, %v8966
          %v8985 = vpack.c.bf16 %v8969, %v8968
          %v8986 = vld [vmem:[#allocation24] sm:$0xf]
          %v8987 = vld [vmem:[#allocation24 + $0x4] sm:$0xf]
          %v8988 = vld [vmem:[#allocation24 + $0x8] sm:$0xf]
          %v8989 = vld [vmem:[#allocation24 + $0xc] sm:$0xf]
          %v8990 = vld [vmem:[#allocation24 + $0x10] sm:$0xf]
          %v8991 = vld [vmem:[#allocation24 + $0x14] sm:$0xf]
          %v8992 = vld [vmem:[#allocation24 + $0x18] sm:$0xf]
          %v8993 = vld [vmem:[#allocation24 + $0x1c] sm:$0xf]
          %v8994 = vld [vmem:[#allocation24 + $0x20] sm:$0xf]
          %v8995 = vld [vmem:[#allocation24 + $0x24] sm:$0xf]
          %v8996 = vld [vmem:[#allocation24 + $0x28] sm:$0xf]
          %v8997 = vld [vmem:[#allocation24 + $0x2c] sm:$0xf]
          %v8998 = vld [vmem:[#allocation24 + $0x30] sm:$0xf]
          %v8999 = vld [vmem:[#allocation24 + $0x34] sm:$0xf]
          %v9000 = vld [vmem:[#allocation24 + $0x38] sm:$0xf]
          %v9001 = vld [vmem:[#allocation24 + $0x3c] sm:$0xf]
          %v9002 = vld [vmem:[#allocation25] sm:$0x1]
          %v9004 = vlaneseq
          %v9005 = vshrl.u32 %v9004, 7
          %v9006 = vsub.s32 0, %v9005
          %v9007 = vrot.slane %v9002, %v9006
          %v9025 = vunpack.c.l.b16 %v8986
          %v9026 = vunpack.c.l.b16 %v8987
          %v9027 = vunpack.c.l.b16 %v8988
          %v9028 = vunpack.c.l.b16 %v8989
          %v9029 = vunpack.c.l.b16 %v8990
          %v9030 = vunpack.c.l.b16 %v8991
          %v9031 = vunpack.c.l.b16 %v8992
          %v9032 = vunpack.c.l.b16 %v8993
          %v9033 = vunpack.c.l.b16 %v8994
          %v9034 = vunpack.c.l.b16 %v8995
          %v9035 = vunpack.c.l.b16 %v8996
          %v9036 = vunpack.c.l.b16 %v8997
          %v9037 = vunpack.c.l.b16 %v8998
          %v9038 = vunpack.c.l.b16 %v8999
          %v9039 = vunpack.c.l.b16 %v9000
          %v9040 = vunpack.c.l.b16 %v9001
          %v9041 = vpack.c.b16 %v9026, %v9025
          %v9042 = vpack.c.b16 %v9028, %v9027
          %v9043 = vpack.c.b16 %v9030, %v9029
          %v9044 = vpack.c.b16 %v9032, %v9031
          %v9045 = vpack.c.b16 %v9034, %v9033
          %v9046 = vpack.c.b16 %v9036, %v9035
          %v9047 = vpack.c.b16 %v9038, %v9037
          %v9048 = vpack.c.b16 %v9040, %v9039
          %9057 = vmatprep.subr.bf16.mxu0 0
          %9058 = vmatpush1.bf16.msra.mxu0 %v9041
          %9059 = vmatprep.subr.bf16.mxu0 0
          %9060 = vmatpush1.bf16.msra.mxu0 %v9042
          %9061 = vmatprep.subr.bf16.mxu0 0
          %9062 = vmatpush1.bf16.msra.mxu0 %v9043
          %9063 = vmatprep.subr.bf16.mxu0 0
          %9064 = vmatpush1.bf16.msra.mxu0 %v9044
          %9065 = vmatprep.subr.bf16.mxu0 0
          %9066 = vmatpush1.bf16.msra.mxu0 %v9045
          %9067 = vmatprep.subr.bf16.mxu0 0
          %9068 = vmatpush1.bf16.msra.mxu0 %v9046
          %9069 = vmatprep.subr.bf16.mxu0 0
          %9070 = vmatpush1.bf16.msra.mxu0 %v9047
          %9071 = vmatprep.subr.bf16.mxu0 0
          %9072 = vmatpush1.bf16.msra.mxu0 %v9048
          %9073 = vmatprep.subr.bf16.mxu0 0
          %9074 = vmatpush1.bf16.msra.mxu0 0
          %9075 = vmatprep.subr.bf16.mxu0 0
          %9076 = vmatpush1.bf16.msra.mxu0 0
          %9077 = vmatprep.subr.bf16.mxu0 0
          %9078 = vmatpush1.bf16.msra.mxu0 0
          %9079 = vmatprep.subr.bf16.mxu0 0
          %9080 = vmatpush1.bf16.msra.mxu0 0
          %9081 = vmatprep.subr.bf16.mxu0 0
          %9082 = vmatpush1.bf16.msra.mxu0 0
          %9083 = vmatprep.subr.bf16.mxu0 0
          %9084 = vmatpush1.bf16.msra.mxu0 0
          %9085 = vmatprep.subr.bf16.mxu0 0
          %9086 = vmatpush1.bf16.msra.mxu0 0
          %9087 = vmatprep.subr.bf16.mxu0 0
          %9088 = vmatpush1.bf16.msra.mxu0 0
          %9089 = vmatprep.mubr.bf16.mxu0 0
          %9090 = vmatmul.mubr.bf16.gmra.mrb[0].mxu0 %v8982
          %v9091 = vpop.f32.mrb[0].mxu0
          %v9092 = vadd.f32 %v9007, %v9091
          %v9093 = vpop.f32.mrb[0].mxu0
          %v9094 = vpop.f32.mrb[0].mxu0
          %v9095 = vadd.f32 %v9007, %v9094
          %v9096 = vpop.f32.mrb[0].mxu0
          %9097 = vmatprep.mubr.bf16.mxu0 0
          %9098 = vmatmul.mubr.bf16.gmra.mrb[0].mxu0 %v8983
          %v9099 = vpop.f32.mrb[0].mxu0
          %v9100 = vadd.f32 %v9007, %v9099
          %v9101 = vpop.f32.mrb[0].mxu0
          %v9102 = vpop.f32.mrb[0].mxu0
          %v9103 = vadd.f32 %v9007, %v9102
          %v9104 = vpop.f32.mrb[0].mxu0
          %9105 = vmatprep.mubr.bf16.mxu0 0
          %9106 = vmatmul.mubr.bf16.gmra.mrb[0].mxu0 %v8984
          %v9107 = vpop.f32.mrb[0].mxu0
          %v9108 = vadd.f32 %v9007, %v9107
          %v9109 = vpop.f32.mrb[0].mxu0
          %v9110 = vpop.f32.mrb[0].mxu0
          %v9111 = vadd.f32 %v9007, %v9110
          %v9112 = vpop.f32.mrb[0].mxu0
          %9113 = vmatprep.mubr.bf16.mxu0 0
          %9114 = vmatmul.mubr.bf16.gmra.mrb[0].mxu0 %v8985
          %v9115 = vpop.f32.mrb[0].mxu0
          %v9116 = vadd.f32 %v9007, %v9115
          %v9117 = vpop.f32.mrb[0].mxu0
          %v9118 = vpop.f32.mrb[0].mxu0
          %v9119 = vadd.f32 %v9007, %v9118
          %v9120 = vpop.f32.mrb[0].mxu0
          %9121 = vdwg.mxu0
          %v9122 = vld [vmem:[%s49] sm:$0x1]
          %v9123 = vld [vmem:[#allocation26] sm:$0x1]
          %9124 = vadd.xlane.f32.xlu0 %v9092
          %v9125 = vpop.xlane.xlu0 %9124
          %9126 = vadd.xlane.f32.xlu0 %v9095
          %v9127 = vpop.xlane.xlu0 %9126
          %9128 = vadd.xlane.f32.xlu0 %v9100
          %v9129 = vpop.xlane.xlu0 %9128
          %9130 = vadd.xlane.f32.xlu0 %v9103
          %v9131 = vpop.xlane.xlu0 %9130
          %9132 = vadd.xlane.f32.xlu0 %v9108
          %v9133 = vpop.xlane.xlu0 %9132
          %9134 = vadd.xlane.f32.xlu0 %v9111
          %v9135 = vpop.xlane.xlu0 %9134
          %9136 = vadd.xlane.f32.xlu0 %v9116
          %v9137 = vpop.xlane.xlu0 %9136
          %9138 = vadd.xlane.f32.xlu0 %v9119
          %v9139 = vpop.xlane.xlu0 %9138
          %v9140 = vmul.f32 %v9125, %v5560
          %v9141 = vmul.f32 %v9127, %v5560
          %v9142 = vmul.f32 %v9129, %v5560
          %v9143 = vmul.f32 %v9131, %v5560
          %v9144 = vmul.f32 %v9133, %v5560
          %v9145 = vmul.f32 %v9135, %v5560
          %v9146 = vmul.f32 %v9137, %v5560
          %v9147 = vmul.f32 %v9139, %v5560
          %v9148 = vsub.f32 %v9092, %v9140
          %v9149 = vsub.f32 %v9095, %v9141
          %v9150 = vsub.f32 %v9100, %v9142
          %v9151 = vsub.f32 %v9103, %v9143
          %v9152 = vsub.f32 %v9108, %v9144
          %v9153 = vsub.f32 %v9111, %v9145
          %v9154 = vsub.f32 %v9116, %v9146
          %v9155 = vsub.f32 %v9119, %v9147
          %v9156 = vmul.f32 %v9148, %v9148
          %v9157 = vmul.f32 %v9149, %v9149
          %v9158 = vmul.f32 %v9150, %v9150
          %v9159 = vmul.f32 %v9151, %v9151
          %v9160 = vmul.f32 %v9152, %v9152
          %v9161 = vmul.f32 %v9153, %v9153
          %v9162 = vmul.f32 %v9154, %v9154
          %v9163 = vmul.f32 %v9155, %v9155
          %9164 = vadd.xlane.f32.xlu0 %v9156
          %v9165 = vpop.xlane.xlu0 %9164
          %9166 = vadd.xlane.f32.xlu0 %v9157
          %v9167 = vpop.xlane.xlu0 %9166
          %9168 = vadd.xlane.f32.xlu0 %v9158
          %v9169 = vpop.xlane.xlu0 %9168
          %9170 = vadd.xlane.f32.xlu0 %v9159
          %v9171 = vpop.xlane.xlu0 %9170
          %9172 = vadd.xlane.f32.xlu0 %v9160
          %v9173 = vpop.xlane.xlu0 %9172
          %9174 = vadd.xlane.f32.xlu0 %v9161
          %v9175 = vpop.xlane.xlu0 %9174
          %9176 = vadd.xlane.f32.xlu0 %v9162
          %v9177 = vpop.xlane.xlu0 %9176
          %9178 = vadd.xlane.f32.xlu0 %v9163
          %v9179 = vpop.xlane.xlu0 %9178
          %v9180 = vmul.f32 %v9165, %v5560
          %v9181 = vmul.f32 %v9167, %v5560
          %v9182 = vmul.f32 %v9169, %v5560
          %v9183 = vmul.f32 %v9171, %v5560
          %v9184 = vmul.f32 %v9173, %v5560
          %v9185 = vmul.f32 %v9175, %v5560
          %v9186 = vmul.f32 %v9177, %v5560
          %v9187 = vmul.f32 %v9179, %v5560
          %v9188 = vadd.f32 %v9180, 1e-05
          %v9189 = vadd.f32 %v9181, 1e-05
          %v9190 = vadd.f32 %v9182, 1e-05
          %v9191 = vadd.f32 %v9183, 1e-05
          %v9192 = vadd.f32 %v9184, 1e-05
          %v9193 = vadd.f32 %v9185, 1e-05
          %v9194 = vadd.f32 %v9186, 1e-05
          %v9195 = vadd.f32 %v9187, 1e-05
          %v9196 = vrsqrt.pop %v9188
          %v9197 = vrsqrt.pop %v9189
          %v9198 = vrsqrt.pop %v9190
          %v9199 = vrsqrt.pop %v9191
          %v9200 = vrsqrt.pop %v9192
          %v9201 = vrsqrt.pop %v9193
          %v9202 = vrsqrt.pop %v9194
          %v9203 = vrsqrt.pop %v9195
          %v9204 = vmul.f32 %v9148, %v9196
          %v9205 = vmul.f32 %v9149, %v9197
          %v9206 = vmul.f32 %v9150, %v9198
          %v9207 = vmul.f32 %v9151, %v9199
          %v9208 = vmul.f32 %v9152, %v9200
          %v9209 = vmul.f32 %v9153, %v9201
          %v9210 = vmul.f32 %v9154, %v9202
          %v9211 = vmul.f32 %v9155, %v9203
          %v9213 = vlaneseq
          %v9214 = vshrl.u32 %v9213, 7
          %v9215 = vsub.s32 0, %v9214
          %v9216 = vrot.slane %v9122, %v9215
          %v9218 = vmul.f32 %v9204, %v9216
          %v9219 = vmul.f32 %v9205, %v9216
          %v9220 = vmul.f32 %v9206, %v9216
          %v9221 = vmul.f32 %v9207, %v9216
          %v9222 = vmul.f32 %v9208, %v9216
          %v9223 = vmul.f32 %v9209, %v9216
          %v9224 = vmul.f32 %v9210, %v9216
          %v9225 = vmul.f32 %v9211, %v9216
          %v9227 = vlaneseq
          %v9228 = vshrl.u32 %v9227, 7
          %v9229 = vsub.s32 0, %v9228
          %v9230 = vrot.slane %v9123, %v9229
          %v9232 = vadd.f32 %v9218, %v9230
          %v9233 = vadd.f32 %v9219, %v9230
          %v9234 = vadd.f32 %v9220, %v9230
          %v9235 = vadd.f32 %v9221, %v9230
          %v9236 = vadd.f32 %v9222, %v9230
          %v9237 = vadd.f32 %v9223, %v9230
          %v9238 = vadd.f32 %v9224, %v9230
          %v9239 = vadd.f32 %v9225, %v9230
          %v9240 = vmul.f32 %v9232, 0.5
          %v9241 = vmul.f32 %v9233, 0.5
          %v9242 = vmul.f32 %v9234, 0.5
          %v9243 = vmul.f32 %v9235, 0.5
          %v9244 = vmul.f32 %v9236, 0.5
          %v9245 = vmul.f32 %v9237, 0.5
          %v9246 = vmul.f32 %v9238, 0.5
          %v9247 = vmul.f32 %v9239, 0.5
          %v9248 = vtanh.pop %v9240
          %v9249 = vtanh.pop %v9241
          %v9250 = vtanh.pop %v9242
          %v9251 = vtanh.pop %v9243
          %v9252 = vtanh.pop %v9244
          %v9253 = vtanh.pop %v9245
          %v9254 = vtanh.pop %v9246
          %v9255 = vtanh.pop %v9247
          %v9256 = vadd.f32 %v9248, 1.0
          %v9257 = vadd.f32 %v9249, 1.0
          %v9258 = vadd.f32 %v9250, 1.0
          %v9259 = vadd.f32 %v9251, 1.0
          %v9260 = vadd.f32 %v9252, 1.0
          %v9261 = vadd.f32 %v9253, 1.0
          %v9262 = vadd.f32 %v9254, 1.0
          %v9263 = vadd.f32 %v9255, 1.0
          %v9264 = vmul.f32 %v9256, 0.5
          %v9265 = vmul.f32 %v9257, 0.5
          %v9266 = vmul.f32 %v9258, 0.5
          %v9267 = vmul.f32 %v9259, 0.5
          %v9268 = vmul.f32 %v9260, 0.5
          %v9269 = vmul.f32 %v9261, 0.5
          %v9270 = vmul.f32 %v9262, 0.5
          %v9271 = vmul.f32 %v9263, 0.5
          %v9272 = vmul.f32 %v9232, %v9264
          %v9273 = vmul.f32 %v9233, %v9265
          %v9274 = vmul.f32 %v9234, %v9266
          %v9275 = vmul.f32 %v9235, %v9267
          %v9276 = vmul.f32 %v9236, %v9268
          %v9277 = vmul.f32 %v9237, %v9269
          %v9278 = vmul.f32 %v9238, %v9270
          %v9279 = vmul.f32 %v9239, %v9271
          %v9280 = vpack.c.bf16 %v9273, %v9272
          %v9281 = vpack.c.bf16 %v9275, %v9274
          %v9282 = vpack.c.bf16 %v9277, %v9276
          %v9283 = vpack.c.bf16 %v9279, %v9278
          %v9284 = vld [vmem:[#allocation27] sm:$0xf]
          %v9285 = vld [vmem:[#allocation27 + $0x4] sm:$0xf]
          %v9286 = vld [vmem:[#allocation27 + $0x8] sm:$0xf]
          %v9287 = vld [vmem:[#allocation27 + $0xc] sm:$0xf]
          %v9288 = vld [vmem:[#allocation27 + $0x10] sm:$0xf]
          %v9289 = vld [vmem:[#allocation27 + $0x14] sm:$0xf]
          %v9290 = vld [vmem:[#allocation27 + $0x18] sm:$0xf]
          %v9291 = vld [vmem:[#allocation27 + $0x1c] sm:$0xf]
          %v9292 = vld [vmem:[#allocation27 + $0x20] sm:$0xf]
          %v9293 = vld [vmem:[#allocation27 + $0x24] sm:$0xf]
          %v9294 = vld [vmem:[#allocation27 + $0x28] sm:$0xf]
          %v9295 = vld [vmem:[#allocation27 + $0x2c] sm:$0xf]
          %v9296 = vld [vmem:[#allocation27 + $0x30] sm:$0xf]
          %v9297 = vld [vmem:[#allocation27 + $0x34] sm:$0xf]
          %v9298 = vld [vmem:[#allocation27 + $0x38] sm:$0xf]
          %v9299 = vld [vmem:[#allocation27 + $0x3c] sm:$0xf]
          %v9300 = vld [vmem:[#allocation29] sm:$0x1]
          %v9302 = vlaneseq
          %v9303 = vshrl.u32 %v9302, 7
          %v9304 = vsub.s32 0, %v9303
          %v9305 = vrot.slane %v9300, %v9304
          %v9323 = vunpack.c.l.b16 %v9284
          %v9324 = vunpack.c.l.b16 %v9285
          %v9325 = vunpack.c.l.b16 %v9286
          %v9326 = vunpack.c.l.b16 %v9287
          %v9327 = vunpack.c.l.b16 %v9288
          %v9328 = vunpack.c.l.b16 %v9289
          %v9329 = vunpack.c.l.b16 %v9290
          %v9330 = vunpack.c.l.b16 %v9291
          %v9331 = vunpack.c.l.b16 %v9292
          %v9332 = vunpack.c.l.b16 %v9293
          %v9333 = vunpack.c.l.b16 %v9294
          %v9334 = vunpack.c.l.b16 %v9295
          %v9335 = vunpack.c.l.b16 %v9296
          %v9336 = vunpack.c.l.b16 %v9297
          %v9337 = vunpack.c.l.b16 %v9298
          %v9338 = vunpack.c.l.b16 %v9299
          %v9339 = vpack.c.b16 %v9324, %v9323
          %v9340 = vpack.c.b16 %v9326, %v9325
          %v9341 = vpack.c.b16 %v9328, %v9327
          %v9342 = vpack.c.b16 %v9330, %v9329
          %v9343 = vpack.c.b16 %v9332, %v9331
          %v9344 = vpack.c.b16 %v9334, %v9333
          %v9345 = vpack.c.b16 %v9336, %v9335
          %v9346 = vpack.c.b16 %v9338, %v9337
          %9355 = vmatprep.subr.bf16.mxu0 0
          %9356 = vmatpush1.bf16.msra.mxu0 %v9339
          %9357 = vmatprep.subr.bf16.mxu0 0
          %9358 = vmatpush1.bf16.msra.mxu0 %v9340
          %9359 = vmatprep.subr.bf16.mxu0 0
          %9360 = vmatpush1.bf16.msra.mxu0 %v9341
          %9361 = vmatprep.subr.bf16.mxu0 0
          %9362 = vmatpush1.bf16.msra.mxu0 %v9342
          %9363 = vmatprep.subr.bf16.mxu0 0
          %9364 = vmatpush1.bf16.msra.mxu0 %v9343
          %9365 = vmatprep.subr.bf16.mxu0 0
          %9366 = vmatpush1.bf16.msra.mxu0 %v9344
          %9367 = vmatprep.subr.bf16.mxu0 0
          %9368 = vmatpush1.bf16.msra.mxu0 %v9345
          %9369 = vmatprep.subr.bf16.mxu0 0
          %9370 = vmatpush1.bf16.msra.mxu0 %v9346
          %9371 = vmatprep.subr.bf16.mxu0 0
          %9372 = vmatpush1.bf16.msra.mxu0 0
          %9373 = vmatprep.subr.bf16.mxu0 0
          %9374 = vmatpush1.bf16.msra.mxu0 0
          %9375 = vmatprep.subr.bf16.mxu0 0
          %9376 = vmatpush1.bf16.msra.mxu0 0
          %9377 = vmatprep.subr.bf16.mxu0 0
          %9378 = vmatpush1.bf16.msra.mxu0 0
          %9379 = vmatprep.subr.bf16.mxu0 0
          %9380 = vmatpush1.bf16.msra.mxu0 0
          %9381 = vmatprep.subr.bf16.mxu0 0
          %9382 = vmatpush1.bf16.msra.mxu0 0
          %9383 = vmatprep.subr.bf16.mxu0 0
          %9384 = vmatpush1.bf16.msra.mxu0 0
          %9385 = vmatprep.subr.bf16.mxu0 0
          %9386 = vmatpush1.bf16.msra.mxu0 0
          %9387 = vmatprep.mubr.bf16.mxu0 0
          %9388 = vmatmul.mubr.bf16.gmra.mrb[0].mxu0 %v9280
          %v9389 = vpop.f32.mrb[0].mxu0
          %v9390 = vadd.f32 %v9305, %v9389
          %v9391 = vpop.f32.mrb[0].mxu0
          %v9392 = vpop.f32.mrb[0].mxu0
          %v9393 = vadd.f32 %v9305, %v9392
          %v9394 = vpop.f32.mrb[0].mxu0
          %9395 = vmatprep.mubr.bf16.mxu0 0
          %9396 = vmatmul.mubr.bf16.gmra.mrb[0].mxu0 %v9281
          %v9397 = vpop.f32.mrb[0].mxu0
          %v9398 = vadd.f32 %v9305, %v9397
          %v9399 = vpop.f32.mrb[0].mxu0
          %v9400 = vpop.f32.mrb[0].mxu0
          %v9401 = vadd.f32 %v9305, %v9400
          %v9402 = vpop.f32.mrb[0].mxu0
          %9403 = vmatprep.mubr.bf16.mxu0 0
          %9404 = vmatmul.mubr.bf16.gmra.mrb[0].mxu0 %v9282
          %v9405 = vpop.f32.mrb[0].mxu0
          %v9406 = vadd.f32 %v9305, %v9405
          %v9407 = vpop.f32.mrb[0].mxu0
          %v9408 = vpop.f32.mrb[0].mxu0
          %v9409 = vadd.f32 %v9305, %v9408
          %v9410 = vpop.f32.mrb[0].mxu0
          %9411 = vmatprep.mubr.bf16.mxu0 0
          %9412 = vmatmul.mubr.bf16.gmra.mrb[0].mxu0 %v9283
          %v9413 = vpop.f32.mrb[0].mxu0
          %v9414 = vadd.f32 %v9305, %v9413
          %v9415 = vpop.f32.mrb[0].mxu0
          %v9416 = vpop.f32.mrb[0].mxu0
          %v9417 = vadd.f32 %v9305, %v9416
          %v9418 = vpop.f32.mrb[0].mxu0
          %9419 = vdwg.mxu0
          %v9420 = vld [vmem:[%s57] sm:$0x1]
          %v9421 = vld [vmem:[%s59] sm:$0x1]
          %9422 = vadd.xlane.f32.xlu0 %v9390
          %v9423 = vpop.xlane.xlu0 %9422
          %9424 = vadd.xlane.f32.xlu0 %v9393
          %v9425 = vpop.xlane.xlu0 %9424
          %9426 = vadd.xlane.f32.xlu0 %v9398
          %v9427 = vpop.xlane.xlu0 %9426
          %9428 = vadd.xlane.f32.xlu0 %v9401
          %v9429 = vpop.xlane.xlu0 %9428
          %9430 = vadd.xlane.f32.xlu0 %v9406
          %v9431 = vpop.xlane.xlu0 %9430
          %9432 = vadd.xlane.f32.xlu0 %v9409
          %v9433 = vpop.xlane.xlu0 %9432
          %9434 = vadd.xlane.f32.xlu0 %v9414
          %v9435 = vpop.xlane.xlu0 %9434
          %9436 = vadd.xlane.f32.xlu0 %v9417
          %v9437 = vpop.xlane.xlu0 %9436
          %v9438 = vmul.f32 %v9423, %v5560
          %v9439 = vmul.f32 %v9425, %v5560
          %v9440 = vmul.f32 %v9427, %v5560
          %v9441 = vmul.f32 %v9429, %v5560
          %v9442 = vmul.f32 %v9431, %v5560
          %v9443 = vmul.f32 %v9433, %v5560
          %v9444 = vmul.f32 %v9435, %v5560
          %v9445 = vmul.f32 %v9437, %v5560
          %v9446 = vsub.f32 %v9390, %v9438
          %v9447 = vsub.f32 %v9393, %v9439
          %v9448 = vsub.f32 %v9398, %v9440
          %v9449 = vsub.f32 %v9401, %v9441
          %v9450 = vsub.f32 %v9406, %v9442
          %v9451 = vsub.f32 %v9409, %v9443
          %v9452 = vsub.f32 %v9414, %v9444
          %v9453 = vsub.f32 %v9417, %v9445
          %v9454 = vmul.f32 %v9446, %v9446
          %v9455 = vmul.f32 %v9447, %v9447
          %v9456 = vmul.f32 %v9448, %v9448
          %v9457 = vmul.f32 %v9449, %v9449
          %v9458 = vmul.f32 %v9450, %v9450
          %v9459 = vmul.f32 %v9451, %v9451
          %v9460 = vmul.f32 %v9452, %v9452
          %v9461 = vmul.f32 %v9453, %v9453
          %9462 = vadd.xlane.f32.xlu0 %v9454
          %v9463 = vpop.xlane.xlu0 %9462
          %9464 = vadd.xlane.f32.xlu0 %v9455
          %v9465 = vpop.xlane.xlu0 %9464
          %9466 = vadd.xlane.f32.xlu0 %v9456
          %v9467 = vpop.xlane.xlu0 %9466
          %9468 = vadd.xlane.f32.xlu0 %v9457
          %v9469 = vpop.xlane.xlu0 %9468
          %9470 = vadd.xlane.f32.xlu0 %v9458
          %v9471 = vpop.xlane.xlu0 %9470
          %9472 = vadd.xlane.f32.xlu0 %v9459
          %v9473 = vpop.xlane.xlu0 %9472
          %9474 = vadd.xlane.f32.xlu0 %v9460
          %v9475 = vpop.xlane.xlu0 %9474
          %9476 = vadd.xlane.f32.xlu0 %v9461
          %v9477 = vpop.xlane.xlu0 %9476
          %v9478 = vmul.f32 %v9463, %v5560
          %v9479 = vmul.f32 %v9465, %v5560
          %v9480 = vmul.f32 %v9467, %v5560
          %v9481 = vmul.f32 %v9469, %v5560
          %v9482 = vmul.f32 %v9471, %v5560
          %v9483 = vmul.f32 %v9473, %v5560
          %v9484 = vmul.f32 %v9475, %v5560
          %v9485 = vmul.f32 %v9477, %v5560
          %v9486 = vadd.f32 %v9478, 1e-05
          %v9487 = vadd.f32 %v9479, 1e-05
          %v9488 = vadd.f32 %v9480, 1e-05
          %v9489 = vadd.f32 %v9481, 1e-05
          %v9490 = vadd.f32 %v9482, 1e-05
          %v9491 = vadd.f32 %v9483, 1e-05
          %v9492 = vadd.f32 %v9484, 1e-05
          %v9493 = vadd.f32 %v9485, 1e-05
          %v9494 = vrsqrt.pop %v9486
          %v9495 = vrsqrt.pop %v9487
          %v9496 = vrsqrt.pop %v9488
          %v9497 = vrsqrt.pop %v9489
          %v9498 = vrsqrt.pop %v9490
          %v9499 = vrsqrt.pop %v9491
          %v9500 = vrsqrt.pop %v9492
          %v9501 = vrsqrt.pop %v9493
          %v9502 = vmul.f32 %v9446, %v9494
          %v9503 = vmul.f32 %v9447, %v9495
          %v9504 = vmul.f32 %v9448, %v9496
          %v9505 = vmul.f32 %v9449, %v9497
          %v9506 = vmul.f32 %v9450, %v9498
          %v9507 = vmul.f32 %v9451, %v9499
          %v9508 = vmul.f32 %v9452, %v9500
          %v9509 = vmul.f32 %v9453, %v9501
          %v9511 = vlaneseq
          %v9512 = vshrl.u32 %v9511, 7
          %v9513 = vsub.s32 0, %v9512
          %v9514 = vrot.slane %v9420, %v9513
          %v9516 = vmul.f32 %v9502, %v9514
          %v9517 = vmul.f32 %v9503, %v9514
          %v9518 = vmul.f32 %v9504, %v9514
          %v9519 = vmul.f32 %v9505, %v9514
          %v9520 = vmul.f32 %v9506, %v9514
          %v9521 = vmul.f32 %v9507, %v9514
          %v9522 = vmul.f32 %v9508, %v9514
          %v9523 = vmul.f32 %v9509, %v9514
          %v9525 = vlaneseq
          %v9526 = vshrl.u32 %v9525, 7
          %v9527 = vsub.s32 0, %v9526
          %v9528 = vrot.slane %v9421, %v9527
          %v9530 = vadd.f32 %v9516, %v9528
          %v9531 = vadd.f32 %v9517, %v9528
          %v9532 = vadd.f32 %v9518, %v9528
          %v9533 = vadd.f32 %v9519, %v9528
          %v9534 = vadd.f32 %v9520, %v9528
          %v9535 = vadd.f32 %v9521, %v9528
          %v9536 = vadd.f32 %v9522, %v9528
          %v9537 = vadd.f32 %v9523, %v9528
          %v9538 = vmul.f32 %v9530, 0.5
          %v9539 = vmul.f32 %v9531, 0.5
          %v9540 = vmul.f32 %v9532, 0.5
          %v9541 = vmul.f32 %v9533, 0.5
          %v9542 = vmul.f32 %v9534, 0.5
          %v9543 = vmul.f32 %v9535, 0.5
          %v9544 = vmul.f32 %v9536, 0.5
          %v9545 = vmul.f32 %v9537, 0.5
          %v9546 = vtanh.pop %v9538
          %v9547 = vtanh.pop %v9539
          %v9548 = vtanh.pop %v9540
          %v9549 = vtanh.pop %v9541
          %v9550 = vtanh.pop %v9542
          %v9551 = vtanh.pop %v9543
          %v9552 = vtanh.pop %v9544
          %v9553 = vtanh.pop %v9545
          %v9554 = vadd.f32 %v9546, 1.0
          %v9555 = vadd.f32 %v9547, 1.0
          %v9556 = vadd.f32 %v9548, 1.0
          %v9557 = vadd.f32 %v9549, 1.0
          %v9558 = vadd.f32 %v9550, 1.0
          %v9559 = vadd.f32 %v9551, 1.0
          %v9560 = vadd.f32 %v9552, 1.0
          %v9561 = vadd.f32 %v9553, 1.0
          %v9562 = vmul.f32 %v9554, 0.5
          %v9563 = vmul.f32 %v9555, 0.5
          %v9564 = vmul.f32 %v9556, 0.5
          %v9565 = vmul.f32 %v9557, 0.5
          %v9566 = vmul.f32 %v9558, 0.5
          %v9567 = vmul.f32 %v9559, 0.5
          %v9568 = vmul.f32 %v9560, 0.5
          %v9569 = vmul.f32 %v9561, 0.5
          %v9570 = vmul.f32 %v9530, %v9562
          %v9571 = vmul.f32 %v9531, %v9563
          %v9572 = vmul.f32 %v9532, %v9564
          %v9573 = vmul.f32 %v9533, %v9565
          %v9574 = vmul.f32 %v9534, %v9566
          %v9575 = vmul.f32 %v9535, %v9567
          %v9576 = vmul.f32 %v9536, %v9568
          %v9577 = vmul.f32 %v9537, %v9569
          %v9578 = vpack.c.bf16 %v9571, %v9570
          %v9579 = vpack.c.bf16 %v9573, %v9572
          %v9580 = vpack.c.bf16 %v9575, %v9574
          %v9581 = vpack.c.bf16 %v9577, %v9576
          %v9582 = vld [vmem:[%s61] sm:$0xf]
          %v9583 = vld [vmem:[%s61 + $0x4] sm:$0xf]
          %v9584 = vld [vmem:[%s61 + $0x8] sm:$0xf]
          %v9585 = vld [vmem:[%s61 + $0xc] sm:$0xf]
          %v9586 = vld [vmem:[%s61 + $0x10] sm:$0xf]
          %v9587 = vld [vmem:[%s61 + $0x14] sm:$0xf]
          %v9588 = vld [vmem:[%s61 + $0x18] sm:$0xf]
          %v9589 = vld [vmem:[%s61 + $0x1c] sm:$0xf]
          %v9590 = vld [vmem:[%s61 + $0x20] sm:$0xf]
          %v9591 = vld [vmem:[%s61 + $0x24] sm:$0xf]
          %v9592 = vld [vmem:[%s61 + $0x28] sm:$0xf]
          %v9593 = vld [vmem:[%s61 + $0x2c] sm:$0xf]
          %v9594 = vld [vmem:[%s61 + $0x30] sm:$0xf]
          %v9595 = vld [vmem:[%s61 + $0x34] sm:$0xf]
          %v9596 = vld [vmem:[%s61 + $0x38] sm:$0xf]
          %v9597 = vld [vmem:[%s61 + $0x3c] sm:$0xf]
          %v9598 = vld [vmem:[#allocation30] sm:$0x1]
          %v9600 = vlaneseq
          %v9601 = vshrl.u32 %v9600, 7
          %v9602 = vsub.s32 0, %v9601
          %v9603 = vrot.slane %v9598, %v9602
          %v9621 = vunpack.c.l.b16 %v9582
          %v9622 = vunpack.c.l.b16 %v9583
          %v9623 = vunpack.c.l.b16 %v9584
          %v9624 = vunpack.c.l.b16 %v9585
          %v9625 = vunpack.c.l.b16 %v9586
          %v9626 = vunpack.c.l.b16 %v9587
          %v9627 = vunpack.c.l.b16 %v9588
          %v9628 = vunpack.c.l.b16 %v9589
          %v9629 = vunpack.c.l.b16 %v9590
          %v9630 = vunpack.c.l.b16 %v9591
          %v9631 = vunpack.c.l.b16 %v9592
          %v9632 = vunpack.c.l.b16 %v9593
          %v9633 = vunpack.c.l.b16 %v9594
          %v9634 = vunpack.c.l.b16 %v9595
          %v9635 = vunpack.c.l.b16 %v9596
          %v9636 = vunpack.c.l.b16 %v9597
          %v9637 = vpack.c.b16 %v9622, %v9621
          %v9638 = vpack.c.b16 %v9624, %v9623
          %v9639 = vpack.c.b16 %v9626, %v9625
          %v9640 = vpack.c.b16 %v9628, %v9627
          %v9641 = vpack.c.b16 %v9630, %v9629
          %v9642 = vpack.c.b16 %v9632, %v9631
          %v9643 = vpack.c.b16 %v9634, %v9633
          %v9644 = vpack.c.b16 %v9636, %v9635
          %9653 = vmatprep.subr.bf16.mxu0 0
          %9654 = vmatpush1.bf16.msra.mxu0 %v9637
          %9655 = vmatprep.subr.bf16.mxu0 0
          %9656 = vmatpush1.bf16.msra.mxu0 %v9638
          %9657 = vmatprep.subr.bf16.mxu0 0
          %9658 = vmatpush1.bf16.msra.mxu0 %v9639
          %9659 = vmatprep.subr.bf16.mxu0 0
          %9660 = vmatpush1.bf16.msra.mxu0 %v9640
          %9661 = vmatprep.subr.bf16.mxu0 0
          %9662 = vmatpush1.bf16.msra.mxu0 %v9641
          %9663 = vmatprep.subr.bf16.mxu0 0
          %9664 = vmatpush1.bf16.msra.mxu0 %v9642
          %9665 = vmatprep.subr.bf16.mxu0 0
          %9666 = vmatpush1.bf16.msra.mxu0 %v9643
          %9667 = vmatprep.subr.bf16.mxu0 0
          %9668 = vmatpush1.bf16.msra.mxu0 %v9644
          %9669 = vmatprep.subr.bf16.mxu0 0
          %9670 = vmatpush1.bf16.msra.mxu0 0
          %9671 = vmatprep.subr.bf16.mxu0 0
          %9672 = vmatpush1.bf16.msra.mxu0 0
          %9673 = vmatprep.subr.bf16.mxu0 0
          %9674 = vmatpush1.bf16.msra.mxu0 0
          %9675 = vmatprep.subr.bf16.mxu0 0
          %9676 = vmatpush1.bf16.msra.mxu0 0
          %9677 = vmatprep.subr.bf16.mxu0 0
          %9678 = vmatpush1.bf16.msra.mxu0 0
          %9679 = vmatprep.subr.bf16.mxu0 0
          %9680 = vmatpush1.bf16.msra.mxu0 0
          %9681 = vmatprep.subr.bf16.mxu0 0
          %9682 = vmatpush1.bf16.msra.mxu0 0
          %9683 = vmatprep.subr.bf16.mxu0 0
          %9684 = vmatpush1.bf16.msra.mxu0 0
          %9685 = vmatprep.mubr.bf16.mxu0 0
          %9686 = vmatmul.mubr.bf16.gmra.mrb[0].mxu0 %v9578
          %v9687 = vpop.f32.mrb[0].mxu0
          %v9688 = vadd.f32 %v9603, %v9687
          %v9689 = vpop.f32.mrb[0].mxu0
          %v9690 = vpop.f32.mrb[0].mxu0
          %v9691 = vadd.f32 %v9603, %v9690
          %v9692 = vpop.f32.mrb[0].mxu0
          %9693 = vmatprep.mubr.bf16.mxu0 0
          %9694 = vmatmul.mubr.bf16.gmra.mrb[0].mxu0 %v9579
          %v9695 = vpop.f32.mrb[0].mxu0
          %v9696 = vadd.f32 %v9603, %v9695
          %v9697 = vpop.f32.mrb[0].mxu0
          %v9698 = vpop.f32.mrb[0].mxu0
          %v9699 = vadd.f32 %v9603, %v9698
          %v9700 = vpop.f32.mrb[0].mxu0
          %9701 = vmatprep.mubr.bf16.mxu0 0
          %9702 = vmatmul.mubr.bf16.gmra.mrb[0].mxu0 %v9580
          %v9703 = vpop.f32.mrb[0].mxu0
          %v9704 = vadd.f32 %v9603, %v9703
          %v9705 = vpop.f32.mrb[0].mxu0
          %v9706 = vpop.f32.mrb[0].mxu0
          %v9707 = vadd.f32 %v9603, %v9706
          %v9708 = vpop.f32.mrb[0].mxu0
          %9709 = vmatprep.mubr.bf16.mxu0 0
          %9710 = vmatmul.mubr.bf16.gmra.mrb[0].mxu0 %v9581
          %v9711 = vpop.f32.mrb[0].mxu0
          %v9712 = vadd.f32 %v9603, %v9711
          %v9713 = vpop.f32.mrb[0].mxu0
          %v9714 = vpop.f32.mrb[0].mxu0
          %v9715 = vadd.f32 %v9603, %v9714
          %v9716 = vpop.f32.mrb[0].mxu0
          %9717 = vdwg.mxu0
          %v9718 = vtanh.pop %v9688
          %v9719 = vtanh.pop %v9691
          %v9720 = vtanh.pop %v9696
          %v9721 = vtanh.pop %v9699
          %v9722 = vtanh.pop %v9704
          %v9723 = vtanh.pop %v9707
          %v9724 = vtanh.pop %v9712
          %v9725 = vtanh.pop %v9715
          %9726 = vst [vmem:[%s1593] sm:$0xff] %v9718
          %9727 = vst [vmem:[%s1593 + $0x8] sm:$0xff] %v9719
          %9728 = vst [vmem:[%s1593 + $0x10] sm:$0xff] %v9720
          %9729 = vst [vmem:[%s1593 + $0x18] sm:$0xff] %v9721
          %9730 = vst [vmem:[%s1593 + $0x20] sm:$0xff] %v9722
          %9731 = vst [vmem:[%s1593 + $0x28] sm:$0xff] %v9723
          %9732 = vst [vmem:[%s1593 + $0x30] sm:$0xff] %v9724
          %9733 = vst [vmem:[%s1593 + $0x38] sm:$0xff] %v9725
        $region248: #{conditional_attention_forward.1} parent=147 // pred_fallthru
          _
        %s9734 = smul.u32 8, %s86
        %p9735 = scmp.lt.s32.totalorder %s9734, 15
        %s9736 = scalar_select %p9735, %s9734, 15
        %s9737 = smul.addr %s9736, 8
        %s9738 = scalar_lea.vmem %s65, %s9737
        // Predicated region
        $region249: #{conditional_attention_forward.1} parent=147 // pred_check
          %p9739 = pneg %p859
        $region250: #{conditional_attention_forward.1} parent=147 // pred_check_branch
          %9741 = sbr.rel (%p9739) target = $region252
        $region251: #{conditional_attention_forward.1} parent=147 // pred_region
          %s9742 = smul.u32 8, %s86
        $region252: #{conditional_attention_forward.1} parent=147 // pred_fallthru
          _
      $region148: #{conditional_attention_forward.1} parent=5 // pred_fallthru
        _
      %p9743 = scmp.le.s32.totalorder 2, %s77
      // Predicated region
      $region253: #{conditional_attention_forward.1} parent=5 // pred_check
        %p9744 = pneg %p9743
      $region254: #{conditional_attention_forward.1} parent=5 // pred_check_branch
        %9746 = sbr.rel (%p9744) target = $region256
      $region255: #{conditional_attention_forward.1} parent=5 // pred_region
        %s9747 = ssub.s32 %s77, 2
        // Predicated region
        $region257: #{conditional_attention_forward.1} parent=255 // pred_check
          %p9748 = pneg %p865
        $region258: #{conditional_attention_forward.1} parent=255 // pred_check_branch
          %9750 = sbr.rel (%p9748) target = $region260
        $region259: #{conditional_attention_forward.1} parent=255 // pred_region
          %s9751 = smul.u32 8, %s88
          %p9752 = scmp.lt.s32.totalorder %s9751, 15
          %s9753 = scalar_select %p9752, %s9751, 15
          %s9754 = smul.addr %s9753, 8
          %s9755 = scalar_lea.vmem %s65, %s9754
        $region260: #{conditional_attention_forward.1} parent=255 // pred_fallthru
          _
      $region256: #{conditional_attention_forward.1} parent=5 // pred_fallthru
        _
    $region6: #{conditional_attention_forward.1} parent=1 // loop_footer
      %s81 = sadd.s32 1, %s77
    $region7: #{conditional_attention_forward.1} parent=1 // loop_footer_branch
      %76 = sbr.rel target = $region3
    $region8: #{conditional_attention_forward.1} parent=1 // loop_exit
      _
    %9756 = vsyncpa [#allocation4], 1
    %s9757 = scalar_lea.sflag [#allocation4], 1
    %9758 = vsyncpa %s9757, 1
    %9759 = vsyncpa [#allocation6], 1
    %9760 = vsyncpa [#allocation9], 1
    %9761 = vsyncpa [#allocation12], 1
    %9762 = vsyncpa [#allocation28], 1
    %9763 = vsyncpa [#allocation31], 1

</llo_original>
